<compile_context>
chip_gen: v7x
topology: tpu7x:2x2x1
jax: 0.10.0
libtpu: 0.0.40
codegen_flags: <defaults>
</compile_context>

<pallas_src>
import jax
import jax.numpy as jnp
from jax.experimental import pallas as pl
from jax.experimental.pallas import tpu as pltpu

_EPS = 1e-5  # PyTorch InstanceNorm2d default (affine=False, biased variance)


def _make_kernel(has_downsample):
    def kernel(*refs):
        if has_downsample:
            (x_ref, w1_ref, w2_ref, w3_ref, wd_ref,
             o_ref, p1_ref, p2_ref, p3_ref, acc_ref) = refs
        else:
            (x_ref, w1_ref, w2_ref, w3_ref,
             o_ref, p1_ref, p2_ref, p3_ref, acc_ref) = refs
            wd_ref = None

        _, H, W, Cin = x_ref.shape
        HW = H * W
        C1 = w1_ref.shape[1]
        C2 = w2_ref.shape[1]
        C3 = w3_ref.shape[1]
        Cout = C1 + C2 + C3

        def inorm_relu(f, C):
            # InstanceNorm2d (per-channel over spatial dims) + ReLU.
            # One-pass stats: sum and sum-of-squares in a single reduction.
            s = jnp.sum(f, axis=0, keepdims=True)
            ss = jnp.sum(f * f, axis=0, keepdims=True)
            mean = s * (1.0 / HW)
            var = jnp.maximum(ss * (1.0 / HW) - mean * mean, 0.0)
            return jnp.maximum((f - mean) * jax.lax.rsqrt(var + _EPS), 0.0)

        def conv3x3_im2col(p_ref, f, w_ref, C):
            # f: (HW, C) f32 normalized activations.
            # p_ref: (H, W, 9*C) bf16 im2col scratch.
            # Builds the patch matrix then does a single large-K MXU matmul:
            #   (HW, 9C)bf16 @ (9C, Cl)bf16 -> (HW, Cl)f32.
            vb = f.reshape(H, W, C).astype(jnp.bfloat16)
            zrow = jnp.zeros((1, W, C), jnp.bfloat16)
            zcol = jnp.zeros((H, 1, C), jnp.bfloat16)
            for dy in range(3):
                for dx in range(3):
                    t = dy * 3 + dx
                    cs = slice(t * C, (t + 1) * C)
                    # Zero only the 1-pixel halo strips this tap never writes.
                    if dy == 0:
                        p_ref[0:1, :, cs] = zrow
                    if dy == 2:
                        p_ref[H - 1:H, :, cs] = zrow
                    if dx == 0:
                        p_ref[:, 0:1, cs] = zcol
                    if dx == 2:
                        p_ref[:, W - 1:W, cs] = zcol
                    # Output pixel (h, w) reads input (h+dy-1, w+dx-1).
                    h0, h1 = max(0, 1 - dy), min(H, H + 1 - dy)
                    w0, w1 = max(0, 1 - dx), min(W, W + 1 - dx)
                    p_ref[h0:h1, w0:w1, cs] = vb[h0 + dy - 1:h1 + dy - 1,
                                                 w0 + dx - 1:w1 + dx - 1, :]
            patches = p_ref[...].reshape(HW, 9 * C)
            return jnp.dot(patches, w_ref[...],
                           preferred_element_type=jnp.float32)      # (HW, Cl)

        xf = x_ref[0].astype(jnp.float32).reshape(HW, Cin)
        xn = inorm_relu(xf, Cin)                                     # bn1+relu

        o1 = conv3x3_im2col(p1_ref, xn, w1_ref, Cin)                 # (HW, C1)
        o2 = conv3x3_im2col(p2_ref, inorm_relu(o1, C1), w2_ref, C1)  # (HW, C2)
        o3 = conv3x3_im2col(p3_ref, inorm_relu(o2, C2), w3_ref, C2)  # (HW, C3)

        # Write conv outputs straight into channel slices (no concatenate).
        acc_ref[:, 0:C1] = o1
        acc_ref[:, C1:C1 + C2] = o2
        acc_ref[:, C1 + C2:Cout] = o3

        if has_downsample:
            # downsample = InstanceNorm -> ReLU -> 1x1 conv; same norm as bn1,
            # so xn is reused.
            res = jnp.dot(xn.astype(jnp.bfloat16), wd_ref[...],
                          preferred_element_type=jnp.float32)        # (HW, Cout)
        else:
            res = xf                                                  # Cin == Cout

        o_ref[0] = (acc_ref[...] + res).reshape(H, W, Cout).astype(o_ref.dtype)

    return kernel


def _oihw_to_im2col(w):
    # (O, I, 3, 3) -> (9*I, O), K ordered as (ky, kx, in_channel) to match the
    # patch layout built in the kernel.
    o, i = w.shape[0], w.shape[1]
    return jnp.transpose(w, (2, 3, 1, 0)).reshape(9 * i, o).astype(jnp.bfloat16)


@jax.jit
def conv_block(x_nchw, w1, w2, w3, wd=None):
    """ConvBlock forward. x_nchw: (N, Cin, H, W); conv weights in PyTorch OIHW."""
    N, Cin, H, W = x_nchw.shape
    C1, C2, C3 = w1.shape[0], w2.shape[0], w3.shape[0]
    Cout = C1 + C2 + C3
    has_ds = wd is not None
    if not has_ds and Cin != Cout:
        raise ValueError("no downsample weight requires in_planes == out_planes")

    x = jnp.transpose(x_nchw, (0, 2, 3, 1)).astype(jnp.float32)   # NHWC

    inputs = [x, _oihw_to_im2col(w1), _oihw_to_im2col(w2), _oihw_to_im2col(w3)]
    in_specs = [
        pl.BlockSpec((1, H, W, Cin), lambda n: (n, 0, 0, 0)),
        pl.BlockSpec((9 * Cin, C1), lambda n: (0, 0)),
        pl.BlockSpec((9 * C1, C2), lambda n: (0, 0)),
        pl.BlockSpec((9 * C2, C3), lambda n: (0, 0)),
    ]
    if has_ds:
        wdh = jnp.transpose(wd.reshape(Cout, Cin), (1, 0)).astype(jnp.bfloat16)
        inputs.append(wdh)
        in_specs.append(pl.BlockSpec((Cin, Cout), lambda n: (0, 0)))

    # Explicit VMEM budget: double-buffered I/O + weights + scratches,
    # with a 4x layout-padding fudge; clamped below v7x's 64 MiB physical VMEM.
    f32b, bf16b = 4, 2
    need = 2 * (H * W * Cin * f32b + H * W * Cout * f32b)
    need += 2 * (9 * Cin * C1 + 9 * C1 * C2 + 9 * C2 * C3 + Cin * Cout) * bf16b
    need += H * W * (9 * Cin + 9 * C1 + 9 * C2) * bf16b + H * W * Cout * f32b
    vmem_limit = int(min(max(4 * need + (4 << 20), 32 << 20), 56 << 20))

    out_nhwc = pl.pallas_call(
        _make_kernel(has_ds),
        out_shape=jax.ShapeDtypeStruct((N, H, W, Cout), jnp.float32),
        grid_spec=pltpu.PrefetchScalarGridSpec(
            num_scalar_prefetch=0,
            grid=(N,),
            in_specs=in_specs,
            out_specs=pl.BlockSpec((1, H, W, Cout), lambda n: (n, 0, 0, 0)),
            scratch_shapes=[
                pltpu.VMEM((H, W, 9 * Cin), jnp.bfloat16),   # im2col for conv1
                pltpu.VMEM((H, W, 9 * C1), jnp.bfloat16),    # im2col for conv2
                pltpu.VMEM((H, W, 9 * C2), jnp.bfloat16),    # im2col for conv3
                pltpu.VMEM((H * W, Cout), jnp.float32),      # channel-slice accumulator
            ],
        ),
        compiler_params=pltpu.CompilerParams(
            dimension_semantics=("parallel",),
            vmem_limit_bytes=vmem_limit),
    )(*inputs)

    return jnp.transpose(out_nhwc, (0, 3, 1, 2))   # back to NCHW


# ------------------------- pure-JAX reference ------------------------------
def _inorm_relu_ref(x):
    mean = jnp.mean(x, axis=(2, 3), keepdims=True)
    var = jnp.mean((x - mean) ** 2, axis=(2, 3), keepdims=True)
    return jax.nn.relu((x - mean) / jnp.sqrt(var + _EPS))


def _conv_ref(x, w, pad):
    return jax.lax.conv_general_dilated(
        x, w, window_strides=(1, 1), padding=[(pad, pad), (pad, pad)],
        dimension_numbers=("NCHW", "OIHW", "NCHW"),
        precision=jax.lax.Precision.HIGHEST)


def conv_block_reference(x, w1, w2, w3, wd=None):
    o1 = _conv_ref(_inorm_relu_ref(x), w1, 1)
    o2 = _conv_ref(_inorm_relu_ref(o1), w2, 1)
    o3 = _conv_ref(_inorm_relu_ref(o2), w3, 1)
    out = jnp.concatenate([o1, o2, o3], axis=1)
    res = _conv_ref(_inorm_relu_ref(x), wd, 0) if wd is not None else x
    return out + res


# --------------------------------- demo ------------------------------------
if __name__ == "__main__":
    N, Cin, H, W = 2, 4, 16, 16
    out_planes = 8                              # in_planes != out_planes -> downsample
    C1, C2, C3 = out_planes // 2, out_planes // 4, out_planes // 4

    key = jax.random.PRNGKey(0)
    kx, k1, k2, k3, k4 = jax.random.split(key, 5)
    x = jax.random.normal(kx, (N, Cin, H, W), jnp.float32)
    w1 = jax.random.normal(k1, (C1, Cin, 3, 3), jnp.float32) * 0.1   # conv1 (OIHW)
    w2 = jax.random.normal(k2, (C2, C1, 3, 3), jnp.float32) * 0.1    # conv2
    w3 = jax.random.normal(k3, (C3, C2, 3, 3), jnp.float32) * 0.1    # conv3
    wd = jax.random.normal(k4, (out_planes, Cin, 1, 1), jnp.float32) * 0.1  # 1x1 downsample

    y = jax.block_until_ready(conv_block(x, w1, w2, w3, wd))
    assert y.shape == (N, out_planes, H, W)

    y_ref = jax.block_until_ready(conv_block_reference(x, w1, w2, w3, wd))
    # Kernel uses bf16 matmul operands (f32 accumulate), so compare by
    # relative L2 error against the f32 HIGHEST-precision reference.
    rel = jnp.sqrt(jnp.sum((y - y_ref) ** 2) / jnp.sum(y_ref ** 2))
    assert float(rel) < 5e-2, f"relative L2 error too large: {float(rel)}"
    print("KERNEL_OK")
</pallas_src>

<mosaic_0001>
module attributes {stable_mosaic.version = 11 : i64} {
  func.func @kernel(%arg0: i32, %arg1: memref<1x16x16x4xf32, #tpu.memory_space<vmem>>, %arg2: memref<36x4xbf16, #tpu.memory_space<vmem>>, %arg3: memref<36x2xbf16, #tpu.memory_space<vmem>>, %arg4: memref<18x2xbf16, #tpu.memory_space<vmem>>, %arg5: memref<4x8xbf16, #tpu.memory_space<vmem>>, %arg6: memref<1x16x16x8xf32, #tpu.memory_space<vmem>>, %arg7: memref<16x16x36xbf16, #tpu.memory_space<vmem>>, %arg8: memref<16x16x36xbf16, #tpu.memory_space<vmem>>, %arg9: memref<16x16x18xbf16, #tpu.memory_space<vmem>>, %arg10: memref<256x8xf32, #tpu.memory_space<vmem>>) attributes {dimension_semantics = [#tpu.dimension_semantics<parallel>], iteration_bounds = array<i64: 2>, scalar_prefetch = 0 : i64, scratch_operands = 4 : i64, tpu.core_type = #tpu.core_type<tc>, window_params = [{transform_indices = @transform_0, window_bounds = array<i64: 1, 16, 16, 4>}, {pipeline_mode = #tpu.pipeline_mode<synchronous>, transform_indices = @transform_1, window_bounds = array<i64: 36, 4>}, {pipeline_mode = #tpu.pipeline_mode<synchronous>, transform_indices = @transform_2, window_bounds = array<i64: 36, 2>}, {pipeline_mode = #tpu.pipeline_mode<synchronous>, transform_indices = @transform_3, window_bounds = array<i64: 18, 2>}, {pipeline_mode = #tpu.pipeline_mode<synchronous>, transform_indices = @transform_4, window_bounds = array<i64: 4, 8>}, {transform_indices = @transform_5, window_bounds = array<i64: 1, 16, 16, 8>}]} {
    %c0 = arith.constant 0 : index
    %c0_0 = arith.constant 0 : index
    %c0_1 = arith.constant 0 : index
    %c0_2 = arith.constant 0 : index
    %0 = vector.load %arg1[%c0, %c0_0, %c0_1, %c0_2] : memref<1x16x16x4xf32, #tpu.memory_space<vmem>>, vector<1x16x16x4xf32>
    %1 = vector.shape_cast %0 : vector<1x16x16x4xf32> to vector<16x16x4xf32>
    %2 = vector.shape_cast %1 : vector<16x16x4xf32> to vector<256x4xf32>
    %cst = arith.constant dense<0.000000e+00> : vector<4xf32>
    %3 = vector.multi_reduction <add>, %2, %cst [0] : vector<256x4xf32> to vector<4xf32>
    %4 = vector.shape_cast %3 : vector<4xf32> to vector<1x4xf32>
    %5 = arith.mulf %2, %2 : vector<256x4xf32>
    %cst_3 = arith.constant dense<0.000000e+00> : vector<4xf32>
    %6 = vector.multi_reduction <add>, %5, %cst_3 [0] : vector<256x4xf32> to vector<4xf32>
    %7 = vector.shape_cast %6 : vector<4xf32> to vector<1x4xf32>
    %cst_4 = arith.constant 3.906250e-03 : f32
    %8 = vector.broadcast %cst_4 : f32 to vector<1x4xf32>
    %9 = arith.mulf %4, %8 : vector<1x4xf32>
    %cst_5 = arith.constant 3.906250e-03 : f32
    %10 = vector.broadcast %cst_5 : f32 to vector<1x4xf32>
    %11 = arith.mulf %7, %10 : vector<1x4xf32>
    %12 = arith.mulf %9, %9 : vector<1x4xf32>
    %13 = arith.subf %11, %12 : vector<1x4xf32>
    %cst_6 = arith.constant 0.000000e+00 : f32
    %14 = vector.broadcast %cst_6 : f32 to vector<1x4xf32>
    %15 = arith.maximumf %13, %14 : vector<1x4xf32>
    %16 = vector.broadcast %9 : vector<1x4xf32> to vector<256x4xf32>
    %17 = arith.subf %2, %16 : vector<256x4xf32>
    %cst_7 = arith.constant 9.99999974E-6 : f32
    %18 = vector.broadcast %cst_7 : f32 to vector<1x4xf32>
    %19 = arith.addf %15, %18 : vector<1x4xf32>
    %20 = math.rsqrt %19 : vector<1x4xf32>
    %21 = vector.broadcast %20 : vector<1x4xf32> to vector<256x4xf32>
    %22 = arith.mulf %17, %21 : vector<256x4xf32>
    %cst_8 = arith.constant 0.000000e+00 : f32
    %23 = vector.broadcast %cst_8 : f32 to vector<256x4xf32>
    %24 = arith.maximumf %22, %23 : vector<256x4xf32>
    %25 = vector.shape_cast %24 : vector<256x4xf32> to vector<16x16x4xf32>
    %26 = arith.truncf %25 : vector<16x16x4xf32> to vector<16x16x4xbf16>
    %cst_9 = arith.constant 0.000000e+00 : bf16
    %27 = vector.broadcast %cst_9 : bf16 to vector<1x16x4xbf16>
    %cst_10 = arith.constant 0.000000e+00 : bf16
    %28 = vector.broadcast %cst_10 : bf16 to vector<16x1x4xbf16>
    %c0_11 = arith.constant 0 : index
    %c0_12 = arith.constant 0 : index
    %c0_13 = arith.constant 0 : index
    %29 = vector.load %arg7[%c0_11, %c0_12, %c0_13] : memref<16x16x36xbf16, #tpu.memory_space<vmem>>, vector<1x16x4xbf16>
    tpu.vector_store %arg7[%c0_11, %c0_12, %c0_13], %27 {strides = array<i32>} : memref<16x16x36xbf16, #tpu.memory_space<vmem>>, vector<1x16x4xbf16>,
    %c0_14 = arith.constant 0 : index
    %c0_15 = arith.constant 0 : index
    %c0_16 = arith.constant 0 : index
    %30 = vector.load %arg7[%c0_14, %c0_15, %c0_16] : memref<16x16x36xbf16, #tpu.memory_space<vmem>>, vector<16x1x4xbf16>
    tpu.vector_store %arg7[%c0_14, %c0_15, %c0_16], %28 {strides = array<i32>} : memref<16x16x36xbf16, #tpu.memory_space<vmem>>, vector<16x1x4xbf16>,
    %31 = vector.extract_strided_slice %26 {offsets = [0, 0, 0], sizes = [15, 15, 4], strides = [1, 1, 1]} : vector<16x16x4xbf16> to vector<15x15x4xbf16>
    %c1 = arith.constant 1 : index
    %c1_17 = arith.constant 1 : index
    %c0_18 = arith.constant 0 : index
    %32 = vector.load %arg7[%c1, %c1_17, %c0_18] : memref<16x16x36xbf16, #tpu.memory_space<vmem>>, vector<15x15x4xbf16>
    tpu.vector_store %arg7[%c1, %c1_17, %c0_18], %31 {strides = array<i32>} : memref<16x16x36xbf16, #tpu.memory_space<vmem>>, vector<15x15x4xbf16>,
    %c0_19 = arith.constant 0 : index
    %c0_20 = arith.constant 0 : index
    %c4 = arith.constant 4 : index
    %33 = vector.load %arg7[%c0_19, %c0_20, %c4] : memref<16x16x36xbf16, #tpu.memory_space<vmem>>, vector<1x16x4xbf16>
    tpu.vector_store %arg7[%c0_19, %c0_20, %c4], %27 {strides = array<i32>} : memref<16x16x36xbf16, #tpu.memory_space<vmem>>, vector<1x16x4xbf16>,
    %34 = vector.extract_strided_slice %26 {offsets = [0, 0, 0], sizes = [15, 16, 4], strides = [1, 1, 1]} : vector<16x16x4xbf16> to vector<15x16x4xbf16>
    %c1_21 = arith.constant 1 : index
    %c0_22 = arith.constant 0 : index
    %c4_23 = arith.constant 4 : index
    %35 = vector.load %arg7[%c1_21, %c0_22, %c4_23] : memref<16x16x36xbf16, #tpu.memory_space<vmem>>, vector<15x16x4xbf16>
    tpu.vector_store %arg7[%c1_21, %c0_22, %c4_23], %34 {strides = array<i32>} : memref<16x16x36xbf16, #tpu.memory_space<vmem>>, vector<15x16x4xbf16>,
    %c0_24 = arith.constant 0 : index
    %c0_25 = arith.constant 0 : index
    %c8 = arith.constant 8 : index
    %36 = vector.load %arg7[%c0_24, %c0_25, %c8] : memref<16x16x36xbf16, #tpu.memory_space<vmem>>, vector<1x16x4xbf16>
    tpu.vector_store %arg7[%c0_24, %c0_25, %c8], %27 {strides = array<i32>} : memref<16x16x36xbf16, #tpu.memory_space<vmem>>, vector<1x16x4xbf16>,
    %c0_26 = arith.constant 0 : index
    %c15 = arith.constant 15 : index
    %c8_27 = arith.constant 8 : index
    %37 = vector.load %arg7[%c0_26, %c15, %c8_27] : memref<16x16x36xbf16, #tpu.memory_space<vmem>>, vector<16x1x4xbf16>
    tpu.vector_store %arg7[%c0_26, %c15, %c8_27], %28 {strides = array<i32>} : memref<16x16x36xbf16, #tpu.memory_space<vmem>>, vector<16x1x4xbf16>,
    %38 = vector.extract_strided_slice %26 {offsets = [0, 1, 0], sizes = [15, 15, 4], strides = [1, 1, 1]} : vector<16x16x4xbf16> to vector<15x15x4xbf16>
    %c1_28 = arith.constant 1 : index
    %c0_29 = arith.constant 0 : index
    %c8_30 = arith.constant 8 : index
    %39 = vector.load %arg7[%c1_28, %c0_29, %c8_30] : memref<16x16x36xbf16, #tpu.memory_space<vmem>>, vector<15x15x4xbf16>
    tpu.vector_store %arg7[%c1_28, %c0_29, %c8_30], %38 {strides = array<i32>} : memref<16x16x36xbf16, #tpu.memory_space<vmem>>, vector<15x15x4xbf16>,
    %c0_31 = arith.constant 0 : index
    %c0_32 = arith.constant 0 : index
    %c12 = arith.constant 12 : index
    %40 = vector.load %arg7[%c0_31, %c0_32, %c12] : memref<16x16x36xbf16, #tpu.memory_space<vmem>>, vector<16x1x4xbf16>
    tpu.vector_store %arg7[%c0_31, %c0_32, %c12], %28 {strides = array<i32>} : memref<16x16x36xbf16, #tpu.memory_space<vmem>>, vector<16x1x4xbf16>,
    %41 = vector.extract_strided_slice %26 {offsets = [0, 0, 0], sizes = [16, 15, 4], strides = [1, 1, 1]} : vector<16x16x4xbf16> to vector<16x15x4xbf16>
    %c0_33 = arith.constant 0 : index
    %c1_34 = arith.constant 1 : index
    %c12_35 = arith.constant 12 : index
    %42 = vector.load %arg7[%c0_33, %c1_34, %c12_35] : memref<16x16x36xbf16, #tpu.memory_space<vmem>>, vector<16x15x4xbf16>
    tpu.vector_store %arg7[%c0_33, %c1_34, %c12_35], %41 {strides = array<i32>} : memref<16x16x36xbf16, #tpu.memory_space<vmem>>, vector<16x15x4xbf16>,
    %c0_36 = arith.constant 0 : index
    %c0_37 = arith.constant 0 : index
    %c16 = arith.constant 16 : index
    %43 = vector.load %arg7[%c0_36, %c0_37, %c16] : memref<16x16x36xbf16, #tpu.memory_space<vmem>>, vector<16x16x4xbf16>
    tpu.vector_store %arg7[%c0_36, %c0_37, %c16], %26 {strides = array<i32>} : memref<16x16x36xbf16, #tpu.memory_space<vmem>>, vector<16x16x4xbf16>,
    %c0_38 = arith.constant 0 : index
    %c15_39 = arith.constant 15 : index
    %c20 = arith.constant 20 : index
    %44 = vector.load %arg7[%c0_38, %c15_39, %c20] : memref<16x16x36xbf16, #tpu.memory_space<vmem>>, vector<16x1x4xbf16>
    tpu.vector_store %arg7[%c0_38, %c15_39, %c20], %28 {strides = array<i32>} : memref<16x16x36xbf16, #tpu.memory_space<vmem>>, vector<16x1x4xbf16>,
    %45 = vector.extract_strided_slice %26 {offsets = [0, 1, 0], sizes = [16, 15, 4], strides = [1, 1, 1]} : vector<16x16x4xbf16> to vector<16x15x4xbf16>
    %c0_40 = arith.constant 0 : index
    %c0_41 = arith.constant 0 : index
    %c20_42 = arith.constant 20 : index
    %46 = vector.load %arg7[%c0_40, %c0_41, %c20_42] : memref<16x16x36xbf16, #tpu.memory_space<vmem>>, vector<16x15x4xbf16>
    tpu.vector_store %arg7[%c0_40, %c0_41, %c20_42], %45 {strides = array<i32>} : memref<16x16x36xbf16, #tpu.memory_space<vmem>>, vector<16x15x4xbf16>,
    %c15_43 = arith.constant 15 : index
    %c0_44 = arith.constant 0 : index
    %c24 = arith.constant 24 : index
    %47 = vector.load %arg7[%c15_43, %c0_44, %c24] : memref<16x16x36xbf16, #tpu.memory_space<vmem>>, vector<1x16x4xbf16>
    tpu.vector_store %arg7[%c15_43, %c0_44, %c24], %27 {strides = array<i32>} : memref<16x16x36xbf16, #tpu.memory_space<vmem>>, vector<1x16x4xbf16>,
    %c0_45 = arith.constant 0 : index
    %c0_46 = arith.constant 0 : index
    %c24_47 = arith.constant 24 : index
    %48 = vector.load %arg7[%c0_45, %c0_46, %c24_47] : memref<16x16x36xbf16, #tpu.memory_space<vmem>>, vector<16x1x4xbf16>
    tpu.vector_store %arg7[%c0_45, %c0_46, %c24_47], %28 {strides = array<i32>} : memref<16x16x36xbf16, #tpu.memory_space<vmem>>, vector<16x1x4xbf16>,
    %49 = vector.extract_strided_slice %26 {offsets = [1, 0, 0], sizes = [15, 15, 4], strides = [1, 1, 1]} : vector<16x16x4xbf16> to vector<15x15x4xbf16>
    %c0_48 = arith.constant 0 : index
    %c1_49 = arith.constant 1 : index
    %c24_50 = arith.constant 24 : index
    %50 = vector.load %arg7[%c0_48, %c1_49, %c24_50] : memref<16x16x36xbf16, #tpu.memory_space<vmem>>, vector<15x15x4xbf16>
    tpu.vector_store %arg7[%c0_48, %c1_49, %c24_50], %49 {strides = array<i32>} : memref<16x16x36xbf16, #tpu.memory_space<vmem>>, vector<15x15x4xbf16>,
    %c15_51 = arith.constant 15 : index
    %c0_52 = arith.constant 0 : index
    %c28 = arith.constant 28 : index
    %51 = vector.load %arg7[%c15_51, %c0_52, %c28] : memref<16x16x36xbf16, #tpu.memory_space<vmem>>, vector<1x16x4xbf16>
    tpu.vector_store %arg7[%c15_51, %c0_52, %c28], %27 {strides = array<i32>} : memref<16x16x36xbf16, #tpu.memory_space<vmem>>, vector<1x16x4xbf16>,
    %52 = vector.extract_strided_slice %26 {offsets = [1, 0, 0], sizes = [15, 16, 4], strides = [1, 1, 1]} : vector<16x16x4xbf16> to vector<15x16x4xbf16>
    %c0_53 = arith.constant 0 : index
    %c0_54 = arith.constant 0 : index
    %c28_55 = arith.constant 28 : index
    %53 = vector.load %arg7[%c0_53, %c0_54, %c28_55] : memref<16x16x36xbf16, #tpu.memory_space<vmem>>, vector<15x16x4xbf16>
    tpu.vector_store %arg7[%c0_53, %c0_54, %c28_55], %52 {strides = array<i32>} : memref<16x16x36xbf16, #tpu.memory_space<vmem>>, vector<15x16x4xbf16>,
    %c15_56 = arith.constant 15 : index
    %c0_57 = arith.constant 0 : index
    %c32 = arith.constant 32 : index
    %54 = vector.load %arg7[%c15_56, %c0_57, %c32] : memref<16x16x36xbf16, #tpu.memory_space<vmem>>, vector<1x16x4xbf16>
    tpu.vector_store %arg7[%c15_56, %c0_57, %c32], %27 {strides = array<i32>} : memref<16x16x36xbf16, #tpu.memory_space<vmem>>, vector<1x16x4xbf16>,
    %c0_58 = arith.constant 0 : index
    %c15_59 = arith.constant 15 : index
    %c32_60 = arith.constant 32 : index
    %55 = vector.load %arg7[%c0_58, %c15_59, %c32_60] : memref<16x16x36xbf16, #tpu.memory_space<vmem>>, vector<16x1x4xbf16>
    tpu.vector_store %arg7[%c0_58, %c15_59, %c32_60], %28 {strides = array<i32>} : memref<16x16x36xbf16, #tpu.memory_space<vmem>>, vector<16x1x4xbf16>,
    %56 = vector.extract_strided_slice %26 {offsets = [1, 1, 0], sizes = [15, 15, 4], strides = [1, 1, 1]} : vector<16x16x4xbf16> to vector<15x15x4xbf16>
    %c0_61 = arith.constant 0 : index
    %c0_62 = arith.constant 0 : index
    %c32_63 = arith.constant 32 : index
    %57 = vector.load %arg7[%c0_61, %c0_62, %c32_63] : memref<16x16x36xbf16, #tpu.memory_space<vmem>>, vector<15x15x4xbf16>
    tpu.vector_store %arg7[%c0_61, %c0_62, %c32_63], %56 {strides = array<i32>} : memref<16x16x36xbf16, #tpu.memory_space<vmem>>, vector<15x15x4xbf16>,
    %c0_64 = arith.constant 0 : index
    %c0_65 = arith.constant 0 : index
    %c0_66 = arith.constant 0 : index
    %58 = vector.load %arg7[%c0_64, %c0_65, %c0_66] : memref<16x16x36xbf16, #tpu.memory_space<vmem>>, vector<16x16x36xbf16>
    %59 = vector.shape_cast %58 : vector<16x16x36xbf16> to vector<256x36xbf16>
    %c0_67 = arith.constant 0 : index
    %c0_68 = arith.constant 0 : index
    %60 = vector.load %arg2[%c0_67, %c0_68] : memref<36x4xbf16, #tpu.memory_space<vmem>>, vector<36x4xbf16>
    %cst_69 = arith.constant dense<0.000000e+00> : vector<256x4xf32>
    %61 = tpu.matmul %59, %60, %cst_69 {dimension_numbers = #tpu.dot_dimension_numbers<[1], [0], [0], [1], [0, 0, 1, 1], [], []>} : vector<256x36xbf16>, vector<36x4xbf16>, vector<256x4xf32> -> vector<256x4xf32>
    %cst_70 = arith.constant dense<0.000000e+00> : vector<4xf32>
    %62 = vector.multi_reduction <add>, %61, %cst_70 [0] : vector<256x4xf32> to vector<4xf32>
    %63 = vector.shape_cast %62 : vector<4xf32> to vector<1x4xf32>
    %64 = arith.mulf %61, %61 : vector<256x4xf32>
    %cst_71 = arith.constant dense<0.000000e+00> : vector<4xf32>
    %65 = vector.multi_reduction <add>, %64, %cst_71 [0] : vector<256x4xf32> to vector<4xf32>
    %66 = vector.shape_cast %65 : vector<4xf32> to vector<1x4xf32>
    %cst_72 = arith.constant 3.906250e-03 : f32
    %67 = vector.broadcast %cst_72 : f32 to vector<1x4xf32>
    %68 = arith.mulf %63, %67 : vector<1x4xf32>
    %cst_73 = arith.constant 3.906250e-03 : f32
    %69 = vector.broadcast %cst_73 : f32 to vector<1x4xf32>
    %70 = arith.mulf %66, %69 : vector<1x4xf32>
    %71 = arith.mulf %68, %68 : vector<1x4xf32>
    %72 = arith.subf %70, %71 : vector<1x4xf32>
    %cst_74 = arith.constant 0.000000e+00 : f32
    %73 = vector.broadcast %cst_74 : f32 to vector<1x4xf32>
    %74 = arith.maximumf %72, %73 : vector<1x4xf32>
    %75 = vector.broadcast %68 : vector<1x4xf32> to vector<256x4xf32>
    %76 = arith.subf %61, %75 : vector<256x4xf32>
    %cst_75 = arith.constant 9.99999974E-6 : f32
    %77 = vector.broadcast %cst_75 : f32 to vector<1x4xf32>
    %78 = arith.addf %74, %77 : vector<1x4xf32>
    %79 = math.rsqrt %78 : vector<1x4xf32>
    %80 = vector.broadcast %79 : vector<1x4xf32> to vector<256x4xf32>
    %81 = arith.mulf %76, %80 : vector<256x4xf32>
    %cst_76 = arith.constant 0.000000e+00 : f32
    %82 = vector.broadcast %cst_76 : f32 to vector<256x4xf32>
    %83 = arith.maximumf %81, %82 : vector<256x4xf32>
    %84 = vector.shape_cast %83 : vector<256x4xf32> to vector<16x16x4xf32>
    %85 = arith.truncf %84 : vector<16x16x4xf32> to vector<16x16x4xbf16>
    %cst_77 = arith.constant 0.000000e+00 : bf16
    %86 = vector.broadcast %cst_77 : bf16 to vector<1x16x4xbf16>
    %cst_78 = arith.constant 0.000000e+00 : bf16
    %87 = vector.broadcast %cst_78 : bf16 to vector<16x1x4xbf16>
    %c0_79 = arith.constant 0 : index
    %c0_80 = arith.constant 0 : index
    %c0_81 = arith.constant 0 : index
    %88 = vector.load %arg8[%c0_79, %c0_80, %c0_81] : memref<16x16x36xbf16, #tpu.memory_space<vmem>>, vector<1x16x4xbf16>
    tpu.vector_store %arg8[%c0_79, %c0_80, %c0_81], %86 {strides = array<i32>} : memref<16x16x36xbf16, #tpu.memory_space<vmem>>, vector<1x16x4xbf16>,
    %c0_82 = arith.constant 0 : index
    %c0_83 = arith.constant 0 : index
    %c0_84 = arith.constant 0 : index
    %89 = vector.load %arg8[%c0_82, %c0_83, %c0_84] : memref<16x16x36xbf16, #tpu.memory_space<vmem>>, vector<16x1x4xbf16>
    tpu.vector_store %arg8[%c0_82, %c0_83, %c0_84], %87 {strides = array<i32>} : memref<16x16x36xbf16, #tpu.memory_space<vmem>>, vector<16x1x4xbf16>,
    %90 = vector.extract_strided_slice %85 {offsets = [0, 0, 0], sizes = [15, 15, 4], strides = [1, 1, 1]} : vector<16x16x4xbf16> to vector<15x15x4xbf16>
    %c1_85 = arith.constant 1 : index
    %c1_86 = arith.constant 1 : index
    %c0_87 = arith.constant 0 : index
    %91 = vector.load %arg8[%c1_85, %c1_86, %c0_87] : memref<16x16x36xbf16, #tpu.memory_space<vmem>>, vector<15x15x4xbf16>
    tpu.vector_store %arg8[%c1_85, %c1_86, %c0_87], %90 {strides = array<i32>} : memref<16x16x36xbf16, #tpu.memory_space<vmem>>, vector<15x15x4xbf16>,
    %c0_88 = arith.constant 0 : index
    %c0_89 = arith.constant 0 : index
    %c4_90 = arith.constant 4 : index
    %92 = vector.load %arg8[%c0_88, %c0_89, %c4_90] : memref<16x16x36xbf16, #tpu.memory_space<vmem>>, vector<1x16x4xbf16>
    tpu.vector_store %arg8[%c0_88, %c0_89, %c4_90], %86 {strides = array<i32>} : memref<16x16x36xbf16, #tpu.memory_space<vmem>>, vector<1x16x4xbf16>,
    %93 = vector.extract_strided_slice %85 {offsets = [0, 0, 0], sizes = [15, 16, 4], strides = [1, 1, 1]} : vector<16x16x4xbf16> to vector<15x16x4xbf16>
    %c1_91 = arith.constant 1 : index
    %c0_92 = arith.constant 0 : index
    %c4_93 = arith.constant 4 : index
    %94 = vector.load %arg8[%c1_91, %c0_92, %c4_93] : memref<16x16x36xbf16, #tpu.memory_space<vmem>>, vector<15x16x4xbf16>
    tpu.vector_store %arg8[%c1_91, %c0_92, %c4_93], %93 {strides = array<i32>} : memref<16x16x36xbf16, #tpu.memory_space<vmem>>, vector<15x16x4xbf16>,
    %c0_94 = arith.constant 0 : index
    %c0_95 = arith.constant 0 : index
    %c8_96 = arith.constant 8 : index
    %95 = vector.load %arg8[%c0_94, %c0_95, %c8_96] : memref<16x16x36xbf16, #tpu.memory_space<vmem>>, vector<1x16x4xbf16>
    tpu.vector_store %arg8[%c0_94, %c0_95, %c8_96], %86 {strides = array<i32>} : memref<16x16x36xbf16, #tpu.memory_space<vmem>>, vector<1x16x4xbf16>,
    %c0_97 = arith.constant 0 : index
    %c15_98 = arith.constant 15 : index
    %c8_99 = arith.constant 8 : index
    %96 = vector.load %arg8[%c0_97, %c15_98, %c8_99] : memref<16x16x36xbf16, #tpu.memory_space<vmem>>, vector<16x1x4xbf16>
    tpu.vector_store %arg8[%c0_97, %c15_98, %c8_99], %87 {strides = array<i32>} : memref<16x16x36xbf16, #tpu.memory_space<vmem>>, vector<16x1x4xbf16>,
    %97 = vector.extract_strided_slice %85 {offsets = [0, 1, 0], sizes = [15, 15, 4], strides = [1, 1, 1]} : vector<16x16x4xbf16> to vector<15x15x4xbf16>
    %c1_100 = arith.constant 1 : index
    %c0_101 = arith.constant 0 : index
    %c8_102 = arith.constant 8 : index
    %98 = vector.load %arg8[%c1_100, %c0_101, %c8_102] : memref<16x16x36xbf16, #tpu.memory_space<vmem>>, vector<15x15x4xbf16>
    tpu.vector_store %arg8[%c1_100, %c0_101, %c8_102], %97 {strides = array<i32>} : memref<16x16x36xbf16, #tpu.memory_space<vmem>>, vector<15x15x4xbf16>,
    %c0_103 = arith.constant 0 : index
    %c0_104 = arith.constant 0 : index
    %c12_105 = arith.constant 12 : index
    %99 = vector.load %arg8[%c0_103, %c0_104, %c12_105] : memref<16x16x36xbf16, #tpu.memory_space<vmem>>, vector<16x1x4xbf16>
    tpu.vector_store %arg8[%c0_103, %c0_104, %c12_105], %87 {strides = array<i32>} : memref<16x16x36xbf16, #tpu.memory_space<vmem>>, vector<16x1x4xbf16>,
    %100 = vector.extract_strided_slice %85 {offsets = [0, 0, 0], sizes = [16, 15, 4], strides = [1, 1, 1]} : vector<16x16x4xbf16> to vector<16x15x4xbf16>
    %c0_106 = arith.constant 0 : index
    %c1_107 = arith.constant 1 : index
    %c12_108 = arith.constant 12 : index
    %101 = vector.load %arg8[%c0_106, %c1_107, %c12_108] : memref<16x16x36xbf16, #tpu.memory_space<vmem>>, vector<16x15x4xbf16>
    tpu.vector_store %arg8[%c0_106, %c1_107, %c12_108], %100 {strides = array<i32>} : memref<16x16x36xbf16, #tpu.memory_space<vmem>>, vector<16x15x4xbf16>,
    %c0_109 = arith.constant 0 : index
    %c0_110 = arith.constant 0 : index
    %c16_111 = arith.constant 16 : index
    %102 = vector.load %arg8[%c0_109, %c0_110, %c16_111] : memref<16x16x36xbf16, #tpu.memory_space<vmem>>, vector<16x16x4xbf16>
    tpu.vector_store %arg8[%c0_109, %c0_110, %c16_111], %85 {strides = array<i32>} : memref<16x16x36xbf16, #tpu.memory_space<vmem>>, vector<16x16x4xbf16>,
    %c0_112 = arith.constant 0 : index
    %c15_113 = arith.constant 15 : index
    %c20_114 = arith.constant 20 : index
    %103 = vector.load %arg8[%c0_112, %c15_113, %c20_114] : memref<16x16x36xbf16, #tpu.memory_space<vmem>>, vector<16x1x4xbf16>
    tpu.vector_store %arg8[%c0_112, %c15_113, %c20_114], %87 {strides = array<i32>} : memref<16x16x36xbf16, #tpu.memory_space<vmem>>, vector<16x1x4xbf16>,
    %104 = vector.extract_strided_slice %85 {offsets = [0, 1, 0], sizes = [16, 15, 4], strides = [1, 1, 1]} : vector<16x16x4xbf16> to vector<16x15x4xbf16>
    %c0_115 = arith.constant 0 : index
    %c0_116 = arith.constant 0 : index
    %c20_117 = arith.constant 20 : index
    %105 = vector.load %arg8[%c0_115, %c0_116, %c20_117] : memref<16x16x36xbf16, #tpu.memory_space<vmem>>, vector<16x15x4xbf16>
    tpu.vector_store %arg8[%c0_115, %c0_116, %c20_117], %104 {strides = array<i32>} : memref<16x16x36xbf16, #tpu.memory_space<vmem>>, vector<16x15x4xbf16>,
    %c15_118 = arith.constant 15 : index
    %c0_119 = arith.constant 0 : index
    %c24_120 = arith.constant 24 : index
    %106 = vector.load %arg8[%c15_118, %c0_119, %c24_120] : memref<16x16x36xbf16, #tpu.memory_space<vmem>>, vector<1x16x4xbf16>
    tpu.vector_store %arg8[%c15_118, %c0_119, %c24_120], %86 {strides = array<i32>} : memref<16x16x36xbf16, #tpu.memory_space<vmem>>, vector<1x16x4xbf16>,
    %c0_121 = arith.constant 0 : index
    %c0_122 = arith.constant 0 : index
    %c24_123 = arith.constant 24 : index
    %107 = vector.load %arg8[%c0_121, %c0_122, %c24_123] : memref<16x16x36xbf16, #tpu.memory_space<vmem>>, vector<16x1x4xbf16>
    tpu.vector_store %arg8[%c0_121, %c0_122, %c24_123], %87 {strides = array<i32>} : memref<16x16x36xbf16, #tpu.memory_space<vmem>>, vector<16x1x4xbf16>,
    %108 = vector.extract_strided_slice %85 {offsets = [1, 0, 0], sizes = [15, 15, 4], strides = [1, 1, 1]} : vector<16x16x4xbf16> to vector<15x15x4xbf16>
    %c0_124 = arith.constant 0 : index
    %c1_125 = arith.constant 1 : index
    %c24_126 = arith.constant 24 : index
    %109 = vector.load %arg8[%c0_124, %c1_125, %c24_126] : memref<16x16x36xbf16, #tpu.memory_space<vmem>>, vector<15x15x4xbf16>
    tpu.vector_store %arg8[%c0_124, %c1_125, %c24_126], %108 {strides = array<i32>} : memref<16x16x36xbf16, #tpu.memory_space<vmem>>, vector<15x15x4xbf16>,
    %c15_127 = arith.constant 15 : index
    %c0_128 = arith.constant 0 : index
    %c28_129 = arith.constant 28 : index
    %110 = vector.load %arg8[%c15_127, %c0_128, %c28_129] : memref<16x16x36xbf16, #tpu.memory_space<vmem>>, vector<1x16x4xbf16>
    tpu.vector_store %arg8[%c15_127, %c0_128, %c28_129], %86 {strides = array<i32>} : memref<16x16x36xbf16, #tpu.memory_space<vmem>>, vector<1x16x4xbf16>,
    %111 = vector.extract_strided_slice %85 {offsets = [1, 0, 0], sizes = [15, 16, 4], strides = [1, 1, 1]} : vector<16x16x4xbf16> to vector<15x16x4xbf16>
    %c0_130 = arith.constant 0 : index
    %c0_131 = arith.constant 0 : index
    %c28_132 = arith.constant 28 : index
    %112 = vector.load %arg8[%c0_130, %c0_131, %c28_132] : memref<16x16x36xbf16, #tpu.memory_space<vmem>>, vector<15x16x4xbf16>
    tpu.vector_store %arg8[%c0_130, %c0_131, %c28_132], %111 {strides = array<i32>} : memref<16x16x36xbf16, #tpu.memory_space<vmem>>, vector<15x16x4xbf16>,
    %c15_133 = arith.constant 15 : index
    %c0_134 = arith.constant 0 : index
    %c32_135 = arith.constant 32 : index
    %113 = vector.load %arg8[%c15_133, %c0_134, %c32_135] : memref<16x16x36xbf16, #tpu.memory_space<vmem>>, vector<1x16x4xbf16>
    tpu.vector_store %arg8[%c15_133, %c0_134, %c32_135], %86 {strides = array<i32>} : memref<16x16x36xbf16, #tpu.memory_space<vmem>>, vector<1x16x4xbf16>,
    %c0_136 = arith.constant 0 : index
    %c15_137 = arith.constant 15 : index
    %c32_138 = arith.constant 32 : index
    %114 = vector.load %arg8[%c0_136, %c15_137, %c32_138] : memref<16x16x36xbf16, #tpu.memory_space<vmem>>, vector<16x1x4xbf16>
    tpu.vector_store %arg8[%c0_136, %c15_137, %c32_138], %87 {strides = array<i32>} : memref<16x16x36xbf16, #tpu.memory_space<vmem>>, vector<16x1x4xbf16>,
    %115 = vector.extract_strided_slice %85 {offsets = [1, 1, 0], sizes = [15, 15, 4], strides = [1, 1, 1]} : vector<16x16x4xbf16> to vector<15x15x4xbf16>
    %c0_139 = arith.constant 0 : index
    %c0_140 = arith.constant 0 : index
    %c32_141 = arith.constant 32 : index
    %116 = vector.load %arg8[%c0_139, %c0_140, %c32_141] : memref<16x16x36xbf16, #tpu.memory_space<vmem>>, vector<15x15x4xbf16>
    tpu.vector_store %arg8[%c0_139, %c0_140, %c32_141], %115 {strides = array<i32>} : memref<16x16x36xbf16, #tpu.memory_space<vmem>>, vector<15x15x4xbf16>,
    %c0_142 = arith.constant 0 : index
    %c0_143 = arith.constant 0 : index
    %c0_144 = arith.constant 0 : index
    %117 = vector.load %arg8[%c0_142, %c0_143, %c0_144] : memref<16x16x36xbf16, #tpu.memory_space<vmem>>, vector<16x16x36xbf16>
    %118 = vector.shape_cast %117 : vector<16x16x36xbf16> to vector<256x36xbf16>
    %c0_145 = arith.constant 0 : index
    %c0_146 = arith.constant 0 : index
    %119 = vector.load %arg3[%c0_145, %c0_146] : memref<36x2xbf16, #tpu.memory_space<vmem>>, vector<36x2xbf16>
    %cst_147 = arith.constant dense<0.000000e+00> : vector<256x2xf32>
    %120 = tpu.matmul %118, %119, %cst_147 {dimension_numbers = #tpu.dot_dimension_numbers<[1], [0], [0], [1], [0, 0, 1, 1], [], []>} : vector<256x36xbf16>, vector<36x2xbf16>, vector<256x2xf32> -> vector<256x2xf32>
    %cst_148 = arith.constant dense<0.000000e+00> : vector<2xf32>
    %121 = vector.multi_reduction <add>, %120, %cst_148 [0] : vector<256x2xf32> to vector<2xf32>
    %122 = vector.shape_cast %121 : vector<2xf32> to vector<1x2xf32>
    %123 = arith.mulf %120, %120 : vector<256x2xf32>
    %cst_149 = arith.constant dense<0.000000e+00> : vector<2xf32>
    %124 = vector.multi_reduction <add>, %123, %cst_149 [0] : vector<256x2xf32> to vector<2xf32>
    %125 = vector.shape_cast %124 : vector<2xf32> to vector<1x2xf32>
    %cst_150 = arith.constant 3.906250e-03 : f32
    %126 = vector.broadcast %cst_150 : f32 to vector<1x2xf32>
    %127 = arith.mulf %122, %126 : vector<1x2xf32>
    %cst_151 = arith.constant 3.906250e-03 : f32
    %128 = vector.broadcast %cst_151 : f32 to vector<1x2xf32>
    %129 = arith.mulf %125, %128 : vector<1x2xf32>
    %130 = arith.mulf %127, %127 : vector<1x2xf32>
    %131 = arith.subf %129, %130 : vector<1x2xf32>
    %cst_152 = arith.constant 0.000000e+00 : f32
    %132 = vector.broadcast %cst_152 : f32 to vector<1x2xf32>
    %133 = arith.maximumf %131, %132 : vector<1x2xf32>
    %134 = vector.broadcast %127 : vector<1x2xf32> to vector<256x2xf32>
    %135 = arith.subf %120, %134 : vector<256x2xf32>
    %cst_153 = arith.constant 9.99999974E-6 : f32
    %136 = vector.broadcast %cst_153 : f32 to vector<1x2xf32>
    %137 = arith.addf %133, %136 : vector<1x2xf32>
    %138 = math.rsqrt %137 : vector<1x2xf32>
    %139 = vector.broadcast %138 : vector<1x2xf32> to vector<256x2xf32>
    %140 = arith.mulf %135, %139 : vector<256x2xf32>
    %cst_154 = arith.constant 0.000000e+00 : f32
    %141 = vector.broadcast %cst_154 : f32 to vector<256x2xf32>
    %142 = arith.maximumf %140, %141 : vector<256x2xf32>
    %143 = vector.shape_cast %142 : vector<256x2xf32> to vector<16x16x2xf32>
    %144 = arith.truncf %143 : vector<16x16x2xf32> to vector<16x16x2xbf16>
    %cst_155 = arith.constant 0.000000e+00 : bf16
    %145 = vector.broadcast %cst_155 : bf16 to vector<1x16x2xbf16>
    %cst_156 = arith.constant 0.000000e+00 : bf16
    %146 = vector.broadcast %cst_156 : bf16 to vector<16x1x2xbf16>
    %c0_157 = arith.constant 0 : index
    %c0_158 = arith.constant 0 : index
    %c0_159 = arith.constant 0 : index
    %147 = vector.load %arg9[%c0_157, %c0_158, %c0_159] : memref<16x16x18xbf16, #tpu.memory_space<vmem>>, vector<1x16x2xbf16>
    tpu.vector_store %arg9[%c0_157, %c0_158, %c0_159], %145 {strides = array<i32>} : memref<16x16x18xbf16, #tpu.memory_space<vmem>>, vector<1x16x2xbf16>,
    %c0_160 = arith.constant 0 : index
    %c0_161 = arith.constant 0 : index
    %c0_162 = arith.constant 0 : index
    %148 = vector.load %arg9[%c0_160, %c0_161, %c0_162] : memref<16x16x18xbf16, #tpu.memory_space<vmem>>, vector<16x1x2xbf16>
    tpu.vector_store %arg9[%c0_160, %c0_161, %c0_162], %146 {strides = array<i32>} : memref<16x16x18xbf16, #tpu.memory_space<vmem>>, vector<16x1x2xbf16>,
    %149 = vector.extract_strided_slice %144 {offsets = [0, 0, 0], sizes = [15, 15, 2], strides = [1, 1, 1]} : vector<16x16x2xbf16> to vector<15x15x2xbf16>
    %c1_163 = arith.constant 1 : index
    %c1_164 = arith.constant 1 : index
    %c0_165 = arith.constant 0 : index
    %150 = vector.load %arg9[%c1_163, %c1_164, %c0_165] : memref<16x16x18xbf16, #tpu.memory_space<vmem>>, vector<15x15x2xbf16>
    tpu.vector_store %arg9[%c1_163, %c1_164, %c0_165], %149 {strides = array<i32>} : memref<16x16x18xbf16, #tpu.memory_space<vmem>>, vector<15x15x2xbf16>,
    %c0_166 = arith.constant 0 : index
    %c0_167 = arith.constant 0 : index
    %c2 = arith.constant 2 : index
    %151 = vector.load %arg9[%c0_166, %c0_167, %c2] : memref<16x16x18xbf16, #tpu.memory_space<vmem>>, vector<1x16x2xbf16>
    tpu.vector_store %arg9[%c0_166, %c0_167, %c2], %145 {strides = array<i32>} : memref<16x16x18xbf16, #tpu.memory_space<vmem>>, vector<1x16x2xbf16>,
    %152 = vector.extract_strided_slice %144 {offsets = [0, 0, 0], sizes = [15, 16, 2], strides = [1, 1, 1]} : vector<16x16x2xbf16> to vector<15x16x2xbf16>
    %c1_168 = arith.constant 1 : index
    %c0_169 = arith.constant 0 : index
    %c2_170 = arith.constant 2 : index
    %153 = vector.load %arg9[%c1_168, %c0_169, %c2_170] : memref<16x16x18xbf16, #tpu.memory_space<vmem>>, vector<15x16x2xbf16>
    tpu.vector_store %arg9[%c1_168, %c0_169, %c2_170], %152 {strides = array<i32>} : memref<16x16x18xbf16, #tpu.memory_space<vmem>>, vector<15x16x2xbf16>,
    %c0_171 = arith.constant 0 : index
    %c0_172 = arith.constant 0 : index
    %c4_173 = arith.constant 4 : index
    %154 = vector.load %arg9[%c0_171, %c0_172, %c4_173] : memref<16x16x18xbf16, #tpu.memory_space<vmem>>, vector<1x16x2xbf16>
    tpu.vector_store %arg9[%c0_171, %c0_172, %c4_173], %145 {strides = array<i32>} : memref<16x16x18xbf16, #tpu.memory_space<vmem>>, vector<1x16x2xbf16>,
    %c0_174 = arith.constant 0 : index
    %c15_175 = arith.constant 15 : index
    %c4_176 = arith.constant 4 : index
    %155 = vector.load %arg9[%c0_174, %c15_175, %c4_176] : memref<16x16x18xbf16, #tpu.memory_space<vmem>>, vector<16x1x2xbf16>
    tpu.vector_store %arg9[%c0_174, %c15_175, %c4_176], %146 {strides = array<i32>} : memref<16x16x18xbf16, #tpu.memory_space<vmem>>, vector<16x1x2xbf16>,
    %156 = vector.extract_strided_slice %144 {offsets = [0, 1, 0], sizes = [15, 15, 2], strides = [1, 1, 1]} : vector<16x16x2xbf16> to vector<15x15x2xbf16>
    %c1_177 = arith.constant 1 : index
    %c0_178 = arith.constant 0 : index
    %c4_179 = arith.constant 4 : index
    %157 = vector.load %arg9[%c1_177, %c0_178, %c4_179] : memref<16x16x18xbf16, #tpu.memory_space<vmem>>, vector<15x15x2xbf16>
    tpu.vector_store %arg9[%c1_177, %c0_178, %c4_179], %156 {strides = array<i32>} : memref<16x16x18xbf16, #tpu.memory_space<vmem>>, vector<15x15x2xbf16>,
    %c0_180 = arith.constant 0 : index
    %c0_181 = arith.constant 0 : index
    %c6 = arith.constant 6 : index
    %158 = vector.load %arg9[%c0_180, %c0_181, %c6] : memref<16x16x18xbf16, #tpu.memory_space<vmem>>, vector<16x1x2xbf16>
    tpu.vector_store %arg9[%c0_180, %c0_181, %c6], %146 {strides = array<i32>} : memref<16x16x18xbf16, #tpu.memory_space<vmem>>, vector<16x1x2xbf16>,
    %159 = vector.extract_strided_slice %144 {offsets = [0, 0, 0], sizes = [16, 15, 2], strides = [1, 1, 1]} : vector<16x16x2xbf16> to vector<16x15x2xbf16>
    %c0_182 = arith.constant 0 : index
    %c1_183 = arith.constant 1 : index
    %c6_184 = arith.constant 6 : index
    %160 = vector.load %arg9[%c0_182, %c1_183, %c6_184] : memref<16x16x18xbf16, #tpu.memory_space<vmem>>, vector<16x15x2xbf16>
    tpu.vector_store %arg9[%c0_182, %c1_183, %c6_184], %159 {strides = array<i32>} : memref<16x16x18xbf16, #tpu.memory_space<vmem>>, vector<16x15x2xbf16>,
    %c0_185 = arith.constant 0 : index
    %c0_186 = arith.constant 0 : index
    %c8_187 = arith.constant 8 : index
    %161 = vector.load %arg9[%c0_185, %c0_186, %c8_187] : memref<16x16x18xbf16, #tpu.memory_space<vmem>>, vector<16x16x2xbf16>
    tpu.vector_store %arg9[%c0_185, %c0_186, %c8_187], %144 {strides = array<i32>} : memref<16x16x18xbf16, #tpu.memory_space<vmem>>, vector<16x16x2xbf16>,
    %c0_188 = arith.constant 0 : index
    %c15_189 = arith.constant 15 : index
    %c10 = arith.constant 10 : index
    %162 = vector.load %arg9[%c0_188, %c15_189, %c10] : memref<16x16x18xbf16, #tpu.memory_space<vmem>>, vector<16x1x2xbf16>
    tpu.vector_store %arg9[%c0_188, %c15_189, %c10], %146 {strides = array<i32>} : memref<16x16x18xbf16, #tpu.memory_space<vmem>>, vector<16x1x2xbf16>,
    %163 = vector.extract_strided_slice %144 {offsets = [0, 1, 0], sizes = [16, 15, 2], strides = [1, 1, 1]} : vector<16x16x2xbf16> to vector<16x15x2xbf16>
    %c0_190 = arith.constant 0 : index
    %c0_191 = arith.constant 0 : index
    %c10_192 = arith.constant 10 : index
    %164 = vector.load %arg9[%c0_190, %c0_191, %c10_192] : memref<16x16x18xbf16, #tpu.memory_space<vmem>>, vector<16x15x2xbf16>
    tpu.vector_store %arg9[%c0_190, %c0_191, %c10_192], %163 {strides = array<i32>} : memref<16x16x18xbf16, #tpu.memory_space<vmem>>, vector<16x15x2xbf16>,
    %c15_193 = arith.constant 15 : index
    %c0_194 = arith.constant 0 : index
    %c12_195 = arith.constant 12 : index
    %165 = vector.load %arg9[%c15_193, %c0_194, %c12_195] : memref<16x16x18xbf16, #tpu.memory_space<vmem>>, vector<1x16x2xbf16>
    tpu.vector_store %arg9[%c15_193, %c0_194, %c12_195], %145 {strides = array<i32>} : memref<16x16x18xbf16, #tpu.memory_space<vmem>>, vector<1x16x2xbf16>,
    %c0_196 = arith.constant 0 : index
    %c0_197 = arith.constant 0 : index
    %c12_198 = arith.constant 12 : index
    %166 = vector.load %arg9[%c0_196, %c0_197, %c12_198] : memref<16x16x18xbf16, #tpu.memory_space<vmem>>, vector<16x1x2xbf16>
    tpu.vector_store %arg9[%c0_196, %c0_197, %c12_198], %146 {strides = array<i32>} : memref<16x16x18xbf16, #tpu.memory_space<vmem>>, vector<16x1x2xbf16>,
    %167 = vector.extract_strided_slice %144 {offsets = [1, 0, 0], sizes = [15, 15, 2], strides = [1, 1, 1]} : vector<16x16x2xbf16> to vector<15x15x2xbf16>
    %c0_199 = arith.constant 0 : index
    %c1_200 = arith.constant 1 : index
    %c12_201 = arith.constant 12 : index
    %168 = vector.load %arg9[%c0_199, %c1_200, %c12_201] : memref<16x16x18xbf16, #tpu.memory_space<vmem>>, vector<15x15x2xbf16>
    tpu.vector_store %arg9[%c0_199, %c1_200, %c12_201], %167 {strides = array<i32>} : memref<16x16x18xbf16, #tpu.memory_space<vmem>>, vector<15x15x2xbf16>,
    %c15_202 = arith.constant 15 : index
    %c0_203 = arith.constant 0 : index
    %c14 = arith.constant 14 : index
    %169 = vector.load %arg9[%c15_202, %c0_203, %c14] : memref<16x16x18xbf16, #tpu.memory_space<vmem>>, vector<1x16x2xbf16>
    tpu.vector_store %arg9[%c15_202, %c0_203, %c14], %145 {strides = array<i32>} : memref<16x16x18xbf16, #tpu.memory_space<vmem>>, vector<1x16x2xbf16>,
    %170 = vector.extract_strided_slice %144 {offsets = [1, 0, 0], sizes = [15, 16, 2], strides = [1, 1, 1]} : vector<16x16x2xbf16> to vector<15x16x2xbf16>
    %c0_204 = arith.constant 0 : index
    %c0_205 = arith.constant 0 : index
    %c14_206 = arith.constant 14 : index
    %171 = vector.load %arg9[%c0_204, %c0_205, %c14_206] : memref<16x16x18xbf16, #tpu.memory_space<vmem>>, vector<15x16x2xbf16>
    tpu.vector_store %arg9[%c0_204, %c0_205, %c14_206], %170 {strides = array<i32>} : memref<16x16x18xbf16, #tpu.memory_space<vmem>>, vector<15x16x2xbf16>,
    %c15_207 = arith.constant 15 : index
    %c0_208 = arith.constant 0 : index
    %c16_209 = arith.constant 16 : index
    %172 = vector.load %arg9[%c15_207, %c0_208, %c16_209] : memref<16x16x18xbf16, #tpu.memory_space<vmem>>, vector<1x16x2xbf16>
    tpu.vector_store %arg9[%c15_207, %c0_208, %c16_209], %145 {strides = array<i32>} : memref<16x16x18xbf16, #tpu.memory_space<vmem>>, vector<1x16x2xbf16>,
    %c0_210 = arith.constant 0 : index
    %c15_211 = arith.constant 15 : index
    %c16_212 = arith.constant 16 : index
    %173 = vector.load %arg9[%c0_210, %c15_211, %c16_212] : memref<16x16x18xbf16, #tpu.memory_space<vmem>>, vector<16x1x2xbf16>
    tpu.vector_store %arg9[%c0_210, %c15_211, %c16_212], %146 {strides = array<i32>} : memref<16x16x18xbf16, #tpu.memory_space<vmem>>, vector<16x1x2xbf16>,
    %174 = vector.extract_strided_slice %144 {offsets = [1, 1, 0], sizes = [15, 15, 2], strides = [1, 1, 1]} : vector<16x16x2xbf16> to vector<15x15x2xbf16>
    %c0_213 = arith.constant 0 : index
    %c0_214 = arith.constant 0 : index
    %c16_215 = arith.constant 16 : index
    %175 = vector.load %arg9[%c0_213, %c0_214, %c16_215] : memref<16x16x18xbf16, #tpu.memory_space<vmem>>, vector<15x15x2xbf16>
    tpu.vector_store %arg9[%c0_213, %c0_214, %c16_215], %174 {strides = array<i32>} : memref<16x16x18xbf16, #tpu.memory_space<vmem>>, vector<15x15x2xbf16>,
    %c0_216 = arith.constant 0 : index
    %c0_217 = arith.constant 0 : index
    %c0_218 = arith.constant 0 : index
    %176 = vector.load %arg9[%c0_216, %c0_217, %c0_218] : memref<16x16x18xbf16, #tpu.memory_space<vmem>>, vector<16x16x18xbf16>
    %177 = vector.shape_cast %176 : vector<16x16x18xbf16> to vector<256x18xbf16>
    %c0_219 = arith.constant 0 : index
    %c0_220 = arith.constant 0 : index
    %178 = vector.load %arg4[%c0_219, %c0_220] : memref<18x2xbf16, #tpu.memory_space<vmem>>, vector<18x2xbf16>
    %cst_221 = arith.constant dense<0.000000e+00> : vector<256x2xf32>
    %179 = tpu.matmul %177, %178, %cst_221 {dimension_numbers = #tpu.dot_dimension_numbers<[1], [0], [0], [1], [0, 0, 1, 1], [], []>} : vector<256x18xbf16>, vector<18x2xbf16>, vector<256x2xf32> -> vector<256x2xf32>
    %c0_222 = arith.constant 0 : index
    %c0_223 = arith.constant 0 : index
    %180 = vector.load %arg10[%c0_222, %c0_223] : memref<256x8xf32, #tpu.memory_space<vmem>>, vector<256x4xf32>
    tpu.vector_store %arg10[%c0_222, %c0_223], %61 {strides = array<i32>} : memref<256x8xf32, #tpu.memory_space<vmem>>, vector<256x4xf32>,
    %c0_224 = arith.constant 0 : index
    %c4_225 = arith.constant 4 : index
    %181 = vector.load %arg10[%c0_224, %c4_225] : memref<256x8xf32, #tpu.memory_space<vmem>>, vector<256x2xf32>
    tpu.vector_store %arg10[%c0_224, %c4_225], %120 {strides = array<i32>} : memref<256x8xf32, #tpu.memory_space<vmem>>, vector<256x2xf32>,
    %c0_226 = arith.constant 0 : index
    %c6_227 = arith.constant 6 : index
    %182 = vector.load %arg10[%c0_226, %c6_227] : memref<256x8xf32, #tpu.memory_space<vmem>>, vector<256x2xf32>
    tpu.vector_store %arg10[%c0_226, %c6_227], %179 {strides = array<i32>} : memref<256x8xf32, #tpu.memory_space<vmem>>, vector<256x2xf32>,
    %183 = arith.truncf %24 : vector<256x4xf32> to vector<256x4xbf16>
    %c0_228 = arith.constant 0 : index
    %c0_229 = arith.constant 0 : index
    %184 = vector.load %arg5[%c0_228, %c0_229] : memref<4x8xbf16, #tpu.memory_space<vmem>>, vector<4x8xbf16>
    %cst_230 = arith.constant dense<0.000000e+00> : vector<256x8xf32>
    %185 = tpu.matmul %183, %184, %cst_230 {dimension_numbers = #tpu.dot_dimension_numbers<[1], [0], [0], [1], [0, 0, 1, 1], [], []>} : vector<256x4xbf16>, vector<4x8xbf16>, vector<256x8xf32> -> vector<256x8xf32>
    %c0_231 = arith.constant 0 : index
    %c0_232 = arith.constant 0 : index
    %186 = vector.load %arg10[%c0_231, %c0_232] : memref<256x8xf32, #tpu.memory_space<vmem>>, vector<256x8xf32>
    %187 = arith.addf %186, %185 : vector<256x8xf32>
    %188 = vector.shape_cast %187 : vector<256x8xf32> to vector<16x16x8xf32>
    %c0_233 = arith.constant 0 : index
    %c0_234 = arith.constant 0 : index
    %c0_235 = arith.constant 0 : index
    %c0_236 = arith.constant 0 : index
    %189 = vector.load %arg6[%c0_233, %c0_234, %c0_235, %c0_236] : memref<1x16x16x8xf32, #tpu.memory_space<vmem>>, vector<1x16x16x8xf32>
    %190 = vector.shape_cast %189 : vector<1x16x16x8xf32> to vector<16x16x8xf32>
    %191 = vector.shape_cast %188 : vector<16x16x8xf32> to vector<1x16x16x8xf32>
    tpu.vector_store %arg6[%c0_233, %c0_234, %c0_235, %c0_236], %191 {strides = array<i32>} : memref<1x16x16x8xf32, #tpu.memory_space<vmem>>, vector<1x16x16x8xf32>,
    return
  }
  func.func @transform_0(%arg0: i32) -> (i32, i32, i32, i32) {
    %c0_i32 = arith.constant 0 : i32
    %c0_i32_0 = arith.constant 0 : i32
    %c0_i32_1 = arith.constant 0 : i32
    %c0_i32_2 = arith.constant 0 : i32
    return %arg0, %c0_i32, %c0_i32_0, %c0_i32_1 : i32, i32, i32, i32
  }
  func.func @transform_1(%arg0: i32) -> (i32, i32) {
    %c0_i32 = arith.constant 0 : i32
    %c0_i32_0 = arith.constant 0 : i32
    %c0_i32_1 = arith.constant 0 : i32
    return %c0_i32, %c0_i32_0 : i32, i32
  }
  func.func @transform_2(%arg0: i32) -> (i32, i32) {
    %c0_i32 = arith.constant 0 : i32
    %c0_i32_0 = arith.constant 0 : i32
    %c0_i32_1 = arith.constant 0 : i32
    return %c0_i32, %c0_i32_0 : i32, i32
  }
  func.func @transform_3(%arg0: i32) -> (i32, i32) {
    %c0_i32 = arith.constant 0 : i32
    %c0_i32_0 = arith.constant 0 : i32
    %c0_i32_1 = arith.constant 0 : i32
    return %c0_i32, %c0_i32_0 : i32, i32
  }
  func.func @transform_4(%arg0: i32) -> (i32, i32) {
    %c0_i32 = arith.constant 0 : i32
    %c0_i32_0 = arith.constant 0 : i32
    %c0_i32_1 = arith.constant 0 : i32
    return %c0_i32, %c0_i32_0 : i32, i32
  }
  func.func @transform_5(%arg0: i32) -> (i32, i32, i32, i32) {
    %c0_i32 = arith.constant 0 : i32
    %c0_i32_0 = arith.constant 0 : i32
    %c0_i32_1 = arith.constant 0 : i32
    %c0_i32_2 = arith.constant 0 : i32
    return %arg0, %c0_i32, %c0_i32_0, %c0_i32_1 : i32, i32, i32, i32
  }
}

</mosaic_0001>

<llo_original>
// kernel: conv_block.1
$region0: #{conv_block.1}
  #allocation0 [shape = 'u32[]', space=smem, size = 0x4, offset = 0x4, fixed_abs, tag = 'smem constant byte address 0x4 - core index']
  #allocation1 [shape = 'u32[144,128]{1,0:T(1,128)}', space=vmem, size = 0x12000, scoped, tag = 'internal scratch']
  #allocation2 [shape = 'bf16[16,16,36]{2,1,0:T(16,128)(2,1)}', space=vmem, size = 0x10000, scoped, tag = 'scratch operand']
  #allocation3 [shape = 'bf16[16,16,36]{2,1,0:T(16,128)(2,1)}', space=vmem, size = 0x10000, scoped, tag = 'scratch operand']
  #allocation4 [shape = 'bf16[16,16,18]{2,1,0:T(16,128)(2,1)}', space=vmem, size = 0x10000, scoped, tag = 'scratch operand']
  #allocation5 [shape = 'f32[256,8]{1,0:T(8,128)}', space=vmem, size = 0x20000, scoped, tag = 'scratch operand']
  %s0 = inlined_call_operand.vmem [shape: f32[2,16,16,4], index: 0, kind: input, shape index: {}]
  %s1 = inlined_call_operand.vmem [shape: bf16[36,4], index: 1, kind: input, shape index: {}]
  %s2 = inlined_call_operand.vmem [shape: bf16[36,2], index: 2, kind: input, shape index: {}]
  %s3 = inlined_call_operand.vmem [shape: bf16[18,2], index: 3, kind: input, shape index: {}]
  %s4 = inlined_call_operand.vmem [shape: bf16[4,8], index: 4, kind: input, shape index: {}]
  %s5 = inlined_call_operand.vmem [shape: f32[2,16,16,8], index: 5, kind: output, shape index: {}]
  %s6 = sld [smem:[#allocation0]]
  $region53: #{conv_block.1} parent=0
    _
  %s8 = ssub.s32 1, %s6
  %s9 = scalar_select 0, %s8, %s6
  loop: start=0, step=1, limit=4
  $region2: #{conv_block.1} parent=0 // loop_pre_header
    _
  $region3: #{conv_block.1} parent=0 // loop_header
    %s11 = sphi 0, %s15
    %p12 = scmp.ge.s32.totalorder %s11, 4
    %s21 = sphi 0, %s23
    %s24 = sphi 0, %s21
    %s25 = sphi 0, %s24
    %s41 = sphi 0, %s25
    %s45 = sphi 0, %s45
    %s47 = sphi 0, %s45
    %s48 = sphi 0, %s47
    %s62 = sphi 0, %s48
    %s66 = sphi 0, %s66
    %s68 = sphi 0, %s66
    %s69 = sphi 0, %s68
    %s83 = sphi 0, %s69
    %s87 = sphi 0, %s87
    %s89 = sphi 0, %s87
    %s90 = sphi 0, %s89
    %s104 = sphi 0, %s90
    %s108 = sphi 0, %s108
    %s110 = sphi 0, %s108
    %s111 = sphi 0, %s110
    %s125 = sphi 0, %s111
    %s131 = sphi 0, %s133
    %s134 = sphi 0, %s131
    %s135 = sphi 0, %s134
    %s151 = sphi 0, %s135
  $region4: #{conv_block.1} parent=0 // loop_header_branch
    %14 = sbr.rel (%p12) target = $region8
  $region5: #{conv_block.1} parent=0 // loop_body
    %s16 = ssub.s32 %s11, 1
    %s17 = ssub.s32 %s11, 2
    %s18 = sadd.s32 %s11, 1
    %s19 = ssub.s32 %s11, %s18
    %p20 = scmp.eq.s32.totalorder %s19, 0
    %s22 = sadd.s32 %s21, 1
    %s23 = scalar_select %p20, %s21, %s22
    %p26 = pneg %p20
    %p27 = scmp.eq.s32.totalorder %s11, 1
    %p28 = por %p26, %p27
    %p29 = scmp.ne.s32.totalorder %s21, %s24
    %p30 = scmp.eq.s32.totalorder %s11, 0
    %p31 = por %p29, %p30
    %p32 = scmp.ne.s32.totalorder %s21, %s24
    %p33 = scmp.eq.s32.totalorder %s16, 1
    %p34 = por %p32, %p33
    %p35 = scmp.ne.s32.totalorder %s24, %s25
    %p36 = scmp.eq.s32.totalorder %s16, 0
    %p37 = por %p35, %p36
    %p38 = scmp.ne.s32.totalorder %s24, %s25
    %p39 = scmp.eq.s32.totalorder %s17, 1
    %p40 = por %p38, %p39
    %p42 = scmp.ne.s32.totalorder %s25, %s41
    %p43 = scmp.eq.s32.totalorder %s17, 0
    %p44 = por %p42, %p43
    %s46 = sadd.s32 %s45, 1
    %p49 = scmp.eq.s32.totalorder %s11, 1
    %p50 = scmp.ne.s32.totalorder %s45, %s47
    %p51 = scmp.eq.s32.totalorder %s11, 0
    %p52 = por %p50, %p51
    %p53 = scmp.ne.s32.totalorder %s45, %s47
    %p54 = scmp.eq.s32.totalorder %s16, 1
    %p55 = por %p53, %p54
    %p56 = scmp.ne.s32.totalorder %s47, %s48
    %p57 = scmp.eq.s32.totalorder %s16, 0
    %p58 = por %p56, %p57
    %p59 = scmp.ne.s32.totalorder %s47, %s48
    %p60 = scmp.eq.s32.totalorder %s17, 1
    %p61 = por %p59, %p60
    %p63 = scmp.ne.s32.totalorder %s48, %s62
    %p64 = scmp.eq.s32.totalorder %s17, 0
    %p65 = por %p63, %p64
    %s67 = sadd.s32 %s66, 1
    %p70 = scmp.eq.s32.totalorder %s11, 1
    %p71 = scmp.ne.s32.totalorder %s66, %s68
    %p72 = scmp.eq.s32.totalorder %s11, 0
    %p73 = por %p71, %p72
    %p74 = scmp.ne.s32.totalorder %s66, %s68
    %p75 = scmp.eq.s32.totalorder %s16, 1
    %p76 = por %p74, %p75
    %p77 = scmp.ne.s32.totalorder %s68, %s69
    %p78 = scmp.eq.s32.totalorder %s16, 0
    %p79 = por %p77, %p78
    %p80 = scmp.ne.s32.totalorder %s68, %s69
    %p81 = scmp.eq.s32.totalorder %s17, 1
    %p82 = por %p80, %p81
    %p84 = scmp.ne.s32.totalorder %s69, %s83
    %p85 = scmp.eq.s32.totalorder %s17, 0
    %p86 = por %p84, %p85
    %s88 = sadd.s32 %s87, 1
    %p91 = scmp.eq.s32.totalorder %s11, 1
    %p92 = scmp.ne.s32.totalorder %s87, %s89
    %p93 = scmp.eq.s32.totalorder %s11, 0
    %p94 = por %p92, %p93
    %p95 = scmp.ne.s32.totalorder %s87, %s89
    %p96 = scmp.eq.s32.totalorder %s16, 1
    %p97 = por %p95, %p96
    %p98 = scmp.ne.s32.totalorder %s89, %s90
    %p99 = scmp.eq.s32.totalorder %s16, 0
    %p100 = por %p98, %p99
    %p101 = scmp.ne.s32.totalorder %s89, %s90
    %p102 = scmp.eq.s32.totalorder %s17, 1
    %p103 = por %p101, %p102
    %p105 = scmp.ne.s32.totalorder %s90, %s104
    %p106 = scmp.eq.s32.totalorder %s17, 0
    %p107 = por %p105, %p106
    %s109 = sadd.s32 %s108, 1
    %p112 = scmp.eq.s32.totalorder %s11, 1
    %p113 = scmp.ne.s32.totalorder %s108, %s110
    %p114 = scmp.eq.s32.totalorder %s11, 0
    %p115 = por %p113, %p114
    %p116 = scmp.ne.s32.totalorder %s108, %s110
    %p117 = scmp.eq.s32.totalorder %s16, 1
    %p118 = por %p116, %p117
    %p119 = scmp.ne.s32.totalorder %s110, %s111
    %p120 = scmp.eq.s32.totalorder %s16, 0
    %p121 = por %p119, %p120
    %p122 = scmp.ne.s32.totalorder %s110, %s111
    %p123 = scmp.eq.s32.totalorder %s17, 1
    %p124 = por %p122, %p123
    %p126 = scmp.ne.s32.totalorder %s111, %s125
    %p127 = scmp.eq.s32.totalorder %s17, 0
    %p128 = por %p126, %p127
    %s129 = ssub.s32 %s11, %s18
    %p130 = scmp.eq.s32.totalorder %s129, 0
    %s132 = sadd.s32 %s131, 1
    %s133 = scalar_select %p130, %s131, %s132
    %p136 = pneg %p130
    %p137 = scmp.eq.s32.totalorder %s11, 1
    %p138 = por %p136, %p137
    %p139 = scmp.ne.s32.totalorder %s131, %s134
    %p140 = scmp.eq.s32.totalorder %s11, 0
    %p141 = por %p139, %p140
    %p142 = scmp.ne.s32.totalorder %s131, %s134
    %p143 = scmp.eq.s32.totalorder %s16, 1
    %p144 = por %p142, %p143
    %p145 = scmp.ne.s32.totalorder %s134, %s135
    %p146 = scmp.eq.s32.totalorder %s16, 0
    %p147 = por %p145, %p146
    %p148 = scmp.ne.s32.totalorder %s134, %s135
    %p149 = scmp.eq.s32.totalorder %s17, 1
    %p150 = por %p148, %p149
    %p152 = scmp.ne.s32.totalorder %s135, %s151
    %p153 = scmp.eq.s32.totalorder %s17, 0
    %p154 = por %p152, %p153
    %p155 = scmp.le.s32.totalorder 1, %s11
    %p156 = scmp.lt.s32.totalorder %s11, 3
    %p157 = pnand %p155, %p156
    %p158 = pneg %p157
    // Predicated region
    $region9: #{conv_block.1} parent=5 // pred_check
      _
    $region10: #{conv_block.1} parent=5 // pred_check_branch
      %160 = sbr.rel (%p157) target = $region12
    $region11: #{conv_block.1} parent=5 // pred_region
      %s161 = ssub.s32 %s11, 1
      // Predicated region
      $region13: #{conv_block.1} parent=11 // pred_check
        %p162 = pneg %p58
      $region14: #{conv_block.1} parent=11 // pred_check_branch
        %164 = sbr.rel (%p162) target = $region16
      $region15: #{conv_block.1} parent=11 // pred_region
        _
      $region16: #{conv_block.1} parent=11 // pred_fallthru
        _
      // Predicated region
      $region17: #{conv_block.1} parent=11 // pred_check
        %p165 = pneg %p79
      $region18: #{conv_block.1} parent=11 // pred_check_branch
        %167 = sbr.rel (%p165) target = $region20
      $region19: #{conv_block.1} parent=11 // pred_region
        _
      $region20: #{conv_block.1} parent=11 // pred_fallthru
        _
      // Predicated region
      $region21: #{conv_block.1} parent=11 // pred_check
        %p168 = pneg %p100
      $region22: #{conv_block.1} parent=11 // pred_check_branch
        %170 = sbr.rel (%p168) target = $region24
      $region23: #{conv_block.1} parent=11 // pred_region
        _
      $region24: #{conv_block.1} parent=11 // pred_fallthru
        _
      // Predicated region
      $region25: #{conv_block.1} parent=11 // pred_check
        %p171 = pneg %p121
      $region26: #{conv_block.1} parent=11 // pred_check_branch
        %173 = sbr.rel (%p171) target = $region28
      $region27: #{conv_block.1} parent=11 // pred_region
        _
      $region28: #{conv_block.1} parent=11 // pred_fallthru
        _
    $region12: #{conv_block.1} parent=5 // pred_fallthru
      _
    %p174 = scmp.lt.s32.totalorder %s11, 2
    // Predicated region
    $region29: #{conv_block.1} parent=5 // pred_check
      %p175 = pneg %p174
    $region30: #{conv_block.1} parent=5 // pred_check_branch
      %177 = sbr.rel (%p175) target = $region32
    $region31: #{conv_block.1} parent=5 // pred_region
      // Predicated region
      $region33: #{conv_block.1} parent=31 // pred_check
        %p178 = pneg %p31
      $region34: #{conv_block.1} parent=31 // pred_check_branch
        %180 = sbr.rel (%p178) target = $region36
      $region35: #{conv_block.1} parent=31 // pred_region
        %p181 = scmp.lt.s32.totalorder %s11, 1
        %s182 = scalar_select %p181, %s11, 1
        %s183 = smul.addr %s182, 32
        %s184 = smul.addr %s183, 8
        %s185 = scalar_lea.vmem %s0, %s184
      $region36: #{conv_block.1} parent=31 // pred_fallthru
        _
    $region32: #{conv_block.1} parent=5 // pred_fallthru
      _
    %p186 = scmp.le.s32.totalorder 1, %s11
    %p187 = scmp.lt.s32.totalorder %s11, 3
    %p188 = pnand %p186, %p187
    %p189 = pneg %p188
    // Predicated region
    $region37: #{conv_block.1} parent=5 // pred_check
      _
    $region38: #{conv_block.1} parent=5 // pred_check_branch
      %191 = sbr.rel (%p188) target = $region40
    $region39: #{conv_block.1} parent=5 // pred_region
      %s192 = ssub.s32 %s11, 1
      %p193 = scmp.lt.s32.totalorder %s16, 1
      %s194 = scalar_select %p193, %s16, 1
      %s195 = smul.addr %s194, 32
      %s196 = smul.addr %s195, 8
      %s197 = scalar_lea.vmem %s0, %s196
      %p198 = pneg %p37
      %p199 = pneg %p34
      %p200 = pneg %p58
      %p201 = pneg %p55
      %p202 = pneg %p79
      %p203 = pneg %p76
      %p204 = pneg %p100
      %p205 = pneg %p97
      %p206 = pneg %p121
      %p207 = pneg %p118
      %p208 = pneg %p147
      %p209 = pneg %p144
      %p210 = scmp.lt.s32.totalorder %s16, 1
      %s211 = scalar_select %p210, %s16, 1
      %s212 = smul.addr %s211, 32
      %s213 = smul.addr %s212, 8
      %s214 = scalar_lea.vmem %s5, %s213
      %p215 = scmp.lt.s32.totalorder %s16, 1
      %s216 = scalar_select %p215, %s16, 1
      %s217 = smul.addr %s216, 32
      %s218 = smul.addr %s217, 8
      %s219 = scalar_lea.vmem %s0, %s218
      %p220 = scmp.lt.s32.totalorder %s16, 1
      %s221 = scalar_select %p220, %s16, 1
      %s222 = smul.addr %s221, 32
      %s223 = smul.addr %s222, 8
      %s224 = scalar_lea.vmem %s5, %s223
      %v226 = vld [vmem:[%s219] sm:$0xff]
      %v227 = vld [vmem:[%s219 + $0x8] sm:$0xff]
      %v228 = vld [vmem:[%s219 + $0x10] sm:$0xff]
      %v229 = vld [vmem:[%s219 + $0x18] sm:$0xff]
      %v230 = vld [vmem:[%s219 + $0x20] sm:$0xff]
      %v231 = vld [vmem:[%s219 + $0x28] sm:$0xff]
      %v232 = vld [vmem:[%s219 + $0x30] sm:$0xff]
      %v233 = vld [vmem:[%s219 + $0x38] sm:$0xff]
      %v234 = vld [vmem:[%s219 + $0x40] sm:$0xff]
      %v235 = vld [vmem:[%s219 + $0x48] sm:$0xff]
      %v236 = vld [vmem:[%s219 + $0x50] sm:$0xff]
      %v237 = vld [vmem:[%s219 + $0x58] sm:$0xff]
      %v238 = vld [vmem:[%s219 + $0x60] sm:$0xff]
      %v239 = vld [vmem:[%s219 + $0x68] sm:$0xff]
      %v240 = vld [vmem:[%s219 + $0x70] sm:$0xff]
      %v241 = vld [vmem:[%s219 + $0x78] sm:$0xff]
      %v242 = vld [vmem:[%s219 + $0x80] sm:$0xff]
      %v243 = vld [vmem:[%s219 + $0x88] sm:$0xff]
      %v244 = vld [vmem:[%s219 + $0x90] sm:$0xff]
      %v245 = vld [vmem:[%s219 + $0x98] sm:$0xff]
      %v246 = vld [vmem:[%s219 + $0xa0] sm:$0xff]
      %v247 = vld [vmem:[%s219 + $0xa8] sm:$0xff]
      %v248 = vld [vmem:[%s219 + $0xb0] sm:$0xff]
      %v249 = vld [vmem:[%s219 + $0xb8] sm:$0xff]
      %v250 = vld [vmem:[%s219 + $0xc0] sm:$0xff]
      %v251 = vld [vmem:[%s219 + $0xc8] sm:$0xff]
      %v252 = vld [vmem:[%s219 + $0xd0] sm:$0xff]
      %v253 = vld [vmem:[%s219 + $0xd8] sm:$0xff]
      %v254 = vld [vmem:[%s219 + $0xe0] sm:$0xff]
      %v255 = vld [vmem:[%s219 + $0xe8] sm:$0xff]
      %v256 = vld [vmem:[%s219 + $0xf0] sm:$0xff]
      %v257 = vld [vmem:[%s219 + $0xf8] sm:$0xff]
      %vm258 = vcmask 31744
      %v259 = vsel %vm258, %v226, 0.0
      %v260 = vsel %vm258, %v227, 0.0
      %v261 = vadd.f32 %v259, %v260
      %v262 = vsel %vm258, %v228, 0.0
      %v263 = vadd.f32 %v261, %v262
      %v264 = vsel %vm258, %v229, 0.0
      %v265 = vadd.f32 %v263, %v264
      %v266 = vsel %vm258, %v230, 0.0
      %v267 = vadd.f32 %v265, %v266
      %v268 = vsel %vm258, %v231, 0.0
      %v269 = vadd.f32 %v267, %v268
      %v270 = vsel %vm258, %v232, 0.0
      %v271 = vadd.f32 %v269, %v270
      %v272 = vsel %vm258, %v233, 0.0
      %v273 = vadd.f32 %v271, %v272
      %v274 = vsel %vm258, %v234, 0.0
      %v275 = vadd.f32 %v273, %v274
      %v276 = vsel %vm258, %v235, 0.0
      %v277 = vadd.f32 %v275, %v276
      %v278 = vsel %vm258, %v236, 0.0
      %v279 = vadd.f32 %v277, %v278
      %v280 = vsel %vm258, %v237, 0.0
      %v281 = vadd.f32 %v279, %v280
      %v282 = vsel %vm258, %v238, 0.0
      %v283 = vadd.f32 %v281, %v282
      %v284 = vsel %vm258, %v239, 0.0
      %v285 = vadd.f32 %v283, %v284
      %v286 = vsel %vm258, %v240, 0.0
      %v287 = vadd.f32 %v285, %v286
      %v288 = vsel %vm258, %v241, 0.0
      %v289 = vadd.f32 %v287, %v288
      %v290 = vsel %vm258, %v242, 0.0
      %v291 = vadd.f32 %v289, %v290
      %v292 = vsel %vm258, %v243, 0.0
      %v293 = vadd.f32 %v291, %v292
      %v294 = vsel %vm258, %v244, 0.0
      %v295 = vadd.f32 %v293, %v294
      %v296 = vsel %vm258, %v245, 0.0
      %v297 = vadd.f32 %v295, %v296
      %v298 = vsel %vm258, %v246, 0.0
      %v299 = vadd.f32 %v297, %v298
      %v300 = vsel %vm258, %v247, 0.0
      %v301 = vadd.f32 %v299, %v300
      %v302 = vsel %vm258, %v248, 0.0
      %v303 = vadd.f32 %v301, %v302
      %v304 = vsel %vm258, %v249, 0.0
      %v305 = vadd.f32 %v303, %v304
      %v306 = vsel %vm258, %v250, 0.0
      %v307 = vadd.f32 %v305, %v306
      %v308 = vsel %vm258, %v251, 0.0
      %v309 = vadd.f32 %v307, %v308
      %v310 = vsel %vm258, %v252, 0.0
      %v311 = vadd.f32 %v309, %v310
      %v312 = vsel %vm258, %v253, 0.0
      %v313 = vadd.f32 %v311, %v312
      %v314 = vsel %vm258, %v254, 0.0
      %v315 = vadd.f32 %v313, %v314
      %v316 = vsel %vm258, %v255, 0.0
      %v317 = vadd.f32 %v315, %v316
      %v318 = vsel %vm258, %v256, 0.0
      %v319 = vadd.f32 %v317, %v318
      %v320 = vsel %vm258, %v257, 0.0
      %v321 = vadd.f32 %v319, %v320
      %v322 = vrot.slane %v321, 4
      %v323 = vadd.f32 %v321, %v322
      %v324 = vrot.slane %v323, 2
      %v325 = vadd.f32 %v323, %v324
      %v326 = vrot.slane %v325, 1
      %v327 = vadd.f32 %v325, %v326
      %v328 = vmul.f32 %v226, %v226
      %v329 = vmul.f32 %v227, %v227
      %v330 = vmul.f32 %v228, %v228
      %v331 = vmul.f32 %v229, %v229
      %v332 = vmul.f32 %v230, %v230
      %v333 = vmul.f32 %v231, %v231
      %v334 = vmul.f32 %v232, %v232
      %v335 = vmul.f32 %v233, %v233
      %v336 = vmul.f32 %v234, %v234
      %v337 = vmul.f32 %v235, %v235
      %v338 = vmul.f32 %v236, %v236
      %v339 = vmul.f32 %v237, %v237
      %v340 = vmul.f32 %v238, %v238
      %v341 = vmul.f32 %v239, %v239
      %v342 = vmul.f32 %v240, %v240
      %v343 = vmul.f32 %v241, %v241
      %v344 = vmul.f32 %v242, %v242
      %v345 = vmul.f32 %v243, %v243
      %v346 = vmul.f32 %v244, %v244
      %v347 = vmul.f32 %v245, %v245
      %v348 = vmul.f32 %v246, %v246
      %v349 = vmul.f32 %v247, %v247
      %v350 = vmul.f32 %v248, %v248
      %v351 = vmul.f32 %v249, %v249
      %v352 = vmul.f32 %v250, %v250
      %v353 = vmul.f32 %v251, %v251
      %v354 = vmul.f32 %v252, %v252
      %v355 = vmul.f32 %v253, %v253
      %v356 = vmul.f32 %v254, %v254
      %v357 = vmul.f32 %v255, %v255
      %v358 = vmul.f32 %v256, %v256
      %v359 = vmul.f32 %v257, %v257
      %v360 = vsel %vm258, %v328, 0.0
      %v361 = vsel %vm258, %v329, 0.0
      %v362 = vadd.f32 %v360, %v361
      %v363 = vsel %vm258, %v330, 0.0
      %v364 = vadd.f32 %v362, %v363
      %v365 = vsel %vm258, %v331, 0.0
      %v366 = vadd.f32 %v364, %v365
      %v367 = vsel %vm258, %v332, 0.0
      %v368 = vadd.f32 %v366, %v367
      %v369 = vsel %vm258, %v333, 0.0
      %v370 = vadd.f32 %v368, %v369
      %v371 = vsel %vm258, %v334, 0.0
      %v372 = vadd.f32 %v370, %v371
      %v373 = vsel %vm258, %v335, 0.0
      %v374 = vadd.f32 %v372, %v373
      %v375 = vsel %vm258, %v336, 0.0
      %v376 = vadd.f32 %v374, %v375
      %v377 = vsel %vm258, %v337, 0.0
      %v378 = vadd.f32 %v376, %v377
      %v379 = vsel %vm258, %v338, 0.0
      %v380 = vadd.f32 %v378, %v379
      %v381 = vsel %vm258, %v339, 0.0
      %v382 = vadd.f32 %v380, %v381
      %v383 = vsel %vm258, %v340, 0.0
      %v384 = vadd.f32 %v382, %v383
      %v385 = vsel %vm258, %v341, 0.0
      %v386 = vadd.f32 %v384, %v385
      %v387 = vsel %vm258, %v342, 0.0
      %v388 = vadd.f32 %v386, %v387
      %v389 = vsel %vm258, %v343, 0.0
      %v390 = vadd.f32 %v388, %v389
      %v391 = vsel %vm258, %v344, 0.0
      %v392 = vadd.f32 %v390, %v391
      %v393 = vsel %vm258, %v345, 0.0
      %v394 = vadd.f32 %v392, %v393
      %v395 = vsel %vm258, %v346, 0.0
      %v396 = vadd.f32 %v394, %v395
      %v397 = vsel %vm258, %v347, 0.0
      %v398 = vadd.f32 %v396, %v397
      %v399 = vsel %vm258, %v348, 0.0
      %v400 = vadd.f32 %v398, %v399
      %v401 = vsel %vm258, %v349, 0.0
      %v402 = vadd.f32 %v400, %v401
      %v403 = vsel %vm258, %v350, 0.0
      %v404 = vadd.f32 %v402, %v403
      %v405 = vsel %vm258, %v351, 0.0
      %v406 = vadd.f32 %v404, %v405
      %v407 = vsel %vm258, %v352, 0.0
      %v408 = vadd.f32 %v406, %v407
      %v409 = vsel %vm258, %v353, 0.0
      %v410 = vadd.f32 %v408, %v409
      %v411 = vsel %vm258, %v354, 0.0
      %v412 = vadd.f32 %v410, %v411
      %v413 = vsel %vm258, %v355, 0.0
      %v414 = vadd.f32 %v412, %v413
      %v415 = vsel %vm258, %v356, 0.0
      %v416 = vadd.f32 %v414, %v415
      %v417 = vsel %vm258, %v357, 0.0
      %v418 = vadd.f32 %v416, %v417
      %v419 = vsel %vm258, %v358, 0.0
      %v420 = vadd.f32 %v418, %v419
      %v421 = vsel %vm258, %v359, 0.0
      %v422 = vadd.f32 %v420, %v421
      %v423 = vrot.slane %v422, 4
      %v424 = vadd.f32 %v422, %v423
      %v425 = vrot.slane %v424, 2
      %v426 = vadd.f32 %v424, %v425
      %v427 = vrot.slane %v426, 1
      %v428 = vadd.f32 %v426, %v427
      %v429 = vmul.f32 %v327, 0.00390625
      %v430 = vmul.f32 %v428, 0.00390625
      %v431 = vmul.f32 %v429, %v429
      %v432 = vsub.f32 %v430, %v431
      %v433 = vmax.f32 %v432, 0.0
      %v434 = vsub.f32 %v226, %v429
      %v435 = vsub.f32 %v227, %v429
      %v436 = vsub.f32 %v228, %v429
      %v437 = vsub.f32 %v229, %v429
      %v438 = vsub.f32 %v230, %v429
      %v439 = vsub.f32 %v231, %v429
      %v440 = vsub.f32 %v232, %v429
      %v441 = vsub.f32 %v233, %v429
      %v442 = vsub.f32 %v234, %v429
      %v443 = vsub.f32 %v235, %v429
      %v444 = vsub.f32 %v236, %v429
      %v445 = vsub.f32 %v237, %v429
      %v446 = vsub.f32 %v238, %v429
      %v447 = vsub.f32 %v239, %v429
      %v448 = vsub.f32 %v240, %v429
      %v449 = vsub.f32 %v241, %v429
      %v450 = vsub.f32 %v242, %v429
      %v451 = vsub.f32 %v243, %v429
      %v452 = vsub.f32 %v244, %v429
      %v453 = vsub.f32 %v245, %v429
      %v454 = vsub.f32 %v246, %v429
      %v455 = vsub.f32 %v247, %v429
      %v456 = vsub.f32 %v248, %v429
      %v457 = vsub.f32 %v249, %v429
      %v458 = vsub.f32 %v250, %v429
      %v459 = vsub.f32 %v251, %v429
      %v460 = vsub.f32 %v252, %v429
      %v461 = vsub.f32 %v253, %v429
      %v462 = vsub.f32 %v254, %v429
      %v463 = vsub.f32 %v255, %v429
      %v464 = vsub.f32 %v256, %v429
      %v465 = vsub.f32 %v257, %v429
      %v466 = vadd.f32 %v433, 1e-05
      %v467 = vrsqrt.pop %v466
      %v468 = vmul.f32 %v434, %v467
      %v469 = vmul.f32 %v435, %v467
      %v470 = vmul.f32 %v436, %v467
      %v471 = vmul.f32 %v437, %v467
      %v472 = vmul.f32 %v438, %v467
      %v473 = vmul.f32 %v439, %v467
      %v474 = vmul.f32 %v440, %v467
      %v475 = vmul.f32 %v441, %v467
      %v476 = vmul.f32 %v442, %v467
      %v477 = vmul.f32 %v443, %v467
      %v478 = vmul.f32 %v444, %v467
      %v479 = vmul.f32 %v445, %v467
      %v480 = vmul.f32 %v446, %v467
      %v481 = vmul.f32 %v447, %v467
      %v482 = vmul.f32 %v448, %v467
      %v483 = vmul.f32 %v449, %v467
      %v484 = vmul.f32 %v450, %v467
      %v485 = vmul.f32 %v451, %v467
      %v486 = vmul.f32 %v452, %v467
      %v487 = vmul.f32 %v453, %v467
      %v488 = vmul.f32 %v454, %v467
      %v489 = vmul.f32 %v455, %v467
      %v490 = vmul.f32 %v456, %v467
      %v491 = vmul.f32 %v457, %v467
      %v492 = vmul.f32 %v458, %v467
      %v493 = vmul.f32 %v459, %v467
      %v494 = vmul.f32 %v460, %v467
      %v495 = vmul.f32 %v461, %v467
      %v496 = vmul.f32 %v462, %v467
      %v497 = vmul.f32 %v463, %v467
      %v498 = vmul.f32 %v464, %v467
      %v499 = vmul.f32 %v465, %v467
      %v500 = vmax.f32 %v468, 0.0
      %v501 = vmax.f32 %v469, 0.0
      %v502 = vmax.f32 %v470, 0.0
      %v503 = vmax.f32 %v471, 0.0
      %v504 = vmax.f32 %v472, 0.0
      %v505 = vmax.f32 %v473, 0.0
      %v506 = vmax.f32 %v474, 0.0
      %v507 = vmax.f32 %v475, 0.0
      %v508 = vmax.f32 %v476, 0.0
      %v509 = vmax.f32 %v477, 0.0
      %v510 = vmax.f32 %v478, 0.0
      %v511 = vmax.f32 %v479, 0.0
      %v512 = vmax.f32 %v480, 0.0
      %v513 = vmax.f32 %v481, 0.0
      %v514 = vmax.f32 %v482, 0.0
      %v515 = vmax.f32 %v483, 0.0
      %v516 = vmax.f32 %v484, 0.0
      %v517 = vmax.f32 %v485, 0.0
      %v518 = vmax.f32 %v486, 0.0
      %v519 = vmax.f32 %v487, 0.0
      %v520 = vmax.f32 %v488, 0.0
      %v521 = vmax.f32 %v489, 0.0
      %v522 = vmax.f32 %v490, 0.0
      %v523 = vmax.f32 %v491, 0.0
      %v524 = vmax.f32 %v492, 0.0
      %v525 = vmax.f32 %v493, 0.0
      %v526 = vmax.f32 %v494, 0.0
      %v527 = vmax.f32 %v495, 0.0
      %v528 = vmax.f32 %v496, 0.0
      %v529 = vmax.f32 %v497, 0.0
      %v530 = vmax.f32 %v498, 0.0
      %v531 = vmax.f32 %v499, 0.0
      %v532 = vpack.c.bf16 %v501, %v500
      %v533 = vpack.c.bf16 %v503, %v502
      %v534 = vpack.c.bf16 %v505, %v504
      %v535 = vpack.c.bf16 %v507, %v506
      %v536 = vpack.c.bf16 %v509, %v508
      %v537 = vpack.c.bf16 %v511, %v510
      %v538 = vpack.c.bf16 %v513, %v512
      %v539 = vpack.c.bf16 %v515, %v514
      %v540 = vpack.c.bf16 %v517, %v516
      %v541 = vpack.c.bf16 %v519, %v518
      %v542 = vpack.c.bf16 %v521, %v520
      %v543 = vpack.c.bf16 %v523, %v522
      %v544 = vpack.c.bf16 %v525, %v524
      %v545 = vpack.c.bf16 %v527, %v526
      %v546 = vpack.c.bf16 %v529, %v528
      %v547 = vpack.c.bf16 %v531, %v530
      %548 = vst.msk [vmem:[#allocation2] sm:$0xff] %vm258, 0
      %vm549 = vcmask 24576
      %vm550 = vsmask.f32 256
      %vm551 = vmand %vm549, %vm550
      %v552 = vld [vmem:[#allocation2] sm:$0x1]
      %v553 = vsel %vm551, 0, %v552
      %554 = vst [vmem:[#allocation2] sm:$0x1] %v553
      %v555 = vld [vmem:[#allocation2 + $0x8] sm:$0x1]
      %v556 = vsel %vm551, 0, %v555
      %557 = vst [vmem:[#allocation2 + $0x8] sm:$0x1] %v556
      %v558 = vld [vmem:[#allocation2 + $0x10] sm:$0x1]
      %v559 = vsel %vm551, 0, %v558
      %560 = vst [vmem:[#allocation2 + $0x10] sm:$0x1] %v559
      %v561 = vld [vmem:[#allocation2 + $0x18] sm:$0x1]
      %v562 = vsel %vm551, 0, %v561
      %563 = vst [vmem:[#allocation2 + $0x18] sm:$0x1] %v562
      %v564 = vld [vmem:[#allocation2 + $0x20] sm:$0x1]
      %v565 = vsel %vm551, 0, %v564
      %566 = vst [vmem:[#allocation2 + $0x20] sm:$0x1] %v565
      %v567 = vld [vmem:[#allocation2 + $0x28] sm:$0x1]
      %v568 = vsel %vm551, 0, %v567
      %569 = vst [vmem:[#allocation2 + $0x28] sm:$0x1] %v568
      %v570 = vld [vmem:[#allocation2 + $0x30] sm:$0x1]
      %v571 = vsel %vm551, 0, %v570
      %572 = vst [vmem:[#allocation2 + $0x30] sm:$0x1] %v571
      %v573 = vld [vmem:[#allocation2 + $0x38] sm:$0x1]
      %v574 = vsel %vm551, 0, %v573
      %575 = vst [vmem:[#allocation2 + $0x38] sm:$0x1] %v574
      %v576 = vld [vmem:[#allocation2 + $0x40] sm:$0x1]
      %v577 = vsel %vm551, 0, %v576
      %578 = vst [vmem:[#allocation2 + $0x40] sm:$0x1] %v577
      %v579 = vld [vmem:[#allocation2 + $0x48] sm:$0x1]
      %v580 = vsel %vm551, 0, %v579
      %581 = vst [vmem:[#allocation2 + $0x48] sm:$0x1] %v580
      %v582 = vld [vmem:[#allocation2 + $0x50] sm:$0x1]
      %v583 = vsel %vm551, 0, %v582
      %584 = vst [vmem:[#allocation2 + $0x50] sm:$0x1] %v583
      %v585 = vld [vmem:[#allocation2 + $0x58] sm:$0x1]
      %v586 = vsel %vm551, 0, %v585
      %587 = vst [vmem:[#allocation2 + $0x58] sm:$0x1] %v586
      %v588 = vld [vmem:[#allocation2 + $0x60] sm:$0x1]
      %v589 = vsel %vm551, 0, %v588
      %590 = vst [vmem:[#allocation2 + $0x60] sm:$0x1] %v589
      %v591 = vld [vmem:[#allocation2 + $0x68] sm:$0x1]
      %v592 = vsel %vm551, 0, %v591
      %593 = vst [vmem:[#allocation2 + $0x68] sm:$0x1] %v592
      %v594 = vld [vmem:[#allocation2 + $0x70] sm:$0x1]
      %v595 = vsel %vm551, 0, %v594
      %596 = vst [vmem:[#allocation2 + $0x70] sm:$0x1] %v595
      %v597 = vld [vmem:[#allocation2 + $0x78] sm:$0x1]
      %v598 = vsel %vm551, 0, %v597
      %599 = vst [vmem:[#allocation2 + $0x78] sm:$0x1] %v598
      %v601 = vshrl.u32 %v532, 16
      %v603 = vrot.slane %v601, 7
      %v604 = vshll.u32 %v532, 16
      %v606 = vor.u32 %v603, %v604
      %v608 = vshrl.u32 %v533, 16
      %v610 = vrot.slane %v608, 7
      %v611 = vshll.u32 %v533, 16
      %v613 = vor.u32 %v610, %v611
      %v615 = vshrl.u32 %v534, 16
      %v617 = vrot.slane %v615, 7
      %v618 = vshll.u32 %v534, 16
      %v620 = vor.u32 %v617, %v618
      %v622 = vshrl.u32 %v535, 16
      %v624 = vrot.slane %v622, 7
      %v625 = vshll.u32 %v535, 16
      %v627 = vor.u32 %v624, %v625
      %v629 = vshrl.u32 %v536, 16
      %v631 = vrot.slane %v629, 7
      %v632 = vshll.u32 %v536, 16
      %v634 = vor.u32 %v631, %v632
      %v636 = vshrl.u32 %v537, 16
      %v638 = vrot.slane %v636, 7
      %v639 = vshll.u32 %v537, 16
      %v641 = vor.u32 %v638, %v639
      %v643 = vshrl.u32 %v538, 16
      %v645 = vrot.slane %v643, 7
      %v646 = vshll.u32 %v538, 16
      %v648 = vor.u32 %v645, %v646
      %v650 = vshrl.u32 %v539, 16
      %v652 = vrot.slane %v650, 7
      %v653 = vshll.u32 %v539, 16
      %v655 = vor.u32 %v652, %v653
      %v657 = vshrl.u32 %v540, 16
      %v659 = vrot.slane %v657, 7
      %v660 = vshll.u32 %v540, 16
      %v662 = vor.u32 %v659, %v660
      %v664 = vshrl.u32 %v541, 16
      %v666 = vrot.slane %v664, 7
      %v667 = vshll.u32 %v541, 16
      %v669 = vor.u32 %v666, %v667
      %v671 = vshrl.u32 %v542, 16
      %v673 = vrot.slane %v671, 7
      %v674 = vshll.u32 %v542, 16
      %v676 = vor.u32 %v673, %v674
      %v678 = vshrl.u32 %v543, 16
      %v680 = vrot.slane %v678, 7
      %v681 = vshll.u32 %v543, 16
      %v683 = vor.u32 %v680, %v681
      %v685 = vshrl.u32 %v544, 16
      %v687 = vrot.slane %v685, 7
      %v688 = vshll.u32 %v544, 16
      %v690 = vor.u32 %v687, %v688
      %v692 = vshrl.u32 %v545, 16
      %v694 = vrot.slane %v692, 7
      %v695 = vshll.u32 %v545, 16
      %v697 = vor.u32 %v694, %v695
      %v699 = vshrl.u32 %v546, 16
      %v701 = vrot.slane %v699, 7
      %v702 = vshll.u32 %v546, 16
      %v704 = vor.u32 %v701, %v702
      %s720 = scalar_lea.vmem [#allocation2], 8
      %vm721 = vcmask 31744
      %vm722 = vsmask.f32 7938
      %vm723 = vmand %vm721, %vm722
      %v724 = vld [vmem:[%s720] sm:$0xff]
      %v725 = vsel %vm723, %v606, %v724
      %726 = vst [vmem:[%s720] sm:$0xff] %v725
      %v727 = vld [vmem:[%s720 + $0x8] sm:$0xff]
      %v728 = vsel %vm723, %v613, %v727
      %729 = vst [vmem:[%s720 + $0x8] sm:$0xff] %v728
      %v730 = vld [vmem:[%s720 + $0x10] sm:$0xff]
      %v731 = vsel %vm723, %v620, %v730
      %732 = vst [vmem:[%s720 + $0x10] sm:$0xff] %v731
      %v733 = vld [vmem:[%s720 + $0x18] sm:$0xff]
      %v734 = vsel %vm723, %v627, %v733
      %735 = vst [vmem:[%s720 + $0x18] sm:$0xff] %v734
      %v736 = vld [vmem:[%s720 + $0x20] sm:$0xff]
      %v737 = vsel %vm723, %v634, %v736
      %738 = vst [vmem:[%s720 + $0x20] sm:$0xff] %v737
      %v739 = vld [vmem:[%s720 + $0x28] sm:$0xff]
      %v740 = vsel %vm723, %v641, %v739
      %741 = vst [vmem:[%s720 + $0x28] sm:$0xff] %v740
      %v742 = vld [vmem:[%s720 + $0x30] sm:$0xff]
      %v743 = vsel %vm723, %v648, %v742
      %744 = vst [vmem:[%s720 + $0x30] sm:$0xff] %v743
      %v745 = vld [vmem:[%s720 + $0x38] sm:$0xff]
      %v746 = vsel %vm723, %v655, %v745
      %747 = vst [vmem:[%s720 + $0x38] sm:$0xff] %v746
      %v748 = vld [vmem:[%s720 + $0x40] sm:$0xff]
      %v749 = vsel %vm723, %v662, %v748
      %750 = vst [vmem:[%s720 + $0x40] sm:$0xff] %v749
      %v751 = vld [vmem:[%s720 + $0x48] sm:$0xff]
      %v752 = vsel %vm723, %v669, %v751
      %753 = vst [vmem:[%s720 + $0x48] sm:$0xff] %v752
      %v754 = vld [vmem:[%s720 + $0x50] sm:$0xff]
      %v755 = vsel %vm723, %v676, %v754
      %756 = vst [vmem:[%s720 + $0x50] sm:$0xff] %v755
      %v757 = vld [vmem:[%s720 + $0x58] sm:$0xff]
      %v758 = vsel %vm723, %v683, %v757
      %759 = vst [vmem:[%s720 + $0x58] sm:$0xff] %v758
      %v760 = vld [vmem:[%s720 + $0x60] sm:$0xff]
      %v761 = vsel %vm723, %v690, %v760
      %762 = vst [vmem:[%s720 + $0x60] sm:$0xff] %v761
      %v763 = vld [vmem:[%s720 + $0x68] sm:$0xff]
      %v764 = vsel %vm723, %v697, %v763
      %765 = vst [vmem:[%s720 + $0x68] sm:$0xff] %v764
      %v766 = vld [vmem:[%s720 + $0x70] sm:$0xff]
      %v767 = vsel %vm723, %v704, %v766
      %768 = vst [vmem:[%s720 + $0x70] sm:$0xff] %v767
      %vm769 = vcmask 64544
      %770 = vst.msk [vmem:[#allocation2] sm:$0xff] %vm769, 0
      %786 = vrot.lane.b32.xlu0 %v532, 4
      %v787 = vpop.permute.xlu0 %786
      %788 = vrot.lane.b32.xlu0 %v533, 4
      %v789 = vpop.permute.xlu0 %788
      %790 = vrot.lane.b32.xlu0 %v534, 4
      %v791 = vpop.permute.xlu0 %790
      %792 = vrot.lane.b32.xlu0 %v535, 4
      %v793 = vpop.permute.xlu0 %792
      %794 = vrot.lane.b32.xlu0 %v536, 4
      %v795 = vpop.permute.xlu0 %794
      %796 = vrot.lane.b32.xlu0 %v537, 4
      %v797 = vpop.permute.xlu0 %796
      %798 = vrot.lane.b32.xlu0 %v538, 4
      %v799 = vpop.permute.xlu0 %798
      %800 = vrot.lane.b32.xlu0 %v539, 4
      %v801 = vpop.permute.xlu0 %800
      %802 = vrot.lane.b32.xlu0 %v540, 4
      %v803 = vpop.permute.xlu0 %802
      %804 = vrot.lane.b32.xlu0 %v541, 4
      %v805 = vpop.permute.xlu0 %804
      %806 = vrot.lane.b32.xlu0 %v542, 4
      %v807 = vpop.permute.xlu0 %806
      %808 = vrot.lane.b32.xlu0 %v543, 4
      %v809 = vpop.permute.xlu0 %808
      %810 = vrot.lane.b32.xlu0 %v544, 4
      %v811 = vpop.permute.xlu0 %810
      %812 = vrot.lane.b32.xlu0 %v545, 4
      %v813 = vpop.permute.xlu0 %812
      %814 = vrot.lane.b32.xlu0 %v546, 4
      %v815 = vpop.permute.xlu0 %814
      %831 = vst.msk [vmem:[%s720] sm:$0xff] %vm769, %v787
      %832 = vst.msk [vmem:[%s720 + $0x8] sm:$0xff] %vm769, %v789
      %833 = vst.msk [vmem:[%s720 + $0x10] sm:$0xff] %vm769, %v791
      %834 = vst.msk [vmem:[%s720 + $0x18] sm:$0xff] %vm769, %v793
      %835 = vst.msk [vmem:[%s720 + $0x20] sm:$0xff] %vm769, %v795
      %836 = vst.msk [vmem:[%s720 + $0x28] sm:$0xff] %vm769, %v797
      %837 = vst.msk [vmem:[%s720 + $0x30] sm:$0xff] %vm769, %v799
      %838 = vst.msk [vmem:[%s720 + $0x38] sm:$0xff] %vm769, %v801
      %839 = vst.msk [vmem:[%s720 + $0x40] sm:$0xff] %vm769, %v803
      %840 = vst.msk [vmem:[%s720 + $0x48] sm:$0xff] %vm769, %v805
      %841 = vst.msk [vmem:[%s720 + $0x50] sm:$0xff] %vm769, %v807
      %842 = vst.msk [vmem:[%s720 + $0x58] sm:$0xff] %vm769, %v809
      %843 = vst.msk [vmem:[%s720 + $0x60] sm:$0xff] %vm769, %v811
      %844 = vst.msk [vmem:[%s720 + $0x68] sm:$0xff] %vm769, %v813
      %845 = vst.msk [vmem:[%s720 + $0x70] sm:$0xff] %vm769, %v815
      %vm846 = vcmask 97344
      %847 = vst.msk [vmem:[#allocation2] sm:$0xff] %vm846, 0
      %vm848 = vcmask 97351
      %vm849 = vsmask.f32 7966
      %vm850 = vmand %vm848, %vm849
      %v851 = vld [vmem:[#allocation2] sm:$0x80]
      %v852 = vsel %vm850, 0, %v851
      %853 = vst [vmem:[#allocation2] sm:$0x80] %v852
      %v854 = vld [vmem:[#allocation2 + $0x8] sm:$0x80]
      %v855 = vsel %vm850, 0, %v854
      %856 = vst [vmem:[#allocation2 + $0x8] sm:$0x80] %v855
      %v857 = vld [vmem:[#allocation2 + $0x10] sm:$0x80]
      %v858 = vsel %vm850, 0, %v857
      %859 = vst [vmem:[#allocation2 + $0x10] sm:$0x80] %v858
      %v860 = vld [vmem:[#allocation2 + $0x18] sm:$0x80]
      %v861 = vsel %vm850, 0, %v860
      %862 = vst [vmem:[#allocation2 + $0x18] sm:$0x80] %v861
      %v863 = vld [vmem:[#allocation2 + $0x20] sm:$0x80]
      %v864 = vsel %vm850, 0, %v863
      %865 = vst [vmem:[#allocation2 + $0x20] sm:$0x80] %v864
      %v866 = vld [vmem:[#allocation2 + $0x28] sm:$0x80]
      %v867 = vsel %vm850, 0, %v866
      %868 = vst [vmem:[#allocation2 + $0x28] sm:$0x80] %v867
      %v869 = vld [vmem:[#allocation2 + $0x30] sm:$0x80]
      %v870 = vsel %vm850, 0, %v869
      %871 = vst [vmem:[#allocation2 + $0x30] sm:$0x80] %v870
      %v872 = vld [vmem:[#allocation2 + $0x38] sm:$0x80]
      %v873 = vsel %vm850, 0, %v872
      %874 = vst [vmem:[#allocation2 + $0x38] sm:$0x80] %v873
      %v875 = vld [vmem:[#allocation2 + $0x40] sm:$0x80]
      %v876 = vsel %vm850, 0, %v875
      %877 = vst [vmem:[#allocation2 + $0x40] sm:$0x80] %v876
      %v878 = vld [vmem:[#allocation2 + $0x48] sm:$0x80]
      %v879 = vsel %vm850, 0, %v878
      %880 = vst [vmem:[#allocation2 + $0x48] sm:$0x80] %v879
      %v881 = vld [vmem:[#allocation2 + $0x50] sm:$0x80]
      %v882 = vsel %vm850, 0, %v881
      %883 = vst [vmem:[#allocation2 + $0x50] sm:$0x80] %v882
      %v884 = vld [vmem:[#allocation2 + $0x58] sm:$0x80]
      %v885 = vsel %vm850, 0, %v884
      %886 = vst [vmem:[#allocation2 + $0x58] sm:$0x80] %v885
      %v887 = vld [vmem:[#allocation2 + $0x60] sm:$0x80]
      %v888 = vsel %vm850, 0, %v887
      %889 = vst [vmem:[#allocation2 + $0x60] sm:$0x80] %v888
      %v890 = vld [vmem:[#allocation2 + $0x68] sm:$0x80]
      %v891 = vsel %vm850, 0, %v890
      %892 = vst [vmem:[#allocation2 + $0x68] sm:$0x80] %v891
      %v893 = vld [vmem:[#allocation2 + $0x70] sm:$0x80]
      %v894 = vsel %vm850, 0, %v893
      %895 = vst [vmem:[#allocation2 + $0x70] sm:$0x80] %v894
      %v896 = vld [vmem:[#allocation2 + $0x78] sm:$0x80]
      %v897 = vsel %vm850, 0, %v896
      %898 = vst [vmem:[#allocation2 + $0x78] sm:$0x80] %v897
      %v899 = vrot.slane %v604, 1
      %v900 = vor.u32 %v601, %v899
      %v901 = vrot.slane %v611, 1
      %v902 = vor.u32 %v608, %v901
      %v903 = vrot.slane %v618, 1
      %v904 = vor.u32 %v615, %v903
      %v905 = vrot.slane %v625, 1
      %v906 = vor.u32 %v622, %v905
      %v907 = vrot.slane %v632, 1
      %v908 = vor.u32 %v629, %v907
      %v909 = vrot.slane %v639, 1
      %v910 = vor.u32 %v636, %v909
      %v911 = vrot.slane %v646, 1
      %v912 = vor.u32 %v643, %v911
      %v913 = vrot.slane %v653, 1
      %v914 = vor.u32 %v650, %v913
      %v915 = vrot.slane %v660, 1
      %v916 = vor.u32 %v657, %v915
      %v917 = vrot.slane %v667, 1
      %v918 = vor.u32 %v664, %v917
      %v919 = vrot.slane %v674, 1
      %v920 = vor.u32 %v671, %v919
      %v921 = vrot.slane %v681, 1
      %v922 = vor.u32 %v678, %v921
      %v923 = vrot.slane %v688, 1
      %v924 = vor.u32 %v685, %v923
      %v925 = vrot.slane %v695, 1
      %v926 = vor.u32 %v692, %v925
      %v927 = vrot.slane %v702, 1
      %v928 = vor.u32 %v699, %v927
      %929 = vrot.lane.b32.xlu0 %v900, 8
      %v930 = vpop.permute.xlu0 %929
      %931 = vrot.lane.b32.xlu0 %v902, 8
      %v932 = vpop.permute.xlu0 %931
      %933 = vrot.lane.b32.xlu0 %v904, 8
      %v934 = vpop.permute.xlu0 %933
      %935 = vrot.lane.b32.xlu0 %v906, 8
      %v936 = vpop.permute.xlu0 %935
      %937 = vrot.lane.b32.xlu0 %v908, 8
      %v938 = vpop.permute.xlu0 %937
      %939 = vrot.lane.b32.xlu0 %v910, 8
      %v940 = vpop.permute.xlu0 %939
      %941 = vrot.lane.b32.xlu0 %v912, 8
      %v942 = vpop.permute.xlu0 %941
      %943 = vrot.lane.b32.xlu0 %v914, 8
      %v944 = vpop.permute.xlu0 %943
      %945 = vrot.lane.b32.xlu0 %v916, 8
      %v946 = vpop.permute.xlu0 %945
      %947 = vrot.lane.b32.xlu0 %v918, 8
      %v948 = vpop.permute.xlu0 %947
      %949 = vrot.lane.b32.xlu0 %v920, 8
      %v950 = vpop.permute.xlu0 %949
      %951 = vrot.lane.b32.xlu0 %v922, 8
      %v952 = vpop.permute.xlu0 %951
      %953 = vrot.lane.b32.xlu0 %v924, 8
      %v954 = vpop.permute.xlu0 %953
      %955 = vrot.lane.b32.xlu0 %v926, 8
      %v956 = vpop.permute.xlu0 %955
      %957 = vrot.lane.b32.xlu0 %v928, 8
      %v958 = vpop.permute.xlu0 %957
      %vm974 = vcmask 97344
      %vm975 = vsmask.f32 7424
      %vm976 = vmand %vm974, %vm975
      %v977 = vld [vmem:[%s720] sm:$0xff]
      %v978 = vsel %vm976, %v930, %v977
      %979 = vst [vmem:[%s720] sm:$0xff] %v978
      %v980 = vld [vmem:[%s720 + $0x8] sm:$0xff]
      %v981 = vsel %vm976, %v932, %v980
      %982 = vst [vmem:[%s720 + $0x8] sm:$0xff] %v981
      %v983 = vld [vmem:[%s720 + $0x10] sm:$0xff]
      %v984 = vsel %vm976, %v934, %v983
      %985 = vst [vmem:[%s720 + $0x10] sm:$0xff] %v984
      %v986 = vld [vmem:[%s720 + $0x18] sm:$0xff]
      %v987 = vsel %vm976, %v936, %v986
      %988 = vst [vmem:[%s720 + $0x18] sm:$0xff] %v987
      %v989 = vld [vmem:[%s720 + $0x20] sm:$0xff]
      %v990 = vsel %vm976, %v938, %v989
      %991 = vst [vmem:[%s720 + $0x20] sm:$0xff] %v990
      %v992 = vld [vmem:[%s720 + $0x28] sm:$0xff]
      %v993 = vsel %vm976, %v940, %v992
      %994 = vst [vmem:[%s720 + $0x28] sm:$0xff] %v993
      %v995 = vld [vmem:[%s720 + $0x30] sm:$0xff]
      %v996 = vsel %vm976, %v942, %v995
      %997 = vst [vmem:[%s720 + $0x30] sm:$0xff] %v996
      %v998 = vld [vmem:[%s720 + $0x38] sm:$0xff]
      %v999 = vsel %vm976, %v944, %v998
      %1000 = vst [vmem:[%s720 + $0x38] sm:$0xff] %v999
      %v1001 = vld [vmem:[%s720 + $0x40] sm:$0xff]
      %v1002 = vsel %vm976, %v946, %v1001
      %1003 = vst [vmem:[%s720 + $0x40] sm:$0xff] %v1002
      %v1004 = vld [vmem:[%s720 + $0x48] sm:$0xff]
      %v1005 = vsel %vm976, %v948, %v1004
      %1006 = vst [vmem:[%s720 + $0x48] sm:$0xff] %v1005
      %v1007 = vld [vmem:[%s720 + $0x50] sm:$0xff]
      %v1008 = vsel %vm976, %v950, %v1007
      %1009 = vst [vmem:[%s720 + $0x50] sm:$0xff] %v1008
      %v1010 = vld [vmem:[%s720 + $0x58] sm:$0xff]
      %v1011 = vsel %vm976, %v952, %v1010
      %1012 = vst [vmem:[%s720 + $0x58] sm:$0xff] %v1011
      %v1013 = vld [vmem:[%s720 + $0x60] sm:$0xff]
      %v1014 = vsel %vm976, %v954, %v1013
      %1015 = vst [vmem:[%s720 + $0x60] sm:$0xff] %v1014
      %v1016 = vld [vmem:[%s720 + $0x68] sm:$0xff]
      %v1017 = vsel %vm976, %v956, %v1016
      %1018 = vst [vmem:[%s720 + $0x68] sm:$0xff] %v1017
      %v1019 = vld [vmem:[%s720 + $0x70] sm:$0xff]
      %v1020 = vsel %vm976, %v958, %v1019
      %1021 = vst [vmem:[%s720 + $0x70] sm:$0xff] %v1020
      %vm1022 = vcmask 122976
      %vm1023 = vmand %vm1022, %vm550
      %v1024 = vld [vmem:[#allocation2] sm:$0x1]
      %v1025 = vsel %vm1023, 0, %v1024
      %1026 = vst [vmem:[#allocation2] sm:$0x1] %v1025
      %v1027 = vld [vmem:[#allocation2 + $0x8] sm:$0x1]
      %v1028 = vsel %vm1023, 0, %v1027
      %1029 = vst [vmem:[#allocation2 + $0x8] sm:$0x1] %v1028
      %v1030 = vld [vmem:[#allocation2 + $0x10] sm:$0x1]
      %v1031 = vsel %vm1023, 0, %v1030
      %1032 = vst [vmem:[#allocation2 + $0x10] sm:$0x1] %v1031
      %v1033 = vld [vmem:[#allocation2 + $0x18] sm:$0x1]
      %v1034 = vsel %vm1023, 0, %v1033
      %1035 = vst [vmem:[#allocation2 + $0x18] sm:$0x1] %v1034
      %v1036 = vld [vmem:[#allocation2 + $0x20] sm:$0x1]
      %v1037 = vsel %vm1023, 0, %v1036
      %1038 = vst [vmem:[#allocation2 + $0x20] sm:$0x1] %v1037
      %v1039 = vld [vmem:[#allocation2 + $0x28] sm:$0x1]
      %v1040 = vsel %vm1023, 0, %v1039
      %1041 = vst [vmem:[#allocation2 + $0x28] sm:$0x1] %v1040
      %v1042 = vld [vmem:[#allocation2 + $0x30] sm:$0x1]
      %v1043 = vsel %vm1023, 0, %v1042
      %1044 = vst [vmem:[#allocation2 + $0x30] sm:$0x1] %v1043
      %v1045 = vld [vmem:[#allocation2 + $0x38] sm:$0x1]
      %v1046 = vsel %vm1023, 0, %v1045
      %1047 = vst [vmem:[#allocation2 + $0x38] sm:$0x1] %v1046
      %v1048 = vld [vmem:[#allocation2 + $0x40] sm:$0x1]
      %v1049 = vsel %vm1023, 0, %v1048
      %1050 = vst [vmem:[#allocation2 + $0x40] sm:$0x1] %v1049
      %v1051 = vld [vmem:[#allocation2 + $0x48] sm:$0x1]
      %v1052 = vsel %vm1023, 0, %v1051
      %1053 = vst [vmem:[#allocation2 + $0x48] sm:$0x1] %v1052
      %v1054 = vld [vmem:[#allocation2 + $0x50] sm:$0x1]
      %v1055 = vsel %vm1023, 0, %v1054
      %1056 = vst [vmem:[#allocation2 + $0x50] sm:$0x1] %v1055
      %v1057 = vld [vmem:[#allocation2 + $0x58] sm:$0x1]
      %v1058 = vsel %vm1023, 0, %v1057
      %1059 = vst [vmem:[#allocation2 + $0x58] sm:$0x1] %v1058
      %v1060 = vld [vmem:[#allocation2 + $0x60] sm:$0x1]
      %v1061 = vsel %vm1023, 0, %v1060
      %1062 = vst [vmem:[#allocation2 + $0x60] sm:$0x1] %v1061
      %v1063 = vld [vmem:[#allocation2 + $0x68] sm:$0x1]
      %v1064 = vsel %vm1023, 0, %v1063
      %1065 = vst [vmem:[#allocation2 + $0x68] sm:$0x1] %v1064
      %v1066 = vld [vmem:[#allocation2 + $0x70] sm:$0x1]
      %v1067 = vsel %vm1023, 0, %v1066
      %1068 = vst [vmem:[#allocation2 + $0x70] sm:$0x1] %v1067
      %v1069 = vld [vmem:[#allocation2 + $0x78] sm:$0x1]
      %v1070 = vsel %vm1023, 0, %v1069
      %1071 = vst [vmem:[#allocation2 + $0x78] sm:$0x1] %v1070
      %v1073 = vshrl.u32 %v547, 16
      %v1075 = vrot.slane %v1073, 7
      %v1076 = vshll.u32 %v547, 16
      %v1078 = vor.u32 %v1075, %v1076
      %1079 = vrot.lane.b32.xlu0 %v606, 12
      %v1080 = vpop.permute.xlu0 %1079
      %1081 = vrot.lane.b32.xlu0 %v613, 12
      %v1082 = vpop.permute.xlu0 %1081
      %1083 = vrot.lane.b32.xlu0 %v620, 12
      %v1084 = vpop.permute.xlu0 %1083
      %1085 = vrot.lane.b32.xlu0 %v627, 12
      %v1086 = vpop.permute.xlu0 %1085
      %1087 = vrot.lane.b32.xlu0 %v634, 12
      %v1088 = vpop.permute.xlu0 %1087
      %1089 = vrot.lane.b32.xlu0 %v641, 12
      %v1090 = vpop.permute.xlu0 %1089
      %1091 = vrot.lane.b32.xlu0 %v648, 12
      %v1092 = vpop.permute.xlu0 %1091
      %1093 = vrot.lane.b32.xlu0 %v655, 12
      %v1094 = vpop.permute.xlu0 %1093
      %1095 = vrot.lane.b32.xlu0 %v662, 12
      %v1096 = vpop.permute.xlu0 %1095
      %1097 = vrot.lane.b32.xlu0 %v669, 12
      %v1098 = vpop.permute.xlu0 %1097
      %1099 = vrot.lane.b32.xlu0 %v676, 12
      %v1100 = vpop.permute.xlu0 %1099
      %1101 = vrot.lane.b32.xlu0 %v683, 12
      %v1102 = vpop.permute.xlu0 %1101
      %1103 = vrot.lane.b32.xlu0 %v690, 12
      %v1104 = vpop.permute.xlu0 %1103
      %1105 = vrot.lane.b32.xlu0 %v697, 12
      %v1106 = vpop.permute.xlu0 %1105
      %1107 = vrot.lane.b32.xlu0 %v704, 12
      %v1108 = vpop.permute.xlu0 %1107
      %1109 = vrot.lane.b32.xlu0 %v1078, 12
      %v1110 = vpop.permute.xlu0 %1109
      %vm1127 = vcmask 130144
      %vm1128 = vmand %vm1127, %vm722
      %v1129 = vld [vmem:[#allocation2] sm:$0xff]
      %v1130 = vsel %vm1128, %v1080, %v1129
      %1131 = vst [vmem:[#allocation2] sm:$0xff] %v1130
      %v1132 = vld [vmem:[#allocation2 + $0x8] sm:$0xff]
      %v1133 = vsel %vm1128, %v1082, %v1132
      %1134 = vst [vmem:[#allocation2 + $0x8] sm:$0xff] %v1133
      %v1135 = vld [vmem:[#allocation2 + $0x10] sm:$0xff]
      %v1136 = vsel %vm1128, %v1084, %v1135
      %1137 = vst [vmem:[#allocation2 + $0x10] sm:$0xff] %v1136
      %v1138 = vld [vmem:[#allocation2 + $0x18] sm:$0xff]
      %v1139 = vsel %vm1128, %v1086, %v1138
      %1140 = vst [vmem:[#allocation2 + $0x18] sm:$0xff] %v1139
      %v1141 = vld [vmem:[#allocation2 + $0x20] sm:$0xff]
      %v1142 = vsel %vm1128, %v1088, %v1141
      %1143 = vst [vmem:[#allocation2 + $0x20] sm:$0xff] %v1142
      %v1144 = vld [vmem:[#allocation2 + $0x28] sm:$0xff]
      %v1145 = vsel %vm1128, %v1090, %v1144
      %1146 = vst [vmem:[#allocation2 + $0x28] sm:$0xff] %v1145
      %v1147 = vld [vmem:[#allocation2 + $0x30] sm:$0xff]
      %v1148 = vsel %vm1128, %v1092, %v1147
      %1149 = vst [vmem:[#allocation2 + $0x30] sm:$0xff] %v1148
      %v1150 = vld [vmem:[#allocation2 + $0x38] sm:$0xff]
      %v1151 = vsel %vm1128, %v1094, %v1150
      %1152 = vst [vmem:[#allocation2 + $0x38] sm:$0xff] %v1151
      %v1153 = vld [vmem:[#allocation2 + $0x40] sm:$0xff]
      %v1154 = vsel %vm1128, %v1096, %v1153
      %1155 = vst [vmem:[#allocation2 + $0x40] sm:$0xff] %v1154
      %v1156 = vld [vmem:[#allocation2 + $0x48] sm:$0xff]
      %v1157 = vsel %vm1128, %v1098, %v1156
      %1158 = vst [vmem:[#allocation2 + $0x48] sm:$0xff] %v1157
      %v1159 = vld [vmem:[#allocation2 + $0x50] sm:$0xff]
      %v1160 = vsel %vm1128, %v1100, %v1159
      %1161 = vst [vmem:[#allocation2 + $0x50] sm:$0xff] %v1160
      %v1162 = vld [vmem:[#allocation2 + $0x58] sm:$0xff]
      %v1163 = vsel %vm1128, %v1102, %v1162
      %1164 = vst [vmem:[#allocation2 + $0x58] sm:$0xff] %v1163
      %v1165 = vld [vmem:[#allocation2 + $0x60] sm:$0xff]
      %v1166 = vsel %vm1128, %v1104, %v1165
      %1167 = vst [vmem:[#allocation2 + $0x60] sm:$0xff] %v1166
      %v1168 = vld [vmem:[#allocation2 + $0x68] sm:$0xff]
      %v1169 = vsel %vm1128, %v1106, %v1168
      %1170 = vst [vmem:[#allocation2 + $0x68] sm:$0xff] %v1169
      %v1171 = vld [vmem:[#allocation2 + $0x70] sm:$0xff]
      %v1172 = vsel %vm1128, %v1108, %v1171
      %1173 = vst [vmem:[#allocation2 + $0x70] sm:$0xff] %v1172
      %v1174 = vld [vmem:[#allocation2 + $0x78] sm:$0xff]
      %v1175 = vsel %vm1128, %v1110, %v1174
      %1176 = vst [vmem:[#allocation2 + $0x78] sm:$0xff] %v1175
      %1178 = vrot.lane.b32.xlu0 %v532, 16
      %v1179 = vpop.permute.xlu0 %1178
      %1180 = vrot.lane.b32.xlu0 %v533, 16
      %v1181 = vpop.permute.xlu0 %1180
      %1182 = vrot.lane.b32.xlu0 %v534, 16
      %v1183 = vpop.permute.xlu0 %1182
      %1184 = vrot.lane.b32.xlu0 %v535, 16
      %v1185 = vpop.permute.xlu0 %1184
      %1186 = vrot.lane.b32.xlu0 %v536, 16
      %v1187 = vpop.permute.xlu0 %1186
      %1188 = vrot.lane.b32.xlu0 %v537, 16
      %v1189 = vpop.permute.xlu0 %1188
      %1190 = vrot.lane.b32.xlu0 %v538, 16
      %v1191 = vpop.permute.xlu0 %1190
      %1192 = vrot.lane.b32.xlu0 %v539, 16
      %v1193 = vpop.permute.xlu0 %1192
      %1194 = vrot.lane.b32.xlu0 %v540, 16
      %v1195 = vpop.permute.xlu0 %1194
      %1196 = vrot.lane.b32.xlu0 %v541, 16
      %v1197 = vpop.permute.xlu0 %1196
      %1198 = vrot.lane.b32.xlu0 %v542, 16
      %v1199 = vpop.permute.xlu0 %1198
      %1200 = vrot.lane.b32.xlu0 %v543, 16
      %v1201 = vpop.permute.xlu0 %1200
      %1202 = vrot.lane.b32.xlu0 %v544, 16
      %v1203 = vpop.permute.xlu0 %1202
      %1204 = vrot.lane.b32.xlu0 %v545, 16
      %v1205 = vpop.permute.xlu0 %1204
      %1206 = vrot.lane.b32.xlu0 %v546, 16
      %v1207 = vpop.permute.xlu0 %1206
      %1208 = vrot.lane.b32.xlu0 %v547, 16
      %v1209 = vpop.permute.xlu0 %1208
      %vm1226 = vcmask 162944
      %1227 = vst.msk [vmem:[#allocation2] sm:$0xff] %vm1226, %v1179
      %1228 = vst.msk [vmem:[#allocation2 + $0x8] sm:$0xff] %vm1226, %v1181
      %1229 = vst.msk [vmem:[#allocation2 + $0x10] sm:$0xff] %vm1226, %v1183
      %1230 = vst.msk [vmem:[#allocation2 + $0x18] sm:$0xff] %vm1226, %v1185
      %1231 = vst.msk [vmem:[#allocation2 + $0x20] sm:$0xff] %vm1226, %v1187
      %1232 = vst.msk [vmem:[#allocation2 + $0x28] sm:$0xff] %vm1226, %v1189
      %1233 = vst.msk [vmem:[#allocation2 + $0x30] sm:$0xff] %vm1226, %v1191
      %1234 = vst.msk [vmem:[#allocation2 + $0x38] sm:$0xff] %vm1226, %v1193
      %1235 = vst.msk [vmem:[#allocation2 + $0x40] sm:$0xff] %vm1226, %v1195
      %1236 = vst.msk [vmem:[#allocation2 + $0x48] sm:$0xff] %vm1226, %v1197
      %1237 = vst.msk [vmem:[#allocation2 + $0x50] sm:$0xff] %vm1226, %v1199
      %1238 = vst.msk [vmem:[#allocation2 + $0x58] sm:$0xff] %vm1226, %v1201
      %1239 = vst.msk [vmem:[#allocation2 + $0x60] sm:$0xff] %vm1226, %v1203
      %1240 = vst.msk [vmem:[#allocation2 + $0x68] sm:$0xff] %vm1226, %v1205
      %1241 = vst.msk [vmem:[#allocation2 + $0x70] sm:$0xff] %vm1226, %v1207
      %1242 = vst.msk [vmem:[#allocation2 + $0x78] sm:$0xff] %vm1226, %v1209
      %vm1243 = vcmask 195751
      %vm1244 = vmand %vm1243, %vm849
      %v1245 = vld [vmem:[#allocation2] sm:$0x80]
      %v1246 = vsel %vm1244, 0, %v1245
      %1247 = vst [vmem:[#allocation2] sm:$0x80] %v1246
      %v1248 = vld [vmem:[#allocation2 + $0x8] sm:$0x80]
      %v1249 = vsel %vm1244, 0, %v1248
      %1250 = vst [vmem:[#allocation2 + $0x8] sm:$0x80] %v1249
      %v1251 = vld [vmem:[#allocation2 + $0x10] sm:$0x80]
      %v1252 = vsel %vm1244, 0, %v1251
      %1253 = vst [vmem:[#allocation2 + $0x10] sm:$0x80] %v1252
      %v1254 = vld [vmem:[#allocation2 + $0x18] sm:$0x80]
      %v1255 = vsel %vm1244, 0, %v1254
      %1256 = vst [vmem:[#allocation2 + $0x18] sm:$0x80] %v1255
      %v1257 = vld [vmem:[#allocation2 + $0x20] sm:$0x80]
      %v1258 = vsel %vm1244, 0, %v1257
      %1259 = vst [vmem:[#allocation2 + $0x20] sm:$0x80] %v1258
      %v1260 = vld [vmem:[#allocation2 + $0x28] sm:$0x80]
      %v1261 = vsel %vm1244, 0, %v1260
      %1262 = vst [vmem:[#allocation2 + $0x28] sm:$0x80] %v1261
      %v1263 = vld [vmem:[#allocation2 + $0x30] sm:$0x80]
      %v1264 = vsel %vm1244, 0, %v1263
      %1265 = vst [vmem:[#allocation2 + $0x30] sm:$0x80] %v1264
      %v1266 = vld [vmem:[#allocation2 + $0x38] sm:$0x80]
      %v1267 = vsel %vm1244, 0, %v1266
      %1268 = vst [vmem:[#allocation2 + $0x38] sm:$0x80] %v1267
      %v1269 = vld [vmem:[#allocation2 + $0x40] sm:$0x80]
      %v1270 = vsel %vm1244, 0, %v1269
      %1271 = vst [vmem:[#allocation2 + $0x40] sm:$0x80] %v1270
      %v1272 = vld [vmem:[#allocation2 + $0x48] sm:$0x80]
      %v1273 = vsel %vm1244, 0, %v1272
      %1274 = vst [vmem:[#allocation2 + $0x48] sm:$0x80] %v1273
      %v1275 = vld [vmem:[#allocation2 + $0x50] sm:$0x80]
      %v1276 = vsel %vm1244, 0, %v1275
      %1277 = vst [vmem:[#allocation2 + $0x50] sm:$0x80] %v1276
      %v1278 = vld [vmem:[#allocation2 + $0x58] sm:$0x80]
      %v1279 = vsel %vm1244, 0, %v1278
      %1280 = vst [vmem:[#allocation2 + $0x58] sm:$0x80] %v1279
      %v1281 = vld [vmem:[#allocation2 + $0x60] sm:$0x80]
      %v1282 = vsel %vm1244, 0, %v1281
      %1283 = vst [vmem:[#allocation2 + $0x60] sm:$0x80] %v1282
      %v1284 = vld [vmem:[#allocation2 + $0x68] sm:$0x80]
      %v1285 = vsel %vm1244, 0, %v1284
      %1286 = vst [vmem:[#allocation2 + $0x68] sm:$0x80] %v1285
      %v1287 = vld [vmem:[#allocation2 + $0x70] sm:$0x80]
      %v1288 = vsel %vm1244, 0, %v1287
      %1289 = vst [vmem:[#allocation2 + $0x70] sm:$0x80] %v1288
      %v1290 = vld [vmem:[#allocation2 + $0x78] sm:$0x80]
      %v1291 = vsel %vm1244, 0, %v1290
      %1292 = vst [vmem:[#allocation2 + $0x78] sm:$0x80] %v1291
      %v1293 = vrot.slane %v1076, 1
      %v1294 = vor.u32 %v1073, %v1293
      %1295 = vrot.lane.b32.xlu0 %v900, 20
      %v1296 = vpop.permute.xlu0 %1295
      %1297 = vrot.lane.b32.xlu0 %v902, 20
      %v1298 = vpop.permute.xlu0 %1297
      %1299 = vrot.lane.b32.xlu0 %v904, 20
      %v1300 = vpop.permute.xlu0 %1299
      %1301 = vrot.lane.b32.xlu0 %v906, 20
      %v1302 = vpop.permute.xlu0 %1301
      %1303 = vrot.lane.b32.xlu0 %v908, 20
      %v1304 = vpop.permute.xlu0 %1303
      %1305 = vrot.lane.b32.xlu0 %v910, 20
      %v1306 = vpop.permute.xlu0 %1305
      %1307 = vrot.lane.b32.xlu0 %v912, 20
      %v1308 = vpop.permute.xlu0 %1307
      %1309 = vrot.lane.b32.xlu0 %v914, 20
      %v1310 = vpop.permute.xlu0 %1309
      %1311 = vrot.lane.b32.xlu0 %v916, 20
      %v1312 = vpop.permute.xlu0 %1311
      %1313 = vrot.lane.b32.xlu0 %v918, 20
      %v1314 = vpop.permute.xlu0 %1313
      %1315 = vrot.lane.b32.xlu0 %v920, 20
      %v1316 = vpop.permute.xlu0 %1315
      %1317 = vrot.lane.b32.xlu0 %v922, 20
      %v1318 = vpop.permute.xlu0 %1317
      %1319 = vrot.lane.b32.xlu0 %v924, 20
      %v1320 = vpop.permute.xlu0 %1319
      %1321 = vrot.lane.b32.xlu0 %v926, 20
      %v1322 = vpop.permute.xlu0 %1321
      %1323 = vrot.lane.b32.xlu0 %v928, 20
      %v1324 = vpop.permute.xlu0 %1323
      %1325 = vrot.lane.b32.xlu0 %v1294, 20
      %v1326 = vpop.permute.xlu0 %1325
      %vm1343 = vcmask 195744
      %vm1344 = vmand %vm1343, %vm975
      %v1345 = vld [vmem:[#allocation2] sm:$0xff]
      %v1346 = vsel %vm1344, %v1296, %v1345
      %1347 = vst [vmem:[#allocation2] sm:$0xff] %v1346
      %v1348 = vld [vmem:[#allocation2 + $0x8] sm:$0xff]
      %v1349 = vsel %vm1344, %v1298, %v1348
      %1350 = vst [vmem:[#allocation2 + $0x8] sm:$0xff] %v1349
      %v1351 = vld [vmem:[#allocation2 + $0x10] sm:$0xff]
      %v1352 = vsel %vm1344, %v1300, %v1351
      %1353 = vst [vmem:[#allocation2 + $0x10] sm:$0xff] %v1352
      %v1354 = vld [vmem:[#allocation2 + $0x18] sm:$0xff]
      %v1355 = vsel %vm1344, %v1302, %v1354
      %1356 = vst [vmem:[#allocation2 + $0x18] sm:$0xff] %v1355
      %v1357 = vld [vmem:[#allocation2 + $0x20] sm:$0xff]
      %v1358 = vsel %vm1344, %v1304, %v1357
      %1359 = vst [vmem:[#allocation2 + $0x20] sm:$0xff] %v1358
      %v1360 = vld [vmem:[#allocation2 + $0x28] sm:$0xff]
      %v1361 = vsel %vm1344, %v1306, %v1360
      %1362 = vst [vmem:[#allocation2 + $0x28] sm:$0xff] %v1361
      %v1363 = vld [vmem:[#allocation2 + $0x30] sm:$0xff]
      %v1364 = vsel %vm1344, %v1308, %v1363
      %1365 = vst [vmem:[#allocation2 + $0x30] sm:$0xff] %v1364
      %v1366 = vld [vmem:[#allocation2 + $0x38] sm:$0xff]
      %v1367 = vsel %vm1344, %v1310, %v1366
      %1368 = vst [vmem:[#allocation2 + $0x38] sm:$0xff] %v1367
      %v1369 = vld [vmem:[#allocation2 + $0x40] sm:$0xff]
      %v1370 = vsel %vm1344, %v1312, %v1369
      %1371 = vst [vmem:[#allocation2 + $0x40] sm:$0xff] %v1370
      %v1372 = vld [vmem:[#allocation2 + $0x48] sm:$0xff]
      %v1373 = vsel %vm1344, %v1314, %v1372
      %1374 = vst [vmem:[#allocation2 + $0x48] sm:$0xff] %v1373
      %v1375 = vld [vmem:[#allocation2 + $0x50] sm:$0xff]
      %v1376 = vsel %vm1344, %v1316, %v1375
      %1377 = vst [vmem:[#allocation2 + $0x50] sm:$0xff] %v1376
      %v1378 = vld [vmem:[#allocation2 + $0x58] sm:$0xff]
      %v1379 = vsel %vm1344, %v1318, %v1378
      %1380 = vst [vmem:[#allocation2 + $0x58] sm:$0xff] %v1379
      %v1381 = vld [vmem:[#allocation2 + $0x60] sm:$0xff]
      %v1382 = vsel %vm1344, %v1320, %v1381
      %1383 = vst [vmem:[#allocation2 + $0x60] sm:$0xff] %v1382
      %v1384 = vld [vmem:[#allocation2 + $0x68] sm:$0xff]
      %v1385 = vsel %vm1344, %v1322, %v1384
      %1386 = vst [vmem:[#allocation2 + $0x68] sm:$0xff] %v1385
      %v1387 = vld [vmem:[#allocation2 + $0x70] sm:$0xff]
      %v1388 = vsel %vm1344, %v1324, %v1387
      %1389 = vst [vmem:[#allocation2 + $0x70] sm:$0xff] %v1388
      %v1390 = vld [vmem:[#allocation2 + $0x78] sm:$0xff]
      %v1391 = vsel %vm1344, %v1326, %v1390
      %1392 = vst [vmem:[#allocation2 + $0x78] sm:$0xff] %v1391
      %s1393 = scalar_lea.vmem [#allocation2], 120
      %vm1394 = vcmask 228544
      %1395 = vst.msk [vmem:[%s1393] sm:$0xff] %vm1394, 0
      %vm1396 = vcmask 221376
      %vm1397 = vmand %vm1396, %vm550
      %v1398 = vld [vmem:[#allocation2] sm:$0x1]
      %v1399 = vsel %vm1397, 0, %v1398
      %1400 = vst [vmem:[#allocation2] sm:$0x1] %v1399
      %v1401 = vld [vmem:[#allocation2 + $0x8] sm:$0x1]
      %v1402 = vsel %vm1397, 0, %v1401
      %1403 = vst [vmem:[#allocation2 + $0x8] sm:$0x1] %v1402
      %v1404 = vld [vmem:[#allocation2 + $0x10] sm:$0x1]
      %v1405 = vsel %vm1397, 0, %v1404
      %1406 = vst [vmem:[#allocation2 + $0x10] sm:$0x1] %v1405
      %v1407 = vld [vmem:[#allocation2 + $0x18] sm:$0x1]
      %v1408 = vsel %vm1397, 0, %v1407
      %1409 = vst [vmem:[#allocation2 + $0x18] sm:$0x1] %v1408
      %v1410 = vld [vmem:[#allocation2 + $0x20] sm:$0x1]
      %v1411 = vsel %vm1397, 0, %v1410
      %1412 = vst [vmem:[#allocation2 + $0x20] sm:$0x1] %v1411
      %v1413 = vld [vmem:[#allocation2 + $0x28] sm:$0x1]
      %v1414 = vsel %vm1397, 0, %v1413
      %1415 = vst [vmem:[#allocation2 + $0x28] sm:$0x1] %v1414
      %v1416 = vld [vmem:[#allocation2 + $0x30] sm:$0x1]
      %v1417 = vsel %vm1397, 0, %v1416
      %1418 = vst [vmem:[#allocation2 + $0x30] sm:$0x1] %v1417
      %v1419 = vld [vmem:[#allocation2 + $0x38] sm:$0x1]
      %v1420 = vsel %vm1397, 0, %v1419
      %1421 = vst [vmem:[#allocation2 + $0x38] sm:$0x1] %v1420
      %v1422 = vld [vmem:[#allocation2 + $0x40] sm:$0x1]
      %v1423 = vsel %vm1397, 0, %v1422
      %1424 = vst [vmem:[#allocation2 + $0x40] sm:$0x1] %v1423
      %v1425 = vld [vmem:[#allocation2 + $0x48] sm:$0x1]
      %v1426 = vsel %vm1397, 0, %v1425
      %1427 = vst [vmem:[#allocation2 + $0x48] sm:$0x1] %v1426
      %v1428 = vld [vmem:[#allocation2 + $0x50] sm:$0x1]
      %v1429 = vsel %vm1397, 0, %v1428
      %1430 = vst [vmem:[#allocation2 + $0x50] sm:$0x1] %v1429
      %v1431 = vld [vmem:[#allocation2 + $0x58] sm:$0x1]
      %v1432 = vsel %vm1397, 0, %v1431
      %1433 = vst [vmem:[#allocation2 + $0x58] sm:$0x1] %v1432
      %v1434 = vld [vmem:[#allocation2 + $0x60] sm:$0x1]
      %v1435 = vsel %vm1397, 0, %v1434
      %1436 = vst [vmem:[#allocation2 + $0x60] sm:$0x1] %v1435
      %v1437 = vld [vmem:[#allocation2 + $0x68] sm:$0x1]
      %v1438 = vsel %vm1397, 0, %v1437
      %1439 = vst [vmem:[#allocation2 + $0x68] sm:$0x1] %v1438
      %v1440 = vld [vmem:[#allocation2 + $0x70] sm:$0x1]
      %v1441 = vsel %vm1397, 0, %v1440
      %1442 = vst [vmem:[#allocation2 + $0x70] sm:$0x1] %v1441
      %v1443 = vld [vmem:[#allocation2 + $0x78] sm:$0x1]
      %v1444 = vsel %vm1397, 0, %v1443
      %1445 = vst [vmem:[#allocation2 + $0x78] sm:$0x1] %v1444
      %1446 = vrot.lane.b32.xlu0 %v613, 24
      %v1447 = vpop.permute.xlu0 %1446
      %1448 = vrot.lane.b32.xlu0 %v620, 24
      %v1449 = vpop.permute.xlu0 %1448
      %1450 = vrot.lane.b32.xlu0 %v627, 24
      %v1451 = vpop.permute.xlu0 %1450
      %1452 = vrot.lane.b32.xlu0 %v634, 24
      %v1453 = vpop.permute.xlu0 %1452
      %1454 = vrot.lane.b32.xlu0 %v641, 24
      %v1455 = vpop.permute.xlu0 %1454
      %1456 = vrot.lane.b32.xlu0 %v648, 24
      %v1457 = vpop.permute.xlu0 %1456
      %1458 = vrot.lane.b32.xlu0 %v655, 24
      %v1459 = vpop.permute.xlu0 %1458
      %1460 = vrot.lane.b32.xlu0 %v662, 24
      %v1461 = vpop.permute.xlu0 %1460
      %1462 = vrot.lane.b32.xlu0 %v669, 24
      %v1463 = vpop.permute.xlu0 %1462
      %1464 = vrot.lane.b32.xlu0 %v676, 24
      %v1465 = vpop.permute.xlu0 %1464
      %1466 = vrot.lane.b32.xlu0 %v683, 24
      %v1467 = vpop.permute.xlu0 %1466
      %1468 = vrot.lane.b32.xlu0 %v690, 24
      %v1469 = vpop.permute.xlu0 %1468
      %1470 = vrot.lane.b32.xlu0 %v697, 24
      %v1471 = vpop.permute.xlu0 %1470
      %1472 = vrot.lane.b32.xlu0 %v704, 24
      %v1473 = vpop.permute.xlu0 %1472
      %1474 = vrot.lane.b32.xlu0 %v1078, 24
      %v1475 = vpop.permute.xlu0 %1474
      %vm1491 = vcmask 228544
      %vm1492 = vmand %vm1491, %vm722
      %v1493 = vld [vmem:[#allocation2] sm:$0xff]
      %v1494 = vsel %vm1492, %v1447, %v1493
      %1495 = vst [vmem:[#allocation2] sm:$0xff] %v1494
      %v1496 = vld [vmem:[#allocation2 + $0x8] sm:$0xff]
      %v1497 = vsel %vm1492, %v1449, %v1496
      %1498 = vst [vmem:[#allocation2 + $0x8] sm:$0xff] %v1497
      %v1499 = vld [vmem:[#allocation2 + $0x10] sm:$0xff]
      %v1500 = vsel %vm1492, %v1451, %v1499
      %1501 = vst [vmem:[#allocation2 + $0x10] sm:$0xff] %v1500
      %v1502 = vld [vmem:[#allocation2 + $0x18] sm:$0xff]
      %v1503 = vsel %vm1492, %v1453, %v1502
      %1504 = vst [vmem:[#allocation2 + $0x18] sm:$0xff] %v1503
      %v1505 = vld [vmem:[#allocation2 + $0x20] sm:$0xff]
      %v1506 = vsel %vm1492, %v1455, %v1505
      %1507 = vst [vmem:[#allocation2 + $0x20] sm:$0xff] %v1506
      %v1508 = vld [vmem:[#allocation2 + $0x28] sm:$0xff]
      %v1509 = vsel %vm1492, %v1457, %v1508
      %1510 = vst [vmem:[#allocation2 + $0x28] sm:$0xff] %v1509
      %v1511 = vld [vmem:[#allocation2 + $0x30] sm:$0xff]
      %v1512 = vsel %vm1492, %v1459, %v1511
      %1513 = vst [vmem:[#allocation2 + $0x30] sm:$0xff] %v1512
      %v1514 = vld [vmem:[#allocation2 + $0x38] sm:$0xff]
      %v1515 = vsel %vm1492, %v1461, %v1514
      %1516 = vst [vmem:[#allocation2 + $0x38] sm:$0xff] %v1515
      %v1517 = vld [vmem:[#allocation2 + $0x40] sm:$0xff]
      %v1518 = vsel %vm1492, %v1463, %v1517
      %1519 = vst [vmem:[#allocation2 + $0x40] sm:$0xff] %v1518
      %v1520 = vld [vmem:[#allocation2 + $0x48] sm:$0xff]
      %v1521 = vsel %vm1492, %v1465, %v1520
      %1522 = vst [vmem:[#allocation2 + $0x48] sm:$0xff] %v1521
      %v1523 = vld [vmem:[#allocation2 + $0x50] sm:$0xff]
      %v1524 = vsel %vm1492, %v1467, %v1523
      %1525 = vst [vmem:[#allocation2 + $0x50] sm:$0xff] %v1524
      %v1526 = vld [vmem:[#allocation2 + $0x58] sm:$0xff]
      %v1527 = vsel %vm1492, %v1469, %v1526
      %1528 = vst [vmem:[#allocation2 + $0x58] sm:$0xff] %v1527
      %v1529 = vld [vmem:[#allocation2 + $0x60] sm:$0xff]
      %v1530 = vsel %vm1492, %v1471, %v1529
      %1531 = vst [vmem:[#allocation2 + $0x60] sm:$0xff] %v1530
      %v1532 = vld [vmem:[#allocation2 + $0x68] sm:$0xff]
      %v1533 = vsel %vm1492, %v1473, %v1532
      %1534 = vst [vmem:[#allocation2 + $0x68] sm:$0xff] %v1533
      %v1535 = vld [vmem:[#allocation2 + $0x70] sm:$0xff]
      %v1536 = vsel %vm1492, %v1475, %v1535
      %1537 = vst [vmem:[#allocation2 + $0x70] sm:$0xff] %v1536
      %vm1538 = vcmask 261344
      %1539 = vst.msk [vmem:[%s1393] sm:$0xff] %vm1538, 0
      %1540 = vrot.lane.b32.xlu0 %v533, 28
      %v1541 = vpop.permute.xlu0 %1540
      %1542 = vrot.lane.b32.xlu0 %v534, 28
      %v1543 = vpop.permute.xlu0 %1542
      %1544 = vrot.lane.b32.xlu0 %v535, 28
      %v1545 = vpop.permute.xlu0 %1544
      %1546 = vrot.lane.b32.xlu0 %v536, 28
      %v1547 = vpop.permute.xlu0 %1546
      %1548 = vrot.lane.b32.xlu0 %v537, 28
      %v1549 = vpop.permute.xlu0 %1548
      %1550 = vrot.lane.b32.xlu0 %v538, 28
      %v1551 = vpop.permute.xlu0 %1550
      %1552 = vrot.lane.b32.xlu0 %v539, 28
      %v1553 = vpop.permute.xlu0 %1552
      %1554 = vrot.lane.b32.xlu0 %v540, 28
      %v1555 = vpop.permute.xlu0 %1554
      %1556 = vrot.lane.b32.xlu0 %v541, 28
      %v1557 = vpop.permute.xlu0 %1556
      %1558 = vrot.lane.b32.xlu0 %v542, 28
      %v1559 = vpop.permute.xlu0 %1558
      %1560 = vrot.lane.b32.xlu0 %v543, 28
      %v1561 = vpop.permute.xlu0 %1560
      %1562 = vrot.lane.b32.xlu0 %v544, 28
      %v1563 = vpop.permute.xlu0 %1562
      %1564 = vrot.lane.b32.xlu0 %v545, 28
      %v1565 = vpop.permute.xlu0 %1564
      %1566 = vrot.lane.b32.xlu0 %v546, 28
      %v1567 = vpop.permute.xlu0 %1566
      %1568 = vrot.lane.b32.xlu0 %v547, 28
      %v1569 = vpop.permute.xlu0 %1568
      %1585 = vst.msk [vmem:[#allocation2] sm:$0xff] %vm1538, %v1541
      %1586 = vst.msk [vmem:[#allocation2 + $0x8] sm:$0xff] %vm1538, %v1543
      %1587 = vst.msk [vmem:[#allocation2 + $0x10] sm:$0xff] %vm1538, %v1545
      %1588 = vst.msk [vmem:[#allocation2 + $0x18] sm:$0xff] %vm1538, %v1547
      %1589 = vst.msk [vmem:[#allocation2 + $0x20] sm:$0xff] %vm1538, %v1549
      %1590 = vst.msk [vmem:[#allocation2 + $0x28] sm:$0xff] %vm1538, %v1551
      %1591 = vst.msk [vmem:[#allocation2 + $0x30] sm:$0xff] %vm1538, %v1553
      %1592 = vst.msk [vmem:[#allocation2 + $0x38] sm:$0xff] %vm1538, %v1555
      %1593 = vst.msk [vmem:[#allocation2 + $0x40] sm:$0xff] %vm1538, %v1557
      %1594 = vst.msk [vmem:[#allocation2 + $0x48] sm:$0xff] %vm1538, %v1559
      %1595 = vst.msk [vmem:[#allocation2 + $0x50] sm:$0xff] %vm1538, %v1561
      %1596 = vst.msk [vmem:[#allocation2 + $0x58] sm:$0xff] %vm1538, %v1563
      %1597 = vst.msk [vmem:[#allocation2 + $0x60] sm:$0xff] %vm1538, %v1565
      %1598 = vst.msk [vmem:[#allocation2 + $0x68] sm:$0xff] %vm1538, %v1567
      %1599 = vst.msk [vmem:[#allocation2 + $0x70] sm:$0xff] %vm1538, %v1569
      %vm1600 = vcmask 294144
      %1601 = vst.msk [vmem:[%s1393] sm:$0xff] %vm1600, 0
      %vm1602 = vcmask 294151
      %vm1603 = vmand %vm1602, %vm849
      %v1604 = vld [vmem:[#allocation2] sm:$0x80]
      %v1605 = vsel %vm1603, 0, %v1604
      %1606 = vst [vmem:[#allocation2] sm:$0x80] %v1605
      %v1607 = vld [vmem:[#allocation2 + $0x8] sm:$0x80]
      %v1608 = vsel %vm1603, 0, %v1607
      %1609 = vst [vmem:[#allocation2 + $0x8] sm:$0x80] %v1608
      %v1610 = vld [vmem:[#allocation2 + $0x10] sm:$0x80]
      %v1611 = vsel %vm1603, 0, %v1610
      %1612 = vst [vmem:[#allocation2 + $0x10] sm:$0x80] %v1611
      %v1613 = vld [vmem:[#allocation2 + $0x18] sm:$0x80]
      %v1614 = vsel %vm1603, 0, %v1613
      %1615 = vst [vmem:[#allocation2 + $0x18] sm:$0x80] %v1614
      %v1616 = vld [vmem:[#allocation2 + $0x20] sm:$0x80]
      %v1617 = vsel %vm1603, 0, %v1616
      %1618 = vst [vmem:[#allocation2 + $0x20] sm:$0x80] %v1617
      %v1619 = vld [vmem:[#allocation2 + $0x28] sm:$0x80]
      %v1620 = vsel %vm1603, 0, %v1619
      %1621 = vst [vmem:[#allocation2 + $0x28] sm:$0x80] %v1620
      %v1622 = vld [vmem:[#allocation2 + $0x30] sm:$0x80]
      %v1623 = vsel %vm1603, 0, %v1622
      %1624 = vst [vmem:[#allocation2 + $0x30] sm:$0x80] %v1623
      %v1625 = vld [vmem:[#allocation2 + $0x38] sm:$0x80]
      %v1626 = vsel %vm1603, 0, %v1625
      %1627 = vst [vmem:[#allocation2 + $0x38] sm:$0x80] %v1626
      %v1628 = vld [vmem:[#allocation2 + $0x40] sm:$0x80]
      %v1629 = vsel %vm1603, 0, %v1628
      %1630 = vst [vmem:[#allocation2 + $0x40] sm:$0x80] %v1629
      %v1631 = vld [vmem:[#allocation2 + $0x48] sm:$0x80]
      %v1632 = vsel %vm1603, 0, %v1631
      %1633 = vst [vmem:[#allocation2 + $0x48] sm:$0x80] %v1632
      %v1634 = vld [vmem:[#allocation2 + $0x50] sm:$0x80]
      %v1635 = vsel %vm1603, 0, %v1634
      %1636 = vst [vmem:[#allocation2 + $0x50] sm:$0x80] %v1635
      %v1637 = vld [vmem:[#allocation2 + $0x58] sm:$0x80]
      %v1638 = vsel %vm1603, 0, %v1637
      %1639 = vst [vmem:[#allocation2 + $0x58] sm:$0x80] %v1638
      %v1640 = vld [vmem:[#allocation2 + $0x60] sm:$0x80]
      %v1641 = vsel %vm1603, 0, %v1640
      %1642 = vst [vmem:[#allocation2 + $0x60] sm:$0x80] %v1641
      %v1643 = vld [vmem:[#allocation2 + $0x68] sm:$0x80]
      %v1644 = vsel %vm1603, 0, %v1643
      %1645 = vst [vmem:[#allocation2 + $0x68] sm:$0x80] %v1644
      %v1646 = vld [vmem:[#allocation2 + $0x70] sm:$0x80]
      %v1647 = vsel %vm1603, 0, %v1646
      %1648 = vst [vmem:[#allocation2 + $0x70] sm:$0x80] %v1647
      %v1649 = vld [vmem:[#allocation2 + $0x78] sm:$0x80]
      %v1650 = vsel %vm1603, 0, %v1649
      %1651 = vst [vmem:[#allocation2 + $0x78] sm:$0x80] %v1650
      %1652 = vrot.lane.b32.xlu0 %v902, 32
      %v1653 = vpop.permute.xlu0 %1652
      %1654 = vrot.lane.b32.xlu0 %v904, 32
      %v1655 = vpop.permute.xlu0 %1654
      %1656 = vrot.lane.b32.xlu0 %v906, 32
      %v1657 = vpop.permute.xlu0 %1656
      %1658 = vrot.lane.b32.xlu0 %v908, 32
      %v1659 = vpop.permute.xlu0 %1658
      %1660 = vrot.lane.b32.xlu0 %v910, 32
      %v1661 = vpop.permute.xlu0 %1660
      %1662 = vrot.lane.b32.xlu0 %v912, 32
      %v1663 = vpop.permute.xlu0 %1662
      %1664 = vrot.lane.b32.xlu0 %v914, 32
      %v1665 = vpop.permute.xlu0 %1664
      %1666 = vrot.lane.b32.xlu0 %v916, 32
      %v1667 = vpop.permute.xlu0 %1666
      %1668 = vrot.lane.b32.xlu0 %v918, 32
      %v1669 = vpop.permute.xlu0 %1668
      %1670 = vrot.lane.b32.xlu0 %v920, 32
      %v1671 = vpop.permute.xlu0 %1670
      %1672 = vrot.lane.b32.xlu0 %v922, 32
      %v1673 = vpop.permute.xlu0 %1672
      %1674 = vrot.lane.b32.xlu0 %v924, 32
      %v1675 = vpop.permute.xlu0 %1674
      %1676 = vrot.lane.b32.xlu0 %v926, 32
      %v1677 = vpop.permute.xlu0 %1676
      %1678 = vrot.lane.b32.xlu0 %v928, 32
      %v1679 = vpop.permute.xlu0 %1678
      %1680 = vrot.lane.b32.xlu0 %v1294, 32
      %v1681 = vpop.permute.xlu0 %1680
      %vm1697 = vcmask 294144
      %vm1698 = vmand %vm1697, %vm975
      %v1699 = vld [vmem:[#allocation2] sm:$0xff]
      %v1700 = vsel %vm1698, %v1653, %v1699
      %1701 = vst [vmem:[#allocation2] sm:$0xff] %v1700
      %v1702 = vld [vmem:[#allocation2 + $0x8] sm:$0xff]
      %v1703 = vsel %vm1698, %v1655, %v1702
      %1704 = vst [vmem:[#allocation2 + $0x8] sm:$0xff] %v1703
      %v1705 = vld [vmem:[#allocation2 + $0x10] sm:$0xff]
      %v1706 = vsel %vm1698, %v1657, %v1705
      %1707 = vst [vmem:[#allocation2 + $0x10] sm:$0xff] %v1706
      %v1708 = vld [vmem:[#allocation2 + $0x18] sm:$0xff]
      %v1709 = vsel %vm1698, %v1659, %v1708
      %1710 = vst [vmem:[#allocation2 + $0x18] sm:$0xff] %v1709
      %v1711 = vld [vmem:[#allocation2 + $0x20] sm:$0xff]
      %v1712 = vsel %vm1698, %v1661, %v1711
      %1713 = vst [vmem:[#allocation2 + $0x20] sm:$0xff] %v1712
      %v1714 = vld [vmem:[#allocation2 + $0x28] sm:$0xff]
      %v1715 = vsel %vm1698, %v1663, %v1714
      %1716 = vst [vmem:[#allocation2 + $0x28] sm:$0xff] %v1715
      %v1717 = vld [vmem:[#allocation2 + $0x30] sm:$0xff]
      %v1718 = vsel %vm1698, %v1665, %v1717
      %1719 = vst [vmem:[#allocation2 + $0x30] sm:$0xff] %v1718
      %v1720 = vld [vmem:[#allocation2 + $0x38] sm:$0xff]
      %v1721 = vsel %vm1698, %v1667, %v1720
      %1722 = vst [vmem:[#allocation2 + $0x38] sm:$0xff] %v1721
      %v1723 = vld [vmem:[#allocation2 + $0x40] sm:$0xff]
      %v1724 = vsel %vm1698, %v1669, %v1723
      %1725 = vst [vmem:[#allocation2 + $0x40] sm:$0xff] %v1724
      %v1726 = vld [vmem:[#allocation2 + $0x48] sm:$0xff]
      %v1727 = vsel %vm1698, %v1671, %v1726
      %1728 = vst [vmem:[#allocation2 + $0x48] sm:$0xff] %v1727
      %v1729 = vld [vmem:[#allocation2 + $0x50] sm:$0xff]
      %v1730 = vsel %vm1698, %v1673, %v1729
      %1731 = vst [vmem:[#allocation2 + $0x50] sm:$0xff] %v1730
      %v1732 = vld [vmem:[#allocation2 + $0x58] sm:$0xff]
      %v1733 = vsel %vm1698, %v1675, %v1732
      %1734 = vst [vmem:[#allocation2 + $0x58] sm:$0xff] %v1733
      %v1735 = vld [vmem:[#allocation2 + $0x60] sm:$0xff]
      %v1736 = vsel %vm1698, %v1677, %v1735
      %1737 = vst [vmem:[#allocation2 + $0x60] sm:$0xff] %v1736
      %v1738 = vld [vmem:[#allocation2 + $0x68] sm:$0xff]
      %v1739 = vsel %vm1698, %v1679, %v1738
      %1740 = vst [vmem:[#allocation2 + $0x68] sm:$0xff] %v1739
      %v1741 = vld [vmem:[#allocation2 + $0x70] sm:$0xff]
      %v1742 = vsel %vm1698, %v1681, %v1741
      %1743 = vst [vmem:[#allocation2 + $0x70] sm:$0xff] %v1742
      %v1744 = vld [vmem:[#allocation2] sm:$0xff]
      %v1745 = vld [vmem:[#allocation2 + $0x8] sm:$0xff]
      %v1746 = vld [vmem:[#allocation2 + $0x10] sm:$0xff]
      %v1747 = vld [vmem:[#allocation2 + $0x18] sm:$0xff]
      %v1748 = vld [vmem:[#allocation2 + $0x20] sm:$0xff]
      %v1749 = vld [vmem:[#allocation2 + $0x28] sm:$0xff]
      %v1750 = vld [vmem:[#allocation2 + $0x30] sm:$0xff]
      %v1751 = vld [vmem:[#allocation2 + $0x38] sm:$0xff]
      %v1752 = vld [vmem:[#allocation2 + $0x40] sm:$0xff]
      %v1753 = vld [vmem:[#allocation2 + $0x48] sm:$0xff]
      %v1754 = vld [vmem:[#allocation2 + $0x50] sm:$0xff]
      %v1755 = vld [vmem:[#allocation2 + $0x58] sm:$0xff]
      %v1756 = vld [vmem:[#allocation2 + $0x60] sm:$0xff]
      %v1757 = vld [vmem:[#allocation2 + $0x68] sm:$0xff]
      %v1758 = vld [vmem:[#allocation2 + $0x70] sm:$0xff]
      %v1759 = vld [vmem:[#allocation2 + $0x78] sm:$0xff]
      %v1760 = vld [vmem:[%s1] sm:$0xf]
      %v1761 = vld [vmem:[%s1 + $0x4] sm:$0xf]
      %v1762 = vld [vmem:[%s1 + $0x8] sm:$0xf]
      %v1763 = vld [vmem:[%s1 + $0xc] sm:$0xf]
      %v1764 = vld [vmem:[%s1 + $0x10] sm:$0x3]
      %v1770 = vunpack.c.l.b16 %v1760
      %v1771 = vunpack.c.l.b16 %v1761
      %v1772 = vunpack.c.l.b16 %v1762
      %v1773 = vunpack.c.l.b16 %v1763
      %v1774 = vunpack.c.l.b16 %v1764
      %v1775 = vpack.c.b16 %v1771, %v1770
      %v1776 = vpack.c.b16 %v1773, %v1772
      %v1777 = vpack.c.b16 %v1774, %v1774
      %vm1780 = vcmask 293888
      %v1782 = vsel %vm1780, %v1744, 0
      %v1785 = vsel %vm1780, %v1745, 0
      %v1788 = vsel %vm1780, %v1746, 0
      %v1791 = vsel %vm1780, %v1747, 0
      %v1794 = vsel %vm1780, %v1748, 0
      %v1797 = vsel %vm1780, %v1749, 0
      %v1800 = vsel %vm1780, %v1750, 0
      %v1803 = vsel %vm1780, %v1751, 0
      %v1806 = vsel %vm1780, %v1752, 0
      %v1809 = vsel %vm1780, %v1753, 0
      %v1812 = vsel %vm1780, %v1754, 0
      %v1815 = vsel %vm1780, %v1755, 0
      %v1818 = vsel %vm1780, %v1756, 0
      %v1821 = vsel %vm1780, %v1757, 0
      %v1824 = vsel %vm1780, %v1758, 0
      %v1827 = vsel %vm1780, %v1759, 0
      %vm1829 = vcmask 1041408
      %v1831 = vsel %vm1829, %v1777, 0
      %1833 = vmatprep.subr.bf16.mxu0 0
      %1834 = vmatpush1.bf16.msra.mxu0 %v1775
      %1835 = vmatprep.subr.bf16.mxu0 0
      %1836 = vmatpush1.bf16.msra.mxu0 %v1776
      %1837 = vmatprep.subr.bf16.mxu0 0
      %1838 = vmatpush1.bf16.msra.mxu0 %v1831
      %1839 = vmatprep.subr.bf16.mxu0 0
      %1840 = vmatpush1.bf16.msra.mxu0 0
      %1841 = vmatprep.subr.bf16.mxu0 0
      %1842 = vmatpush1.bf16.msra.mxu0 0
      %1843 = vmatprep.subr.bf16.mxu0 0
      %1844 = vmatpush1.bf16.msra.mxu0 0
      %1845 = vmatprep.subr.bf16.mxu0 0
      %1846 = vmatpush1.bf16.msra.mxu0 0
      %1847 = vmatprep.subr.bf16.mxu0 0
      %1848 = vmatpush1.bf16.msra.mxu0 0
      %1849 = vmatprep.subr.bf16.mxu0 0
      %1850 = vmatpush1.bf16.msra.mxu0 0
      %1851 = vmatprep.subr.bf16.mxu0 0
      %1852 = vmatpush1.bf16.msra.mxu0 0
      %1853 = vmatprep.subr.bf16.mxu0 0
      %1854 = vmatpush1.bf16.msra.mxu0 0
      %1855 = vmatprep.subr.bf16.mxu0 0
      %1856 = vmatpush1.bf16.msra.mxu0 0
      %1857 = vmatprep.subr.bf16.mxu0 0
      %1858 = vmatpush1.bf16.msra.mxu0 0
      %1859 = vmatprep.subr.bf16.mxu0 0
      %1860 = vmatpush1.bf16.msra.mxu0 0
      %1861 = vmatprep.subr.bf16.mxu0 0
      %1862 = vmatpush1.bf16.msra.mxu0 0
      %1863 = vmatprep.subr.bf16.mxu0 0
      %1864 = vmatpush1.bf16.msra.mxu0 0
      %1865 = vmatprep.mubr.bf16.mxu0 0
      %1866 = vmatmul.mubr.bf16.gmra.mrb[0].mxu0 %v1782
      %v1867 = vpop.f32.mrb[0].mxu0
      %v1868 = vadd.f32 0.0, %v1867
      %v1869 = vpop.f32.mrb[0].mxu0
      %v1870 = vpop.f32.mrb[0].mxu0
      %v1871 = vadd.f32 0.0, %v1870
      %v1872 = vpop.f32.mrb[0].mxu0
      %1873 = vmatprep.mubr.bf16.mxu0 0
      %1874 = vmatmul.mubr.bf16.gmra.mrb[0].mxu0 %v1785
      %v1875 = vpop.f32.mrb[0].mxu0
      %v1876 = vadd.f32 0.0, %v1875
      %v1877 = vpop.f32.mrb[0].mxu0
      %v1878 = vpop.f32.mrb[0].mxu0
      %v1879 = vadd.f32 0.0, %v1878
      %v1880 = vpop.f32.mrb[0].mxu0
      %1881 = vmatprep.mubr.bf16.mxu0 0
      %1882 = vmatmul.mubr.bf16.gmra.mrb[0].mxu0 %v1788
      %v1883 = vpop.f32.mrb[0].mxu0
      %v1884 = vadd.f32 0.0, %v1883
      %v1885 = vpop.f32.mrb[0].mxu0
      %v1886 = vpop.f32.mrb[0].mxu0
      %v1887 = vadd.f32 0.0, %v1886
      %v1888 = vpop.f32.mrb[0].mxu0
      %1889 = vmatprep.mubr.bf16.mxu0 0
      %1890 = vmatmul.mubr.bf16.gmra.mrb[0].mxu0 %v1791
      %v1891 = vpop.f32.mrb[0].mxu0
      %v1892 = vadd.f32 0.0, %v1891
      %v1893 = vpop.f32.mrb[0].mxu0
      %v1894 = vpop.f32.mrb[0].mxu0
      %v1895 = vadd.f32 0.0, %v1894
      %v1896 = vpop.f32.mrb[0].mxu0
      %1897 = vmatprep.mubr.bf16.mxu0 0
      %1898 = vmatmul.mubr.bf16.gmra.mrb[0].mxu0 %v1794
      %v1899 = vpop.f32.mrb[0].mxu0
      %v1900 = vadd.f32 0.0, %v1899
      %v1901 = vpop.f32.mrb[0].mxu0
      %v1902 = vpop.f32.mrb[0].mxu0
      %v1903 = vadd.f32 0.0, %v1902
      %v1904 = vpop.f32.mrb[0].mxu0
      %1905 = vmatprep.mubr.bf16.mxu0 0
      %1906 = vmatmul.mubr.bf16.gmra.mrb[0].mxu0 %v1797
      %v1907 = vpop.f32.mrb[0].mxu0
      %v1908 = vadd.f32 0.0, %v1907
      %v1909 = vpop.f32.mrb[0].mxu0
      %v1910 = vpop.f32.mrb[0].mxu0
      %v1911 = vadd.f32 0.0, %v1910
      %v1912 = vpop.f32.mrb[0].mxu0
      %1913 = vmatprep.mubr.bf16.mxu0 0
      %1914 = vmatmul.mubr.bf16.gmra.mrb[0].mxu0 %v1800
      %v1915 = vpop.f32.mrb[0].mxu0
      %v1916 = vadd.f32 0.0, %v1915
      %v1917 = vpop.f32.mrb[0].mxu0
      %v1918 = vpop.f32.mrb[0].mxu0
      %v1919 = vadd.f32 0.0, %v1918
      %v1920 = vpop.f32.mrb[0].mxu0
      %1921 = vmatprep.mubr.bf16.mxu0 0
      %1922 = vmatmul.mubr.bf16.gmra.mrb[0].mxu0 %v1803
      %v1923 = vpop.f32.mrb[0].mxu0
      %v1924 = vadd.f32 0.0, %v1923
      %v1925 = vpop.f32.mrb[0].mxu0
      %v1926 = vpop.f32.mrb[0].mxu0
      %v1927 = vadd.f32 0.0, %v1926
      %v1928 = vpop.f32.mrb[0].mxu0
      %1929 = vmatprep.mubr.bf16.mxu0 0
      %1930 = vmatmul.mubr.bf16.gmra.mrb[0].mxu0 %v1806
      %v1931 = vpop.f32.mrb[0].mxu0
      %v1932 = vadd.f32 0.0, %v1931
      %v1933 = vpop.f32.mrb[0].mxu0
      %v1934 = vpop.f32.mrb[0].mxu0
      %v1935 = vadd.f32 0.0, %v1934
      %v1936 = vpop.f32.mrb[0].mxu0
      %1937 = vmatprep.mubr.bf16.mxu0 0
      %1938 = vmatmul.mubr.bf16.gmra.mrb[0].mxu0 %v1809
      %v1939 = vpop.f32.mrb[0].mxu0
      %v1940 = vadd.f32 0.0, %v1939
      %v1941 = vpop.f32.mrb[0].mxu0
      %v1942 = vpop.f32.mrb[0].mxu0
      %v1943 = vadd.f32 0.0, %v1942
      %v1944 = vpop.f32.mrb[0].mxu0
      %1945 = vmatprep.mubr.bf16.mxu0 0
      %1946 = vmatmul.mubr.bf16.gmra.mrb[0].mxu0 %v1812
      %v1947 = vpop.f32.mrb[0].mxu0
      %v1948 = vadd.f32 0.0, %v1947
      %v1949 = vpop.f32.mrb[0].mxu0
      %v1950 = vpop.f32.mrb[0].mxu0
      %v1951 = vadd.f32 0.0, %v1950
      %v1952 = vpop.f32.mrb[0].mxu0
      %1953 = vmatprep.mubr.bf16.mxu0 0
      %1954 = vmatmul.mubr.bf16.gmra.mrb[0].mxu0 %v1815
      %v1955 = vpop.f32.mrb[0].mxu0
      %v1956 = vadd.f32 0.0, %v1955
      %v1957 = vpop.f32.mrb[0].mxu0
      %v1958 = vpop.f32.mrb[0].mxu0
      %v1959 = vadd.f32 0.0, %v1958
      %v1960 = vpop.f32.mrb[0].mxu0
      %1961 = vmatprep.mubr.bf16.mxu0 0
      %1962 = vmatmul.mubr.bf16.gmra.mrb[0].mxu0 %v1818
      %v1963 = vpop.f32.mrb[0].mxu0
      %v1964 = vadd.f32 0.0, %v1963
      %v1965 = vpop.f32.mrb[0].mxu0
      %v1966 = vpop.f32.mrb[0].mxu0
      %v1967 = vadd.f32 0.0, %v1966
      %v1968 = vpop.f32.mrb[0].mxu0
      %1969 = vmatprep.mubr.bf16.mxu0 0
      %1970 = vmatmul.mubr.bf16.gmra.mrb[0].mxu0 %v1821
      %v1971 = vpop.f32.mrb[0].mxu0
      %v1972 = vadd.f32 0.0, %v1971
      %v1973 = vpop.f32.mrb[0].mxu0
      %v1974 = vpop.f32.mrb[0].mxu0
      %v1975 = vadd.f32 0.0, %v1974
      %v1976 = vpop.f32.mrb[0].mxu0
      %1977 = vmatprep.mubr.bf16.mxu0 0
      %1978 = vmatmul.mubr.bf16.gmra.mrb[0].mxu0 %v1824
      %v1979 = vpop.f32.mrb[0].mxu0
      %v1980 = vadd.f32 0.0, %v1979
      %v1981 = vpop.f32.mrb[0].mxu0
      %v1982 = vpop.f32.mrb[0].mxu0
      %v1983 = vadd.f32 0.0, %v1982
      %v1984 = vpop.f32.mrb[0].mxu0
      %1985 = vmatprep.mubr.bf16.mxu0 0
      %1986 = vmatmul.mubr.bf16.gmra.mrb[0].mxu0 %v1827
      %v1987 = vpop.f32.mrb[0].mxu0
      %v1988 = vadd.f32 0.0, %v1987
      %v1989 = vpop.f32.mrb[0].mxu0
      %v1990 = vpop.f32.mrb[0].mxu0
      %v1991 = vadd.f32 0.0, %v1990
      %v1992 = vpop.f32.mrb[0].mxu0
      %1993 = vdwg.mxu0
      %v1994 = vsel %vm258, %v1868, 0.0
      %v1995 = vsel %vm258, %v1871, 0.0
      %v1996 = vadd.f32 %v1994, %v1995
      %v1997 = vsel %vm258, %v1876, 0.0
      %v1998 = vadd.f32 %v1996, %v1997
      %v1999 = vsel %vm258, %v1879, 0.0
      %v2000 = vadd.f32 %v1998, %v1999
      %v2001 = vsel %vm258, %v1884, 0.0
      %v2002 = vadd.f32 %v2000, %v2001
      %v2003 = vsel %vm258, %v1887, 0.0
      %v2004 = vadd.f32 %v2002, %v2003
      %v2005 = vsel %vm258, %v1892, 0.0
      %v2006 = vadd.f32 %v2004, %v2005
      %v2007 = vsel %vm258, %v1895, 0.0
      %v2008 = vadd.f32 %v2006, %v2007
      %v2009 = vsel %vm258, %v1900, 0.0
      %v2010 = vadd.f32 %v2008, %v2009
      %v2011 = vsel %vm258, %v1903, 0.0
      %v2012 = vadd.f32 %v2010, %v2011
      %v2013 = vsel %vm258, %v1908, 0.0
      %v2014 = vadd.f32 %v2012, %v2013
      %v2015 = vsel %vm258, %v1911, 0.0
      %v2016 = vadd.f32 %v2014, %v2015
      %v2017 = vsel %vm258, %v1916, 0.0
      %v2018 = vadd.f32 %v2016, %v2017
      %v2019 = vsel %vm258, %v1919, 0.0
      %v2020 = vadd.f32 %v2018, %v2019
      %v2021 = vsel %vm258, %v1924, 0.0
      %v2022 = vadd.f32 %v2020, %v2021
      %v2023 = vsel %vm258, %v1927, 0.0
      %v2024 = vadd.f32 %v2022, %v2023
      %v2025 = vsel %vm258, %v1932, 0.0
      %v2026 = vadd.f32 %v2024, %v2025
      %v2027 = vsel %vm258, %v1935, 0.0
      %v2028 = vadd.f32 %v2026, %v2027
      %v2029 = vsel %vm258, %v1940, 0.0
      %v2030 = vadd.f32 %v2028, %v2029
      %v2031 = vsel %vm258, %v1943, 0.0
      %v2032 = vadd.f32 %v2030, %v2031
      %v2033 = vsel %vm258, %v1948, 0.0
      %v2034 = vadd.f32 %v2032, %v2033
      %v2035 = vsel %vm258, %v1951, 0.0
      %v2036 = vadd.f32 %v2034, %v2035
      %v2037 = vsel %vm258, %v1956, 0.0
      %v2038 = vadd.f32 %v2036, %v2037
      %v2039 = vsel %vm258, %v1959, 0.0
      %v2040 = vadd.f32 %v2038, %v2039
      %v2041 = vsel %vm258, %v1964, 0.0
      %v2042 = vadd.f32 %v2040, %v2041
      %v2043 = vsel %vm258, %v1967, 0.0
      %v2044 = vadd.f32 %v2042, %v2043
      %v2045 = vsel %vm258, %v1972, 0.0
      %v2046 = vadd.f32 %v2044, %v2045
      %v2047 = vsel %vm258, %v1975, 0.0
      %v2048 = vadd.f32 %v2046, %v2047
      %v2049 = vsel %vm258, %v1980, 0.0
      %v2050 = vadd.f32 %v2048, %v2049
      %v2051 = vsel %vm258, %v1983, 0.0
      %v2052 = vadd.f32 %v2050, %v2051
      %v2053 = vsel %vm258, %v1988, 0.0
      %v2054 = vadd.f32 %v2052, %v2053
      %v2055 = vsel %vm258, %v1991, 0.0
      %v2056 = vadd.f32 %v2054, %v2055
      %v2057 = vrot.slane %v2056, 4
      %v2058 = vadd.f32 %v2056, %v2057
      %v2059 = vrot.slane %v2058, 2
      %v2060 = vadd.f32 %v2058, %v2059
      %v2061 = vrot.slane %v2060, 1
      %v2062 = vadd.f32 %v2060, %v2061
      %v2063 = vmul.f32 %v1868, %v1868
      %v2064 = vmul.f32 %v1871, %v1871
      %v2065 = vmul.f32 %v1876, %v1876
      %v2066 = vmul.f32 %v1879, %v1879
      %v2067 = vmul.f32 %v1884, %v1884
      %v2068 = vmul.f32 %v1887, %v1887
      %v2069 = vmul.f32 %v1892, %v1892
      %v2070 = vmul.f32 %v1895, %v1895
      %v2071 = vmul.f32 %v1900, %v1900
      %v2072 = vmul.f32 %v1903, %v1903
      %v2073 = vmul.f32 %v1908, %v1908
      %v2074 = vmul.f32 %v1911, %v1911
      %v2075 = vmul.f32 %v1916, %v1916
      %v2076 = vmul.f32 %v1919, %v1919
      %v2077 = vmul.f32 %v1924, %v1924
      %v2078 = vmul.f32 %v1927, %v1927
      %v2079 = vmul.f32 %v1932, %v1932
      %v2080 = vmul.f32 %v1935, %v1935
      %v2081 = vmul.f32 %v1940, %v1940
      %v2082 = vmul.f32 %v1943, %v1943
      %v2083 = vmul.f32 %v1948, %v1948
      %v2084 = vmul.f32 %v1951, %v1951
      %v2085 = vmul.f32 %v1956, %v1956
      %v2086 = vmul.f32 %v1959, %v1959
      %v2087 = vmul.f32 %v1964, %v1964
      %v2088 = vmul.f32 %v1967, %v1967
      %v2089 = vmul.f32 %v1972, %v1972
      %v2090 = vmul.f32 %v1975, %v1975
      %v2091 = vmul.f32 %v1980, %v1980
      %v2092 = vmul.f32 %v1983, %v1983
      %v2093 = vmul.f32 %v1988, %v1988
      %v2094 = vmul.f32 %v1991, %v1991
      %v2095 = vsel %vm258, %v2063, 0.0
      %v2096 = vsel %vm258, %v2064, 0.0
      %v2097 = vadd.f32 %v2095, %v2096
      %v2098 = vsel %vm258, %v2065, 0.0
      %v2099 = vadd.f32 %v2097, %v2098
      %v2100 = vsel %vm258, %v2066, 0.0
      %v2101 = vadd.f32 %v2099, %v2100
      %v2102 = vsel %vm258, %v2067, 0.0
      %v2103 = vadd.f32 %v2101, %v2102
      %v2104 = vsel %vm258, %v2068, 0.0
      %v2105 = vadd.f32 %v2103, %v2104
      %v2106 = vsel %vm258, %v2069, 0.0
      %v2107 = vadd.f32 %v2105, %v2106
      %v2108 = vsel %vm258, %v2070, 0.0
      %v2109 = vadd.f32 %v2107, %v2108
      %v2110 = vsel %vm258, %v2071, 0.0
      %v2111 = vadd.f32 %v2109, %v2110
      %v2112 = vsel %vm258, %v2072, 0.0
      %v2113 = vadd.f32 %v2111, %v2112
      %v2114 = vsel %vm258, %v2073, 0.0
      %v2115 = vadd.f32 %v2113, %v2114
      %v2116 = vsel %vm258, %v2074, 0.0
      %v2117 = vadd.f32 %v2115, %v2116
      %v2118 = vsel %vm258, %v2075, 0.0
      %v2119 = vadd.f32 %v2117, %v2118
      %v2120 = vsel %vm258, %v2076, 0.0
      %v2121 = vadd.f32 %v2119, %v2120
      %v2122 = vsel %vm258, %v2077, 0.0
      %v2123 = vadd.f32 %v2121, %v2122
      %v2124 = vsel %vm258, %v2078, 0.0
      %v2125 = vadd.f32 %v2123, %v2124
      %v2126 = vsel %vm258, %v2079, 0.0
      %v2127 = vadd.f32 %v2125, %v2126
      %v2128 = vsel %vm258, %v2080, 0.0
      %v2129 = vadd.f32 %v2127, %v2128
      %v2130 = vsel %vm258, %v2081, 0.0
      %v2131 = vadd.f32 %v2129, %v2130
      %v2132 = vsel %vm258, %v2082, 0.0
      %v2133 = vadd.f32 %v2131, %v2132
      %v2134 = vsel %vm258, %v2083, 0.0
      %v2135 = vadd.f32 %v2133, %v2134
      %v2136 = vsel %vm258, %v2084, 0.0
      %v2137 = vadd.f32 %v2135, %v2136
      %v2138 = vsel %vm258, %v2085, 0.0
      %v2139 = vadd.f32 %v2137, %v2138
      %v2140 = vsel %vm258, %v2086, 0.0
      %v2141 = vadd.f32 %v2139, %v2140
      %v2142 = vsel %vm258, %v2087, 0.0
      %v2143 = vadd.f32 %v2141, %v2142
      %v2144 = vsel %vm258, %v2088, 0.0
      %v2145 = vadd.f32 %v2143, %v2144
      %v2146 = vsel %vm258, %v2089, 0.0
      %v2147 = vadd.f32 %v2145, %v2146
      %v2148 = vsel %vm258, %v2090, 0.0
      %v2149 = vadd.f32 %v2147, %v2148
      %v2150 = vsel %vm258, %v2091, 0.0
      %v2151 = vadd.f32 %v2149, %v2150
      %v2152 = vsel %vm258, %v2092, 0.0
      %v2153 = vadd.f32 %v2151, %v2152
      %v2154 = vsel %vm258, %v2093, 0.0
      %v2155 = vadd.f32 %v2153, %v2154
      %v2156 = vsel %vm258, %v2094, 0.0
      %v2157 = vadd.f32 %v2155, %v2156
      %v2158 = vrot.slane %v2157, 4
      %v2159 = vadd.f32 %v2157, %v2158
      %v2160 = vrot.slane %v2159, 2
      %v2161 = vadd.f32 %v2159, %v2160
      %v2162 = vrot.slane %v2161, 1
      %v2163 = vadd.f32 %v2161, %v2162
      %v2164 = vmul.f32 %v2062, 0.00390625
      %v2165 = vmul.f32 %v2163, 0.00390625
      %v2166 = vmul.f32 %v2164, %v2164
      %v2167 = vsub.f32 %v2165, %v2166
      %v2168 = vmax.f32 %v2167, 0.0
      %v2169 = vsub.f32 %v1868, %v2164
      %v2170 = vsub.f32 %v1871, %v2164
      %v2171 = vsub.f32 %v1876, %v2164
      %v2172 = vsub.f32 %v1879, %v2164
      %v2173 = vsub.f32 %v1884, %v2164
      %v2174 = vsub.f32 %v1887, %v2164
      %v2175 = vsub.f32 %v1892, %v2164
      %v2176 = vsub.f32 %v1895, %v2164
      %v2177 = vsub.f32 %v1900, %v2164
      %v2178 = vsub.f32 %v1903, %v2164
      %v2179 = vsub.f32 %v1908, %v2164
      %v2180 = vsub.f32 %v1911, %v2164
      %v2181 = vsub.f32 %v1916, %v2164
      %v2182 = vsub.f32 %v1919, %v2164
      %v2183 = vsub.f32 %v1924, %v2164
      %v2184 = vsub.f32 %v1927, %v2164
      %v2185 = vsub.f32 %v1932, %v2164
      %v2186 = vsub.f32 %v1935, %v2164
      %v2187 = vsub.f32 %v1940, %v2164
      %v2188 = vsub.f32 %v1943, %v2164
      %v2189 = vsub.f32 %v1948, %v2164
      %v2190 = vsub.f32 %v1951, %v2164
      %v2191 = vsub.f32 %v1956, %v2164
      %v2192 = vsub.f32 %v1959, %v2164
      %v2193 = vsub.f32 %v1964, %v2164
      %v2194 = vsub.f32 %v1967, %v2164
      %v2195 = vsub.f32 %v1972, %v2164
      %v2196 = vsub.f32 %v1975, %v2164
      %v2197 = vsub.f32 %v1980, %v2164
      %v2198 = vsub.f32 %v1983, %v2164
      %v2199 = vsub.f32 %v1988, %v2164
      %v2200 = vsub.f32 %v1991, %v2164
      %v2201 = vadd.f32 %v2168, 1e-05
      %v2202 = vrsqrt.pop %v2201
      %v2203 = vmul.f32 %v2169, %v2202
      %v2204 = vmul.f32 %v2170, %v2202
      %v2205 = vmul.f32 %v2171, %v2202
      %v2206 = vmul.f32 %v2172, %v2202
      %v2207 = vmul.f32 %v2173, %v2202
      %v2208 = vmul.f32 %v2174, %v2202
      %v2209 = vmul.f32 %v2175, %v2202
      %v2210 = vmul.f32 %v2176, %v2202
      %v2211 = vmul.f32 %v2177, %v2202
      %v2212 = vmul.f32 %v2178, %v2202
      %v2213 = vmul.f32 %v2179, %v2202
      %v2214 = vmul.f32 %v2180, %v2202
      %v2215 = vmul.f32 %v2181, %v2202
      %v2216 = vmul.f32 %v2182, %v2202
      %v2217 = vmul.f32 %v2183, %v2202
      %v2218 = vmul.f32 %v2184, %v2202
      %v2219 = vmul.f32 %v2185, %v2202
      %v2220 = vmul.f32 %v2186, %v2202
      %v2221 = vmul.f32 %v2187, %v2202
      %v2222 = vmul.f32 %v2188, %v2202
      %v2223 = vmul.f32 %v2189, %v2202
      %v2224 = vmul.f32 %v2190, %v2202
      %v2225 = vmul.f32 %v2191, %v2202
      %v2226 = vmul.f32 %v2192, %v2202
      %v2227 = vmul.f32 %v2193, %v2202
      %v2228 = vmul.f32 %v2194, %v2202
      %v2229 = vmul.f32 %v2195, %v2202
      %v2230 = vmul.f32 %v2196, %v2202
      %v2231 = vmul.f32 %v2197, %v2202
      %v2232 = vmul.f32 %v2198, %v2202
      %v2233 = vmul.f32 %v2199, %v2202
      %v2234 = vmul.f32 %v2200, %v2202
      %v2235 = vmax.f32 %v2203, 0.0
      %v2236 = vmax.f32 %v2204, 0.0
      %v2237 = vmax.f32 %v2205, 0.0
      %v2238 = vmax.f32 %v2206, 0.0
      %v2239 = vmax.f32 %v2207, 0.0
      %v2240 = vmax.f32 %v2208, 0.0
      %v2241 = vmax.f32 %v2209, 0.0
      %v2242 = vmax.f32 %v2210, 0.0
      %v2243 = vmax.f32 %v2211, 0.0
      %v2244 = vmax.f32 %v2212, 0.0
      %v2245 = vmax.f32 %v2213, 0.0
      %v2246 = vmax.f32 %v2214, 0.0
      %v2247 = vmax.f32 %v2215, 0.0
      %v2248 = vmax.f32 %v2216, 0.0
      %v2249 = vmax.f32 %v2217, 0.0
      %v2250 = vmax.f32 %v2218, 0.0
      %v2251 = vmax.f32 %v2219, 0.0
      %v2252 = vmax.f32 %v2220, 0.0
      %v2253 = vmax.f32 %v2221, 0.0
      %v2254 = vmax.f32 %v2222, 0.0
      %v2255 = vmax.f32 %v2223, 0.0
      %v2256 = vmax.f32 %v2224, 0.0
      %v2257 = vmax.f32 %v2225, 0.0
      %v2258 = vmax.f32 %v2226, 0.0
      %v2259 = vmax.f32 %v2227, 0.0
      %v2260 = vmax.f32 %v2228, 0.0
      %v2261 = vmax.f32 %v2229, 0.0
      %v2262 = vmax.f32 %v2230, 0.0
      %v2263 = vmax.f32 %v2231, 0.0
      %v2264 = vmax.f32 %v2232, 0.0
      %v2265 = vmax.f32 %v2233, 0.0
      %v2266 = vmax.f32 %v2234, 0.0
      %v2267 = vpack.c.bf16 %v2236, %v2235
      %v2268 = vpack.c.bf16 %v2238, %v2237
      %v2269 = vpack.c.bf16 %v2240, %v2239
      %v2270 = vpack.c.bf16 %v2242, %v2241
      %v2271 = vpack.c.bf16 %v2244, %v2243
      %v2272 = vpack.c.bf16 %v2246, %v2245
      %v2273 = vpack.c.bf16 %v2248, %v2247
      %v2274 = vpack.c.bf16 %v2250, %v2249
      %v2275 = vpack.c.bf16 %v2252, %v2251
      %v2276 = vpack.c.bf16 %v2254, %v2253
      %v2277 = vpack.c.bf16 %v2256, %v2255
      %v2278 = vpack.c.bf16 %v2258, %v2257
      %v2279 = vpack.c.bf16 %v2260, %v2259
      %v2280 = vpack.c.bf16 %v2262, %v2261
      %v2281 = vpack.c.bf16 %v2264, %v2263
      %v2282 = vpack.c.bf16 %v2266, %v2265
      %2283 = vst.msk [vmem:[#allocation3] sm:$0xff] %vm258, 0
      %v2284 = vld [vmem:[#allocation3] sm:$0x1]
      %v2285 = vsel %vm551, 0, %v2284
      %2286 = vst [vmem:[#allocation3] sm:$0x1] %v2285
      %v2287 = vld [vmem:[#allocation3 + $0x8] sm:$0x1]
      %v2288 = vsel %vm551, 0, %v2287
      %2289 = vst [vmem:[#allocation3 + $0x8] sm:$0x1] %v2288
      %v2290 = vld [vmem:[#allocation3 + $0x10] sm:$0x1]
      %v2291 = vsel %vm551, 0, %v2290
      %2292 = vst [vmem:[#allocation3 + $0x10] sm:$0x1] %v2291
      %v2293 = vld [vmem:[#allocation3 + $0x18] sm:$0x1]
      %v2294 = vsel %vm551, 0, %v2293
      %2295 = vst [vmem:[#allocation3 + $0x18] sm:$0x1] %v2294
      %v2296 = vld [vmem:[#allocation3 + $0x20] sm:$0x1]
      %v2297 = vsel %vm551, 0, %v2296
      %2298 = vst [vmem:[#allocation3 + $0x20] sm:$0x1] %v2297
      %v2299 = vld [vmem:[#allocation3 + $0x28] sm:$0x1]
      %v2300 = vsel %vm551, 0, %v2299
      %2301 = vst [vmem:[#allocation3 + $0x28] sm:$0x1] %v2300
      %v2302 = vld [vmem:[#allocation3 + $0x30] sm:$0x1]
      %v2303 = vsel %vm551, 0, %v2302
      %2304 = vst [vmem:[#allocation3 + $0x30] sm:$0x1] %v2303
      %v2305 = vld [vmem:[#allocation3 + $0x38] sm:$0x1]
      %v2306 = vsel %vm551, 0, %v2305
      %2307 = vst [vmem:[#allocation3 + $0x38] sm:$0x1] %v2306
      %v2308 = vld [vmem:[#allocation3 + $0x40] sm:$0x1]
      %v2309 = vsel %vm551, 0, %v2308
      %2310 = vst [vmem:[#allocation3 + $0x40] sm:$0x1] %v2309
      %v2311 = vld [vmem:[#allocation3 + $0x48] sm:$0x1]
      %v2312 = vsel %vm551, 0, %v2311
      %2313 = vst [vmem:[#allocation3 + $0x48] sm:$0x1] %v2312
      %v2314 = vld [vmem:[#allocation3 + $0x50] sm:$0x1]
      %v2315 = vsel %vm551, 0, %v2314
      %2316 = vst [vmem:[#allocation3 + $0x50] sm:$0x1] %v2315
      %v2317 = vld [vmem:[#allocation3 + $0x58] sm:$0x1]
      %v2318 = vsel %vm551, 0, %v2317
      %2319 = vst [vmem:[#allocation3 + $0x58] sm:$0x1] %v2318
      %v2320 = vld [vmem:[#allocation3 + $0x60] sm:$0x1]
      %v2321 = vsel %vm551, 0, %v2320
      %2322 = vst [vmem:[#allocation3 + $0x60] sm:$0x1] %v2321
      %v2323 = vld [vmem:[#allocation3 + $0x68] sm:$0x1]
      %v2324 = vsel %vm551, 0, %v2323
      %2325 = vst [vmem:[#allocation3 + $0x68] sm:$0x1] %v2324
      %v2326 = vld [vmem:[#allocation3 + $0x70] sm:$0x1]
      %v2327 = vsel %vm551, 0, %v2326
      %2328 = vst [vmem:[#allocation3 + $0x70] sm:$0x1] %v2327
      %v2329 = vld [vmem:[#allocation3 + $0x78] sm:$0x1]
      %v2330 = vsel %vm551, 0, %v2329
      %2331 = vst [vmem:[#allocation3 + $0x78] sm:$0x1] %v2330
      %v2333 = vshrl.u32 %v2267, 16
      %v2335 = vrot.slane %v2333, 7
      %v2336 = vshll.u32 %v2267, 16
      %v2338 = vor.u32 %v2335, %v2336
      %v2340 = vshrl.u32 %v2268, 16
      %v2342 = vrot.slane %v2340, 7
      %v2343 = vshll.u32 %v2268, 16
      %v2345 = vor.u32 %v2342, %v2343
      %v2347 = vshrl.u32 %v2269, 16
      %v2349 = vrot.slane %v2347, 7
      %v2350 = vshll.u32 %v2269, 16
      %v2352 = vor.u32 %v2349, %v2350
      %v2354 = vshrl.u32 %v2270, 16
      %v2356 = vrot.slane %v2354, 7
      %v2357 = vshll.u32 %v2270, 16
      %v2359 = vor.u32 %v2356, %v2357
      %v2361 = vshrl.u32 %v2271, 16
      %v2363 = vrot.slane %v2361, 7
      %v2364 = vshll.u32 %v2271, 16
      %v2366 = vor.u32 %v2363, %v2364
      %v2368 = vshrl.u32 %v2272, 16
      %v2370 = vrot.slane %v2368, 7
      %v2371 = vshll.u32 %v2272, 16
      %v2373 = vor.u32 %v2370, %v2371
      %v2375 = vshrl.u32 %v2273, 16
      %v2377 = vrot.slane %v2375, 7
      %v2378 = vshll.u32 %v2273, 16
      %v2380 = vor.u32 %v2377, %v2378
      %v2382 = vshrl.u32 %v2274, 16
      %v2384 = vrot.slane %v2382, 7
      %v2385 = vshll.u32 %v2274, 16
      %v2387 = vor.u32 %v2384, %v2385
      %v2389 = vshrl.u32 %v2275, 16
      %v2391 = vrot.slane %v2389, 7
      %v2392 = vshll.u32 %v2275, 16
      %v2394 = vor.u32 %v2391, %v2392
      %v2396 = vshrl.u32 %v2276, 16
      %v2398 = vrot.slane %v2396, 7
      %v2399 = vshll.u32 %v2276, 16
      %v2401 = vor.u32 %v2398, %v2399
      %v2403 = vshrl.u32 %v2277, 16
      %v2405 = vrot.slane %v2403, 7
      %v2406 = vshll.u32 %v2277, 16
      %v2408 = vor.u32 %v2405, %v2406
      %v2410 = vshrl.u32 %v2278, 16
      %v2412 = vrot.slane %v2410, 7
      %v2413 = vshll.u32 %v2278, 16
      %v2415 = vor.u32 %v2412, %v2413
      %v2417 = vshrl.u32 %v2279, 16
      %v2419 = vrot.slane %v2417, 7
      %v2420 = vshll.u32 %v2279, 16
      %v2422 = vor.u32 %v2419, %v2420
      %v2424 = vshrl.u32 %v2280, 16
      %v2426 = vrot.slane %v2424, 7
      %v2427 = vshll.u32 %v2280, 16
      %v2429 = vor.u32 %v2426, %v2427
      %v2431 = vshrl.u32 %v2281, 16
      %v2433 = vrot.slane %v2431, 7
      %v2434 = vshll.u32 %v2281, 16
      %v2436 = vor.u32 %v2433, %v2434
      %s2452 = scalar_lea.vmem [#allocation3], 8
      %v2453 = vld [vmem:[%s2452] sm:$0xff]
      %v2454 = vsel %vm723, %v2338, %v2453
      %2455 = vst [vmem:[%s2452] sm:$0xff] %v2454
      %v2456 = vld [vmem:[%s2452 + $0x8] sm:$0xff]
      %v2457 = vsel %vm723, %v2345, %v2456
      %2458 = vst [vmem:[%s2452 + $0x8] sm:$0xff] %v2457
      %v2459 = vld [vmem:[%s2452 + $0x10] sm:$0xff]
      %v2460 = vsel %vm723, %v2352, %v2459
      %2461 = vst [vmem:[%s2452 + $0x10] sm:$0xff] %v2460
      %v2462 = vld [vmem:[%s2452 + $0x18] sm:$0xff]
      %v2463 = vsel %vm723, %v2359, %v2462
      %2464 = vst [vmem:[%s2452 + $0x18] sm:$0xff] %v2463
      %v2465 = vld [vmem:[%s2452 + $0x20] sm:$0xff]
      %v2466 = vsel %vm723, %v2366, %v2465
      %2467 = vst [vmem:[%s2452 + $0x20] sm:$0xff] %v2466
      %v2468 = vld [vmem:[%s2452 + $0x28] sm:$0xff]
      %v2469 = vsel %vm723, %v2373, %v2468
      %2470 = vst [vmem:[%s2452 + $0x28] sm:$0xff] %v2469
      %v2471 = vld [vmem:[%s2452 + $0x30] sm:$0xff]
      %v2472 = vsel %vm723, %v2380, %v2471
      %2473 = vst [vmem:[%s2452 + $0x30] sm:$0xff] %v2472
      %v2474 = vld [vmem:[%s2452 + $0x38] sm:$0xff]
      %v2475 = vsel %vm723, %v2387, %v2474
      %2476 = vst [vmem:[%s2452 + $0x38] sm:$0xff] %v2475
      %v2477 = vld [vmem:[%s2452 + $0x40] sm:$0xff]
      %v2478 = vsel %vm723, %v2394, %v2477
      %2479 = vst [vmem:[%s2452 + $0x40] sm:$0xff] %v2478
      %v2480 = vld [vmem:[%s2452 + $0x48] sm:$0xff]
      %v2481 = vsel %vm723, %v2401, %v2480
      %2482 = vst [vmem:[%s2452 + $0x48] sm:$0xff] %v2481
      %v2483 = vld [vmem:[%s2452 + $0x50] sm:$0xff]
      %v2484 = vsel %vm723, %v2408, %v2483
      %2485 = vst [vmem:[%s2452 + $0x50] sm:$0xff] %v2484
      %v2486 = vld [vmem:[%s2452 + $0x58] sm:$0xff]
      %v2487 = vsel %vm723, %v2415, %v2486
      %2488 = vst [vmem:[%s2452 + $0x58] sm:$0xff] %v2487
      %v2489 = vld [vmem:[%s2452 + $0x60] sm:$0xff]
      %v2490 = vsel %vm723, %v2422, %v2489
      %2491 = vst [vmem:[%s2452 + $0x60] sm:$0xff] %v2490
      %v2492 = vld [vmem:[%s2452 + $0x68] sm:$0xff]
      %v2493 = vsel %vm723, %v2429, %v2492
      %2494 = vst [vmem:[%s2452 + $0x68] sm:$0xff] %v2493
      %v2495 = vld [vmem:[%s2452 + $0x70] sm:$0xff]
      %v2496 = vsel %vm723, %v2436, %v2495
      %2497 = vst [vmem:[%s2452 + $0x70] sm:$0xff] %v2496
      %2498 = vst.msk [vmem:[#allocation3] sm:$0xff] %vm769, 0
      %2514 = vrot.lane.b32.xlu0 %v2267, 4
      %v2515 = vpop.permute.xlu0 %2514
      %2516 = vrot.lane.b32.xlu0 %v2268, 4
      %v2517 = vpop.permute.xlu0 %2516
      %2518 = vrot.lane.b32.xlu0 %v2269, 4
      %v2519 = vpop.permute.xlu0 %2518
      %2520 = vrot.lane.b32.xlu0 %v2270, 4
      %v2521 = vpop.permute.xlu0 %2520
      %2522 = vrot.lane.b32.xlu0 %v2271, 4
      %v2523 = vpop.permute.xlu0 %2522
      %2524 = vrot.lane.b32.xlu0 %v2272, 4
      %v2525 = vpop.permute.xlu0 %2524
      %2526 = vrot.lane.b32.xlu0 %v2273, 4
      %v2527 = vpop.permute.xlu0 %2526
      %2528 = vrot.lane.b32.xlu0 %v2274, 4
      %v2529 = vpop.permute.xlu0 %2528
      %2530 = vrot.lane.b32.xlu0 %v2275, 4
      %v2531 = vpop.permute.xlu0 %2530
      %2532 = vrot.lane.b32.xlu0 %v2276, 4
      %v2533 = vpop.permute.xlu0 %2532
      %2534 = vrot.lane.b32.xlu0 %v2277, 4
      %v2535 = vpop.permute.xlu0 %2534
      %2536 = vrot.lane.b32.xlu0 %v2278, 4
      %v2537 = vpop.permute.xlu0 %2536
      %2538 = vrot.lane.b32.xlu0 %v2279, 4
      %v2539 = vpop.permute.xlu0 %2538
      %2540 = vrot.lane.b32.xlu0 %v2280, 4
      %v2541 = vpop.permute.xlu0 %2540
      %2542 = vrot.lane.b32.xlu0 %v2281, 4
      %v2543 = vpop.permute.xlu0 %2542
      %2559 = vst.msk [vmem:[%s2452] sm:$0xff] %vm769, %v2515
      %2560 = vst.msk [vmem:[%s2452 + $0x8] sm:$0xff] %vm769, %v2517
      %2561 = vst.msk [vmem:[%s2452 + $0x10] sm:$0xff] %vm769, %v2519
      %2562 = vst.msk [vmem:[%s2452 + $0x18] sm:$0xff] %vm769, %v2521
      %2563 = vst.msk [vmem:[%s2452 + $0x20] sm:$0xff] %vm769, %v2523
      %2564 = vst.msk [vmem:[%s2452 + $0x28] sm:$0xff] %vm769, %v2525
      %2565 = vst.msk [vmem:[%s2452 + $0x30] sm:$0xff] %vm769, %v2527
      %2566 = vst.msk [vmem:[%s2452 + $0x38] sm:$0xff] %vm769, %v2529
      %2567 = vst.msk [vmem:[%s2452 + $0x40] sm:$0xff] %vm769, %v2531
      %2568 = vst.msk [vmem:[%s2452 + $0x48] sm:$0xff] %vm769, %v2533
      %2569 = vst.msk [vmem:[%s2452 + $0x50] sm:$0xff] %vm769, %v2535
      %2570 = vst.msk [vmem:[%s2452 + $0x58] sm:$0xff] %vm769, %v2537
      %2571 = vst.msk [vmem:[%s2452 + $0x60] sm:$0xff] %vm769, %v2539
      %2572 = vst.msk [vmem:[%s2452 + $0x68] sm:$0xff] %vm769, %v2541
      %2573 = vst.msk [vmem:[%s2452 + $0x70] sm:$0xff] %vm769, %v2543
      %2574 = vst.msk [vmem:[#allocation3] sm:$0xff] %vm846, 0
      %v2575 = vld [vmem:[#allocation3] sm:$0x80]
      %v2576 = vsel %vm850, 0, %v2575
      %2577 = vst [vmem:[#allocation3] sm:$0x80] %v2576
      %v2578 = vld [vmem:[#allocation3 + $0x8] sm:$0x80]
      %v2579 = vsel %vm850, 0, %v2578
      %2580 = vst [vmem:[#allocation3 + $0x8] sm:$0x80] %v2579
      %v2581 = vld [vmem:[#allocation3 + $0x10] sm:$0x80]
      %v2582 = vsel %vm850, 0, %v2581
      %2583 = vst [vmem:[#allocation3 + $0x10] sm:$0x80] %v2582
      %v2584 = vld [vmem:[#allocation3 + $0x18] sm:$0x80]
      %v2585 = vsel %vm850, 0, %v2584
      %2586 = vst [vmem:[#allocation3 + $0x18] sm:$0x80] %v2585
      %v2587 = vld [vmem:[#allocation3 + $0x20] sm:$0x80]
      %v2588 = vsel %vm850, 0, %v2587
      %2589 = vst [vmem:[#allocation3 + $0x20] sm:$0x80] %v2588
      %v2590 = vld [vmem:[#allocation3 + $0x28] sm:$0x80]
      %v2591 = vsel %vm850, 0, %v2590
      %2592 = vst [vmem:[#allocation3 + $0x28] sm:$0x80] %v2591
      %v2593 = vld [vmem:[#allocation3 + $0x30] sm:$0x80]
      %v2594 = vsel %vm850, 0, %v2593
      %2595 = vst [vmem:[#allocation3 + $0x30] sm:$0x80] %v2594
      %v2596 = vld [vmem:[#allocation3 + $0x38] sm:$0x80]
      %v2597 = vsel %vm850, 0, %v2596
      %2598 = vst [vmem:[#allocation3 + $0x38] sm:$0x80] %v2597
      %v2599 = vld [vmem:[#allocation3 + $0x40] sm:$0x80]
      %v2600 = vsel %vm850, 0, %v2599
      %2601 = vst [vmem:[#allocation3 + $0x40] sm:$0x80] %v2600
      %v2602 = vld [vmem:[#allocation3 + $0x48] sm:$0x80]
      %v2603 = vsel %vm850, 0, %v2602
      %2604 = vst [vmem:[#allocation3 + $0x48] sm:$0x80] %v2603
      %v2605 = vld [vmem:[#allocation3 + $0x50] sm:$0x80]
      %v2606 = vsel %vm850, 0, %v2605
      %2607 = vst [vmem:[#allocation3 + $0x50] sm:$0x80] %v2606
      %v2608 = vld [vmem:[#allocation3 + $0x58] sm:$0x80]
      %v2609 = vsel %vm850, 0, %v2608
      %2610 = vst [vmem:[#allocation3 + $0x58] sm:$0x80] %v2609
      %v2611 = vld [vmem:[#allocation3 + $0x60] sm:$0x80]
      %v2612 = vsel %vm850, 0, %v2611
      %2613 = vst [vmem:[#allocation3 + $0x60] sm:$0x80] %v2612
      %v2614 = vld [vmem:[#allocation3 + $0x68] sm:$0x80]
      %v2615 = vsel %vm850, 0, %v2614
      %2616 = vst [vmem:[#allocation3 + $0x68] sm:$0x80] %v2615
      %v2617 = vld [vmem:[#allocation3 + $0x70] sm:$0x80]
      %v2618 = vsel %vm850, 0, %v2617
      %2619 = vst [vmem:[#allocation3 + $0x70] sm:$0x80] %v2618
      %v2620 = vld [vmem:[#allocation3 + $0x78] sm:$0x80]
      %v2621 = vsel %vm850, 0, %v2620
      %2622 = vst [vmem:[#allocation3 + $0x78] sm:$0x80] %v2621
      %v2623 = vrot.slane %v2336, 1
      %v2624 = vor.u32 %v2333, %v2623
      %v2625 = vrot.slane %v2343, 1
      %v2626 = vor.u32 %v2340, %v2625
      %v2627 = vrot.slane %v2350, 1
      %v2628 = vor.u32 %v2347, %v2627
      %v2629 = vrot.slane %v2357, 1
      %v2630 = vor.u32 %v2354, %v2629
      %v2631 = vrot.slane %v2364, 1
      %v2632 = vor.u32 %v2361, %v2631
      %v2633 = vrot.slane %v2371, 1
      %v2634 = vor.u32 %v2368, %v2633
      %v2635 = vrot.slane %v2378, 1
      %v2636 = vor.u32 %v2375, %v2635
      %v2637 = vrot.slane %v2385, 1
      %v2638 = vor.u32 %v2382, %v2637
      %v2639 = vrot.slane %v2392, 1
      %v2640 = vor.u32 %v2389, %v2639
      %v2641 = vrot.slane %v2399, 1
      %v2642 = vor.u32 %v2396, %v2641
      %v2643 = vrot.slane %v2406, 1
      %v2644 = vor.u32 %v2403, %v2643
      %v2645 = vrot.slane %v2413, 1
      %v2646 = vor.u32 %v2410, %v2645
      %v2647 = vrot.slane %v2420, 1
      %v2648 = vor.u32 %v2417, %v2647
      %v2649 = vrot.slane %v2427, 1
      %v2650 = vor.u32 %v2424, %v2649
      %v2651 = vrot.slane %v2434, 1
      %v2652 = vor.u32 %v2431, %v2651
      %2653 = vrot.lane.b32.xlu0 %v2624, 8
      %v2654 = vpop.permute.xlu0 %2653
      %2655 = vrot.lane.b32.xlu0 %v2626, 8
      %v2656 = vpop.permute.xlu0 %2655
      %2657 = vrot.lane.b32.xlu0 %v2628, 8
      %v2658 = vpop.permute.xlu0 %2657
      %2659 = vrot.lane.b32.xlu0 %v2630, 8
      %v2660 = vpop.permute.xlu0 %2659
      %2661 = vrot.lane.b32.xlu0 %v2632, 8
      %v2662 = vpop.permute.xlu0 %2661
      %2663 = vrot.lane.b32.xlu0 %v2634, 8
      %v2664 = vpop.permute.xlu0 %2663
      %2665 = vrot.lane.b32.xlu0 %v2636, 8
      %v2666 = vpop.permute.xlu0 %2665
      %2667 = vrot.lane.b32.xlu0 %v2638, 8
      %v2668 = vpop.permute.xlu0 %2667
      %2669 = vrot.lane.b32.xlu0 %v2640, 8
      %v2670 = vpop.permute.xlu0 %2669
      %2671 = vrot.lane.b32.xlu0 %v2642, 8
      %v2672 = vpop.permute.xlu0 %2671
      %2673 = vrot.lane.b32.xlu0 %v2644, 8
      %v2674 = vpop.permute.xlu0 %2673
      %2675 = vrot.lane.b32.xlu0 %v2646, 8
      %v2676 = vpop.permute.xlu0 %2675
      %2677 = vrot.lane.b32.xlu0 %v2648, 8
      %v2678 = vpop.permute.xlu0 %2677
      %2679 = vrot.lane.b32.xlu0 %v2650, 8
      %v2680 = vpop.permute.xlu0 %2679
      %2681 = vrot.lane.b32.xlu0 %v2652, 8
      %v2682 = vpop.permute.xlu0 %2681
      %v2698 = vld [vmem:[%s2452] sm:$0xff]
      %v2699 = vsel %vm976, %v2654, %v2698
      %2700 = vst [vmem:[%s2452] sm:$0xff] %v2699
      %v2701 = vld [vmem:[%s2452 + $0x8] sm:$0xff]
      %v2702 = vsel %vm976, %v2656, %v2701
      %2703 = vst [vmem:[%s2452 + $0x8] sm:$0xff] %v2702
      %v2704 = vld [vmem:[%s2452 + $0x10] sm:$0xff]
      %v2705 = vsel %vm976, %v2658, %v2704
      %2706 = vst [vmem:[%s2452 + $0x10] sm:$0xff] %v2705
      %v2707 = vld [vmem:[%s2452 + $0x18] sm:$0xff]
      %v2708 = vsel %vm976, %v2660, %v2707
      %2709 = vst [vmem:[%s2452 + $0x18] sm:$0xff] %v2708
      %v2710 = vld [vmem:[%s2452 + $0x20] sm:$0xff]
      %v2711 = vsel %vm976, %v2662, %v2710
      %2712 = vst [vmem:[%s2452 + $0x20] sm:$0xff] %v2711
      %v2713 = vld [vmem:[%s2452 + $0x28] sm:$0xff]
      %v2714 = vsel %vm976, %v2664, %v2713
      %2715 = vst [vmem:[%s2452 + $0x28] sm:$0xff] %v2714
      %v2716 = vld [vmem:[%s2452 + $0x30] sm:$0xff]
      %v2717 = vsel %vm976, %v2666, %v2716
      %2718 = vst [vmem:[%s2452 + $0x30] sm:$0xff] %v2717
      %v2719 = vld [vmem:[%s2452 + $0x38] sm:$0xff]
      %v2720 = vsel %vm976, %v2668, %v2719
      %2721 = vst [vmem:[%s2452 + $0x38] sm:$0xff] %v2720
      %v2722 = vld [vmem:[%s2452 + $0x40] sm:$0xff]
      %v2723 = vsel %vm976, %v2670, %v2722
      %2724 = vst [vmem:[%s2452 + $0x40] sm:$0xff] %v2723
      %v2725 = vld [vmem:[%s2452 + $0x48] sm:$0xff]
      %v2726 = vsel %vm976, %v2672, %v2725
      %2727 = vst [vmem:[%s2452 + $0x48] sm:$0xff] %v2726
      %v2728 = vld [vmem:[%s2452 + $0x50] sm:$0xff]
      %v2729 = vsel %vm976, %v2674, %v2728
      %2730 = vst [vmem:[%s2452 + $0x50] sm:$0xff] %v2729
      %v2731 = vld [vmem:[%s2452 + $0x58] sm:$0xff]
      %v2732 = vsel %vm976, %v2676, %v2731
      %2733 = vst [vmem:[%s2452 + $0x58] sm:$0xff] %v2732
      %v2734 = vld [vmem:[%s2452 + $0x60] sm:$0xff]
      %v2735 = vsel %vm976, %v2678, %v2734
      %2736 = vst [vmem:[%s2452 + $0x60] sm:$0xff] %v2735
      %v2737 = vld [vmem:[%s2452 + $0x68] sm:$0xff]
      %v2738 = vsel %vm976, %v2680, %v2737
      %2739 = vst [vmem:[%s2452 + $0x68] sm:$0xff] %v2738
      %v2740 = vld [vmem:[%s2452 + $0x70] sm:$0xff]
      %v2741 = vsel %vm976, %v2682, %v2740
      %2742 = vst [vmem:[%s2452 + $0x70] sm:$0xff] %v2741
      %v2743 = vld [vmem:[#allocation3] sm:$0x1]
      %v2744 = vsel %vm1023, 0, %v2743
      %2745 = vst [vmem:[#allocation3] sm:$0x1] %v2744
      %v2746 = vld [vmem:[#allocation3 + $0x8] sm:$0x1]
      %v2747 = vsel %vm1023, 0, %v2746
      %2748 = vst [vmem:[#allocation3 + $0x8] sm:$0x1] %v2747
      %v2749 = vld [vmem:[#allocation3 + $0x10] sm:$0x1]
      %v2750 = vsel %vm1023, 0, %v2749
      %2751 = vst [vmem:[#allocation3 + $0x10] sm:$0x1] %v2750
      %v2752 = vld [vmem:[#allocation3 + $0x18] sm:$0x1]
      %v2753 = vsel %vm1023, 0, %v2752
      %2754 = vst [vmem:[#allocation3 + $0x18] sm:$0x1] %v2753
      %v2755 = vld [vmem:[#allocation3 + $0x20] sm:$0x1]
      %v2756 = vsel %vm1023, 0, %v2755
      %2757 = vst [vmem:[#allocation3 + $0x20] sm:$0x1] %v2756
      %v2758 = vld [vmem:[#allocation3 + $0x28] sm:$0x1]
      %v2759 = vsel %vm1023, 0, %v2758
      %2760 = vst [vmem:[#allocation3 + $0x28] sm:$0x1] %v2759
      %v2761 = vld [vmem:[#allocation3 + $0x30] sm:$0x1]
      %v2762 = vsel %vm1023, 0, %v2761
      %2763 = vst [vmem:[#allocation3 + $0x30] sm:$0x1] %v2762
      %v2764 = vld [vmem:[#allocation3 + $0x38] sm:$0x1]
      %v2765 = vsel %vm1023, 0, %v2764
      %2766 = vst [vmem:[#allocation3 + $0x38] sm:$0x1] %v2765
      %v2767 = vld [vmem:[#allocation3 + $0x40] sm:$0x1]
      %v2768 = vsel %vm1023, 0, %v2767
      %2769 = vst [vmem:[#allocation3 + $0x40] sm:$0x1] %v2768
      %v2770 = vld [vmem:[#allocation3 + $0x48] sm:$0x1]
      %v2771 = vsel %vm1023, 0, %v2770
      %2772 = vst [vmem:[#allocation3 + $0x48] sm:$0x1] %v2771
      %v2773 = vld [vmem:[#allocation3 + $0x50] sm:$0x1]
      %v2774 = vsel %vm1023, 0, %v2773
      %2775 = vst [vmem:[#allocation3 + $0x50] sm:$0x1] %v2774
      %v2776 = vld [vmem:[#allocation3 + $0x58] sm:$0x1]
      %v2777 = vsel %vm1023, 0, %v2776
      %2778 = vst [vmem:[#allocation3 + $0x58] sm:$0x1] %v2777
      %v2779 = vld [vmem:[#allocation3 + $0x60] sm:$0x1]
      %v2780 = vsel %vm1023, 0, %v2779
      %2781 = vst [vmem:[#allocation3 + $0x60] sm:$0x1] %v2780
      %v2782 = vld [vmem:[#allocation3 + $0x68] sm:$0x1]
      %v2783 = vsel %vm1023, 0, %v2782
      %2784 = vst [vmem:[#allocation3 + $0x68] sm:$0x1] %v2783
      %v2785 = vld [vmem:[#allocation3 + $0x70] sm:$0x1]
      %v2786 = vsel %vm1023, 0, %v2785
      %2787 = vst [vmem:[#allocation3 + $0x70] sm:$0x1] %v2786
      %v2788 = vld [vmem:[#allocation3 + $0x78] sm:$0x1]
      %v2789 = vsel %vm1023, 0, %v2788
      %2790 = vst [vmem:[#allocation3 + $0x78] sm:$0x1] %v2789
      %v2792 = vshrl.u32 %v2282, 16
      %v2794 = vrot.slane %v2792, 7
      %v2795 = vshll.u32 %v2282, 16
      %v2797 = vor.u32 %v2794, %v2795
      %2798 = vrot.lane.b32.xlu0 %v2338, 12
      %v2799 = vpop.permute.xlu0 %2798
      %2800 = vrot.lane.b32.xlu0 %v2345, 12
      %v2801 = vpop.permute.xlu0 %2800
      %2802 = vrot.lane.b32.xlu0 %v2352, 12
      %v2803 = vpop.permute.xlu0 %2802
      %2804 = vrot.lane.b32.xlu0 %v2359, 12
      %v2805 = vpop.permute.xlu0 %2804
      %2806 = vrot.lane.b32.xlu0 %v2366, 12
      %v2807 = vpop.permute.xlu0 %2806
      %2808 = vrot.lane.b32.xlu0 %v2373, 12
      %v2809 = vpop.permute.xlu0 %2808
      %2810 = vrot.lane.b32.xlu0 %v2380, 12
      %v2811 = vpop.permute.xlu0 %2810
      %2812 = vrot.lane.b32.xlu0 %v2387, 12
      %v2813 = vpop.permute.xlu0 %2812
      %2814 = vrot.lane.b32.xlu0 %v2394, 12
      %v2815 = vpop.permute.xlu0 %2814
      %2816 = vrot.lane.b32.xlu0 %v2401, 12
      %v2817 = vpop.permute.xlu0 %2816
      %2818 = vrot.lane.b32.xlu0 %v2408, 12
      %v2819 = vpop.permute.xlu0 %2818
      %2820 = vrot.lane.b32.xlu0 %v2415, 12
      %v2821 = vpop.permute.xlu0 %2820
      %2822 = vrot.lane.b32.xlu0 %v2422, 12
      %v2823 = vpop.permute.xlu0 %2822
      %2824 = vrot.lane.b32.xlu0 %v2429, 12
      %v2825 = vpop.permute.xlu0 %2824
      %2826 = vrot.lane.b32.xlu0 %v2436, 12
      %v2827 = vpop.permute.xlu0 %2826
      %2828 = vrot.lane.b32.xlu0 %v2797, 12
      %v2829 = vpop.permute.xlu0 %2828
      %v2846 = vld [vmem:[#allocation3] sm:$0xff]
      %v2847 = vsel %vm1128, %v2799, %v2846
      %2848 = vst [vmem:[#allocation3] sm:$0xff] %v2847
      %v2849 = vld [vmem:[#allocation3 + $0x8] sm:$0xff]
      %v2850 = vsel %vm1128, %v2801, %v2849
      %2851 = vst [vmem:[#allocation3 + $0x8] sm:$0xff] %v2850
      %v2852 = vld [vmem:[#allocation3 + $0x10] sm:$0xff]
      %v2853 = vsel %vm1128, %v2803, %v2852
      %2854 = vst [vmem:[#allocation3 + $0x10] sm:$0xff] %v2853
      %v2855 = vld [vmem:[#allocation3 + $0x18] sm:$0xff]
      %v2856 = vsel %vm1128, %v2805, %v2855
      %2857 = vst [vmem:[#allocation3 + $0x18] sm:$0xff] %v2856
      %v2858 = vld [vmem:[#allocation3 + $0x20] sm:$0xff]
      %v2859 = vsel %vm1128, %v2807, %v2858
      %2860 = vst [vmem:[#allocation3 + $0x20] sm:$0xff] %v2859
      %v2861 = vld [vmem:[#allocation3 + $0x28] sm:$0xff]
      %v2862 = vsel %vm1128, %v2809, %v2861
      %2863 = vst [vmem:[#allocation3 + $0x28] sm:$0xff] %v2862
      %v2864 = vld [vmem:[#allocation3 + $0x30] sm:$0xff]
      %v2865 = vsel %vm1128, %v2811, %v2864
      %2866 = vst [vmem:[#allocation3 + $0x30] sm:$0xff] %v2865
      %v2867 = vld [vmem:[#allocation3 + $0x38] sm:$0xff]
      %v2868 = vsel %vm1128, %v2813, %v2867
      %2869 = vst [vmem:[#allocation3 + $0x38] sm:$0xff] %v2868
      %v2870 = vld [vmem:[#allocation3 + $0x40] sm:$0xff]
      %v2871 = vsel %vm1128, %v2815, %v2870
      %2872 = vst [vmem:[#allocation3 + $0x40] sm:$0xff] %v2871
      %v2873 = vld [vmem:[#allocation3 + $0x48] sm:$0xff]
      %v2874 = vsel %vm1128, %v2817, %v2873
      %2875 = vst [vmem:[#allocation3 + $0x48] sm:$0xff] %v2874
      %v2876 = vld [vmem:[#allocation3 + $0x50] sm:$0xff]
      %v2877 = vsel %vm1128, %v2819, %v2876
      %2878 = vst [vmem:[#allocation3 + $0x50] sm:$0xff] %v2877
      %v2879 = vld [vmem:[#allocation3 + $0x58] sm:$0xff]
      %v2880 = vsel %vm1128, %v2821, %v2879
      %2881 = vst [vmem:[#allocation3 + $0x58] sm:$0xff] %v2880
      %v2882 = vld [vmem:[#allocation3 + $0x60] sm:$0xff]
      %v2883 = vsel %vm1128, %v2823, %v2882
      %2884 = vst [vmem:[#allocation3 + $0x60] sm:$0xff] %v2883
      %v2885 = vld [vmem:[#allocation3 + $0x68] sm:$0xff]
      %v2886 = vsel %vm1128, %v2825, %v2885
      %2887 = vst [vmem:[#allocation3 + $0x68] sm:$0xff] %v2886
      %v2888 = vld [vmem:[#allocation3 + $0x70] sm:$0xff]
      %v2889 = vsel %vm1128, %v2827, %v2888
      %2890 = vst [vmem:[#allocation3 + $0x70] sm:$0xff] %v2889
      %v2891 = vld [vmem:[#allocation3 + $0x78] sm:$0xff]
      %v2892 = vsel %vm1128, %v2829, %v2891
      %2893 = vst [vmem:[#allocation3 + $0x78] sm:$0xff] %v2892
      %2895 = vrot.lane.b32.xlu0 %v2267, 16
      %v2896 = vpop.permute.xlu0 %2895
      %2897 = vrot.lane.b32.xlu0 %v2268, 16
      %v2898 = vpop.permute.xlu0 %2897
      %2899 = vrot.lane.b32.xlu0 %v2269, 16
      %v2900 = vpop.permute.xlu0 %2899
      %2901 = vrot.lane.b32.xlu0 %v2270, 16
      %v2902 = vpop.permute.xlu0 %2901
      %2903 = vrot.lane.b32.xlu0 %v2271, 16
      %v2904 = vpop.permute.xlu0 %2903
      %2905 = vrot.lane.b32.xlu0 %v2272, 16
      %v2906 = vpop.permute.xlu0 %2905
      %2907 = vrot.lane.b32.xlu0 %v2273, 16
      %v2908 = vpop.permute.xlu0 %2907
      %2909 = vrot.lane.b32.xlu0 %v2274, 16
      %v2910 = vpop.permute.xlu0 %2909
      %2911 = vrot.lane.b32.xlu0 %v2275, 16
      %v2912 = vpop.permute.xlu0 %2911
      %2913 = vrot.lane.b32.xlu0 %v2276, 16
      %v2914 = vpop.permute.xlu0 %2913
      %2915 = vrot.lane.b32.xlu0 %v2277, 16
      %v2916 = vpop.permute.xlu0 %2915
      %2917 = vrot.lane.b32.xlu0 %v2278, 16
      %v2918 = vpop.permute.xlu0 %2917
      %2919 = vrot.lane.b32.xlu0 %v2279, 16
      %v2920 = vpop.permute.xlu0 %2919
      %2921 = vrot.lane.b32.xlu0 %v2280, 16
      %v2922 = vpop.permute.xlu0 %2921
      %2923 = vrot.lane.b32.xlu0 %v2281, 16
      %v2924 = vpop.permute.xlu0 %2923
      %2925 = vrot.lane.b32.xlu0 %v2282, 16
      %v2926 = vpop.permute.xlu0 %2925
      %2943 = vst.msk [vmem:[#allocation3] sm:$0xff] %vm1226, %v2896
      %2944 = vst.msk [vmem:[#allocation3 + $0x8] sm:$0xff] %vm1226, %v2898
      %2945 = vst.msk [vmem:[#allocation3 + $0x10] sm:$0xff] %vm1226, %v2900
      %2946 = vst.msk [vmem:[#allocation3 + $0x18] sm:$0xff] %vm1226, %v2902
      %2947 = vst.msk [vmem:[#allocation3 + $0x20] sm:$0xff] %vm1226, %v2904
      %2948 = vst.msk [vmem:[#allocation3 + $0x28] sm:$0xff] %vm1226, %v2906
      %2949 = vst.msk [vmem:[#allocation3 + $0x30] sm:$0xff] %vm1226, %v2908
      %2950 = vst.msk [vmem:[#allocation3 + $0x38] sm:$0xff] %vm1226, %v2910
      %2951 = vst.msk [vmem:[#allocation3 + $0x40] sm:$0xff] %vm1226, %v2912
      %2952 = vst.msk [vmem:[#allocation3 + $0x48] sm:$0xff] %vm1226, %v2914
      %2953 = vst.msk [vmem:[#allocation3 + $0x50] sm:$0xff] %vm1226, %v2916
      %2954 = vst.msk [vmem:[#allocation3 + $0x58] sm:$0xff] %vm1226, %v2918
      %2955 = vst.msk [vmem:[#allocation3 + $0x60] sm:$0xff] %vm1226, %v2920
      %2956 = vst.msk [vmem:[#allocation3 + $0x68] sm:$0xff] %vm1226, %v2922
      %2957 = vst.msk [vmem:[#allocation3 + $0x70] sm:$0xff] %vm1226, %v2924
      %2958 = vst.msk [vmem:[#allocation3 + $0x78] sm:$0xff] %vm1226, %v2926
      %v2959 = vld [vmem:[#allocation3] sm:$0x80]
      %v2960 = vsel %vm1244, 0, %v2959
      %2961 = vst [vmem:[#allocation3] sm:$0x80] %v2960
      %v2962 = vld [vmem:[#allocation3 + $0x8] sm:$0x80]
      %v2963 = vsel %vm1244, 0, %v2962
      %2964 = vst [vmem:[#allocation3 + $0x8] sm:$0x80] %v2963
      %v2965 = vld [vmem:[#allocation3 + $0x10] sm:$0x80]
      %v2966 = vsel %vm1244, 0, %v2965
      %2967 = vst [vmem:[#allocation3 + $0x10] sm:$0x80] %v2966
      %v2968 = vld [vmem:[#allocation3 + $0x18] sm:$0x80]
      %v2969 = vsel %vm1244, 0, %v2968
      %2970 = vst [vmem:[#allocation3 + $0x18] sm:$0x80] %v2969
      %v2971 = vld [vmem:[#allocation3 + $0x20] sm:$0x80]
      %v2972 = vsel %vm1244, 0, %v2971
      %2973 = vst [vmem:[#allocation3 + $0x20] sm:$0x80] %v2972
      %v2974 = vld [vmem:[#allocation3 + $0x28] sm:$0x80]
      %v2975 = vsel %vm1244, 0, %v2974
      %2976 = vst [vmem:[#allocation3 + $0x28] sm:$0x80] %v2975
      %v2977 = vld [vmem:[#allocation3 + $0x30] sm:$0x80]
      %v2978 = vsel %vm1244, 0, %v2977
      %2979 = vst [vmem:[#allocation3 + $0x30] sm:$0x80] %v2978
      %v2980 = vld [vmem:[#allocation3 + $0x38] sm:$0x80]
      %v2981 = vsel %vm1244, 0, %v2980
      %2982 = vst [vmem:[#allocation3 + $0x38] sm:$0x80] %v2981
      %v2983 = vld [vmem:[#allocation3 + $0x40] sm:$0x80]
      %v2984 = vsel %vm1244, 0, %v2983
      %2985 = vst [vmem:[#allocation3 + $0x40] sm:$0x80] %v2984
      %v2986 = vld [vmem:[#allocation3 + $0x48] sm:$0x80]
      %v2987 = vsel %vm1244, 0, %v2986
      %2988 = vst [vmem:[#allocation3 + $0x48] sm:$0x80] %v2987
      %v2989 = vld [vmem:[#allocation3 + $0x50] sm:$0x80]
      %v2990 = vsel %vm1244, 0, %v2989
      %2991 = vst [vmem:[#allocation3 + $0x50] sm:$0x80] %v2990
      %v2992 = vld [vmem:[#allocation3 + $0x58] sm:$0x80]
      %v2993 = vsel %vm1244, 0, %v2992
      %2994 = vst [vmem:[#allocation3 + $0x58] sm:$0x80] %v2993
      %v2995 = vld [vmem:[#allocation3 + $0x60] sm:$0x80]
      %v2996 = vsel %vm1244, 0, %v2995
      %2997 = vst [vmem:[#allocation3 + $0x60] sm:$0x80] %v2996
      %v2998 = vld [vmem:[#allocation3 + $0x68] sm:$0x80]
      %v2999 = vsel %vm1244, 0, %v2998
      %3000 = vst [vmem:[#allocation3 + $0x68] sm:$0x80] %v2999
      %v3001 = vld [vmem:[#allocation3 + $0x70] sm:$0x80]
      %v3002 = vsel %vm1244, 0, %v3001
      %3003 = vst [vmem:[#allocation3 + $0x70] sm:$0x80] %v3002
      %v3004 = vld [vmem:[#allocation3 + $0x78] sm:$0x80]
      %v3005 = vsel %vm1244, 0, %v3004
      %3006 = vst [vmem:[#allocation3 + $0x78] sm:$0x80] %v3005
      %v3007 = vrot.slane %v2795, 1
      %v3008 = vor.u32 %v2792, %v3007
      %3009 = vrot.lane.b32.xlu0 %v2624, 20
      %v3010 = vpop.permute.xlu0 %3009
      %3011 = vrot.lane.b32.xlu0 %v2626, 20
      %v3012 = vpop.permute.xlu0 %3011
      %3013 = vrot.lane.b32.xlu0 %v2628, 20
      %v3014 = vpop.permute.xlu0 %3013
      %3015 = vrot.lane.b32.xlu0 %v2630, 20
      %v3016 = vpop.permute.xlu0 %3015
      %3017 = vrot.lane.b32.xlu0 %v2632, 20
      %v3018 = vpop.permute.xlu0 %3017
      %3019 = vrot.lane.b32.xlu0 %v2634, 20
      %v3020 = vpop.permute.xlu0 %3019
      %3021 = vrot.lane.b32.xlu0 %v2636, 20
      %v3022 = vpop.permute.xlu0 %3021
      %3023 = vrot.lane.b32.xlu0 %v2638, 20
      %v3024 = vpop.permute.xlu0 %3023
      %3025 = vrot.lane.b32.xlu0 %v2640, 20
      %v3026 = vpop.permute.xlu0 %3025
      %3027 = vrot.lane.b32.xlu0 %v2642, 20
      %v3028 = vpop.permute.xlu0 %3027
      %3029 = vrot.lane.b32.xlu0 %v2644, 20
      %v3030 = vpop.permute.xlu0 %3029
      %3031 = vrot.lane.b32.xlu0 %v2646, 20
      %v3032 = vpop.permute.xlu0 %3031
      %3033 = vrot.lane.b32.xlu0 %v2648, 20
      %v3034 = vpop.permute.xlu0 %3033
      %3035 = vrot.lane.b32.xlu0 %v2650, 20
      %v3036 = vpop.permute.xlu0 %3035
      %3037 = vrot.lane.b32.xlu0 %v2652, 20
      %v3038 = vpop.permute.xlu0 %3037
      %3039 = vrot.lane.b32.xlu0 %v3008, 20
      %v3040 = vpop.permute.xlu0 %3039
      %v3057 = vld [vmem:[#allocation3] sm:$0xff]
      %v3058 = vsel %vm1344, %v3010, %v3057
      %3059 = vst [vmem:[#allocation3] sm:$0xff] %v3058
      %v3060 = vld [vmem:[#allocation3 + $0x8] sm:$0xff]
      %v3061 = vsel %vm1344, %v3012, %v3060
      %3062 = vst [vmem:[#allocation3 + $0x8] sm:$0xff] %v3061
      %v3063 = vld [vmem:[#allocation3 + $0x10] sm:$0xff]
      %v3064 = vsel %vm1344, %v3014, %v3063
      %3065 = vst [vmem:[#allocation3 + $0x10] sm:$0xff] %v3064
      %v3066 = vld [vmem:[#allocation3 + $0x18] sm:$0xff]
      %v3067 = vsel %vm1344, %v3016, %v3066
      %3068 = vst [vmem:[#allocation3 + $0x18] sm:$0xff] %v3067
      %v3069 = vld [vmem:[#allocation3 + $0x20] sm:$0xff]
      %v3070 = vsel %vm1344, %v3018, %v3069
      %3071 = vst [vmem:[#allocation3 + $0x20] sm:$0xff] %v3070
      %v3072 = vld [vmem:[#allocation3 + $0x28] sm:$0xff]
      %v3073 = vsel %vm1344, %v3020, %v3072
      %3074 = vst [vmem:[#allocation3 + $0x28] sm:$0xff] %v3073
      %v3075 = vld [vmem:[#allocation3 + $0x30] sm:$0xff]
      %v3076 = vsel %vm1344, %v3022, %v3075
      %3077 = vst [vmem:[#allocation3 + $0x30] sm:$0xff] %v3076
      %v3078 = vld [vmem:[#allocation3 + $0x38] sm:$0xff]
      %v3079 = vsel %vm1344, %v3024, %v3078
      %3080 = vst [vmem:[#allocation3 + $0x38] sm:$0xff] %v3079
      %v3081 = vld [vmem:[#allocation3 + $0x40] sm:$0xff]
      %v3082 = vsel %vm1344, %v3026, %v3081
      %3083 = vst [vmem:[#allocation3 + $0x40] sm:$0xff] %v3082
      %v3084 = vld [vmem:[#allocation3 + $0x48] sm:$0xff]
      %v3085 = vsel %vm1344, %v3028, %v3084
      %3086 = vst [vmem:[#allocation3 + $0x48] sm:$0xff] %v3085
      %v3087 = vld [vmem:[#allocation3 + $0x50] sm:$0xff]
      %v3088 = vsel %vm1344, %v3030, %v3087
      %3089 = vst [vmem:[#allocation3 + $0x50] sm:$0xff] %v3088
      %v3090 = vld [vmem:[#allocation3 + $0x58] sm:$0xff]
      %v3091 = vsel %vm1344, %v3032, %v3090
      %3092 = vst [vmem:[#allocation3 + $0x58] sm:$0xff] %v3091
      %v3093 = vld [vmem:[#allocation3 + $0x60] sm:$0xff]
      %v3094 = vsel %vm1344, %v3034, %v3093
      %3095 = vst [vmem:[#allocation3 + $0x60] sm:$0xff] %v3094
      %v3096 = vld [vmem:[#allocation3 + $0x68] sm:$0xff]
      %v3097 = vsel %vm1344, %v3036, %v3096
      %3098 = vst [vmem:[#allocation3 + $0x68] sm:$0xff] %v3097
      %v3099 = vld [vmem:[#allocation3 + $0x70] sm:$0xff]
      %v3100 = vsel %vm1344, %v3038, %v3099
      %3101 = vst [vmem:[#allocation3 + $0x70] sm:$0xff] %v3100
      %v3102 = vld [vmem:[#allocation3 + $0x78] sm:$0xff]
      %v3103 = vsel %vm1344, %v3040, %v3102
      %3104 = vst [vmem:[#allocation3 + $0x78] sm:$0xff] %v3103
      %s3105 = scalar_lea.vmem [#allocation3], 120
      %3106 = vst.msk [vmem:[%s3105] sm:$0xff] %vm1394, 0
      %v3107 = vld [vmem:[#allocation3] sm:$0x1]
      %v3108 = vsel %vm1397, 0, %v3107
      %3109 = vst [vmem:[#allocation3] sm:$0x1] %v3108
      %v3110 = vld [vmem:[#allocation3 + $0x8] sm:$0x1]
      %v3111 = vsel %vm1397, 0, %v3110
      %3112 = vst [vmem:[#allocation3 + $0x8] sm:$0x1] %v3111
      %v3113 = vld [vmem:[#allocation3 + $0x10] sm:$0x1]
      %v3114 = vsel %vm1397, 0, %v3113
      %3115 = vst [vmem:[#allocation3 + $0x10] sm:$0x1] %v3114
      %v3116 = vld [vmem:[#allocation3 + $0x18] sm:$0x1]
      %v3117 = vsel %vm1397, 0, %v3116
      %3118 = vst [vmem:[#allocation3 + $0x18] sm:$0x1] %v3117
      %v3119 = vld [vmem:[#allocation3 + $0x20] sm:$0x1]
      %v3120 = vsel %vm1397, 0, %v3119
      %3121 = vst [vmem:[#allocation3 + $0x20] sm:$0x1] %v3120
      %v3122 = vld [vmem:[#allocation3 + $0x28] sm:$0x1]
      %v3123 = vsel %vm1397, 0, %v3122
      %3124 = vst [vmem:[#allocation3 + $0x28] sm:$0x1] %v3123
      %v3125 = vld [vmem:[#allocation3 + $0x30] sm:$0x1]
      %v3126 = vsel %vm1397, 0, %v3125
      %3127 = vst [vmem:[#allocation3 + $0x30] sm:$0x1] %v3126
      %v3128 = vld [vmem:[#allocation3 + $0x38] sm:$0x1]
      %v3129 = vsel %vm1397, 0, %v3128
      %3130 = vst [vmem:[#allocation3 + $0x38] sm:$0x1] %v3129
      %v3131 = vld [vmem:[#allocation3 + $0x40] sm:$0x1]
      %v3132 = vsel %vm1397, 0, %v3131
      %3133 = vst [vmem:[#allocation3 + $0x40] sm:$0x1] %v3132
      %v3134 = vld [vmem:[#allocation3 + $0x48] sm:$0x1]
      %v3135 = vsel %vm1397, 0, %v3134
      %3136 = vst [vmem:[#allocation3 + $0x48] sm:$0x1] %v3135
      %v3137 = vld [vmem:[#allocation3 + $0x50] sm:$0x1]
      %v3138 = vsel %vm1397, 0, %v3137
      %3139 = vst [vmem:[#allocation3 + $0x50] sm:$0x1] %v3138
      %v3140 = vld [vmem:[#allocation3 + $0x58] sm:$0x1]
      %v3141 = vsel %vm1397, 0, %v3140
      %3142 = vst [vmem:[#allocation3 + $0x58] sm:$0x1] %v3141
      %v3143 = vld [vmem:[#allocation3 + $0x60] sm:$0x1]
      %v3144 = vsel %vm1397, 0, %v3143
      %3145 = vst [vmem:[#allocation3 + $0x60] sm:$0x1] %v3144
      %v3146 = vld [vmem:[#allocation3 + $0x68] sm:$0x1]
      %v3147 = vsel %vm1397, 0, %v3146
      %3148 = vst [vmem:[#allocation3 + $0x68] sm:$0x1] %v3147
      %v3149 = vld [vmem:[#allocation3 + $0x70] sm:$0x1]
      %v3150 = vsel %vm1397, 0, %v3149
      %3151 = vst [vmem:[#allocation3 + $0x70] sm:$0x1] %v3150
      %v3152 = vld [vmem:[#allocation3 + $0x78] sm:$0x1]
      %v3153 = vsel %vm1397, 0, %v3152
      %3154 = vst [vmem:[#allocation3 + $0x78] sm:$0x1] %v3153
      %3155 = vrot.lane.b32.xlu0 %v2345, 24
      %v3156 = vpop.permute.xlu0 %3155
      %3157 = vrot.lane.b32.xlu0 %v2352, 24
      %v3158 = vpop.permute.xlu0 %3157
      %3159 = vrot.lane.b32.xlu0 %v2359, 24
      %v3160 = vpop.permute.xlu0 %3159
      %3161 = vrot.lane.b32.xlu0 %v2366, 24
      %v3162 = vpop.permute.xlu0 %3161
      %3163 = vrot.lane.b32.xlu0 %v2373, 24
      %v3164 = vpop.permute.xlu0 %3163
      %3165 = vrot.lane.b32.xlu0 %v2380, 24
      %v3166 = vpop.permute.xlu0 %3165
      %3167 = vrot.lane.b32.xlu0 %v2387, 24
      %v3168 = vpop.permute.xlu0 %3167
      %3169 = vrot.lane.b32.xlu0 %v2394, 24
      %v3170 = vpop.permute.xlu0 %3169
      %3171 = vrot.lane.b32.xlu0 %v2401, 24
      %v3172 = vpop.permute.xlu0 %3171
      %3173 = vrot.lane.b32.xlu0 %v2408, 24
      %v3174 = vpop.permute.xlu0 %3173
      %3175 = vrot.lane.b32.xlu0 %v2415, 24
      %v3176 = vpop.permute.xlu0 %3175
      %3177 = vrot.lane.b32.xlu0 %v2422, 24
      %v3178 = vpop.permute.xlu0 %3177
      %3179 = vrot.lane.b32.xlu0 %v2429, 24
      %v3180 = vpop.permute.xlu0 %3179
      %3181 = vrot.lane.b32.xlu0 %v2436, 24
      %v3182 = vpop.permute.xlu0 %3181
      %3183 = vrot.lane.b32.xlu0 %v2797, 24
      %v3184 = vpop.permute.xlu0 %3183
      %v3200 = vld [vmem:[#allocation3] sm:$0xff]
      %v3201 = vsel %vm1492, %v3156, %v3200
      %3202 = vst [vmem:[#allocation3] sm:$0xff] %v3201
      %v3203 = vld [vmem:[#allocation3 + $0x8] sm:$0xff]
      %v3204 = vsel %vm1492, %v3158, %v3203
      %3205 = vst [vmem:[#allocation3 + $0x8] sm:$0xff] %v3204
      %v3206 = vld [vmem:[#allocation3 + $0x10] sm:$0xff]
      %v3207 = vsel %vm1492, %v3160, %v3206
      %3208 = vst [vmem:[#allocation3 + $0x10] sm:$0xff] %v3207
      %v3209 = vld [vmem:[#allocation3 + $0x18] sm:$0xff]
      %v3210 = vsel %vm1492, %v3162, %v3209
      %3211 = vst [vmem:[#allocation3 + $0x18] sm:$0xff] %v3210
      %v3212 = vld [vmem:[#allocation3 + $0x20] sm:$0xff]
      %v3213 = vsel %vm1492, %v3164, %v3212
      %3214 = vst [vmem:[#allocation3 + $0x20] sm:$0xff] %v3213
      %v3215 = vld [vmem:[#allocation3 + $0x28] sm:$0xff]
      %v3216 = vsel %vm1492, %v3166, %v3215
      %3217 = vst [vmem:[#allocation3 + $0x28] sm:$0xff] %v3216
      %v3218 = vld [vmem:[#allocation3 + $0x30] sm:$0xff]
      %v3219 = vsel %vm1492, %v3168, %v3218
      %3220 = vst [vmem:[#allocation3 + $0x30] sm:$0xff] %v3219
      %v3221 = vld [vmem:[#allocation3 + $0x38] sm:$0xff]
      %v3222 = vsel %vm1492, %v3170, %v3221
      %3223 = vst [vmem:[#allocation3 + $0x38] sm:$0xff] %v3222
      %v3224 = vld [vmem:[#allocation3 + $0x40] sm:$0xff]
      %v3225 = vsel %vm1492, %v3172, %v3224
      %3226 = vst [vmem:[#allocation3 + $0x40] sm:$0xff] %v3225
      %v3227 = vld [vmem:[#allocation3 + $0x48] sm:$0xff]
      %v3228 = vsel %vm1492, %v3174, %v3227
      %3229 = vst [vmem:[#allocation3 + $0x48] sm:$0xff] %v3228
      %v3230 = vld [vmem:[#allocation3 + $0x50] sm:$0xff]
      %v3231 = vsel %vm1492, %v3176, %v3230
      %3232 = vst [vmem:[#allocation3 + $0x50] sm:$0xff] %v3231
      %v3233 = vld [vmem:[#allocation3 + $0x58] sm:$0xff]
      %v3234 = vsel %vm1492, %v3178, %v3233
      %3235 = vst [vmem:[#allocation3 + $0x58] sm:$0xff] %v3234
      %v3236 = vld [vmem:[#allocation3 + $0x60] sm:$0xff]
      %v3237 = vsel %vm1492, %v3180, %v3236
      %3238 = vst [vmem:[#allocation3 + $0x60] sm:$0xff] %v3237
      %v3239 = vld [vmem:[#allocation3 + $0x68] sm:$0xff]
      %v3240 = vsel %vm1492, %v3182, %v3239
      %3241 = vst [vmem:[#allocation3 + $0x68] sm:$0xff] %v3240
      %v3242 = vld [vmem:[#allocation3 + $0x70] sm:$0xff]
      %v3243 = vsel %vm1492, %v3184, %v3242
      %3244 = vst [vmem:[#allocation3 + $0x70] sm:$0xff] %v3243
      %3245 = vst.msk [vmem:[%s3105] sm:$0xff] %vm1538, 0
      %3246 = vrot.lane.b32.xlu0 %v2268, 28
      %v3247 = vpop.permute.xlu0 %3246
      %3248 = vrot.lane.b32.xlu0 %v2269, 28
      %v3249 = vpop.permute.xlu0 %3248
      %3250 = vrot.lane.b32.xlu0 %v2270, 28
      %v3251 = vpop.permute.xlu0 %3250
      %3252 = vrot.lane.b32.xlu0 %v2271, 28
      %v3253 = vpop.permute.xlu0 %3252
      %3254 = vrot.lane.b32.xlu0 %v2272, 28
      %v3255 = vpop.permute.xlu0 %3254
      %3256 = vrot.lane.b32.xlu0 %v2273, 28
      %v3257 = vpop.permute.xlu0 %3256
      %3258 = vrot.lane.b32.xlu0 %v2274, 28
      %v3259 = vpop.permute.xlu0 %3258
      %3260 = vrot.lane.b32.xlu0 %v2275, 28
      %v3261 = vpop.permute.xlu0 %3260
      %3262 = vrot.lane.b32.xlu0 %v2276, 28
      %v3263 = vpop.permute.xlu0 %3262
      %3264 = vrot.lane.b32.xlu0 %v2277, 28
      %v3265 = vpop.permute.xlu0 %3264
      %3266 = vrot.lane.b32.xlu0 %v2278, 28
      %v3267 = vpop.permute.xlu0 %3266
      %3268 = vrot.lane.b32.xlu0 %v2279, 28
      %v3269 = vpop.permute.xlu0 %3268
      %3270 = vrot.lane.b32.xlu0 %v2280, 28
      %v3271 = vpop.permute.xlu0 %3270
      %3272 = vrot.lane.b32.xlu0 %v2281, 28
      %v3273 = vpop.permute.xlu0 %3272
      %3274 = vrot.lane.b32.xlu0 %v2282, 28
      %v3275 = vpop.permute.xlu0 %3274
      %3291 = vst.msk [vmem:[#allocation3] sm:$0xff] %vm1538, %v3247
      %3292 = vst.msk [vmem:[#allocation3 + $0x8] sm:$0xff] %vm1538, %v3249
      %3293 = vst.msk [vmem:[#allocation3 + $0x10] sm:$0xff] %vm1538, %v3251
      %3294 = vst.msk [vmem:[#allocation3 + $0x18] sm:$0xff] %vm1538, %v3253
      %3295 = vst.msk [vmem:[#allocation3 + $0x20] sm:$0xff] %vm1538, %v3255
      %3296 = vst.msk [vmem:[#allocation3 + $0x28] sm:$0xff] %vm1538, %v3257
      %3297 = vst.msk [vmem:[#allocation3 + $0x30] sm:$0xff] %vm1538, %v3259
      %3298 = vst.msk [vmem:[#allocation3 + $0x38] sm:$0xff] %vm1538, %v3261
      %3299 = vst.msk [vmem:[#allocation3 + $0x40] sm:$0xff] %vm1538, %v3263
      %3300 = vst.msk [vmem:[#allocation3 + $0x48] sm:$0xff] %vm1538, %v3265
      %3301 = vst.msk [vmem:[#allocation3 + $0x50] sm:$0xff] %vm1538, %v3267
      %3302 = vst.msk [vmem:[#allocation3 + $0x58] sm:$0xff] %vm1538, %v3269
      %3303 = vst.msk [vmem:[#allocation3 + $0x60] sm:$0xff] %vm1538, %v3271
      %3304 = vst.msk [vmem:[#allocation3 + $0x68] sm:$0xff] %vm1538, %v3273
      %3305 = vst.msk [vmem:[#allocation3 + $0x70] sm:$0xff] %vm1538, %v3275
      %3306 = vst.msk [vmem:[%s3105] sm:$0xff] %vm1600, 0
      %v3307 = vld [vmem:[#allocation3] sm:$0x80]
      %v3308 = vsel %vm1603, 0, %v3307
      %3309 = vst [vmem:[#allocation3] sm:$0x80] %v3308
      %v3310 = vld [vmem:[#allocation3 + $0x8] sm:$0x80]
      %v3311 = vsel %vm1603, 0, %v3310
      %3312 = vst [vmem:[#allocation3 + $0x8] sm:$0x80] %v3311
      %v3313 = vld [vmem:[#allocation3 + $0x10] sm:$0x80]
      %v3314 = vsel %vm1603, 0, %v3313
      %3315 = vst [vmem:[#allocation3 + $0x10] sm:$0x80] %v3314
      %v3316 = vld [vmem:[#allocation3 + $0x18] sm:$0x80]
      %v3317 = vsel %vm1603, 0, %v3316
      %3318 = vst [vmem:[#allocation3 + $0x18] sm:$0x80] %v3317
      %v3319 = vld [vmem:[#allocation3 + $0x20] sm:$0x80]
      %v3320 = vsel %vm1603, 0, %v3319
      %3321 = vst [vmem:[#allocation3 + $0x20] sm:$0x80] %v3320
      %v3322 = vld [vmem:[#allocation3 + $0x28] sm:$0x80]
      %v3323 = vsel %vm1603, 0, %v3322
      %3324 = vst [vmem:[#allocation3 + $0x28] sm:$0x80] %v3323
      %v3325 = vld [vmem:[#allocation3 + $0x30] sm:$0x80]
      %v3326 = vsel %vm1603, 0, %v3325
      %3327 = vst [vmem:[#allocation3 + $0x30] sm:$0x80] %v3326
      %v3328 = vld [vmem:[#allocation3 + $0x38] sm:$0x80]
      %v3329 = vsel %vm1603, 0, %v3328
      %3330 = vst [vmem:[#allocation3 + $0x38] sm:$0x80] %v3329
      %v3331 = vld [vmem:[#allocation3 + $0x40] sm:$0x80]
      %v3332 = vsel %vm1603, 0, %v3331
      %3333 = vst [vmem:[#allocation3 + $0x40] sm:$0x80] %v3332
      %v3334 = vld [vmem:[#allocation3 + $0x48] sm:$0x80]
      %v3335 = vsel %vm1603, 0, %v3334
      %3336 = vst [vmem:[#allocation3 + $0x48] sm:$0x80] %v3335
      %v3337 = vld [vmem:[#allocation3 + $0x50] sm:$0x80]
      %v3338 = vsel %vm1603, 0, %v3337
      %3339 = vst [vmem:[#allocation3 + $0x50] sm:$0x80] %v3338
      %v3340 = vld [vmem:[#allocation3 + $0x58] sm:$0x80]
      %v3341 = vsel %vm1603, 0, %v3340
      %3342 = vst [vmem:[#allocation3 + $0x58] sm:$0x80] %v3341
      %v3343 = vld [vmem:[#allocation3 + $0x60] sm:$0x80]
      %v3344 = vsel %vm1603, 0, %v3343
      %3345 = vst [vmem:[#allocation3 + $0x60] sm:$0x80] %v3344
      %v3346 = vld [vmem:[#allocation3 + $0x68] sm:$0x80]
      %v3347 = vsel %vm1603, 0, %v3346
      %3348 = vst [vmem:[#allocation3 + $0x68] sm:$0x80] %v3347
      %v3349 = vld [vmem:[#allocation3 + $0x70] sm:$0x80]
      %v3350 = vsel %vm1603, 0, %v3349
      %3351 = vst [vmem:[#allocation3 + $0x70] sm:$0x80] %v3350
      %v3352 = vld [vmem:[#allocation3 + $0x78] sm:$0x80]
      %v3353 = vsel %vm1603, 0, %v3352
      %3354 = vst [vmem:[#allocation3 + $0x78] sm:$0x80] %v3353
      %3355 = vrot.lane.b32.xlu0 %v2626, 32
      %v3356 = vpop.permute.xlu0 %3355
      %3357 = vrot.lane.b32.xlu0 %v2628, 32
      %v3358 = vpop.permute.xlu0 %3357
      %3359 = vrot.lane.b32.xlu0 %v2630, 32
      %v3360 = vpop.permute.xlu0 %3359
      %3361 = vrot.lane.b32.xlu0 %v2632, 32
      %v3362 = vpop.permute.xlu0 %3361
      %3363 = vrot.lane.b32.xlu0 %v2634, 32
      %v3364 = vpop.permute.xlu0 %3363
      %3365 = vrot.lane.b32.xlu0 %v2636, 32
      %v3366 = vpop.permute.xlu0 %3365
      %3367 = vrot.lane.b32.xlu0 %v2638, 32
      %v3368 = vpop.permute.xlu0 %3367
      %3369 = vrot.lane.b32.xlu0 %v2640, 32
      %v3370 = vpop.permute.xlu0 %3369
      %3371 = vrot.lane.b32.xlu0 %v2642, 32
      %v3372 = vpop.permute.xlu0 %3371
      %3373 = vrot.lane.b32.xlu0 %v2644, 32
      %v3374 = vpop.permute.xlu0 %3373
      %3375 = vrot.lane.b32.xlu0 %v2646, 32
      %v3376 = vpop.permute.xlu0 %3375
      %3377 = vrot.lane.b32.xlu0 %v2648, 32
      %v3378 = vpop.permute.xlu0 %3377
      %3379 = vrot.lane.b32.xlu0 %v2650, 32
      %v3380 = vpop.permute.xlu0 %3379
      %3381 = vrot.lane.b32.xlu0 %v2652, 32
      %v3382 = vpop.permute.xlu0 %3381
      %3383 = vrot.lane.b32.xlu0 %v3008, 32
      %v3384 = vpop.permute.xlu0 %3383
      %v3400 = vld [vmem:[#allocation3] sm:$0xff]
      %v3401 = vsel %vm1698, %v3356, %v3400
      %3402 = vst [vmem:[#allocation3] sm:$0xff] %v3401
      %v3403 = vld [vmem:[#allocation3 + $0x8] sm:$0xff]
      %v3404 = vsel %vm1698, %v3358, %v3403
      %3405 = vst [vmem:[#allocation3 + $0x8] sm:$0xff] %v3404
      %v3406 = vld [vmem:[#allocation3 + $0x10] sm:$0xff]
      %v3407 = vsel %vm1698, %v3360, %v3406
      %3408 = vst [vmem:[#allocation3 + $0x10] sm:$0xff] %v3407
      %v3409 = vld [vmem:[#allocation3 + $0x18] sm:$0xff]
      %v3410 = vsel %vm1698, %v3362, %v3409
      %3411 = vst [vmem:[#allocation3 + $0x18] sm:$0xff] %v3410
      %v3412 = vld [vmem:[#allocation3 + $0x20] sm:$0xff]
      %v3413 = vsel %vm1698, %v3364, %v3412
      %3414 = vst [vmem:[#allocation3 + $0x20] sm:$0xff] %v3413
      %v3415 = vld [vmem:[#allocation3 + $0x28] sm:$0xff]
      %v3416 = vsel %vm1698, %v3366, %v3415
      %3417 = vst [vmem:[#allocation3 + $0x28] sm:$0xff] %v3416
      %v3418 = vld [vmem:[#allocation3 + $0x30] sm:$0xff]
      %v3419 = vsel %vm1698, %v3368, %v3418
      %3420 = vst [vmem:[#allocation3 + $0x30] sm:$0xff] %v3419
      %v3421 = vld [vmem:[#allocation3 + $0x38] sm:$0xff]
      %v3422 = vsel %vm1698, %v3370, %v3421
      %3423 = vst [vmem:[#allocation3 + $0x38] sm:$0xff] %v3422
      %v3424 = vld [vmem:[#allocation3 + $0x40] sm:$0xff]
      %v3425 = vsel %vm1698, %v3372, %v3424
      %3426 = vst [vmem:[#allocation3 + $0x40] sm:$0xff] %v3425
      %v3427 = vld [vmem:[#allocation3 + $0x48] sm:$0xff]
      %v3428 = vsel %vm1698, %v3374, %v3427
      %3429 = vst [vmem:[#allocation3 + $0x48] sm:$0xff] %v3428
      %v3430 = vld [vmem:[#allocation3 + $0x50] sm:$0xff]
      %v3431 = vsel %vm1698, %v3376, %v3430
      %3432 = vst [vmem:[#allocation3 + $0x50] sm:$0xff] %v3431
      %v3433 = vld [vmem:[#allocation3 + $0x58] sm:$0xff]
      %v3434 = vsel %vm1698, %v3378, %v3433
      %3435 = vst [vmem:[#allocation3 + $0x58] sm:$0xff] %v3434
      %v3436 = vld [vmem:[#allocation3 + $0x60] sm:$0xff]
      %v3437 = vsel %vm1698, %v3380, %v3436
      %3438 = vst [vmem:[#allocation3 + $0x60] sm:$0xff] %v3437
      %v3439 = vld [vmem:[#allocation3 + $0x68] sm:$0xff]
      %v3440 = vsel %vm1698, %v3382, %v3439
      %3441 = vst [vmem:[#allocation3 + $0x68] sm:$0xff] %v3440
      %v3442 = vld [vmem:[#allocation3 + $0x70] sm:$0xff]
      %v3443 = vsel %vm1698, %v3384, %v3442
      %3444 = vst [vmem:[#allocation3 + $0x70] sm:$0xff] %v3443
      %v3445 = vld [vmem:[#allocation3] sm:$0xff]
      %v3446 = vld [vmem:[#allocation3 + $0x8] sm:$0xff]
      %v3447 = vld [vmem:[#allocation3 + $0x10] sm:$0xff]
      %v3448 = vld [vmem:[#allocation3 + $0x18] sm:$0xff]
      %v3449 = vld [vmem:[#allocation3 + $0x20] sm:$0xff]
      %v3450 = vld [vmem:[#allocation3 + $0x28] sm:$0xff]
      %v3451 = vld [vmem:[#allocation3 + $0x30] sm:$0xff]
      %v3452 = vld [vmem:[#allocation3 + $0x38] sm:$0xff]
      %v3453 = vld [vmem:[#allocation3 + $0x40] sm:$0xff]
      %v3454 = vld [vmem:[#allocation3 + $0x48] sm:$0xff]
      %v3455 = vld [vmem:[#allocation3 + $0x50] sm:$0xff]
      %v3456 = vld [vmem:[#allocation3 + $0x58] sm:$0xff]
      %v3457 = vld [vmem:[#allocation3 + $0x60] sm:$0xff]
      %v3458 = vld [vmem:[#allocation3 + $0x68] sm:$0xff]
      %v3459 = vld [vmem:[#allocation3 + $0x70] sm:$0xff]
      %v3460 = vld [vmem:[#allocation3 + $0x78] sm:$0xff]
      %v3461 = vld [vmem:[%s2] sm:$0xf]
      %v3462 = vld [vmem:[%s2 + $0x4] sm:$0xf]
      %v3463 = vld [vmem:[%s2 + $0x8] sm:$0xf]
      %v3464 = vld [vmem:[%s2 + $0xc] sm:$0xf]
      %v3465 = vld [vmem:[%s2 + $0x10] sm:$0x3]
      %v3471 = vunpack.c.l.b16 %v3461
      %v3472 = vunpack.c.l.b16 %v3462
      %v3473 = vunpack.c.l.b16 %v3463
      %v3474 = vunpack.c.l.b16 %v3464
      %v3475 = vunpack.c.l.b16 %v3465
      %v3476 = vpack.c.b16 %v3472, %v3471
      %v3477 = vpack.c.b16 %v3474, %v3473
      %v3478 = vpack.c.b16 %v3475, %v3475
      %v3482 = vsel %vm1780, %v3445, 0
      %v3485 = vsel %vm1780, %v3446, 0
      %v3488 = vsel %vm1780, %v3447, 0
      %v3491 = vsel %vm1780, %v3448, 0
      %v3494 = vsel %vm1780, %v3449, 0
      %v3497 = vsel %vm1780, %v3450, 0
      %v3500 = vsel %vm1780, %v3451, 0
      %v3503 = vsel %vm1780, %v3452, 0
      %v3506 = vsel %vm1780, %v3453, 0
      %v3509 = vsel %vm1780, %v3454, 0
      %v3512 = vsel %vm1780, %v3455, 0
      %v3515 = vsel %vm1780, %v3456, 0
      %v3518 = vsel %vm1780, %v3457, 0
      %v3521 = vsel %vm1780, %v3458, 0
      %v3524 = vsel %vm1780, %v3459, 0
      %v3527 = vsel %vm1780, %v3460, 0
      %v3530 = vsel %vm1829, %v3478, 0
      %3532 = vmatprep.subr.bf16.mxu0 0
      %3533 = vmatpush1.bf16.msra.mxu0 %v3476
      %3534 = vmatprep.subr.bf16.mxu0 0
      %3535 = vmatpush1.bf16.msra.mxu0 %v3477
      %3536 = vmatprep.subr.bf16.mxu0 0
      %3537 = vmatpush1.bf16.msra.mxu0 %v3530
      %3538 = vmatprep.subr.bf16.mxu0 0
      %3539 = vmatpush1.bf16.msra.mxu0 0
      %3540 = vmatprep.subr.bf16.mxu0 0
      %3541 = vmatpush1.bf16.msra.mxu0 0
      %3542 = vmatprep.subr.bf16.mxu0 0
      %3543 = vmatpush1.bf16.msra.mxu0 0
      %3544 = vmatprep.subr.bf16.mxu0 0
      %3545 = vmatpush1.bf16.msra.mxu0 0
      %3546 = vmatprep.subr.bf16.mxu0 0
      %3547 = vmatpush1.bf16.msra.mxu0 0
      %3548 = vmatprep.subr.bf16.mxu0 0
      %3549 = vmatpush1.bf16.msra.mxu0 0
      %3550 = vmatprep.subr.bf16.mxu0 0
      %3551 = vmatpush1.bf16.msra.mxu0 0
      %3552 = vmatprep.subr.bf16.mxu0 0
      %3553 = vmatpush1.bf16.msra.mxu0 0
      %3554 = vmatprep.subr.bf16.mxu0 0
      %3555 = vmatpush1.bf16.msra.mxu0 0
      %3556 = vmatprep.subr.bf16.mxu0 0
      %3557 = vmatpush1.bf16.msra.mxu0 0
      %3558 = vmatprep.subr.bf16.mxu0 0
      %3559 = vmatpush1.bf16.msra.mxu0 0
      %3560 = vmatprep.subr.bf16.mxu0 0
      %3561 = vmatpush1.bf16.msra.mxu0 0
      %3562 = vmatprep.subr.bf16.mxu0 0
      %3563 = vmatpush1.bf16.msra.mxu0 0
      %3564 = vmatprep.mubr.bf16.mxu0 0
      %3565 = vmatmul.mubr.bf16.gmra.mrb[0].mxu0 %v3482
      %v3566 = vpop.f32.mrb[0].mxu0
      %v3567 = vadd.f32 0.0, %v3566
      %v3568 = vpop.f32.mrb[0].mxu0
      %v3569 = vpop.f32.mrb[0].mxu0
      %v3570 = vadd.f32 0.0, %v3569
      %v3571 = vpop.f32.mrb[0].mxu0
      %3572 = vmatprep.mubr.bf16.mxu0 0
      %3573 = vmatmul.mubr.bf16.gmra.mrb[0].mxu0 %v3485
      %v3574 = vpop.f32.mrb[0].mxu0
      %v3575 = vadd.f32 0.0, %v3574
      %v3576 = vpop.f32.mrb[0].mxu0
      %v3577 = vpop.f32.mrb[0].mxu0
      %v3578 = vadd.f32 0.0, %v3577
      %v3579 = vpop.f32.mrb[0].mxu0
      %3580 = vmatprep.mubr.bf16.mxu0 0
      %3581 = vmatmul.mubr.bf16.gmra.mrb[0].mxu0 %v3488
      %v3582 = vpop.f32.mrb[0].mxu0
      %v3583 = vadd.f32 0.0, %v3582
      %v3584 = vpop.f32.mrb[0].mxu0
      %v3585 = vpop.f32.mrb[0].mxu0
      %v3586 = vadd.f32 0.0, %v3585
      %v3587 = vpop.f32.mrb[0].mxu0
      %3588 = vmatprep.mubr.bf16.mxu0 0
      %3589 = vmatmul.mubr.bf16.gmra.mrb[0].mxu0 %v3491
      %v3590 = vpop.f32.mrb[0].mxu0
      %v3591 = vadd.f32 0.0, %v3590
      %v3592 = vpop.f32.mrb[0].mxu0
      %v3593 = vpop.f32.mrb[0].mxu0
      %v3594 = vadd.f32 0.0, %v3593
      %v3595 = vpop.f32.mrb[0].mxu0
      %3596 = vmatprep.mubr.bf16.mxu0 0
      %3597 = vmatmul.mubr.bf16.gmra.mrb[0].mxu0 %v3494
      %v3598 = vpop.f32.mrb[0].mxu0
      %v3599 = vadd.f32 0.0, %v3598
      %v3600 = vpop.f32.mrb[0].mxu0
      %v3601 = vpop.f32.mrb[0].mxu0
      %v3602 = vadd.f32 0.0, %v3601
      %v3603 = vpop.f32.mrb[0].mxu0
      %3604 = vmatprep.mubr.bf16.mxu0 0
      %3605 = vmatmul.mubr.bf16.gmra.mrb[0].mxu0 %v3497
      %v3606 = vpop.f32.mrb[0].mxu0
      %v3607 = vadd.f32 0.0, %v3606
      %v3608 = vpop.f32.mrb[0].mxu0
      %v3609 = vpop.f32.mrb[0].mxu0
      %v3610 = vadd.f32 0.0, %v3609
      %v3611 = vpop.f32.mrb[0].mxu0
      %3612 = vmatprep.mubr.bf16.mxu0 0
      %3613 = vmatmul.mubr.bf16.gmra.mrb[0].mxu0 %v3500
      %v3614 = vpop.f32.mrb[0].mxu0
      %v3615 = vadd.f32 0.0, %v3614
      %v3616 = vpop.f32.mrb[0].mxu0
      %v3617 = vpop.f32.mrb[0].mxu0
      %v3618 = vadd.f32 0.0, %v3617
      %v3619 = vpop.f32.mrb[0].mxu0
      %3620 = vmatprep.mubr.bf16.mxu0 0
      %3621 = vmatmul.mubr.bf16.gmra.mrb[0].mxu0 %v3503
      %v3622 = vpop.f32.mrb[0].mxu0
      %v3623 = vadd.f32 0.0, %v3622
      %v3624 = vpop.f32.mrb[0].mxu0
      %v3625 = vpop.f32.mrb[0].mxu0
      %v3626 = vadd.f32 0.0, %v3625
      %v3627 = vpop.f32.mrb[0].mxu0
      %3628 = vmatprep.mubr.bf16.mxu0 0
      %3629 = vmatmul.mubr.bf16.gmra.mrb[0].mxu0 %v3506
      %v3630 = vpop.f32.mrb[0].mxu0
      %v3631 = vadd.f32 0.0, %v3630
      %v3632 = vpop.f32.mrb[0].mxu0
      %v3633 = vpop.f32.mrb[0].mxu0
      %v3634 = vadd.f32 0.0, %v3633
      %v3635 = vpop.f32.mrb[0].mxu0
      %3636 = vmatprep.mubr.bf16.mxu0 0
      %3637 = vmatmul.mubr.bf16.gmra.mrb[0].mxu0 %v3509
      %v3638 = vpop.f32.mrb[0].mxu0
      %v3639 = vadd.f32 0.0, %v3638
      %v3640 = vpop.f32.mrb[0].mxu0
      %v3641 = vpop.f32.mrb[0].mxu0
      %v3642 = vadd.f32 0.0, %v3641
      %v3643 = vpop.f32.mrb[0].mxu0
      %3644 = vmatprep.mubr.bf16.mxu0 0
      %3645 = vmatmul.mubr.bf16.gmra.mrb[0].mxu0 %v3512
      %v3646 = vpop.f32.mrb[0].mxu0
      %v3647 = vadd.f32 0.0, %v3646
      %v3648 = vpop.f32.mrb[0].mxu0
      %v3649 = vpop.f32.mrb[0].mxu0
      %v3650 = vadd.f32 0.0, %v3649
      %v3651 = vpop.f32.mrb[0].mxu0
      %3652 = vmatprep.mubr.bf16.mxu0 0
      %3653 = vmatmul.mubr.bf16.gmra.mrb[0].mxu0 %v3515
      %v3654 = vpop.f32.mrb[0].mxu0
      %v3655 = vadd.f32 0.0, %v3654
      %v3656 = vpop.f32.mrb[0].mxu0
      %v3657 = vpop.f32.mrb[0].mxu0
      %v3658 = vadd.f32 0.0, %v3657
      %v3659 = vpop.f32.mrb[0].mxu0
      %3660 = vmatprep.mubr.bf16.mxu0 0
      %3661 = vmatmul.mubr.bf16.gmra.mrb[0].mxu0 %v3518
      %v3662 = vpop.f32.mrb[0].mxu0
      %v3663 = vadd.f32 0.0, %v3662
      %v3664 = vpop.f32.mrb[0].mxu0
      %v3665 = vpop.f32.mrb[0].mxu0
      %v3666 = vadd.f32 0.0, %v3665
      %v3667 = vpop.f32.mrb[0].mxu0
      %3668 = vmatprep.mubr.bf16.mxu0 0
      %3669 = vmatmul.mubr.bf16.gmra.mrb[0].mxu0 %v3521
      %v3670 = vpop.f32.mrb[0].mxu0
      %v3671 = vadd.f32 0.0, %v3670
      %v3672 = vpop.f32.mrb[0].mxu0
      %v3673 = vpop.f32.mrb[0].mxu0
      %v3674 = vadd.f32 0.0, %v3673
      %v3675 = vpop.f32.mrb[0].mxu0
      %3676 = vmatprep.mubr.bf16.mxu0 0
      %3677 = vmatmul.mubr.bf16.gmra.mrb[0].mxu0 %v3524
      %v3678 = vpop.f32.mrb[0].mxu0
      %v3679 = vadd.f32 0.0, %v3678
      %v3680 = vpop.f32.mrb[0].mxu0
      %v3681 = vpop.f32.mrb[0].mxu0
      %v3682 = vadd.f32 0.0, %v3681
      %v3683 = vpop.f32.mrb[0].mxu0
      %3684 = vmatprep.mubr.bf16.mxu0 0
      %3685 = vmatmul.mubr.bf16.gmra.mrb[0].mxu0 %v3527
      %v3686 = vpop.f32.mrb[0].mxu0
      %v3687 = vadd.f32 0.0, %v3686
      %v3688 = vpop.f32.mrb[0].mxu0
      %v3689 = vpop.f32.mrb[0].mxu0
      %v3690 = vadd.f32 0.0, %v3689
      %v3691 = vpop.f32.mrb[0].mxu0
      %3692 = vdwg.mxu0
      %vm3693 = vcmask 15360
      %v3694 = vsel %vm3693, %v3567, 0.0
      %v3695 = vsel %vm3693, %v3570, 0.0
      %v3696 = vadd.f32 %v3694, %v3695
      %v3697 = vsel %vm3693, %v3575, 0.0
      %v3698 = vadd.f32 %v3696, %v3697
      %v3699 = vsel %vm3693, %v3578, 0.0
      %v3700 = vadd.f32 %v3698, %v3699
      %v3701 = vsel %vm3693, %v3583, 0.0
      %v3702 = vadd.f32 %v3700, %v3701
      %v3703 = vsel %vm3693, %v3586, 0.0
      %v3704 = vadd.f32 %v3702, %v3703
      %v3705 = vsel %vm3693, %v3591, 0.0
      %v3706 = vadd.f32 %v3704, %v3705
      %v3707 = vsel %vm3693, %v3594, 0.0
      %v3708 = vadd.f32 %v3706, %v3707
      %v3709 = vsel %vm3693, %v3599, 0.0
      %v3710 = vadd.f32 %v3708, %v3709
      %v3711 = vsel %vm3693, %v3602, 0.0
      %v3712 = vadd.f32 %v3710, %v3711
      %v3713 = vsel %vm3693, %v3607, 0.0
      %v3714 = vadd.f32 %v3712, %v3713
      %v3715 = vsel %vm3693, %v3610, 0.0
      %v3716 = vadd.f32 %v3714, %v3715
      %v3717 = vsel %vm3693, %v3615, 0.0
      %v3718 = vadd.f32 %v3716, %v3717
      %v3719 = vsel %vm3693, %v3618, 0.0
      %v3720 = vadd.f32 %v3718, %v3719
      %v3721 = vsel %vm3693, %v3623, 0.0
      %v3722 = vadd.f32 %v3720, %v3721
      %v3723 = vsel %vm3693, %v3626, 0.0
      %v3724 = vadd.f32 %v3722, %v3723
      %v3725 = vsel %vm3693, %v3631, 0.0
      %v3726 = vadd.f32 %v3724, %v3725
      %v3727 = vsel %vm3693, %v3634, 0.0
      %v3728 = vadd.f32 %v3726, %v3727
      %v3729 = vsel %vm3693, %v3639, 0.0
      %v3730 = vadd.f32 %v3728, %v3729
      %v3731 = vsel %vm3693, %v3642, 0.0
      %v3732 = vadd.f32 %v3730, %v3731
      %v3733 = vsel %vm3693, %v3647, 0.0
      %v3734 = vadd.f32 %v3732, %v3733
      %v3735 = vsel %vm3693, %v3650, 0.0
      %v3736 = vadd.f32 %v3734, %v3735
      %v3737 = vsel %vm3693, %v3655, 0.0
      %v3738 = vadd.f32 %v3736, %v3737
      %v3739 = vsel %vm3693, %v3658, 0.0
      %v3740 = vadd.f32 %v3738, %v3739
      %v3741 = vsel %vm3693, %v3663, 0.0
      %v3742 = vadd.f32 %v3740, %v3741
      %v3743 = vsel %vm3693, %v3666, 0.0
      %v3744 = vadd.f32 %v3742, %v3743
      %v3745 = vsel %vm3693, %v3671, 0.0
      %v3746 = vadd.f32 %v3744, %v3745
      %v3747 = vsel %vm3693, %v3674, 0.0
      %v3748 = vadd.f32 %v3746, %v3747
      %v3749 = vsel %vm3693, %v3679, 0.0
      %v3750 = vadd.f32 %v3748, %v3749
      %v3751 = vsel %vm3693, %v3682, 0.0
      %v3752 = vadd.f32 %v3750, %v3751
      %v3753 = vsel %vm3693, %v3687, 0.0
      %v3754 = vadd.f32 %v3752, %v3753
      %v3755 = vsel %vm3693, %v3690, 0.0
      %v3756 = vadd.f32 %v3754, %v3755
      %v3757 = vrot.slane %v3756, 4
      %v3758 = vadd.f32 %v3756, %v3757
      %v3759 = vrot.slane %v3758, 2
      %v3760 = vadd.f32 %v3758, %v3759
      %v3761 = vrot.slane %v3760, 1
      %v3762 = vadd.f32 %v3760, %v3761
      %v3763 = vmul.f32 %v3567, %v3567
      %v3764 = vmul.f32 %v3570, %v3570
      %v3765 = vmul.f32 %v3575, %v3575
      %v3766 = vmul.f32 %v3578, %v3578
      %v3767 = vmul.f32 %v3583, %v3583
      %v3768 = vmul.f32 %v3586, %v3586
      %v3769 = vmul.f32 %v3591, %v3591
      %v3770 = vmul.f32 %v3594, %v3594
      %v3771 = vmul.f32 %v3599, %v3599
      %v3772 = vmul.f32 %v3602, %v3602
      %v3773 = vmul.f32 %v3607, %v3607
      %v3774 = vmul.f32 %v3610, %v3610
      %v3775 = vmul.f32 %v3615, %v3615
      %v3776 = vmul.f32 %v3618, %v3618
      %v3777 = vmul.f32 %v3623, %v3623
      %v3778 = vmul.f32 %v3626, %v3626
      %v3779 = vmul.f32 %v3631, %v3631
      %v3780 = vmul.f32 %v3634, %v3634
      %v3781 = vmul.f32 %v3639, %v3639
      %v3782 = vmul.f32 %v3642, %v3642
      %v3783 = vmul.f32 %v3647, %v3647
      %v3784 = vmul.f32 %v3650, %v3650
      %v3785 = vmul.f32 %v3655, %v3655
      %v3786 = vmul.f32 %v3658, %v3658
      %v3787 = vmul.f32 %v3663, %v3663
      %v3788 = vmul.f32 %v3666, %v3666
      %v3789 = vmul.f32 %v3671, %v3671
      %v3790 = vmul.f32 %v3674, %v3674
      %v3791 = vmul.f32 %v3679, %v3679
      %v3792 = vmul.f32 %v3682, %v3682
      %v3793 = vmul.f32 %v3687, %v3687
      %v3794 = vmul.f32 %v3690, %v3690
      %v3795 = vsel %vm3693, %v3763, 0.0
      %v3796 = vsel %vm3693, %v3764, 0.0
      %v3797 = vadd.f32 %v3795, %v3796
      %v3798 = vsel %vm3693, %v3765, 0.0
      %v3799 = vadd.f32 %v3797, %v3798
      %v3800 = vsel %vm3693, %v3766, 0.0
      %v3801 = vadd.f32 %v3799, %v3800
      %v3802 = vsel %vm3693, %v3767, 0.0
      %v3803 = vadd.f32 %v3801, %v3802
      %v3804 = vsel %vm3693, %v3768, 0.0
      %v3805 = vadd.f32 %v3803, %v3804
      %v3806 = vsel %vm3693, %v3769, 0.0
      %v3807 = vadd.f32 %v3805, %v3806
      %v3808 = vsel %vm3693, %v3770, 0.0
      %v3809 = vadd.f32 %v3807, %v3808
      %v3810 = vsel %vm3693, %v3771, 0.0
      %v3811 = vadd.f32 %v3809, %v3810
      %v3812 = vsel %vm3693, %v3772, 0.0
      %v3813 = vadd.f32 %v3811, %v3812
      %v3814 = vsel %vm3693, %v3773, 0.0
      %v3815 = vadd.f32 %v3813, %v3814
      %v3816 = vsel %vm3693, %v3774, 0.0
      %v3817 = vadd.f32 %v3815, %v3816
      %v3818 = vsel %vm3693, %v3775, 0.0
      %v3819 = vadd.f32 %v3817, %v3818
      %v3820 = vsel %vm3693, %v3776, 0.0
      %v3821 = vadd.f32 %v3819, %v3820
      %v3822 = vsel %vm3693, %v3777, 0.0
      %v3823 = vadd.f32 %v3821, %v3822
      %v3824 = vsel %vm3693, %v3778, 0.0
      %v3825 = vadd.f32 %v3823, %v3824
      %v3826 = vsel %vm3693, %v3779, 0.0
      %v3827 = vadd.f32 %v3825, %v3826
      %v3828 = vsel %vm3693, %v3780, 0.0
      %v3829 = vadd.f32 %v3827, %v3828
      %v3830 = vsel %vm3693, %v3781, 0.0
      %v3831 = vadd.f32 %v3829, %v3830
      %v3832 = vsel %vm3693, %v3782, 0.0
      %v3833 = vadd.f32 %v3831, %v3832
      %v3834 = vsel %vm3693, %v3783, 0.0
      %v3835 = vadd.f32 %v3833, %v3834
      %v3836 = vsel %vm3693, %v3784, 0.0
      %v3837 = vadd.f32 %v3835, %v3836
      %v3838 = vsel %vm3693, %v3785, 0.0
      %v3839 = vadd.f32 %v3837, %v3838
      %v3840 = vsel %vm3693, %v3786, 0.0
      %v3841 = vadd.f32 %v3839, %v3840
      %v3842 = vsel %vm3693, %v3787, 0.0
      %v3843 = vadd.f32 %v3841, %v3842
      %v3844 = vsel %vm3693, %v3788, 0.0
      %v3845 = vadd.f32 %v3843, %v3844
      %v3846 = vsel %vm3693, %v3789, 0.0
      %v3847 = vadd.f32 %v3845, %v3846
      %v3848 = vsel %vm3693, %v3790, 0.0
      %v3849 = vadd.f32 %v3847, %v3848
      %v3850 = vsel %vm3693, %v3791, 0.0
      %v3851 = vadd.f32 %v3849, %v3850
      %v3852 = vsel %vm3693, %v3792, 0.0
      %v3853 = vadd.f32 %v3851, %v3852
      %v3854 = vsel %vm3693, %v3793, 0.0
      %v3855 = vadd.f32 %v3853, %v3854
      %v3856 = vsel %vm3693, %v3794, 0.0
      %v3857 = vadd.f32 %v3855, %v3856
      %v3858 = vrot.slane %v3857, 4
      %v3859 = vadd.f32 %v3857, %v3858
      %v3860 = vrot.slane %v3859, 2
      %v3861 = vadd.f32 %v3859, %v3860
      %v3862 = vrot.slane %v3861, 1
      %v3863 = vadd.f32 %v3861, %v3862
      %v3864 = vmul.f32 %v3762, 0.00390625
      %v3865 = vmul.f32 %v3863, 0.00390625
      %v3866 = vmul.f32 %v3864, %v3864
      %v3867 = vsub.f32 %v3865, %v3866
      %v3868 = vmax.f32 %v3867, 0.0
      %v3869 = vsub.f32 %v3567, %v3864
      %v3870 = vsub.f32 %v3570, %v3864
      %v3871 = vsub.f32 %v3575, %v3864
      %v3872 = vsub.f32 %v3578, %v3864
      %v3873 = vsub.f32 %v3583, %v3864
      %v3874 = vsub.f32 %v3586, %v3864
      %v3875 = vsub.f32 %v3591, %v3864
      %v3876 = vsub.f32 %v3594, %v3864
      %v3877 = vsub.f32 %v3599, %v3864
      %v3878 = vsub.f32 %v3602, %v3864
      %v3879 = vsub.f32 %v3607, %v3864
      %v3880 = vsub.f32 %v3610, %v3864
      %v3881 = vsub.f32 %v3615, %v3864
      %v3882 = vsub.f32 %v3618, %v3864
      %v3883 = vsub.f32 %v3623, %v3864
      %v3884 = vsub.f32 %v3626, %v3864
      %v3885 = vsub.f32 %v3631, %v3864
      %v3886 = vsub.f32 %v3634, %v3864
      %v3887 = vsub.f32 %v3639, %v3864
      %v3888 = vsub.f32 %v3642, %v3864
      %v3889 = vsub.f32 %v3647, %v3864
      %v3890 = vsub.f32 %v3650, %v3864
      %v3891 = vsub.f32 %v3655, %v3864
      %v3892 = vsub.f32 %v3658, %v3864
      %v3893 = vsub.f32 %v3663, %v3864
      %v3894 = vsub.f32 %v3666, %v3864
      %v3895 = vsub.f32 %v3671, %v3864
      %v3896 = vsub.f32 %v3674, %v3864
      %v3897 = vsub.f32 %v3679, %v3864
      %v3898 = vsub.f32 %v3682, %v3864
      %v3899 = vsub.f32 %v3687, %v3864
      %v3900 = vsub.f32 %v3690, %v3864
      %v3901 = vadd.f32 %v3868, 1e-05
      %v3902 = vrsqrt.pop %v3901
      %v3903 = vmul.f32 %v3869, %v3902
      %v3904 = vmul.f32 %v3870, %v3902
      %v3905 = vmul.f32 %v3871, %v3902
      %v3906 = vmul.f32 %v3872, %v3902
      %v3907 = vmul.f32 %v3873, %v3902
      %v3908 = vmul.f32 %v3874, %v3902
      %v3909 = vmul.f32 %v3875, %v3902
      %v3910 = vmul.f32 %v3876, %v3902
      %v3911 = vmul.f32 %v3877, %v3902
      %v3912 = vmul.f32 %v3878, %v3902
      %v3913 = vmul.f32 %v3879, %v3902
      %v3914 = vmul.f32 %v3880, %v3902
      %v3915 = vmul.f32 %v3881, %v3902
      %v3916 = vmul.f32 %v3882, %v3902
      %v3917 = vmul.f32 %v3883, %v3902
      %v3918 = vmul.f32 %v3884, %v3902
      %v3919 = vmul.f32 %v3885, %v3902
      %v3920 = vmul.f32 %v3886, %v3902
      %v3921 = vmul.f32 %v3887, %v3902
      %v3922 = vmul.f32 %v3888, %v3902
      %v3923 = vmul.f32 %v3889, %v3902
      %v3924 = vmul.f32 %v3890, %v3902
      %v3925 = vmul.f32 %v3891, %v3902
      %v3926 = vmul.f32 %v3892, %v3902
      %v3927 = vmul.f32 %v3893, %v3902
      %v3928 = vmul.f32 %v3894, %v3902
      %v3929 = vmul.f32 %v3895, %v3902
      %v3930 = vmul.f32 %v3896, %v3902
      %v3931 = vmul.f32 %v3897, %v3902
      %v3932 = vmul.f32 %v3898, %v3902
      %v3933 = vmul.f32 %v3899, %v3902
      %v3934 = vmul.f32 %v3900, %v3902
      %v3935 = vmax.f32 %v3903, 0.0
      %v3936 = vmax.f32 %v3904, 0.0
      %v3937 = vmax.f32 %v3905, 0.0
      %v3938 = vmax.f32 %v3906, 0.0
      %v3939 = vmax.f32 %v3907, 0.0
      %v3940 = vmax.f32 %v3908, 0.0
      %v3941 = vmax.f32 %v3909, 0.0
      %v3942 = vmax.f32 %v3910, 0.0
      %v3943 = vmax.f32 %v3911, 0.0
      %v3944 = vmax.f32 %v3912, 0.0
      %v3945 = vmax.f32 %v3913, 0.0
      %v3946 = vmax.f32 %v3914, 0.0
      %v3947 = vmax.f32 %v3915, 0.0
      %v3948 = vmax.f32 %v3916, 0.0
      %v3949 = vmax.f32 %v3917, 0.0
      %v3950 = vmax.f32 %v3918, 0.0
      %v3951 = vmax.f32 %v3919, 0.0
      %v3952 = vmax.f32 %v3920, 0.0
      %v3953 = vmax.f32 %v3921, 0.0
      %v3954 = vmax.f32 %v3922, 0.0
      %v3955 = vmax.f32 %v3923, 0.0
      %v3956 = vmax.f32 %v3924, 0.0
      %v3957 = vmax.f32 %v3925, 0.0
      %v3958 = vmax.f32 %v3926, 0.0
      %v3959 = vmax.f32 %v3927, 0.0
      %v3960 = vmax.f32 %v3928, 0.0
      %v3961 = vmax.f32 %v3929, 0.0
      %v3962 = vmax.f32 %v3930, 0.0
      %v3963 = vmax.f32 %v3931, 0.0
      %v3964 = vmax.f32 %v3932, 0.0
      %v3965 = vmax.f32 %v3933, 0.0
      %v3966 = vmax.f32 %v3934, 0.0
      %v3967 = vpack.c.bf16 %v3936, %v3935
      %v3968 = vpack.c.bf16 %v3938, %v3937
      %v3969 = vpack.c.bf16 %v3940, %v3939
      %v3970 = vpack.c.bf16 %v3942, %v3941
      %v3971 = vpack.c.bf16 %v3944, %v3943
      %v3972 = vpack.c.bf16 %v3946, %v3945
      %v3973 = vpack.c.bf16 %v3948, %v3947
      %v3974 = vpack.c.bf16 %v3950, %v3949
      %v3975 = vpack.c.bf16 %v3952, %v3951
      %v3976 = vpack.c.bf16 %v3954, %v3953
      %v3977 = vpack.c.bf16 %v3956, %v3955
      %v3978 = vpack.c.bf16 %v3958, %v3957
      %v3979 = vpack.c.bf16 %v3960, %v3959
      %v3980 = vpack.c.bf16 %v3962, %v3961
      %v3981 = vpack.c.bf16 %v3964, %v3963
      %v3982 = vpack.c.bf16 %v3966, %v3965
      %3983 = vst.msk [vmem:[#allocation4] sm:$0xff] %vm3693, 0
      %vm3984 = vcmask 8192
      %vm3985 = vmand %vm3984, %vm550
      %v3986 = vld [vmem:[#allocation4] sm:$0x1]
      %v3987 = vsel %vm3985, 0, %v3986
      %3988 = vst [vmem:[#allocation4] sm:$0x1] %v3987
      %v3989 = vld [vmem:[#allocation4 + $0x8] sm:$0x1]
      %v3990 = vsel %vm3985, 0, %v3989
      %3991 = vst [vmem:[#allocation4 + $0x8] sm:$0x1] %v3990
      %v3992 = vld [vmem:[#allocation4 + $0x10] sm:$0x1]
      %v3993 = vsel %vm3985, 0, %v3992
      %3994 = vst [vmem:[#allocation4 + $0x10] sm:$0x1] %v3993
      %v3995 = vld [vmem:[#allocation4 + $0x18] sm:$0x1]
      %v3996 = vsel %vm3985, 0, %v3995
      %3997 = vst [vmem:[#allocation4 + $0x18] sm:$0x1] %v3996
      %v3998 = vld [vmem:[#allocation4 + $0x20] sm:$0x1]
      %v3999 = vsel %vm3985, 0, %v3998
      %4000 = vst [vmem:[#allocation4 + $0x20] sm:$0x1] %v3999
      %v4001 = vld [vmem:[#allocation4 + $0x28] sm:$0x1]
      %v4002 = vsel %vm3985, 0, %v4001
      %4003 = vst [vmem:[#allocation4 + $0x28] sm:$0x1] %v4002
      %v4004 = vld [vmem:[#allocation4 + $0x30] sm:$0x1]
      %v4005 = vsel %vm3985, 0, %v4004
      %4006 = vst [vmem:[#allocation4 + $0x30] sm:$0x1] %v4005
      %v4007 = vld [vmem:[#allocation4 + $0x38] sm:$0x1]
      %v4008 = vsel %vm3985, 0, %v4007
      %4009 = vst [vmem:[#allocation4 + $0x38] sm:$0x1] %v4008
      %v4010 = vld [vmem:[#allocation4 + $0x40] sm:$0x1]
      %v4011 = vsel %vm3985, 0, %v4010
      %4012 = vst [vmem:[#allocation4 + $0x40] sm:$0x1] %v4011
      %v4013 = vld [vmem:[#allocation4 + $0x48] sm:$0x1]
      %v4014 = vsel %vm3985, 0, %v4013
      %4015 = vst [vmem:[#allocation4 + $0x48] sm:$0x1] %v4014
      %v4016 = vld [vmem:[#allocation4 + $0x50] sm:$0x1]
      %v4017 = vsel %vm3985, 0, %v4016
      %4018 = vst [vmem:[#allocation4 + $0x50] sm:$0x1] %v4017
      %v4019 = vld [vmem:[#allocation4 + $0x58] sm:$0x1]
      %v4020 = vsel %vm3985, 0, %v4019
      %4021 = vst [vmem:[#allocation4 + $0x58] sm:$0x1] %v4020
      %v4022 = vld [vmem:[#allocation4 + $0x60] sm:$0x1]
      %v4023 = vsel %vm3985, 0, %v4022
      %4024 = vst [vmem:[#allocation4 + $0x60] sm:$0x1] %v4023
      %v4025 = vld [vmem:[#allocation4 + $0x68] sm:$0x1]
      %v4026 = vsel %vm3985, 0, %v4025
      %4027 = vst [vmem:[#allocation4 + $0x68] sm:$0x1] %v4026
      %v4028 = vld [vmem:[#allocation4 + $0x70] sm:$0x1]
      %v4029 = vsel %vm3985, 0, %v4028
      %4030 = vst [vmem:[#allocation4 + $0x70] sm:$0x1] %v4029
      %v4031 = vld [vmem:[#allocation4 + $0x78] sm:$0x1]
      %v4032 = vsel %vm3985, 0, %v4031
      %4033 = vst [vmem:[#allocation4 + $0x78] sm:$0x1] %v4032
      %v4035 = vshrl.u32 %v3967, 16
      %v4037 = vrot.slane %v4035, 7
      %v4038 = vshll.u32 %v3967, 16
      %v4040 = vor.u32 %v4037, %v4038
      %v4042 = vshrl.u32 %v3968, 16
      %v4044 = vrot.slane %v4042, 7
      %v4045 = vshll.u32 %v3968, 16
      %v4047 = vor.u32 %v4044, %v4045
      %v4049 = vshrl.u32 %v3969, 16
      %v4051 = vrot.slane %v4049, 7
      %v4052 = vshll.u32 %v3969, 16
      %v4054 = vor.u32 %v4051, %v4052
      %v4056 = vshrl.u32 %v3970, 16
      %v4058 = vrot.slane %v4056, 7
      %v4059 = vshll.u32 %v3970, 16
      %v4061 = vor.u32 %v4058, %v4059
      %v4063 = vshrl.u32 %v3971, 16
      %v4065 = vrot.slane %v4063, 7
      %v4066 = vshll.u32 %v3971, 16
      %v4068 = vor.u32 %v4065, %v4066
      %v4070 = vshrl.u32 %v3972, 16
      %v4072 = vrot.slane %v4070, 7
      %v4073 = vshll.u32 %v3972, 16
      %v4075 = vor.u32 %v4072, %v4073
      %v4077 = vshrl.u32 %v3973, 16
      %v4079 = vrot.slane %v4077, 7
      %v4080 = vshll.u32 %v3973, 16
      %v4082 = vor.u32 %v4079, %v4080
      %v4084 = vshrl.u32 %v3974, 16
      %v4086 = vrot.slane %v4084, 7
      %v4087 = vshll.u32 %v3974, 16
      %v4089 = vor.u32 %v4086, %v4087
      %v4091 = vshrl.u32 %v3975, 16
      %v4093 = vrot.slane %v4091, 7
      %v4094 = vshll.u32 %v3975, 16
      %v4096 = vor.u32 %v4093, %v4094
      %v4098 = vshrl.u32 %v3976, 16
      %v4100 = vrot.slane %v4098, 7
      %v4101 = vshll.u32 %v3976, 16
      %v4103 = vor.u32 %v4100, %v4101
      %v4105 = vshrl.u32 %v3977, 16
      %v4107 = vrot.slane %v4105, 7
      %v4108 = vshll.u32 %v3977, 16
      %v4110 = vor.u32 %v4107, %v4108
      %v4112 = vshrl.u32 %v3978, 16
      %v4114 = vrot.slane %v4112, 7
      %v4115 = vshll.u32 %v3978, 16
      %v4117 = vor.u32 %v4114, %v4115
      %v4119 = vshrl.u32 %v3979, 16
      %v4121 = vrot.slane %v4119, 7
      %v4122 = vshll.u32 %v3979, 16
      %v4124 = vor.u32 %v4121, %v4122
      %v4126 = vshrl.u32 %v3980, 16
      %v4128 = vrot.slane %v4126, 7
      %v4129 = vshll.u32 %v3980, 16
      %v4131 = vor.u32 %v4128, %v4129
      %v4133 = vshrl.u32 %v3981, 16
      %v4135 = vrot.slane %v4133, 7
      %v4136 = vshll.u32 %v3981, 16
      %v4138 = vor.u32 %v4135, %v4136
      %s4154 = scalar_lea.vmem [#allocation4], 8
      %vm4155 = vcmask 15360
      %vm4156 = vmand %vm4155, %vm722
      %v4157 = vld [vmem:[%s4154] sm:$0xff]
      %v4158 = vsel %vm4156, %v4040, %v4157
      %4159 = vst [vmem:[%s4154] sm:$0xff] %v4158
      %v4160 = vld [vmem:[%s4154 + $0x8] sm:$0xff]
      %v4161 = vsel %vm4156, %v4047, %v4160
      %4162 = vst [vmem:[%s4154 + $0x8] sm:$0xff] %v4161
      %v4163 = vld [vmem:[%s4154 + $0x10] sm:$0xff]
      %v4164 = vsel %vm4156, %v4054, %v4163
      %4165 = vst [vmem:[%s4154 + $0x10] sm:$0xff] %v4164
      %v4166 = vld [vmem:[%s4154 + $0x18] sm:$0xff]
      %v4167 = vsel %vm4156, %v4061, %v4166
      %4168 = vst [vmem:[%s4154 + $0x18] sm:$0xff] %v4167
      %v4169 = vld [vmem:[%s4154 + $0x20] sm:$0xff]
      %v4170 = vsel %vm4156, %v4068, %v4169
      %4171 = vst [vmem:[%s4154 + $0x20] sm:$0xff] %v4170
      %v4172 = vld [vmem:[%s4154 + $0x28] sm:$0xff]
      %v4173 = vsel %vm4156, %v4075, %v4172
      %4174 = vst [vmem:[%s4154 + $0x28] sm:$0xff] %v4173
      %v4175 = vld [vmem:[%s4154 + $0x30] sm:$0xff]
      %v4176 = vsel %vm4156, %v4082, %v4175
      %4177 = vst [vmem:[%s4154 + $0x30] sm:$0xff] %v4176
      %v4178 = vld [vmem:[%s4154 + $0x38] sm:$0xff]
      %v4179 = vsel %vm4156, %v4089, %v4178
      %4180 = vst [vmem:[%s4154 + $0x38] sm:$0xff] %v4179
      %v4181 = vld [vmem:[%s4154 + $0x40] sm:$0xff]
      %v4182 = vsel %vm4156, %v4096, %v4181
      %4183 = vst [vmem:[%s4154 + $0x40] sm:$0xff] %v4182
      %v4184 = vld [vmem:[%s4154 + $0x48] sm:$0xff]
      %v4185 = vsel %vm4156, %v4103, %v4184
      %4186 = vst [vmem:[%s4154 + $0x48] sm:$0xff] %v4185
      %v4187 = vld [vmem:[%s4154 + $0x50] sm:$0xff]
      %v4188 = vsel %vm4156, %v4110, %v4187
      %4189 = vst [vmem:[%s4154 + $0x50] sm:$0xff] %v4188
      %v4190 = vld [vmem:[%s4154 + $0x58] sm:$0xff]
      %v4191 = vsel %vm4156, %v4117, %v4190
      %4192 = vst [vmem:[%s4154 + $0x58] sm:$0xff] %v4191
      %v4193 = vld [vmem:[%s4154 + $0x60] sm:$0xff]
      %v4194 = vsel %vm4156, %v4124, %v4193
      %4195 = vst [vmem:[%s4154 + $0x60] sm:$0xff] %v4194
      %v4196 = vld [vmem:[%s4154 + $0x68] sm:$0xff]
      %v4197 = vsel %vm4156, %v4131, %v4196
      %4198 = vst [vmem:[%s4154 + $0x68] sm:$0xff] %v4197
      %v4199 = vld [vmem:[%s4154 + $0x70] sm:$0xff]
      %v4200 = vsel %vm4156, %v4138, %v4199
      %4201 = vst [vmem:[%s4154 + $0x70] sm:$0xff] %v4200
      %vm4202 = vcmask 31760
      %4203 = vst.msk [vmem:[#allocation4] sm:$0xff] %vm4202, 0
      %4219 = vrot.lane.b32.xlu0 %v3967, 2
      %v4220 = vpop.permute.xlu0 %4219
      %4221 = vrot.lane.b32.xlu0 %v3968, 2
      %v4222 = vpop.permute.xlu0 %4221
      %4223 = vrot.lane.b32.xlu0 %v3969, 2
      %v4224 = vpop.permute.xlu0 %4223
      %4225 = vrot.lane.b32.xlu0 %v3970, 2
      %v4226 = vpop.permute.xlu0 %4225
      %4227 = vrot.lane.b32.xlu0 %v3971, 2
      %v4228 = vpop.permute.xlu0 %4227
      %4229 = vrot.lane.b32.xlu0 %v3972, 2
      %v4230 = vpop.permute.xlu0 %4229
      %4231 = vrot.lane.b32.xlu0 %v3973, 2
      %v4232 = vpop.permute.xlu0 %4231
      %4233 = vrot.lane.b32.xlu0 %v3974, 2
      %v4234 = vpop.permute.xlu0 %4233
      %4235 = vrot.lane.b32.xlu0 %v3975, 2
      %v4236 = vpop.permute.xlu0 %4235
      %4237 = vrot.lane.b32.xlu0 %v3976, 2
      %v4238 = vpop.permute.xlu0 %4237
      %4239 = vrot.lane.b32.xlu0 %v3977, 2
      %v4240 = vpop.permute.xlu0 %4239
      %4241 = vrot.lane.b32.xlu0 %v3978, 2
      %v4242 = vpop.permute.xlu0 %4241
      %4243 = vrot.lane.b32.xlu0 %v3979, 2
      %v4244 = vpop.permute.xlu0 %4243
      %4245 = vrot.lane.b32.xlu0 %v3980, 2
      %v4246 = vpop.permute.xlu0 %4245
      %4247 = vrot.lane.b32.xlu0 %v3981, 2
      %v4248 = vpop.permute.xlu0 %4247
      %4264 = vst.msk [vmem:[%s4154] sm:$0xff] %vm4202, %v4220
      %4265 = vst.msk [vmem:[%s4154 + $0x8] sm:$0xff] %vm4202, %v4222
      %4266 = vst.msk [vmem:[%s4154 + $0x10] sm:$0xff] %vm4202, %v4224
      %4267 = vst.msk [vmem:[%s4154 + $0x18] sm:$0xff] %vm4202, %v4226
      %4268 = vst.msk [vmem:[%s4154 + $0x20] sm:$0xff] %vm4202, %v4228
      %4269 = vst.msk [vmem:[%s4154 + $0x28] sm:$0xff] %vm4202, %v4230
      %4270 = vst.msk [vmem:[%s4154 + $0x30] sm:$0xff] %vm4202, %v4232
      %4271 = vst.msk [vmem:[%s4154 + $0x38] sm:$0xff] %vm4202, %v4234
      %4272 = vst.msk [vmem:[%s4154 + $0x40] sm:$0xff] %vm4202, %v4236
      %4273 = vst.msk [vmem:[%s4154 + $0x48] sm:$0xff] %vm4202, %v4238
      %4274 = vst.msk [vmem:[%s4154 + $0x50] sm:$0xff] %vm4202, %v4240
      %4275 = vst.msk [vmem:[%s4154 + $0x58] sm:$0xff] %vm4202, %v4242
      %4276 = vst.msk [vmem:[%s4154 + $0x60] sm:$0xff] %vm4202, %v4244
      %4277 = vst.msk [vmem:[%s4154 + $0x68] sm:$0xff] %vm4202, %v4246
      %4278 = vst.msk [vmem:[%s4154 + $0x70] sm:$0xff] %vm4202, %v4248
      %vm4279 = vcmask 48160
      %4280 = vst.msk [vmem:[#allocation4] sm:$0xff] %vm4279, 0
      %vm4281 = vcmask 48167
      %vm4282 = vmand %vm4281, %vm849
      %v4283 = vld [vmem:[#allocation4] sm:$0x80]
      %v4284 = vsel %vm4282, 0, %v4283
      %4285 = vst [vmem:[#allocation4] sm:$0x80] %v4284
      %v4286 = vld [vmem:[#allocation4 + $0x8] sm:$0x80]
      %v4287 = vsel %vm4282, 0, %v4286
      %4288 = vst [vmem:[#allocation4 + $0x8] sm:$0x80] %v4287
      %v4289 = vld [vmem:[#allocation4 + $0x10] sm:$0x80]
      %v4290 = vsel %vm4282, 0, %v4289
      %4291 = vst [vmem:[#allocation4 + $0x10] sm:$0x80] %v4290
      %v4292 = vld [vmem:[#allocation4 + $0x18] sm:$0x80]
      %v4293 = vsel %vm4282, 0, %v4292
      %4294 = vst [vmem:[#allocation4 + $0x18] sm:$0x80] %v4293
      %v4295 = vld [vmem:[#allocation4 + $0x20] sm:$0x80]
      %v4296 = vsel %vm4282, 0, %v4295
      %4297 = vst [vmem:[#allocation4 + $0x20] sm:$0x80] %v4296
      %v4298 = vld [vmem:[#allocation4 + $0x28] sm:$0x80]
      %v4299 = vsel %vm4282, 0, %v4298
      %4300 = vst [vmem:[#allocation4 + $0x28] sm:$0x80] %v4299
      %v4301 = vld [vmem:[#allocation4 + $0x30] sm:$0x80]
      %v4302 = vsel %vm4282, 0, %v4301
      %4303 = vst [vmem:[#allocation4 + $0x30] sm:$0x80] %v4302
      %v4304 = vld [vmem:[#allocation4 + $0x38] sm:$0x80]
      %v4305 = vsel %vm4282, 0, %v4304
      %4306 = vst [vmem:[#allocation4 + $0x38] sm:$0x80] %v4305
      %v4307 = vld [vmem:[#allocation4 + $0x40] sm:$0x80]
      %v4308 = vsel %vm4282, 0, %v4307
      %4309 = vst [vmem:[#allocation4 + $0x40] sm:$0x80] %v4308
      %v4310 = vld [vmem:[#allocation4 + $0x48] sm:$0x80]
      %v4311 = vsel %vm4282, 0, %v4310
      %4312 = vst [vmem:[#allocation4 + $0x48] sm:$0x80] %v4311
      %v4313 = vld [vmem:[#allocation4 + $0x50] sm:$0x80]
      %v4314 = vsel %vm4282, 0, %v4313
      %4315 = vst [vmem:[#allocation4 + $0x50] sm:$0x80] %v4314
      %v4316 = vld [vmem:[#allocation4 + $0x58] sm:$0x80]
      %v4317 = vsel %vm4282, 0, %v4316
      %4318 = vst [vmem:[#allocation4 + $0x58] sm:$0x80] %v4317
      %v4319 = vld [vmem:[#allocation4 + $0x60] sm:$0x80]
      %v4320 = vsel %vm4282, 0, %v4319
      %4321 = vst [vmem:[#allocation4 + $0x60] sm:$0x80] %v4320
      %v4322 = vld [vmem:[#allocation4 + $0x68] sm:$0x80]
      %v4323 = vsel %vm4282, 0, %v4322
      %4324 = vst [vmem:[#allocation4 + $0x68] sm:$0x80] %v4323
      %v4325 = vld [vmem:[#allocation4 + $0x70] sm:$0x80]
      %v4326 = vsel %vm4282, 0, %v4325
      %4327 = vst [vmem:[#allocation4 + $0x70] sm:$0x80] %v4326
      %v4328 = vld [vmem:[#allocation4 + $0x78] sm:$0x80]
      %v4329 = vsel %vm4282, 0, %v4328
      %4330 = vst [vmem:[#allocation4 + $0x78] sm:$0x80] %v4329
      %v4331 = vrot.slane %v4038, 1
      %v4332 = vor.u32 %v4035, %v4331
      %v4333 = vrot.slane %v4045, 1
      %v4334 = vor.u32 %v4042, %v4333
      %v4335 = vrot.slane %v4052, 1
      %v4336 = vor.u32 %v4049, %v4335
      %v4337 = vrot.slane %v4059, 1
      %v4338 = vor.u32 %v4056, %v4337
      %v4339 = vrot.slane %v4066, 1
      %v4340 = vor.u32 %v4063, %v4339
      %v4341 = vrot.slane %v4073, 1
      %v4342 = vor.u32 %v4070, %v4341
      %v4343 = vrot.slane %v4080, 1
      %v4344 = vor.u32 %v4077, %v4343
      %v4345 = vrot.slane %v4087, 1
      %v4346 = vor.u32 %v4084, %v4345
      %v4347 = vrot.slane %v4094, 1
      %v4348 = vor.u32 %v4091, %v4347
      %v4349 = vrot.slane %v4101, 1
      %v4350 = vor.u32 %v4098, %v4349
      %v4351 = vrot.slane %v4108, 1
      %v4352 = vor.u32 %v4105, %v4351
      %v4353 = vrot.slane %v4115, 1
      %v4354 = vor.u32 %v4112, %v4353
      %v4355 = vrot.slane %v4122, 1
      %v4356 = vor.u32 %v4119, %v4355
      %v4357 = vrot.slane %v4129, 1
      %v4358 = vor.u32 %v4126, %v4357
      %v4359 = vrot.slane %v4136, 1
      %v4360 = vor.u32 %v4133, %v4359
      %4361 = vrot.lane.b32.xlu0 %v4332, 4
      %v4362 = vpop.permute.xlu0 %4361
      %4363 = vrot.lane.b32.xlu0 %v4334, 4
      %v4364 = vpop.permute.xlu0 %4363
      %4365 = vrot.lane.b32.xlu0 %v4336, 4
      %v4366 = vpop.permute.xlu0 %4365
      %4367 = vrot.lane.b32.xlu0 %v4338, 4
      %v4368 = vpop.permute.xlu0 %4367
      %4369 = vrot.lane.b32.xlu0 %v4340, 4
      %v4370 = vpop.permute.xlu0 %4369
      %4371 = vrot.lane.b32.xlu0 %v4342, 4
      %v4372 = vpop.permute.xlu0 %4371
      %4373 = vrot.lane.b32.xlu0 %v4344, 4
      %v4374 = vpop.permute.xlu0 %4373
      %4375 = vrot.lane.b32.xlu0 %v4346, 4
      %v4376 = vpop.permute.xlu0 %4375
      %4377 = vrot.lane.b32.xlu0 %v4348, 4
      %v4378 = vpop.permute.xlu0 %4377
      %4379 = vrot.lane.b32.xlu0 %v4350, 4
      %v4380 = vpop.permute.xlu0 %4379
      %4381 = vrot.lane.b32.xlu0 %v4352, 4
      %v4382 = vpop.permute.xlu0 %4381
      %4383 = vrot.lane.b32.xlu0 %v4354, 4
      %v4384 = vpop.permute.xlu0 %4383
      %4385 = vrot.lane.b32.xlu0 %v4356, 4
      %v4386 = vpop.permute.xlu0 %4385
      %4387 = vrot.lane.b32.xlu0 %v4358, 4
      %v4388 = vpop.permute.xlu0 %4387
      %4389 = vrot.lane.b32.xlu0 %v4360, 4
      %v4390 = vpop.permute.xlu0 %4389
      %vm4406 = vcmask 48160
      %vm4407 = vmand %vm4406, %vm975
      %v4408 = vld [vmem:[%s4154] sm:$0xff]
      %v4409 = vsel %vm4407, %v4362, %v4408
      %4410 = vst [vmem:[%s4154] sm:$0xff] %v4409
      %v4411 = vld [vmem:[%s4154 + $0x8] sm:$0xff]
      %v4412 = vsel %vm4407, %v4364, %v4411
      %4413 = vst [vmem:[%s4154 + $0x8] sm:$0xff] %v4412
      %v4414 = vld [vmem:[%s4154 + $0x10] sm:$0xff]
      %v4415 = vsel %vm4407, %v4366, %v4414
      %4416 = vst [vmem:[%s4154 + $0x10] sm:$0xff] %v4415
      %v4417 = vld [vmem:[%s4154 + $0x18] sm:$0xff]
      %v4418 = vsel %vm4407, %v4368, %v4417
      %4419 = vst [vmem:[%s4154 + $0x18] sm:$0xff] %v4418
      %v4420 = vld [vmem:[%s4154 + $0x20] sm:$0xff]
      %v4421 = vsel %vm4407, %v4370, %v4420
      %4422 = vst [vmem:[%s4154 + $0x20] sm:$0xff] %v4421
      %v4423 = vld [vmem:[%s4154 + $0x28] sm:$0xff]
      %v4424 = vsel %vm4407, %v4372, %v4423
      %4425 = vst [vmem:[%s4154 + $0x28] sm:$0xff] %v4424
      %v4426 = vld [vmem:[%s4154 + $0x30] sm:$0xff]
      %v4427 = vsel %vm4407, %v4374, %v4426
      %4428 = vst [vmem:[%s4154 + $0x30] sm:$0xff] %v4427
      %v4429 = vld [vmem:[%s4154 + $0x38] sm:$0xff]
      %v4430 = vsel %vm4407, %v4376, %v4429
      %4431 = vst [vmem:[%s4154 + $0x38] sm:$0xff] %v4430
      %v4432 = vld [vmem:[%s4154 + $0x40] sm:$0xff]
      %v4433 = vsel %vm4407, %v4378, %v4432
      %4434 = vst [vmem:[%s4154 + $0x40] sm:$0xff] %v4433
      %v4435 = vld [vmem:[%s4154 + $0x48] sm:$0xff]
      %v4436 = vsel %vm4407, %v4380, %v4435
      %4437 = vst [vmem:[%s4154 + $0x48] sm:$0xff] %v4436
      %v4438 = vld [vmem:[%s4154 + $0x50] sm:$0xff]
      %v4439 = vsel %vm4407, %v4382, %v4438
      %4440 = vst [vmem:[%s4154 + $0x50] sm:$0xff] %v4439
      %v4441 = vld [vmem:[%s4154 + $0x58] sm:$0xff]
      %v4442 = vsel %vm4407, %v4384, %v4441
      %4443 = vst [vmem:[%s4154 + $0x58] sm:$0xff] %v4442
      %v4444 = vld [vmem:[%s4154 + $0x60] sm:$0xff]
      %v4445 = vsel %vm4407, %v4386, %v4444
      %4446 = vst [vmem:[%s4154 + $0x60] sm:$0xff] %v4445
      %v4447 = vld [vmem:[%s4154 + $0x68] sm:$0xff]
      %v4448 = vsel %vm4407, %v4388, %v4447
      %4449 = vst [vmem:[%s4154 + $0x68] sm:$0xff] %v4448
      %v4450 = vld [vmem:[%s4154 + $0x70] sm:$0xff]
      %v4451 = vsel %vm4407, %v4390, %v4450
      %4452 = vst [vmem:[%s4154 + $0x70] sm:$0xff] %v4451
      %vm4453 = vcmask 57392
      %vm4454 = vmand %vm4453, %vm550
      %v4455 = vld [vmem:[#allocation4] sm:$0x1]
      %v4456 = vsel %vm4454, 0, %v4455
      %4457 = vst [vmem:[#allocation4] sm:$0x1] %v4456
      %v4458 = vld [vmem:[#allocation4 + $0x8] sm:$0x1]
      %v4459 = vsel %vm4454, 0, %v4458
      %4460 = vst [vmem:[#allocation4 + $0x8] sm:$0x1] %v4459
      %v4461 = vld [vmem:[#allocation4 + $0x10] sm:$0x1]
      %v4462 = vsel %vm4454, 0, %v4461
      %4463 = vst [vmem:[#allocation4 + $0x10] sm:$0x1] %v4462
      %v4464 = vld [vmem:[#allocation4 + $0x18] sm:$0x1]
      %v4465 = vsel %vm4454, 0, %v4464
      %4466 = vst [vmem:[#allocation4 + $0x18] sm:$0x1] %v4465
      %v4467 = vld [vmem:[#allocation4 + $0x20] sm:$0x1]
      %v4468 = vsel %vm4454, 0, %v4467
      %4469 = vst [vmem:[#allocation4 + $0x20] sm:$0x1] %v4468
      %v4470 = vld [vmem:[#allocation4 + $0x28] sm:$0x1]
      %v4471 = vsel %vm4454, 0, %v4470
      %4472 = vst [vmem:[#allocation4 + $0x28] sm:$0x1] %v4471
      %v4473 = vld [vmem:[#allocation4 + $0x30] sm:$0x1]
      %v4474 = vsel %vm4454, 0, %v4473
      %4475 = vst [vmem:[#allocation4 + $0x30] sm:$0x1] %v4474
      %v4476 = vld [vmem:[#allocation4 + $0x38] sm:$0x1]
      %v4477 = vsel %vm4454, 0, %v4476
      %4478 = vst [vmem:[#allocation4 + $0x38] sm:$0x1] %v4477
      %v4479 = vld [vmem:[#allocation4 + $0x40] sm:$0x1]
      %v4480 = vsel %vm4454, 0, %v4479
      %4481 = vst [vmem:[#allocation4 + $0x40] sm:$0x1] %v4480
      %v4482 = vld [vmem:[#allocation4 + $0x48] sm:$0x1]
      %v4483 = vsel %vm4454, 0, %v4482
      %4484 = vst [vmem:[#allocation4 + $0x48] sm:$0x1] %v4483
      %v4485 = vld [vmem:[#allocation4 + $0x50] sm:$0x1]
      %v4486 = vsel %vm4454, 0, %v4485
      %4487 = vst [vmem:[#allocation4 + $0x50] sm:$0x1] %v4486
      %v4488 = vld [vmem:[#allocation4 + $0x58] sm:$0x1]
      %v4489 = vsel %vm4454, 0, %v4488
      %4490 = vst [vmem:[#allocation4 + $0x58] sm:$0x1] %v4489
      %v4491 = vld [vmem:[#allocation4 + $0x60] sm:$0x1]
      %v4492 = vsel %vm4454, 0, %v4491
      %4493 = vst [vmem:[#allocation4 + $0x60] sm:$0x1] %v4492
      %v4494 = vld [vmem:[#allocation4 + $0x68] sm:$0x1]
      %v4495 = vsel %vm4454, 0, %v4494
      %4496 = vst [vmem:[#allocation4 + $0x68] sm:$0x1] %v4495
      %v4497 = vld [vmem:[#allocation4 + $0x70] sm:$0x1]
      %v4498 = vsel %vm4454, 0, %v4497
      %4499 = vst [vmem:[#allocation4 + $0x70] sm:$0x1] %v4498
      %v4500 = vld [vmem:[#allocation4 + $0x78] sm:$0x1]
      %v4501 = vsel %vm4454, 0, %v4500
      %4502 = vst [vmem:[#allocation4 + $0x78] sm:$0x1] %v4501
      %v4504 = vshrl.u32 %v3982, 16
      %v4506 = vrot.slane %v4504, 7
      %v4507 = vshll.u32 %v3982, 16
      %v4509 = vor.u32 %v4506, %v4507
      %4510 = vrot.lane.b32.xlu0 %v4040, 6
      %v4511 = vpop.permute.xlu0 %4510
      %4512 = vrot.lane.b32.xlu0 %v4047, 6
      %v4513 = vpop.permute.xlu0 %4512
      %4514 = vrot.lane.b32.xlu0 %v4054, 6
      %v4515 = vpop.permute.xlu0 %4514
      %4516 = vrot.lane.b32.xlu0 %v4061, 6
      %v4517 = vpop.permute.xlu0 %4516
      %4518 = vrot.lane.b32.xlu0 %v4068, 6
      %v4519 = vpop.permute.xlu0 %4518
      %4520 = vrot.lane.b32.xlu0 %v4075, 6
      %v4521 = vpop.permute.xlu0 %4520
      %4522 = vrot.lane.b32.xlu0 %v4082, 6
      %v4523 = vpop.permute.xlu0 %4522
      %4524 = vrot.lane.b32.xlu0 %v4089, 6
      %v4525 = vpop.permute.xlu0 %4524
      %4526 = vrot.lane.b32.xlu0 %v4096, 6
      %v4527 = vpop.permute.xlu0 %4526
      %4528 = vrot.lane.b32.xlu0 %v4103, 6
      %v4529 = vpop.permute.xlu0 %4528
      %4530 = vrot.lane.b32.xlu0 %v4110, 6
      %v4531 = vpop.permute.xlu0 %4530
      %4532 = vrot.lane.b32.xlu0 %v4117, 6
      %v4533 = vpop.permute.xlu0 %4532
      %4534 = vrot.lane.b32.xlu0 %v4124, 6
      %v4535 = vpop.permute.xlu0 %4534
      %4536 = vrot.lane.b32.xlu0 %v4131, 6
      %v4537 = vpop.permute.xlu0 %4536
      %4538 = vrot.lane.b32.xlu0 %v4138, 6
      %v4539 = vpop.permute.xlu0 %4538
      %4540 = vrot.lane.b32.xlu0 %v4509, 6
      %v4541 = vpop.permute.xlu0 %4540
      %vm4558 = vcmask 64560
      %vm4559 = vmand %vm4558, %vm722
      %v4560 = vld [vmem:[#allocation4] sm:$0xff]
      %v4561 = vsel %vm4559, %v4511, %v4560
      %4562 = vst [vmem:[#allocation4] sm:$0xff] %v4561
      %v4563 = vld [vmem:[#allocation4 + $0x8] sm:$0xff]
      %v4564 = vsel %vm4559, %v4513, %v4563
      %4565 = vst [vmem:[#allocation4 + $0x8] sm:$0xff] %v4564
      %v4566 = vld [vmem:[#allocation4 + $0x10] sm:$0xff]
      %v4567 = vsel %vm4559, %v4515, %v4566
      %4568 = vst [vmem:[#allocation4 + $0x10] sm:$0xff] %v4567
      %v4569 = vld [vmem:[#allocation4 + $0x18] sm:$0xff]
      %v4570 = vsel %vm4559, %v4517, %v4569
      %4571 = vst [vmem:[#allocation4 + $0x18] sm:$0xff] %v4570
      %v4572 = vld [vmem:[#allocation4 + $0x20] sm:$0xff]
      %v4573 = vsel %vm4559, %v4519, %v4572
      %4574 = vst [vmem:[#allocation4 + $0x20] sm:$0xff] %v4573
      %v4575 = vld [vmem:[#allocation4 + $0x28] sm:$0xff]
      %v4576 = vsel %vm4559, %v4521, %v4575
      %4577 = vst [vmem:[#allocation4 + $0x28] sm:$0xff] %v4576
      %v4578 = vld [vmem:[#allocation4 + $0x30] sm:$0xff]
      %v4579 = vsel %vm4559, %v4523, %v4578
      %4580 = vst [vmem:[#allocation4 + $0x30] sm:$0xff] %v4579
      %v4581 = vld [vmem:[#allocation4 + $0x38] sm:$0xff]
      %v4582 = vsel %vm4559, %v4525, %v4581
      %4583 = vst [vmem:[#allocation4 + $0x38] sm:$0xff] %v4582
      %v4584 = vld [vmem:[#allocation4 + $0x40] sm:$0xff]
      %v4585 = vsel %vm4559, %v4527, %v4584
      %4586 = vst [vmem:[#allocation4 + $0x40] sm:$0xff] %v4585
      %v4587 = vld [vmem:[#allocation4 + $0x48] sm:$0xff]
      %v4588 = vsel %vm4559, %v4529, %v4587
      %4589 = vst [vmem:[#allocation4 + $0x48] sm:$0xff] %v4588
      %v4590 = vld [vmem:[#allocation4 + $0x50] sm:$0xff]
      %v4591 = vsel %vm4559, %v4531, %v4590
      %4592 = vst [vmem:[#allocation4 + $0x50] sm:$0xff] %v4591
      %v4593 = vld [vmem:[#allocation4 + $0x58] sm:$0xff]
      %v4594 = vsel %vm4559, %v4533, %v4593
      %4595 = vst [vmem:[#allocation4 + $0x58] sm:$0xff] %v4594
      %v4596 = vld [vmem:[#allocation4 + $0x60] sm:$0xff]
      %v4597 = vsel %vm4559, %v4535, %v4596
      %4598 = vst [vmem:[#allocation4 + $0x60] sm:$0xff] %v4597
      %v4599 = vld [vmem:[#allocation4 + $0x68] sm:$0xff]
      %v4600 = vsel %vm4559, %v4537, %v4599
      %4601 = vst [vmem:[#allocation4 + $0x68] sm:$0xff] %v4600
      %v4602 = vld [vmem:[#allocation4 + $0x70] sm:$0xff]
      %v4603 = vsel %vm4559, %v4539, %v4602
      %4604 = vst [vmem:[#allocation4 + $0x70] sm:$0xff] %v4603
      %v4605 = vld [vmem:[#allocation4 + $0x78] sm:$0xff]
      %v4606 = vsel %vm4559, %v4541, %v4605
      %4607 = vst [vmem:[#allocation4 + $0x78] sm:$0xff] %v4606
      %4609 = vrot.lane.b32.xlu0 %v3967, 8
      %v4610 = vpop.permute.xlu0 %4609
      %4611 = vrot.lane.b32.xlu0 %v3968, 8
      %v4612 = vpop.permute.xlu0 %4611
      %4613 = vrot.lane.b32.xlu0 %v3969, 8
      %v4614 = vpop.permute.xlu0 %4613
      %4615 = vrot.lane.b32.xlu0 %v3970, 8
      %v4616 = vpop.permute.xlu0 %4615
      %4617 = vrot.lane.b32.xlu0 %v3971, 8
      %v4618 = vpop.permute.xlu0 %4617
      %4619 = vrot.lane.b32.xlu0 %v3972, 8
      %v4620 = vpop.permute.xlu0 %4619
      %4621 = vrot.lane.b32.xlu0 %v3973, 8
      %v4622 = vpop.permute.xlu0 %4621
      %4623 = vrot.lane.b32.xlu0 %v3974, 8
      %v4624 = vpop.permute.xlu0 %4623
      %4625 = vrot.lane.b32.xlu0 %v3975, 8
      %v4626 = vpop.permute.xlu0 %4625
      %4627 = vrot.lane.b32.xlu0 %v3976, 8
      %v4628 = vpop.permute.xlu0 %4627
      %4629 = vrot.lane.b32.xlu0 %v3977, 8
      %v4630 = vpop.permute.xlu0 %4629
      %4631 = vrot.lane.b32.xlu0 %v3978, 8
      %v4632 = vpop.permute.xlu0 %4631
      %4633 = vrot.lane.b32.xlu0 %v3979, 8
      %v4634 = vpop.permute.xlu0 %4633
      %4635 = vrot.lane.b32.xlu0 %v3980, 8
      %v4636 = vpop.permute.xlu0 %4635
      %4637 = vrot.lane.b32.xlu0 %v3981, 8
      %v4638 = vpop.permute.xlu0 %4637
      %4639 = vrot.lane.b32.xlu0 %v3982, 8
      %v4640 = vpop.permute.xlu0 %4639
      %vm4657 = vcmask 80960
      %4658 = vst.msk [vmem:[#allocation4] sm:$0xff] %vm4657, %v4610
      %4659 = vst.msk [vmem:[#allocation4 + $0x8] sm:$0xff] %vm4657, %v4612
      %4660 = vst.msk [vmem:[#allocation4 + $0x10] sm:$0xff] %vm4657, %v4614
      %4661 = vst.msk [vmem:[#allocation4 + $0x18] sm:$0xff] %vm4657, %v4616
      %4662 = vst.msk [vmem:[#allocation4 + $0x20] sm:$0xff] %vm4657, %v4618
      %4663 = vst.msk [vmem:[#allocation4 + $0x28] sm:$0xff] %vm4657, %v4620
      %4664 = vst.msk [vmem:[#allocation4 + $0x30] sm:$0xff] %vm4657, %v4622
      %4665 = vst.msk [vmem:[#allocation4 + $0x38] sm:$0xff] %vm4657, %v4624
      %4666 = vst.msk [vmem:[#allocation4 + $0x40] sm:$0xff] %vm4657, %v4626
      %4667 = vst.msk [vmem:[#allocation4 + $0x48] sm:$0xff] %vm4657, %v4628
      %4668 = vst.msk [vmem:[#allocation4 + $0x50] sm:$0xff] %vm4657, %v4630
      %4669 = vst.msk [vmem:[#allocation4 + $0x58] sm:$0xff] %vm4657, %v4632
      %4670 = vst.msk [vmem:[#allocation4 + $0x60] sm:$0xff] %vm4657, %v4634
      %4671 = vst.msk [vmem:[#allocation4 + $0x68] sm:$0xff] %vm4657, %v4636
      %4672 = vst.msk [vmem:[#allocation4 + $0x70] sm:$0xff] %vm4657, %v4638
      %4673 = vst.msk [vmem:[#allocation4 + $0x78] sm:$0xff] %vm4657, %v4640
      %vm4674 = vcmask 97367
      %vm4675 = vmand %vm4674, %vm849
      %v4676 = vld [vmem:[#allocation4] sm:$0x80]
      %v4677 = vsel %vm4675, 0, %v4676
      %4678 = vst [vmem:[#allocation4] sm:$0x80] %v4677
      %v4679 = vld [vmem:[#allocation4 + $0x8] sm:$0x80]
      %v4680 = vsel %vm4675, 0, %v4679
      %4681 = vst [vmem:[#allocation4 + $0x8] sm:$0x80] %v4680
      %v4682 = vld [vmem:[#allocation4 + $0x10] sm:$0x80]
      %v4683 = vsel %vm4675, 0, %v4682
      %4684 = vst [vmem:[#allocation4 + $0x10] sm:$0x80] %v4683
      %v4685 = vld [vmem:[#allocation4 + $0x18] sm:$0x80]
      %v4686 = vsel %vm4675, 0, %v4685
      %4687 = vst [vmem:[#allocation4 + $0x18] sm:$0x80] %v4686
      %v4688 = vld [vmem:[#allocation4 + $0x20] sm:$0x80]
      %v4689 = vsel %vm4675, 0, %v4688
      %4690 = vst [vmem:[#allocation4 + $0x20] sm:$0x80] %v4689
      %v4691 = vld [vmem:[#allocation4 + $0x28] sm:$0x80]
      %v4692 = vsel %vm4675, 0, %v4691
      %4693 = vst [vmem:[#allocation4 + $0x28] sm:$0x80] %v4692
      %v4694 = vld [vmem:[#allocation4 + $0x30] sm:$0x80]
      %v4695 = vsel %vm4675, 0, %v4694
      %4696 = vst [vmem:[#allocation4 + $0x30] sm:$0x80] %v4695
      %v4697 = vld [vmem:[#allocation4 + $0x38] sm:$0x80]
      %v4698 = vsel %vm4675, 0, %v4697
      %4699 = vst [vmem:[#allocation4 + $0x38] sm:$0x80] %v4698
      %v4700 = vld [vmem:[#allocation4 + $0x40] sm:$0x80]
      %v4701 = vsel %vm4675, 0, %v4700
      %4702 = vst [vmem:[#allocation4 + $0x40] sm:$0x80] %v4701
      %v4703 = vld [vmem:[#allocation4 + $0x48] sm:$0x80]
      %v4704 = vsel %vm4675, 0, %v4703
      %4705 = vst [vmem:[#allocation4 + $0x48] sm:$0x80] %v4704
      %v4706 = vld [vmem:[#allocation4 + $0x50] sm:$0x80]
      %v4707 = vsel %vm4675, 0, %v4706
      %4708 = vst [vmem:[#allocation4 + $0x50] sm:$0x80] %v4707
      %v4709 = vld [vmem:[#allocation4 + $0x58] sm:$0x80]
      %v4710 = vsel %vm4675, 0, %v4709
      %4711 = vst [vmem:[#allocation4 + $0x58] sm:$0x80] %v4710
      %v4712 = vld [vmem:[#allocation4 + $0x60] sm:$0x80]
      %v4713 = vsel %vm4675, 0, %v4712
      %4714 = vst [vmem:[#allocation4 + $0x60] sm:$0x80] %v4713
      %v4715 = vld [vmem:[#allocation4 + $0x68] sm:$0x80]
      %v4716 = vsel %vm4675, 0, %v4715
      %4717 = vst [vmem:[#allocation4 + $0x68] sm:$0x80] %v4716
      %v4718 = vld [vmem:[#allocation4 + $0x70] sm:$0x80]
      %v4719 = vsel %vm4675, 0, %v4718
      %4720 = vst [vmem:[#allocation4 + $0x70] sm:$0x80] %v4719
      %v4721 = vld [vmem:[#allocation4 + $0x78] sm:$0x80]
      %v4722 = vsel %vm4675, 0, %v4721
      %4723 = vst [vmem:[#allocation4 + $0x78] sm:$0x80] %v4722
      %v4724 = vrot.slane %v4507, 1
      %v4725 = vor.u32 %v4504, %v4724
      %4726 = vrot.lane.b32.xlu0 %v4332, 10
      %v4727 = vpop.permute.xlu0 %4726
      %4728 = vrot.lane.b32.xlu0 %v4334, 10
      %v4729 = vpop.permute.xlu0 %4728
      %4730 = vrot.lane.b32.xlu0 %v4336, 10
      %v4731 = vpop.permute.xlu0 %4730
      %4732 = vrot.lane.b32.xlu0 %v4338, 10
      %v4733 = vpop.permute.xlu0 %4732
      %4734 = vrot.lane.b32.xlu0 %v4340, 10
      %v4735 = vpop.permute.xlu0 %4734
      %4736 = vrot.lane.b32.xlu0 %v4342, 10
      %v4737 = vpop.permute.xlu0 %4736
      %4738 = vrot.lane.b32.xlu0 %v4344, 10
      %v4739 = vpop.permute.xlu0 %4738
      %4740 = vrot.lane.b32.xlu0 %v4346, 10
      %v4741 = vpop.permute.xlu0 %4740
      %4742 = vrot.lane.b32.xlu0 %v4348, 10
      %v4743 = vpop.permute.xlu0 %4742
      %4744 = vrot.lane.b32.xlu0 %v4350, 10
      %v4745 = vpop.permute.xlu0 %4744
      %4746 = vrot.lane.b32.xlu0 %v4352, 10
      %v4747 = vpop.permute.xlu0 %4746
      %4748 = vrot.lane.b32.xlu0 %v4354, 10
      %v4749 = vpop.permute.xlu0 %4748
      %4750 = vrot.lane.b32.xlu0 %v4356, 10
      %v4751 = vpop.permute.xlu0 %4750
      %4752 = vrot.lane.b32.xlu0 %v4358, 10
      %v4753 = vpop.permute.xlu0 %4752
      %4754 = vrot.lane.b32.xlu0 %v4360, 10
      %v4755 = vpop.permute.xlu0 %4754
      %4756 = vrot.lane.b32.xlu0 %v4725, 10
      %v4757 = vpop.permute.xlu0 %4756
      %vm4774 = vcmask 97360
      %vm4775 = vmand %vm4774, %vm975
      %v4776 = vld [vmem:[#allocation4] sm:$0xff]
      %v4777 = vsel %vm4775, %v4727, %v4776
      %4778 = vst [vmem:[#allocation4] sm:$0xff] %v4777
      %v4779 = vld [vmem:[#allocation4 + $0x8] sm:$0xff]
      %v4780 = vsel %vm4775, %v4729, %v4779
      %4781 = vst [vmem:[#allocation4 + $0x8] sm:$0xff] %v4780
      %v4782 = vld [vmem:[#allocation4 + $0x10] sm:$0xff]
      %v4783 = vsel %vm4775, %v4731, %v4782
      %4784 = vst [vmem:[#allocation4 + $0x10] sm:$0xff] %v4783
      %v4785 = vld [vmem:[#allocation4 + $0x18] sm:$0xff]
      %v4786 = vsel %vm4775, %v4733, %v4785
      %4787 = vst [vmem:[#allocation4 + $0x18] sm:$0xff] %v4786
      %v4788 = vld [vmem:[#allocation4 + $0x20] sm:$0xff]
      %v4789 = vsel %vm4775, %v4735, %v4788
      %4790 = vst [vmem:[#allocation4 + $0x20] sm:$0xff] %v4789
      %v4791 = vld [vmem:[#allocation4 + $0x28] sm:$0xff]
      %v4792 = vsel %vm4775, %v4737, %v4791
      %4793 = vst [vmem:[#allocation4 + $0x28] sm:$0xff] %v4792
      %v4794 = vld [vmem:[#allocation4 + $0x30] sm:$0xff]
      %v4795 = vsel %vm4775, %v4739, %v4794
      %4796 = vst [vmem:[#allocation4 + $0x30] sm:$0xff] %v4795
      %v4797 = vld [vmem:[#allocation4 + $0x38] sm:$0xff]
      %v4798 = vsel %vm4775, %v4741, %v4797
      %4799 = vst [vmem:[#allocation4 + $0x38] sm:$0xff] %v4798
      %v4800 = vld [vmem:[#allocation4 + $0x40] sm:$0xff]
      %v4801 = vsel %vm4775, %v4743, %v4800
      %4802 = vst [vmem:[#allocation4 + $0x40] sm:$0xff] %v4801
      %v4803 = vld [vmem:[#allocation4 + $0x48] sm:$0xff]
      %v4804 = vsel %vm4775, %v4745, %v4803
      %4805 = vst [vmem:[#allocation4 + $0x48] sm:$0xff] %v4804
      %v4806 = vld [vmem:[#allocation4 + $0x50] sm:$0xff]
      %v4807 = vsel %vm4775, %v4747, %v4806
      %4808 = vst [vmem:[#allocation4 + $0x50] sm:$0xff] %v4807
      %v4809 = vld [vmem:[#allocation4 + $0x58] sm:$0xff]
      %v4810 = vsel %vm4775, %v4749, %v4809
      %4811 = vst [vmem:[#allocation4 + $0x58] sm:$0xff] %v4810
      %v4812 = vld [vmem:[#allocation4 + $0x60] sm:$0xff]
      %v4813 = vsel %vm4775, %v4751, %v4812
      %4814 = vst [vmem:[#allocation4 + $0x60] sm:$0xff] %v4813
      %v4815 = vld [vmem:[#allocation4 + $0x68] sm:$0xff]
      %v4816 = vsel %vm4775, %v4753, %v4815
      %4817 = vst [vmem:[#allocation4 + $0x68] sm:$0xff] %v4816
      %v4818 = vld [vmem:[#allocation4 + $0x70] sm:$0xff]
      %v4819 = vsel %vm4775, %v4755, %v4818
      %4820 = vst [vmem:[#allocation4 + $0x70] sm:$0xff] %v4819
      %v4821 = vld [vmem:[#allocation4 + $0x78] sm:$0xff]
      %v4822 = vsel %vm4775, %v4757, %v4821
      %4823 = vst [vmem:[#allocation4 + $0x78] sm:$0xff] %v4822
      %s4824 = scalar_lea.vmem [#allocation4], 120
      %vm4825 = vcmask 113760
      %4826 = vst.msk [vmem:[%s4824] sm:$0xff] %vm4825, 0
      %vm4827 = vcmask 106592
      %vm4828 = vmand %vm4827, %vm550
      %v4829 = vld [vmem:[#allocation4] sm:$0x1]
      %v4830 = vsel %vm4828, 0, %v4829
      %4831 = vst [vmem:[#allocation4] sm:$0x1] %v4830
      %v4832 = vld [vmem:[#allocation4 + $0x8] sm:$0x1]
      %v4833 = vsel %vm4828, 0, %v4832
      %4834 = vst [vmem:[#allocation4 + $0x8] sm:$0x1] %v4833
      %v4835 = vld [vmem:[#allocation4 + $0x10] sm:$0x1]
      %v4836 = vsel %vm4828, 0, %v4835
      %4837 = vst [vmem:[#allocation4 + $0x10] sm:$0x1] %v4836
      %v4838 = vld [vmem:[#allocation4 + $0x18] sm:$0x1]
      %v4839 = vsel %vm4828, 0, %v4838
      %4840 = vst [vmem:[#allocation4 + $0x18] sm:$0x1] %v4839
      %v4841 = vld [vmem:[#allocation4 + $0x20] sm:$0x1]
      %v4842 = vsel %vm4828, 0, %v4841
      %4843 = vst [vmem:[#allocation4 + $0x20] sm:$0x1] %v4842
      %v4844 = vld [vmem:[#allocation4 + $0x28] sm:$0x1]
      %v4845 = vsel %vm4828, 0, %v4844
      %4846 = vst [vmem:[#allocation4 + $0x28] sm:$0x1] %v4845
      %v4847 = vld [vmem:[#allocation4 + $0x30] sm:$0x1]
      %v4848 = vsel %vm4828, 0, %v4847
      %4849 = vst [vmem:[#allocation4 + $0x30] sm:$0x1] %v4848
      %v4850 = vld [vmem:[#allocation4 + $0x38] sm:$0x1]
      %v4851 = vsel %vm4828, 0, %v4850
      %4852 = vst [vmem:[#allocation4 + $0x38] sm:$0x1] %v4851
      %v4853 = vld [vmem:[#allocation4 + $0x40] sm:$0x1]
      %v4854 = vsel %vm4828, 0, %v4853
      %4855 = vst [vmem:[#allocation4 + $0x40] sm:$0x1] %v4854
      %v4856 = vld [vmem:[#allocation4 + $0x48] sm:$0x1]
      %v4857 = vsel %vm4828, 0, %v4856
      %4858 = vst [vmem:[#allocation4 + $0x48] sm:$0x1] %v4857
      %v4859 = vld [vmem:[#allocation4 + $0x50] sm:$0x1]
      %v4860 = vsel %vm4828, 0, %v4859
      %4861 = vst [vmem:[#allocation4 + $0x50] sm:$0x1] %v4860
      %v4862 = vld [vmem:[#allocation4 + $0x58] sm:$0x1]
      %v4863 = vsel %vm4828, 0, %v4862
      %4864 = vst [vmem:[#allocation4 + $0x58] sm:$0x1] %v4863
      %v4865 = vld [vmem:[#allocation4 + $0x60] sm:$0x1]
      %v4866 = vsel %vm4828, 0, %v4865
      %4867 = vst [vmem:[#allocation4 + $0x60] sm:$0x1] %v4866
      %v4868 = vld [vmem:[#allocation4 + $0x68] sm:$0x1]
      %v4869 = vsel %vm4828, 0, %v4868
      %4870 = vst [vmem:[#allocation4 + $0x68] sm:$0x1] %v4869
      %v4871 = vld [vmem:[#allocation4 + $0x70] sm:$0x1]
      %v4872 = vsel %vm4828, 0, %v4871
      %4873 = vst [vmem:[#allocation4 + $0x70] sm:$0x1] %v4872
      %v4874 = vld [vmem:[#allocation4 + $0x78] sm:$0x1]
      %v4875 = vsel %vm4828, 0, %v4874
      %4876 = vst [vmem:[#allocation4 + $0x78] sm:$0x1] %v4875
      %4877 = vrot.lane.b32.xlu0 %v4047, 12
      %v4878 = vpop.permute.xlu0 %4877
      %4879 = vrot.lane.b32.xlu0 %v4054, 12
      %v4880 = vpop.permute.xlu0 %4879
      %4881 = vrot.lane.b32.xlu0 %v4061, 12
      %v4882 = vpop.permute.xlu0 %4881
      %4883 = vrot.lane.b32.xlu0 %v4068, 12
      %v4884 = vpop.permute.xlu0 %4883
      %4885 = vrot.lane.b32.xlu0 %v4075, 12
      %v4886 = vpop.permute.xlu0 %4885
      %4887 = vrot.lane.b32.xlu0 %v4082, 12
      %v4888 = vpop.permute.xlu0 %4887
      %4889 = vrot.lane.b32.xlu0 %v4089, 12
      %v4890 = vpop.permute.xlu0 %4889
      %4891 = vrot.lane.b32.xlu0 %v4096, 12
      %v4892 = vpop.permute.xlu0 %4891
      %4893 = vrot.lane.b32.xlu0 %v4103, 12
      %v4894 = vpop.permute.xlu0 %4893
      %4895 = vrot.lane.b32.xlu0 %v4110, 12
      %v4896 = vpop.permute.xlu0 %4895
      %4897 = vrot.lane.b32.xlu0 %v4117, 12
      %v4898 = vpop.permute.xlu0 %4897
      %4899 = vrot.lane.b32.xlu0 %v4124, 12
      %v4900 = vpop.permute.xlu0 %4899
      %4901 = vrot.lane.b32.xlu0 %v4131, 12
      %v4902 = vpop.permute.xlu0 %4901
      %4903 = vrot.lane.b32.xlu0 %v4138, 12
      %v4904 = vpop.permute.xlu0 %4903
      %4905 = vrot.lane.b32.xlu0 %v4509, 12
      %v4906 = vpop.permute.xlu0 %4905
      %vm4922 = vcmask 113760
      %vm4923 = vmand %vm4922, %vm722
      %v4924 = vld [vmem:[#allocation4] sm:$0xff]
      %v4925 = vsel %vm4923, %v4878, %v4924
      %4926 = vst [vmem:[#allocation4] sm:$0xff] %v4925
      %v4927 = vld [vmem:[#allocation4 + $0x8] sm:$0xff]
      %v4928 = vsel %vm4923, %v4880, %v4927
      %4929 = vst [vmem:[#allocation4 + $0x8] sm:$0xff] %v4928
      %v4930 = vld [vmem:[#allocation4 + $0x10] sm:$0xff]
      %v4931 = vsel %vm4923, %v4882, %v4930
      %4932 = vst [vmem:[#allocation4 + $0x10] sm:$0xff] %v4931
      %v4933 = vld [vmem:[#allocation4 + $0x18] sm:$0xff]
      %v4934 = vsel %vm4923, %v4884, %v4933
      %4935 = vst [vmem:[#allocation4 + $0x18] sm:$0xff] %v4934
      %v4936 = vld [vmem:[#allocation4 + $0x20] sm:$0xff]
      %v4937 = vsel %vm4923, %v4886, %v4936
      %4938 = vst [vmem:[#allocation4 + $0x20] sm:$0xff] %v4937
      %v4939 = vld [vmem:[#allocation4 + $0x28] sm:$0xff]
      %v4940 = vsel %vm4923, %v4888, %v4939
      %4941 = vst [vmem:[#allocation4 + $0x28] sm:$0xff] %v4940
      %v4942 = vld [vmem:[#allocation4 + $0x30] sm:$0xff]
      %v4943 = vsel %vm4923, %v4890, %v4942
      %4944 = vst [vmem:[#allocation4 + $0x30] sm:$0xff] %v4943
      %v4945 = vld [vmem:[#allocation4 + $0x38] sm:$0xff]
      %v4946 = vsel %vm4923, %v4892, %v4945
      %4947 = vst [vmem:[#allocation4 + $0x38] sm:$0xff] %v4946
      %v4948 = vld [vmem:[#allocation4 + $0x40] sm:$0xff]
      %v4949 = vsel %vm4923, %v4894, %v4948
      %4950 = vst [vmem:[#allocation4 + $0x40] sm:$0xff] %v4949
      %v4951 = vld [vmem:[#allocation4 + $0x48] sm:$0xff]
      %v4952 = vsel %vm4923, %v4896, %v4951
      %4953 = vst [vmem:[#allocation4 + $0x48] sm:$0xff] %v4952
      %v4954 = vld [vmem:[#allocation4 + $0x50] sm:$0xff]
      %v4955 = vsel %vm4923, %v4898, %v4954
      %4956 = vst [vmem:[#allocation4 + $0x50] sm:$0xff] %v4955
      %v4957 = vld [vmem:[#allocation4 + $0x58] sm:$0xff]
      %v4958 = vsel %vm4923, %v4900, %v4957
      %4959 = vst [vmem:[#allocation4 + $0x58] sm:$0xff] %v4958
      %v4960 = vld [vmem:[#allocation4 + $0x60] sm:$0xff]
      %v4961 = vsel %vm4923, %v4902, %v4960
      %4962 = vst [vmem:[#allocation4 + $0x60] sm:$0xff] %v4961
      %v4963 = vld [vmem:[#allocation4 + $0x68] sm:$0xff]
      %v4964 = vsel %vm4923, %v4904, %v4963
      %4965 = vst [vmem:[#allocation4 + $0x68] sm:$0xff] %v4964
      %v4966 = vld [vmem:[#allocation4 + $0x70] sm:$0xff]
      %v4967 = vsel %vm4923, %v4906, %v4966
      %4968 = vst [vmem:[#allocation4 + $0x70] sm:$0xff] %v4967
      %vm4969 = vcmask 130160
      %4970 = vst.msk [vmem:[%s4824] sm:$0xff] %vm4969, 0
      %4971 = vrot.lane.b32.xlu0 %v3968, 14
      %v4972 = vpop.permute.xlu0 %4971
      %4973 = vrot.lane.b32.xlu0 %v3969, 14
      %v4974 = vpop.permute.xlu0 %4973
      %4975 = vrot.lane.b32.xlu0 %v3970, 14
      %v4976 = vpop.permute.xlu0 %4975
      %4977 = vrot.lane.b32.xlu0 %v3971, 14
      %v4978 = vpop.permute.xlu0 %4977
      %4979 = vrot.lane.b32.xlu0 %v3972, 14
      %v4980 = vpop.permute.xlu0 %4979
      %4981 = vrot.lane.b32.xlu0 %v3973, 14
      %v4982 = vpop.permute.xlu0 %4981
      %4983 = vrot.lane.b32.xlu0 %v3974, 14
      %v4984 = vpop.permute.xlu0 %4983
      %4985 = vrot.lane.b32.xlu0 %v3975, 14
      %v4986 = vpop.permute.xlu0 %4985
      %4987 = vrot.lane.b32.xlu0 %v3976, 14
      %v4988 = vpop.permute.xlu0 %4987
      %4989 = vrot.lane.b32.xlu0 %v3977, 14
      %v4990 = vpop.permute.xlu0 %4989
      %4991 = vrot.lane.b32.xlu0 %v3978, 14
      %v4992 = vpop.permute.xlu0 %4991
      %4993 = vrot.lane.b32.xlu0 %v3979, 14
      %v4994 = vpop.permute.xlu0 %4993
      %4995 = vrot.lane.b32.xlu0 %v3980, 14
      %v4996 = vpop.permute.xlu0 %4995
      %4997 = vrot.lane.b32.xlu0 %v3981, 14
      %v4998 = vpop.permute.xlu0 %4997
      %4999 = vrot.lane.b32.xlu0 %v3982, 14
      %v5000 = vpop.permute.xlu0 %4999
      %5016 = vst.msk [vmem:[#allocation4] sm:$0xff] %vm4969, %v4972
      %5017 = vst.msk [vmem:[#allocation4 + $0x8] sm:$0xff] %vm4969, %v4974
      %5018 = vst.msk [vmem:[#allocation4 + $0x10] sm:$0xff] %vm4969, %v4976
      %5019 = vst.msk [vmem:[#allocation4 + $0x18] sm:$0xff] %vm4969, %v4978
      %5020 = vst.msk [vmem:[#allocation4 + $0x20] sm:$0xff] %vm4969, %v4980
      %5021 = vst.msk [vmem:[#allocation4 + $0x28] sm:$0xff] %vm4969, %v4982
      %5022 = vst.msk [vmem:[#allocation4 + $0x30] sm:$0xff] %vm4969, %v4984
      %5023 = vst.msk [vmem:[#allocation4 + $0x38] sm:$0xff] %vm4969, %v4986
      %5024 = vst.msk [vmem:[#allocation4 + $0x40] sm:$0xff] %vm4969, %v4988
      %5025 = vst.msk [vmem:[#allocation4 + $0x48] sm:$0xff] %vm4969, %v4990
      %5026 = vst.msk [vmem:[#allocation4 + $0x50] sm:$0xff] %vm4969, %v4992
      %5027 = vst.msk [vmem:[#allocation4 + $0x58] sm:$0xff] %vm4969, %v4994
      %5028 = vst.msk [vmem:[#allocation4 + $0x60] sm:$0xff] %vm4969, %v4996
      %5029 = vst.msk [vmem:[#allocation4 + $0x68] sm:$0xff] %vm4969, %v4998
      %5030 = vst.msk [vmem:[#allocation4 + $0x70] sm:$0xff] %vm4969, %v5000
      %vm5031 = vcmask 146560
      %5032 = vst.msk [vmem:[%s4824] sm:$0xff] %vm5031, 0
      %vm5033 = vcmask 146567
      %vm5034 = vmand %vm5033, %vm849
      %v5035 = vld [vmem:[#allocation4] sm:$0x80]
      %v5036 = vsel %vm5034, 0, %v5035
      %5037 = vst [vmem:[#allocation4] sm:$0x80] %v5036
      %v5038 = vld [vmem:[#allocation4 + $0x8] sm:$0x80]
      %v5039 = vsel %vm5034, 0, %v5038
      %5040 = vst [vmem:[#allocation4 + $0x8] sm:$0x80] %v5039
      %v5041 = vld [vmem:[#allocation4 + $0x10] sm:$0x80]
      %v5042 = vsel %vm5034, 0, %v5041
      %5043 = vst [vmem:[#allocation4 + $0x10] sm:$0x80] %v5042
      %v5044 = vld [vmem:[#allocation4 + $0x18] sm:$0x80]
      %v5045 = vsel %vm5034, 0, %v5044
      %5046 = vst [vmem:[#allocation4 + $0x18] sm:$0x80] %v5045
      %v5047 = vld [vmem:[#allocation4 + $0x20] sm:$0x80]
      %v5048 = vsel %vm5034, 0, %v5047
      %5049 = vst [vmem:[#allocation4 + $0x20] sm:$0x80] %v5048
      %v5050 = vld [vmem:[#allocation4 + $0x28] sm:$0x80]
      %v5051 = vsel %vm5034, 0, %v5050
      %5052 = vst [vmem:[#allocation4 + $0x28] sm:$0x80] %v5051
      %v5053 = vld [vmem:[#allocation4 + $0x30] sm:$0x80]
      %v5054 = vsel %vm5034, 0, %v5053
      %5055 = vst [vmem:[#allocation4 + $0x30] sm:$0x80] %v5054
      %v5056 = vld [vmem:[#allocation4 + $0x38] sm:$0x80]
      %v5057 = vsel %vm5034, 0, %v5056
      %5058 = vst [vmem:[#allocation4 + $0x38] sm:$0x80] %v5057
      %v5059 = vld [vmem:[#allocation4 + $0x40] sm:$0x80]
      %v5060 = vsel %vm5034, 0, %v5059
      %5061 = vst [vmem:[#allocation4 + $0x40] sm:$0x80] %v5060
      %v5062 = vld [vmem:[#allocation4 + $0x48] sm:$0x80]
      %v5063 = vsel %vm5034, 0, %v5062
      %5064 = vst [vmem:[#allocation4 + $0x48] sm:$0x80] %v5063
      %v5065 = vld [vmem:[#allocation4 + $0x50] sm:$0x80]
      %v5066 = vsel %vm5034, 0, %v5065
      %5067 = vst [vmem:[#allocation4 + $0x50] sm:$0x80] %v5066
      %v5068 = vld [vmem:[#allocation4 + $0x58] sm:$0x80]
      %v5069 = vsel %vm5034, 0, %v5068
      %5070 = vst [vmem:[#allocation4 + $0x58] sm:$0x80] %v5069
      %v5071 = vld [vmem:[#allocation4 + $0x60] sm:$0x80]
      %v5072 = vsel %vm5034, 0, %v5071
      %5073 = vst [vmem:[#allocation4 + $0x60] sm:$0x80] %v5072
      %v5074 = vld [vmem:[#allocation4 + $0x68] sm:$0x80]
      %v5075 = vsel %vm5034, 0, %v5074
      %5076 = vst [vmem:[#allocation4 + $0x68] sm:$0x80] %v5075
      %v5077 = vld [vmem:[#allocation4 + $0x70] sm:$0x80]
      %v5078 = vsel %vm5034, 0, %v5077
      %5079 = vst [vmem:[#allocation4 + $0x70] sm:$0x80] %v5078
      %v5080 = vld [vmem:[#allocation4 + $0x78] sm:$0x80]
      %v5081 = vsel %vm5034, 0, %v5080
      %5082 = vst [vmem:[#allocation4 + $0x78] sm:$0x80] %v5081
      %5083 = vrot.lane.b32.xlu0 %v4334, 16
      %v5084 = vpop.permute.xlu0 %5083
      %5085 = vrot.lane.b32.xlu0 %v4336, 16
      %v5086 = vpop.permute.xlu0 %5085
      %5087 = vrot.lane.b32.xlu0 %v4338, 16
      %v5088 = vpop.permute.xlu0 %5087
      %5089 = vrot.lane.b32.xlu0 %v4340, 16
      %v5090 = vpop.permute.xlu0 %5089
      %5091 = vrot.lane.b32.xlu0 %v4342, 16
      %v5092 = vpop.permute.xlu0 %5091
      %5093 = vrot.lane.b32.xlu0 %v4344, 16
      %v5094 = vpop.permute.xlu0 %5093
      %5095 = vrot.lane.b32.xlu0 %v4346, 16
      %v5096 = vpop.permute.xlu0 %5095
      %5097 = vrot.lane.b32.xlu0 %v4348, 16
      %v5098 = vpop.permute.xlu0 %5097
      %5099 = vrot.lane.b32.xlu0 %v4350, 16
      %v5100 = vpop.permute.xlu0 %5099
      %5101 = vrot.lane.b32.xlu0 %v4352, 16
      %v5102 = vpop.permute.xlu0 %5101
      %5103 = vrot.lane.b32.xlu0 %v4354, 16
      %v5104 = vpop.permute.xlu0 %5103
      %5105 = vrot.lane.b32.xlu0 %v4356, 16
      %v5106 = vpop.permute.xlu0 %5105
      %5107 = vrot.lane.b32.xlu0 %v4358, 16
      %v5108 = vpop.permute.xlu0 %5107
      %5109 = vrot.lane.b32.xlu0 %v4360, 16
      %v5110 = vpop.permute.xlu0 %5109
      %5111 = vrot.lane.b32.xlu0 %v4725, 16
      %v5112 = vpop.permute.xlu0 %5111
      %vm5128 = vcmask 146560
      %vm5129 = vmand %vm5128, %vm975
      %v5130 = vld [vmem:[#allocation4] sm:$0xff]
      %v5131 = vsel %vm5129, %v5084, %v5130
      %5132 = vst [vmem:[#allocation4] sm:$0xff] %v5131
      %v5133 = vld [vmem:[#allocation4 + $0x8] sm:$0xff]
      %v5134 = vsel %vm5129, %v5086, %v5133
      %5135 = vst [vmem:[#allocation4 + $0x8] sm:$0xff] %v5134
      %v5136 = vld [vmem:[#allocation4 + $0x10] sm:$0xff]
      %v5137 = vsel %vm5129, %v5088, %v5136
      %5138 = vst [vmem:[#allocation4 + $0x10] sm:$0xff] %v5137
      %v5139 = vld [vmem:[#allocation4 + $0x18] sm:$0xff]
      %v5140 = vsel %vm5129, %v5090, %v5139
      %5141 = vst [vmem:[#allocation4 + $0x18] sm:$0xff] %v5140
      %v5142 = vld [vmem:[#allocation4 + $0x20] sm:$0xff]
      %v5143 = vsel %vm5129, %v5092, %v5142
      %5144 = vst [vmem:[#allocation4 + $0x20] sm:$0xff] %v5143
      %v5145 = vld [vmem:[#allocation4 + $0x28] sm:$0xff]
      %v5146 = vsel %vm5129, %v5094, %v5145
      %5147 = vst [vmem:[#allocation4 + $0x28] sm:$0xff] %v5146
      %v5148 = vld [vmem:[#allocation4 + $0x30] sm:$0xff]
      %v5149 = vsel %vm5129, %v5096, %v5148
      %5150 = vst [vmem:[#allocation4 + $0x30] sm:$0xff] %v5149
      %v5151 = vld [vmem:[#allocation4 + $0x38] sm:$0xff]
      %v5152 = vsel %vm5129, %v5098, %v5151
      %5153 = vst [vmem:[#allocation4 + $0x38] sm:$0xff] %v5152
      %v5154 = vld [vmem:[#allocation4 + $0x40] sm:$0xff]
      %v5155 = vsel %vm5129, %v5100, %v5154
      %5156 = vst [vmem:[#allocation4 + $0x40] sm:$0xff] %v5155
      %v5157 = vld [vmem:[#allocation4 + $0x48] sm:$0xff]
      %v5158 = vsel %vm5129, %v5102, %v5157
      %5159 = vst [vmem:[#allocation4 + $0x48] sm:$0xff] %v5158
      %v5160 = vld [vmem:[#allocation4 + $0x50] sm:$0xff]
      %v5161 = vsel %vm5129, %v5104, %v5160
      %5162 = vst [vmem:[#allocation4 + $0x50] sm:$0xff] %v5161
      %v5163 = vld [vmem:[#allocation4 + $0x58] sm:$0xff]
      %v5164 = vsel %vm5129, %v5106, %v5163
      %5165 = vst [vmem:[#allocation4 + $0x58] sm:$0xff] %v5164
      %v5166 = vld [vmem:[#allocation4 + $0x60] sm:$0xff]
      %v5167 = vsel %vm5129, %v5108, %v5166
      %5168 = vst [vmem:[#allocation4 + $0x60] sm:$0xff] %v5167
      %v5169 = vld [vmem:[#allocation4 + $0x68] sm:$0xff]
      %v5170 = vsel %vm5129, %v5110, %v5169
      %5171 = vst [vmem:[#allocation4 + $0x68] sm:$0xff] %v5170
      %v5172 = vld [vmem:[#allocation4 + $0x70] sm:$0xff]
      %v5173 = vsel %vm5129, %v5112, %v5172
      %5174 = vst [vmem:[#allocation4 + $0x70] sm:$0xff] %v5173
      %v5175 = vld [vmem:[#allocation4] sm:$0xff]
      %v5176 = vld [vmem:[#allocation4 + $0x8] sm:$0xff]
      %v5177 = vld [vmem:[#allocation4 + $0x10] sm:$0xff]
      %v5178 = vld [vmem:[#allocation4 + $0x18] sm:$0xff]
      %v5179 = vld [vmem:[#allocation4 + $0x20] sm:$0xff]
      %v5180 = vld [vmem:[#allocation4 + $0x28] sm:$0xff]
      %v5181 = vld [vmem:[#allocation4 + $0x30] sm:$0xff]
      %v5182 = vld [vmem:[#allocation4 + $0x38] sm:$0xff]
      %v5183 = vld [vmem:[#allocation4 + $0x40] sm:$0xff]
      %v5184 = vld [vmem:[#allocation4 + $0x48] sm:$0xff]
      %v5185 = vld [vmem:[#allocation4 + $0x50] sm:$0xff]
      %v5186 = vld [vmem:[#allocation4 + $0x58] sm:$0xff]
      %v5187 = vld [vmem:[#allocation4 + $0x60] sm:$0xff]
      %v5188 = vld [vmem:[#allocation4 + $0x68] sm:$0xff]
      %v5189 = vld [vmem:[#allocation4 + $0x70] sm:$0xff]
      %v5190 = vld [vmem:[#allocation4 + $0x78] sm:$0xff]
      %v5191 = vld [vmem:[%s3] sm:$0xf]
      %v5192 = vld [vmem:[%s3 + $0x4] sm:$0xf]
      %v5193 = vld [vmem:[%s3 + $0x8] sm:$0x1]
      %v5197 = vunpack.c.l.b16 %v5191
      %v5198 = vunpack.c.l.b16 %v5192
      %v5199 = vunpack.c.l.b16 %v5193
      %v5200 = vpack.c.b16 %v5198, %v5197
      %v5201 = vpack.c.b16 %v5199, %v5199
      %vm5203 = vcmask 146432
      %v5205 = vsel %vm5203, %v5175, 0
      %v5208 = vsel %vm5203, %v5176, 0
      %v5211 = vsel %vm5203, %v5177, 0
      %v5214 = vsel %vm5203, %v5178, 0
      %v5217 = vsel %vm5203, %v5179, 0
      %v5220 = vsel %vm5203, %v5180, 0
      %v5223 = vsel %vm5203, %v5181, 0
      %v5226 = vsel %vm5203, %v5182, 0
      %v5229 = vsel %vm5203, %v5183, 0
      %v5232 = vsel %vm5203, %v5184, 0
      %v5235 = vsel %vm5203, %v5185, 0
      %v5238 = vsel %vm5203, %v5186, 0
      %v5241 = vsel %vm5203, %v5187, 0
      %v5244 = vsel %vm5203, %v5188, 0
      %v5247 = vsel %vm5203, %v5189, 0
      %v5250 = vsel %vm5203, %v5190, 0
      %vm5252 = vcmask 1040384
      %v5254 = vsel %vm5252, %v5201, 0
      %5256 = vmatprep.subr.bf16.mxu0 0
      %5257 = vmatpush1.bf16.msra.mxu0 %v5200
      %5258 = vmatprep.subr.bf16.mxu0 0
      %5259 = vmatpush1.bf16.msra.mxu0 %v5254
      %5260 = vmatprep.subr.bf16.mxu0 0
      %5261 = vmatpush1.bf16.msra.mxu0 0
      %5262 = vmatprep.subr.bf16.mxu0 0
      %5263 = vmatpush1.bf16.msra.mxu0 0
      %5264 = vmatprep.subr.bf16.mxu0 0
      %5265 = vmatpush1.bf16.msra.mxu0 0
      %5266 = vmatprep.subr.bf16.mxu0 0
      %5267 = vmatpush1.bf16.msra.mxu0 0
      %5268 = vmatprep.subr.bf16.mxu0 0
      %5269 = vmatpush1.bf16.msra.mxu0 0
      %5270 = vmatprep.subr.bf16.mxu0 0
      %5271 = vmatpush1.bf16.msra.mxu0 0
      %5272 = vmatprep.subr.bf16.mxu0 0
      %5273 = vmatpush1.bf16.msra.mxu0 0
      %5274 = vmatprep.subr.bf16.mxu0 0
      %5275 = vmatpush1.bf16.msra.mxu0 0
      %5276 = vmatprep.subr.bf16.mxu0 0
      %5277 = vmatpush1.bf16.msra.mxu0 0
      %5278 = vmatprep.subr.bf16.mxu0 0
      %5279 = vmatpush1.bf16.msra.mxu0 0
      %5280 = vmatprep.subr.bf16.mxu0 0
      %5281 = vmatpush1.bf16.msra.mxu0 0
      %5282 = vmatprep.subr.bf16.mxu0 0
      %5283 = vmatpush1.bf16.msra.mxu0 0
      %5284 = vmatprep.subr.bf16.mxu0 0
      %5285 = vmatpush1.bf16.msra.mxu0 0
      %5286 = vmatprep.subr.bf16.mxu0 0
      %5287 = vmatpush1.bf16.msra.mxu0 0
      %5288 = vmatprep.mubr.bf16.mxu0 0
      %5289 = vmatmul.mubr.bf16.gmra.mrb[0].mxu0 %v5205
      %v5290 = vpop.f32.mrb[0].mxu0
      %v5291 = vadd.f32 0.0, %v5290
      %v5292 = vpop.f32.mrb[0].mxu0
      %v5293 = vpop.f32.mrb[0].mxu0
      %v5294 = vadd.f32 0.0, %v5293
      %v5295 = vpop.f32.mrb[0].mxu0
      %5296 = vmatprep.mubr.bf16.mxu0 0
      %5297 = vmatmul.mubr.bf16.gmra.mrb[0].mxu0 %v5208
      %v5298 = vpop.f32.mrb[0].mxu0
      %v5299 = vadd.f32 0.0, %v5298
      %v5300 = vpop.f32.mrb[0].mxu0
      %v5301 = vpop.f32.mrb[0].mxu0
      %v5302 = vadd.f32 0.0, %v5301
      %v5303 = vpop.f32.mrb[0].mxu0
      %5304 = vmatprep.mubr.bf16.mxu0 0
      %5305 = vmatmul.mubr.bf16.gmra.mrb[0].mxu0 %v5211
      %v5306 = vpop.f32.mrb[0].mxu0
      %v5307 = vadd.f32 0.0, %v5306
      %v5308 = vpop.f32.mrb[0].mxu0
      %v5309 = vpop.f32.mrb[0].mxu0
      %v5310 = vadd.f32 0.0, %v5309
      %v5311 = vpop.f32.mrb[0].mxu0
      %5312 = vmatprep.mubr.bf16.mxu0 0
      %5313 = vmatmul.mubr.bf16.gmra.mrb[0].mxu0 %v5214
      %v5314 = vpop.f32.mrb[0].mxu0
      %v5315 = vadd.f32 0.0, %v5314
      %v5316 = vpop.f32.mrb[0].mxu0
      %v5317 = vpop.f32.mrb[0].mxu0
      %v5318 = vadd.f32 0.0, %v5317
      %v5319 = vpop.f32.mrb[0].mxu0
      %5320 = vmatprep.mubr.bf16.mxu0 0
      %5321 = vmatmul.mubr.bf16.gmra.mrb[0].mxu0 %v5217
      %v5322 = vpop.f32.mrb[0].mxu0
      %v5323 = vadd.f32 0.0, %v5322
      %v5324 = vpop.f32.mrb[0].mxu0
      %v5325 = vpop.f32.mrb[0].mxu0
      %v5326 = vadd.f32 0.0, %v5325
      %v5327 = vpop.f32.mrb[0].mxu0
      %5328 = vmatprep.mubr.bf16.mxu0 0
      %5329 = vmatmul.mubr.bf16.gmra.mrb[0].mxu0 %v5220
      %v5330 = vpop.f32.mrb[0].mxu0
      %v5331 = vadd.f32 0.0, %v5330
      %v5332 = vpop.f32.mrb[0].mxu0
      %v5333 = vpop.f32.mrb[0].mxu0
      %v5334 = vadd.f32 0.0, %v5333
      %v5335 = vpop.f32.mrb[0].mxu0
      %5336 = vmatprep.mubr.bf16.mxu0 0
      %5337 = vmatmul.mubr.bf16.gmra.mrb[0].mxu0 %v5223
      %v5338 = vpop.f32.mrb[0].mxu0
      %v5339 = vadd.f32 0.0, %v5338
      %v5340 = vpop.f32.mrb[0].mxu0
      %v5341 = vpop.f32.mrb[0].mxu0
      %v5342 = vadd.f32 0.0, %v5341
      %v5343 = vpop.f32.mrb[0].mxu0
      %5344 = vmatprep.mubr.bf16.mxu0 0
      %5345 = vmatmul.mubr.bf16.gmra.mrb[0].mxu0 %v5226
      %v5346 = vpop.f32.mrb[0].mxu0
      %v5347 = vadd.f32 0.0, %v5346
      %v5348 = vpop.f32.mrb[0].mxu0
      %v5349 = vpop.f32.mrb[0].mxu0
      %v5350 = vadd.f32 0.0, %v5349
      %v5351 = vpop.f32.mrb[0].mxu0
      %5352 = vmatprep.mubr.bf16.mxu0 0
      %5353 = vmatmul.mubr.bf16.gmra.mrb[0].mxu0 %v5229
      %v5354 = vpop.f32.mrb[0].mxu0
      %v5355 = vadd.f32 0.0, %v5354
      %v5356 = vpop.f32.mrb[0].mxu0
      %v5357 = vpop.f32.mrb[0].mxu0
      %v5358 = vadd.f32 0.0, %v5357
      %v5359 = vpop.f32.mrb[0].mxu0
      %5360 = vmatprep.mubr.bf16.mxu0 0
      %5361 = vmatmul.mubr.bf16.gmra.mrb[0].mxu0 %v5232
      %v5362 = vpop.f32.mrb[0].mxu0
      %v5363 = vadd.f32 0.0, %v5362
      %v5364 = vpop.f32.mrb[0].mxu0
      %v5365 = vpop.f32.mrb[0].mxu0
      %v5366 = vadd.f32 0.0, %v5365
      %v5367 = vpop.f32.mrb[0].mxu0
      %5368 = vmatprep.mubr.bf16.mxu0 0
      %5369 = vmatmul.mubr.bf16.gmra.mrb[0].mxu0 %v5235
      %v5370 = vpop.f32.mrb[0].mxu0
      %v5371 = vadd.f32 0.0, %v5370
      %v5372 = vpop.f32.mrb[0].mxu0
      %v5373 = vpop.f32.mrb[0].mxu0
      %v5374 = vadd.f32 0.0, %v5373
      %v5375 = vpop.f32.mrb[0].mxu0
      %5376 = vmatprep.mubr.bf16.mxu0 0
      %5377 = vmatmul.mubr.bf16.gmra.mrb[0].mxu0 %v5238
      %v5378 = vpop.f32.mrb[0].mxu0
      %v5379 = vadd.f32 0.0, %v5378
      %v5380 = vpop.f32.mrb[0].mxu0
      %v5381 = vpop.f32.mrb[0].mxu0
      %v5382 = vadd.f32 0.0, %v5381
      %v5383 = vpop.f32.mrb[0].mxu0
      %5384 = vmatprep.mubr.bf16.mxu0 0
      %5385 = vmatmul.mubr.bf16.gmra.mrb[0].mxu0 %v5241
      %v5386 = vpop.f32.mrb[0].mxu0
      %v5387 = vadd.f32 0.0, %v5386
      %v5388 = vpop.f32.mrb[0].mxu0
      %v5389 = vpop.f32.mrb[0].mxu0
      %v5390 = vadd.f32 0.0, %v5389
      %v5391 = vpop.f32.mrb[0].mxu0
      %5392 = vmatprep.mubr.bf16.mxu0 0
      %5393 = vmatmul.mubr.bf16.gmra.mrb[0].mxu0 %v5244
      %v5394 = vpop.f32.mrb[0].mxu0
      %v5395 = vadd.f32 0.0, %v5394
      %v5396 = vpop.f32.mrb[0].mxu0
      %v5397 = vpop.f32.mrb[0].mxu0
      %v5398 = vadd.f32 0.0, %v5397
      %v5399 = vpop.f32.mrb[0].mxu0
      %5400 = vmatprep.mubr.bf16.mxu0 0
      %5401 = vmatmul.mubr.bf16.gmra.mrb[0].mxu0 %v5247
      %v5402 = vpop.f32.mrb[0].mxu0
      %v5403 = vadd.f32 0.0, %v5402
      %v5404 = vpop.f32.mrb[0].mxu0
      %v5405 = vpop.f32.mrb[0].mxu0
      %v5406 = vadd.f32 0.0, %v5405
      %v5407 = vpop.f32.mrb[0].mxu0
      %5408 = vmatprep.mubr.bf16.mxu0 0
      %5409 = vmatmul.mubr.bf16.gmra.mrb[0].mxu0 %v5250
      %v5410 = vpop.f32.mrb[0].mxu0
      %v5411 = vadd.f32 0.0, %v5410
      %v5412 = vpop.f32.mrb[0].mxu0
      %v5413 = vpop.f32.mrb[0].mxu0
      %v5414 = vadd.f32 0.0, %v5413
      %v5415 = vpop.f32.mrb[0].mxu0
      %5416 = vdwg.mxu0
      %5417 = vst.msk [vmem:[#allocation5] sm:$0xff] %vm258, %v1868
      %5418 = vst.msk [vmem:[#allocation5 + $0x8] sm:$0xff] %vm258, %v1871
      %5419 = vst.msk [vmem:[#allocation5 + $0x10] sm:$0xff] %vm258, %v1876
      %5420 = vst.msk [vmem:[#allocation5 + $0x18] sm:$0xff] %vm258, %v1879
      %5421 = vst.msk [vmem:[#allocation5 + $0x20] sm:$0xff] %vm258, %v1884
      %5422 = vst.msk [vmem:[#allocation5 + $0x28] sm:$0xff] %vm258, %v1887
      %5423 = vst.msk [vmem:[#allocation5 + $0x30] sm:$0xff] %vm258, %v1892
      %5424 = vst.msk [vmem:[#allocation5 + $0x38] sm:$0xff] %vm258, %v1895
      %5425 = vst.msk [vmem:[#allocation5 + $0x40] sm:$0xff] %vm258, %v1900
      %5426 = vst.msk [vmem:[#allocation5 + $0x48] sm:$0xff] %vm258, %v1903
      %5427 = vst.msk [vmem:[#allocation5 + $0x50] sm:$0xff] %vm258, %v1908
      %5428 = vst.msk [vmem:[#allocation5 + $0x58] sm:$0xff] %vm258, %v1911
      %5429 = vst.msk [vmem:[#allocation5 + $0x60] sm:$0xff] %vm258, %v1916
      %5430 = vst.msk [vmem:[#allocation5 + $0x68] sm:$0xff] %vm258, %v1919
      %5431 = vst.msk [vmem:[#allocation5 + $0x70] sm:$0xff] %vm258, %v1924
      %5432 = vst.msk [vmem:[#allocation5 + $0x78] sm:$0xff] %vm258, %v1927
      %5433 = vst.msk [vmem:[#allocation5 + $0x80] sm:$0xff] %vm258, %v1932
      %5434 = vst.msk [vmem:[#allocation5 + $0x88] sm:$0xff] %vm258, %v1935
      %5435 = vst.msk [vmem:[#allocation5 + $0x90] sm:$0xff] %vm258, %v1940
      %5436 = vst.msk [vmem:[#allocation5 + $0x98] sm:$0xff] %vm258, %v1943
      %5437 = vst.msk [vmem:[#allocation5 + $0xa0] sm:$0xff] %vm258, %v1948
      %5438 = vst.msk [vmem:[#allocation5 + $0xa8] sm:$0xff] %vm258, %v1951
      %5439 = vst.msk [vmem:[#allocation5 + $0xb0] sm:$0xff] %vm258, %v1956
      %5440 = vst.msk [vmem:[#allocation5 + $0xb8] sm:$0xff] %vm258, %v1959
      %5441 = vst.msk [vmem:[#allocation5 + $0xc0] sm:$0xff] %vm258, %v1964
      %5442 = vst.msk [vmem:[#allocation5 + $0xc8] sm:$0xff] %vm258, %v1967
      %5443 = vst.msk [vmem:[#allocation5 + $0xd0] sm:$0xff] %vm258, %v1972
      %5444 = vst.msk [vmem:[#allocation5 + $0xd8] sm:$0xff] %vm258, %v1975
      %5445 = vst.msk [vmem:[#allocation5 + $0xe0] sm:$0xff] %vm258, %v1980
      %5446 = vst.msk [vmem:[#allocation5 + $0xe8] sm:$0xff] %vm258, %v1983
      %5447 = vst.msk [vmem:[#allocation5 + $0xf0] sm:$0xff] %vm258, %v1988
      %5448 = vst.msk [vmem:[#allocation5 + $0xf8] sm:$0xff] %vm258, %v1991
      %5481 = vrot.lane.b32.xlu0 %v3567, 4
      %v5482 = vpop.permute.xlu0 %5481
      %5483 = vrot.lane.b32.xlu0 %v3570, 4
      %v5484 = vpop.permute.xlu0 %5483
      %5485 = vrot.lane.b32.xlu0 %v3575, 4
      %v5486 = vpop.permute.xlu0 %5485
      %5487 = vrot.lane.b32.xlu0 %v3578, 4
      %v5488 = vpop.permute.xlu0 %5487
      %5489 = vrot.lane.b32.xlu0 %v3583, 4
      %v5490 = vpop.permute.xlu0 %5489
      %5491 = vrot.lane.b32.xlu0 %v3586, 4
      %v5492 = vpop.permute.xlu0 %5491
      %5493 = vrot.lane.b32.xlu0 %v3591, 4
      %v5494 = vpop.permute.xlu0 %5493
      %5495 = vrot.lane.b32.xlu0 %v3594, 4
      %v5496 = vpop.permute.xlu0 %5495
      %5497 = vrot.lane.b32.xlu0 %v3599, 4
      %v5498 = vpop.permute.xlu0 %5497
      %5499 = vrot.lane.b32.xlu0 %v3602, 4
      %v5500 = vpop.permute.xlu0 %5499
      %5501 = vrot.lane.b32.xlu0 %v3607, 4
      %v5502 = vpop.permute.xlu0 %5501
      %5503 = vrot.lane.b32.xlu0 %v3610, 4
      %v5504 = vpop.permute.xlu0 %5503
      %5505 = vrot.lane.b32.xlu0 %v3615, 4
      %v5506 = vpop.permute.xlu0 %5505
      %5507 = vrot.lane.b32.xlu0 %v3618, 4
      %v5508 = vpop.permute.xlu0 %5507
      %5509 = vrot.lane.b32.xlu0 %v3623, 4
      %v5510 = vpop.permute.xlu0 %5509
      %5511 = vrot.lane.b32.xlu0 %v3626, 4
      %v5512 = vpop.permute.xlu0 %5511
      %5513 = vrot.lane.b32.xlu0 %v3631, 4
      %v5514 = vpop.permute.xlu0 %5513
      %5515 = vrot.lane.b32.xlu0 %v3634, 4
      %v5516 = vpop.permute.xlu0 %5515
      %5517 = vrot.lane.b32.xlu0 %v3639, 4
      %v5518 = vpop.permute.xlu0 %5517
      %5519 = vrot.lane.b32.xlu0 %v3642, 4
      %v5520 = vpop.permute.xlu0 %5519
      %5521 = vrot.lane.b32.xlu0 %v3647, 4
      %v5522 = vpop.permute.xlu0 %5521
      %5523 = vrot.lane.b32.xlu0 %v3650, 4
      %v5524 = vpop.permute.xlu0 %5523
      %5525 = vrot.lane.b32.xlu0 %v3655, 4
      %v5526 = vpop.permute.xlu0 %5525
      %5527 = vrot.lane.b32.xlu0 %v3658, 4
      %v5528 = vpop.permute.xlu0 %5527
      %5529 = vrot.lane.b32.xlu0 %v3663, 4
      %v5530 = vpop.permute.xlu0 %5529
      %5531 = vrot.lane.b32.xlu0 %v3666, 4
      %v5532 = vpop.permute.xlu0 %5531
      %5533 = vrot.lane.b32.xlu0 %v3671, 4
      %v5534 = vpop.permute.xlu0 %5533
      %5535 = vrot.lane.b32.xlu0 %v3674, 4
      %v5536 = vpop.permute.xlu0 %5535
      %5537 = vrot.lane.b32.xlu0 %v3679, 4
      %v5538 = vpop.permute.xlu0 %5537
      %5539 = vrot.lane.b32.xlu0 %v3682, 4
      %v5540 = vpop.permute.xlu0 %5539
      %5541 = vrot.lane.b32.xlu0 %v3687, 4
      %v5542 = vpop.permute.xlu0 %5541
      %5543 = vrot.lane.b32.xlu0 %v3690, 4
      %v5544 = vpop.permute.xlu0 %5543
      %5577 = vst.msk [vmem:[#allocation5] sm:$0xff] %vm4279, %v5482
      %5578 = vst.msk [vmem:[#allocation5 + $0x8] sm:$0xff] %vm4279, %v5484
      %5579 = vst.msk [vmem:[#allocation5 + $0x10] sm:$0xff] %vm4279, %v5486
      %5580 = vst.msk [vmem:[#allocation5 + $0x18] sm:$0xff] %vm4279, %v5488
      %5581 = vst.msk [vmem:[#allocation5 + $0x20] sm:$0xff] %vm4279, %v5490
      %5582 = vst.msk [vmem:[#allocation5 + $0x28] sm:$0xff] %vm4279, %v5492
      %5583 = vst.msk [vmem:[#allocation5 + $0x30] sm:$0xff] %vm4279, %v5494
      %5584 = vst.msk [vmem:[#allocation5 + $0x38] sm:$0xff] %vm4279, %v5496
      %5585 = vst.msk [vmem:[#allocation5 + $0x40] sm:$0xff] %vm4279, %v5498
      %5586 = vst.msk [vmem:[#allocation5 + $0x48] sm:$0xff] %vm4279, %v5500
      %5587 = vst.msk [vmem:[#allocation5 + $0x50] sm:$0xff] %vm4279, %v5502
      %5588 = vst.msk [vmem:[#allocation5 + $0x58] sm:$0xff] %vm4279, %v5504
      %5589 = vst.msk [vmem:[#allocation5 + $0x60] sm:$0xff] %vm4279, %v5506
      %5590 = vst.msk [vmem:[#allocation5 + $0x68] sm:$0xff] %vm4279, %v5508
      %5591 = vst.msk [vmem:[#allocation5 + $0x70] sm:$0xff] %vm4279, %v5510
      %5592 = vst.msk [vmem:[#allocation5 + $0x78] sm:$0xff] %vm4279, %v5512
      %5593 = vst.msk [vmem:[#allocation5 + $0x80] sm:$0xff] %vm4279, %v5514
      %5594 = vst.msk [vmem:[#allocation5 + $0x88] sm:$0xff] %vm4279, %v5516
      %5595 = vst.msk [vmem:[#allocation5 + $0x90] sm:$0xff] %vm4279, %v5518
      %5596 = vst.msk [vmem:[#allocation5 + $0x98] sm:$0xff] %vm4279, %v5520
      %5597 = vst.msk [vmem:[#allocation5 + $0xa0] sm:$0xff] %vm4279, %v5522
      %5598 = vst.msk [vmem:[#allocation5 + $0xa8] sm:$0xff] %vm4279, %v5524
      %5599 = vst.msk [vmem:[#allocation5 + $0xb0] sm:$0xff] %vm4279, %v5526
      %5600 = vst.msk [vmem:[#allocation5 + $0xb8] sm:$0xff] %vm4279, %v5528
      %5601 = vst.msk [vmem:[#allocation5 + $0xc0] sm:$0xff] %vm4279, %v5530
      %5602 = vst.msk [vmem:[#allocation5 + $0xc8] sm:$0xff] %vm4279, %v5532
      %5603 = vst.msk [vmem:[#allocation5 + $0xd0] sm:$0xff] %vm4279, %v5534
      %5604 = vst.msk [vmem:[#allocation5 + $0xd8] sm:$0xff] %vm4279, %v5536
      %5605 = vst.msk [vmem:[#allocation5 + $0xe0] sm:$0xff] %vm4279, %v5538
      %5606 = vst.msk [vmem:[#allocation5 + $0xe8] sm:$0xff] %vm4279, %v5540
      %5607 = vst.msk [vmem:[#allocation5 + $0xf0] sm:$0xff] %vm4279, %v5542
      %5608 = vst.msk [vmem:[#allocation5 + $0xf8] sm:$0xff] %vm4279, %v5544
      %5641 = vrot.lane.b32.xlu0 %v5291, 6
      %v5642 = vpop.permute.xlu0 %5641
      %5643 = vrot.lane.b32.xlu0 %v5294, 6
      %v5644 = vpop.permute.xlu0 %5643
      %5645 = vrot.lane.b32.xlu0 %v5299, 6
      %v5646 = vpop.permute.xlu0 %5645
      %5647 = vrot.lane.b32.xlu0 %v5302, 6
      %v5648 = vpop.permute.xlu0 %5647
      %5649 = vrot.lane.b32.xlu0 %v5307, 6
      %v5650 = vpop.permute.xlu0 %5649
      %5651 = vrot.lane.b32.xlu0 %v5310, 6
      %v5652 = vpop.permute.xlu0 %5651
      %5653 = vrot.lane.b32.xlu0 %v5315, 6
      %v5654 = vpop.permute.xlu0 %5653
      %5655 = vrot.lane.b32.xlu0 %v5318, 6
      %v5656 = vpop.permute.xlu0 %5655
      %5657 = vrot.lane.b32.xlu0 %v5323, 6
      %v5658 = vpop.permute.xlu0 %5657
      %5659 = vrot.lane.b32.xlu0 %v5326, 6
      %v5660 = vpop.permute.xlu0 %5659
      %5661 = vrot.lane.b32.xlu0 %v5331, 6
      %v5662 = vpop.permute.xlu0 %5661
      %5663 = vrot.lane.b32.xlu0 %v5334, 6
      %v5664 = vpop.permute.xlu0 %5663
      %5665 = vrot.lane.b32.xlu0 %v5339, 6
      %v5666 = vpop.permute.xlu0 %5665
      %5667 = vrot.lane.b32.xlu0 %v5342, 6
      %v5668 = vpop.permute.xlu0 %5667
      %5669 = vrot.lane.b32.xlu0 %v5347, 6
      %v5670 = vpop.permute.xlu0 %5669
      %5671 = vrot.lane.b32.xlu0 %v5350, 6
      %v5672 = vpop.permute.xlu0 %5671
      %5673 = vrot.lane.b32.xlu0 %v5355, 6
      %v5674 = vpop.permute.xlu0 %5673
      %5675 = vrot.lane.b32.xlu0 %v5358, 6
      %v5676 = vpop.permute.xlu0 %5675
      %5677 = vrot.lane.b32.xlu0 %v5363, 6
      %v5678 = vpop.permute.xlu0 %5677
      %5679 = vrot.lane.b32.xlu0 %v5366, 6
      %v5680 = vpop.permute.xlu0 %5679
      %5681 = vrot.lane.b32.xlu0 %v5371, 6
      %v5682 = vpop.permute.xlu0 %5681
      %5683 = vrot.lane.b32.xlu0 %v5374, 6
      %v5684 = vpop.permute.xlu0 %5683
      %5685 = vrot.lane.b32.xlu0 %v5379, 6
      %v5686 = vpop.permute.xlu0 %5685
      %5687 = vrot.lane.b32.xlu0 %v5382, 6
      %v5688 = vpop.permute.xlu0 %5687
      %5689 = vrot.lane.b32.xlu0 %v5387, 6
      %v5690 = vpop.permute.xlu0 %5689
      %5691 = vrot.lane.b32.xlu0 %v5390, 6
      %v5692 = vpop.permute.xlu0 %5691
      %5693 = vrot.lane.b32.xlu0 %v5395, 6
      %v5694 = vpop.permute.xlu0 %5693
      %5695 = vrot.lane.b32.xlu0 %v5398, 6
      %v5696 = vpop.permute.xlu0 %5695
      %5697 = vrot.lane.b32.xlu0 %v5403, 6
      %v5698 = vpop.permute.xlu0 %5697
      %5699 = vrot.lane.b32.xlu0 %v5406, 6
      %v5700 = vpop.permute.xlu0 %5699
      %5701 = vrot.lane.b32.xlu0 %v5411, 6
      %v5702 = vpop.permute.xlu0 %5701
      %5703 = vrot.lane.b32.xlu0 %v5414, 6
      %v5704 = vpop.permute.xlu0 %5703
      %vm5737 = vcmask 64560
      %5738 = vst.msk [vmem:[#allocation5] sm:$0xff] %vm5737, %v5642
      %5739 = vst.msk [vmem:[#allocation5 + $0x8] sm:$0xff] %vm5737, %v5644
      %5740 = vst.msk [vmem:[#allocation5 + $0x10] sm:$0xff] %vm5737, %v5646
      %5741 = vst.msk [vmem:[#allocation5 + $0x18] sm:$0xff] %vm5737, %v5648
      %5742 = vst.msk [vmem:[#allocation5 + $0x20] sm:$0xff] %vm5737, %v5650
      %5743 = vst.msk [vmem:[#allocation5 + $0x28] sm:$0xff] %vm5737, %v5652
      %5744 = vst.msk [vmem:[#allocation5 + $0x30] sm:$0xff] %vm5737, %v5654
      %5745 = vst.msk [vmem:[#allocation5 + $0x38] sm:$0xff] %vm5737, %v5656
      %5746 = vst.msk [vmem:[#allocation5 + $0x40] sm:$0xff] %vm5737, %v5658
      %5747 = vst.msk [vmem:[#allocation5 + $0x48] sm:$0xff] %vm5737, %v5660
      %5748 = vst.msk [vmem:[#allocation5 + $0x50] sm:$0xff] %vm5737, %v5662
      %5749 = vst.msk [vmem:[#allocation5 + $0x58] sm:$0xff] %vm5737, %v5664
      %5750 = vst.msk [vmem:[#allocation5 + $0x60] sm:$0xff] %vm5737, %v5666
      %5751 = vst.msk [vmem:[#allocation5 + $0x68] sm:$0xff] %vm5737, %v5668
      %5752 = vst.msk [vmem:[#allocation5 + $0x70] sm:$0xff] %vm5737, %v5670
      %5753 = vst.msk [vmem:[#allocation5 + $0x78] sm:$0xff] %vm5737, %v5672
      %5754 = vst.msk [vmem:[#allocation5 + $0x80] sm:$0xff] %vm5737, %v5674
      %5755 = vst.msk [vmem:[#allocation5 + $0x88] sm:$0xff] %vm5737, %v5676
      %5756 = vst.msk [vmem:[#allocation5 + $0x90] sm:$0xff] %vm5737, %v5678
      %5757 = vst.msk [vmem:[#allocation5 + $0x98] sm:$0xff] %vm5737, %v5680
      %5758 = vst.msk [vmem:[#allocation5 + $0xa0] sm:$0xff] %vm5737, %v5682
      %5759 = vst.msk [vmem:[#allocation5 + $0xa8] sm:$0xff] %vm5737, %v5684
      %5760 = vst.msk [vmem:[#allocation5 + $0xb0] sm:$0xff] %vm5737, %v5686
      %5761 = vst.msk [vmem:[#allocation5 + $0xb8] sm:$0xff] %vm5737, %v5688
      %5762 = vst.msk [vmem:[#allocation5 + $0xc0] sm:$0xff] %vm5737, %v5690
      %5763 = vst.msk [vmem:[#allocation5 + $0xc8] sm:$0xff] %vm5737, %v5692
      %5764 = vst.msk [vmem:[#allocation5 + $0xd0] sm:$0xff] %vm5737, %v5694
      %5765 = vst.msk [vmem:[#allocation5 + $0xd8] sm:$0xff] %vm5737, %v5696
      %5766 = vst.msk [vmem:[#allocation5 + $0xe0] sm:$0xff] %vm5737, %v5698
      %5767 = vst.msk [vmem:[#allocation5 + $0xe8] sm:$0xff] %vm5737, %v5700
      %5768 = vst.msk [vmem:[#allocation5 + $0xf0] sm:$0xff] %vm5737, %v5702
      %5769 = vst.msk [vmem:[#allocation5 + $0xf8] sm:$0xff] %vm5737, %v5704
      %v5770 = vld [vmem:[%s4] sm:$0x3]
      %v5771 = vsel %vm258, %v532, 0
      %v5773 = vsel %vm258, %v533, 0
      %v5775 = vsel %vm258, %v534, 0
      %v5777 = vsel %vm258, %v535, 0
      %v5779 = vsel %vm258, %v536, 0
      %v5781 = vsel %vm258, %v537, 0
      %v5783 = vsel %vm258, %v538, 0
      %v5785 = vsel %vm258, %v539, 0
      %v5787 = vsel %vm258, %v540, 0
      %v5789 = vsel %vm258, %v541, 0
      %v5791 = vsel %vm258, %v542, 0
      %v5793 = vsel %vm258, %v543, 0
      %v5795 = vsel %vm258, %v544, 0
      %v5797 = vsel %vm258, %v545, 0
      %v5799 = vsel %vm258, %v546, 0
      %v5801 = vsel %vm258, %v547, 0
      %v5804 = vsel %vm1829, %v5770, 0
      %5806 = vmatprep.subr.bf16.mxu0 0
      %5807 = vmatpush1.bf16.msra.mxu0 %v5804
      %5808 = vmatprep.subr.bf16.mxu0 0
      %5809 = vmatpush1.bf16.msra.mxu0 0
      %5810 = vmatprep.subr.bf16.mxu0 0
      %5811 = vmatpush1.bf16.msra.mxu0 0
      %5812 = vmatprep.subr.bf16.mxu0 0
      %5813 = vmatpush1.bf16.msra.mxu0 0
      %5814 = vmatprep.subr.bf16.mxu0 0
      %5815 = vmatpush1.bf16.msra.mxu0 0
      %5816 = vmatprep.subr.bf16.mxu0 0
      %5817 = vmatpush1.bf16.msra.mxu0 0
      %5818 = vmatprep.subr.bf16.mxu0 0
      %5819 = vmatpush1.bf16.msra.mxu0 0
      %5820 = vmatprep.subr.bf16.mxu0 0
      %5821 = vmatpush1.bf16.msra.mxu0 0
      %5822 = vmatprep.subr.bf16.mxu0 0
      %5823 = vmatpush1.bf16.msra.mxu0 0
      %5824 = vmatprep.subr.bf16.mxu0 0
      %5825 = vmatpush1.bf16.msra.mxu0 0
      %5826 = vmatprep.subr.bf16.mxu0 0
      %5827 = vmatpush1.bf16.msra.mxu0 0
      %5828 = vmatprep.subr.bf16.mxu0 0
      %5829 = vmatpush1.bf16.msra.mxu0 0
      %5830 = vmatprep.subr.bf16.mxu0 0
      %5831 = vmatpush1.bf16.msra.mxu0 0
      %5832 = vmatprep.subr.bf16.mxu0 0
      %5833 = vmatpush1.bf16.msra.mxu0 0
      %5834 = vmatprep.subr.bf16.mxu0 0
      %5835 = vmatpush1.bf16.msra.mxu0 0
      %5836 = vmatprep.subr.bf16.mxu0 0
      %5837 = vmatpush1.bf16.msra.mxu0 0
      %5838 = vmatprep.mubr.bf16.mxu0 0
      %5839 = vmatmul.mubr.bf16.gmra.mrb[0].mxu0 %v5771
      %v5840 = vpop.f32.mrb[0].mxu0
      %v5841 = vadd.f32 0.0, %v5840
      %v5842 = vpop.f32.mrb[0].mxu0
      %v5843 = vpop.f32.mrb[0].mxu0
      %v5844 = vadd.f32 0.0, %v5843
      %v5845 = vpop.f32.mrb[0].mxu0
      %5846 = vmatprep.mubr.bf16.mxu0 0
      %5847 = vmatmul.mubr.bf16.gmra.mrb[0].mxu0 %v5773
      %v5848 = vpop.f32.mrb[0].mxu0
      %v5849 = vadd.f32 0.0, %v5848
      %v5850 = vpop.f32.mrb[0].mxu0
      %v5851 = vpop.f32.mrb[0].mxu0
      %v5852 = vadd.f32 0.0, %v5851
      %v5853 = vpop.f32.mrb[0].mxu0
      %5854 = vmatprep.mubr.bf16.mxu0 0
      %5855 = vmatmul.mubr.bf16.gmra.mrb[0].mxu0 %v5775
      %v5856 = vpop.f32.mrb[0].mxu0
      %v5857 = vadd.f32 0.0, %v5856
      %v5858 = vpop.f32.mrb[0].mxu0
      %v5859 = vpop.f32.mrb[0].mxu0
      %v5860 = vadd.f32 0.0, %v5859
      %v5861 = vpop.f32.mrb[0].mxu0
      %5862 = vmatprep.mubr.bf16.mxu0 0
      %5863 = vmatmul.mubr.bf16.gmra.mrb[0].mxu0 %v5777
      %v5864 = vpop.f32.mrb[0].mxu0
      %v5865 = vadd.f32 0.0, %v5864
      %v5866 = vpop.f32.mrb[0].mxu0
      %v5867 = vpop.f32.mrb[0].mxu0
      %v5868 = vadd.f32 0.0, %v5867
      %v5869 = vpop.f32.mrb[0].mxu0
      %5870 = vmatprep.mubr.bf16.mxu0 0
      %5871 = vmatmul.mubr.bf16.gmra.mrb[0].mxu0 %v5779
      %v5872 = vpop.f32.mrb[0].mxu0
      %v5873 = vadd.f32 0.0, %v5872
      %v5874 = vpop.f32.mrb[0].mxu0
      %v5875 = vpop.f32.mrb[0].mxu0
      %v5876 = vadd.f32 0.0, %v5875
      %v5877 = vpop.f32.mrb[0].mxu0
      %5878 = vmatprep.mubr.bf16.mxu0 0
      %5879 = vmatmul.mubr.bf16.gmra.mrb[0].mxu0 %v5781
      %v5880 = vpop.f32.mrb[0].mxu0
      %v5881 = vadd.f32 0.0, %v5880
      %v5882 = vpop.f32.mrb[0].mxu0
      %v5883 = vpop.f32.mrb[0].mxu0
      %v5884 = vadd.f32 0.0, %v5883
      %v5885 = vpop.f32.mrb[0].mxu0
      %5886 = vmatprep.mubr.bf16.mxu0 0
      %5887 = vmatmul.mubr.bf16.gmra.mrb[0].mxu0 %v5783
      %v5888 = vpop.f32.mrb[0].mxu0
      %v5889 = vadd.f32 0.0, %v5888
      %v5890 = vpop.f32.mrb[0].mxu0
      %v5891 = vpop.f32.mrb[0].mxu0
      %v5892 = vadd.f32 0.0, %v5891
      %v5893 = vpop.f32.mrb[0].mxu0
      %5894 = vmatprep.mubr.bf16.mxu0 0
      %5895 = vmatmul.mubr.bf16.gmra.mrb[0].mxu0 %v5785
      %v5896 = vpop.f32.mrb[0].mxu0
      %v5897 = vadd.f32 0.0, %v5896
      %v5898 = vpop.f32.mrb[0].mxu0
      %v5899 = vpop.f32.mrb[0].mxu0
      %v5900 = vadd.f32 0.0, %v5899
      %v5901 = vpop.f32.mrb[0].mxu0
      %5902 = vmatprep.mubr.bf16.mxu0 0
      %5903 = vmatmul.mubr.bf16.gmra.mrb[0].mxu0 %v5787
      %v5904 = vpop.f32.mrb[0].mxu0
      %v5905 = vadd.f32 0.0, %v5904
      %v5906 = vpop.f32.mrb[0].mxu0
      %v5907 = vpop.f32.mrb[0].mxu0
      %v5908 = vadd.f32 0.0, %v5907
      %v5909 = vpop.f32.mrb[0].mxu0
      %5910 = vmatprep.mubr.bf16.mxu0 0
      %5911 = vmatmul.mubr.bf16.gmra.mrb[0].mxu0 %v5789
      %v5912 = vpop.f32.mrb[0].mxu0
      %v5913 = vadd.f32 0.0, %v5912
      %v5914 = vpop.f32.mrb[0].mxu0
      %v5915 = vpop.f32.mrb[0].mxu0
      %v5916 = vadd.f32 0.0, %v5915
      %v5917 = vpop.f32.mrb[0].mxu0
      %5918 = vmatprep.mubr.bf16.mxu0 0
      %5919 = vmatmul.mubr.bf16.gmra.mrb[0].mxu0 %v5791
      %v5920 = vpop.f32.mrb[0].mxu0
      %v5921 = vadd.f32 0.0, %v5920
      %v5922 = vpop.f32.mrb[0].mxu0
      %v5923 = vpop.f32.mrb[0].mxu0
      %v5924 = vadd.f32 0.0, %v5923
      %v5925 = vpop.f32.mrb[0].mxu0
      %5926 = vmatprep.mubr.bf16.mxu0 0
      %5927 = vmatmul.mubr.bf16.gmra.mrb[0].mxu0 %v5793
      %v5928 = vpop.f32.mrb[0].mxu0
      %v5929 = vadd.f32 0.0, %v5928
      %v5930 = vpop.f32.mrb[0].mxu0
      %v5931 = vpop.f32.mrb[0].mxu0
      %v5932 = vadd.f32 0.0, %v5931
      %v5933 = vpop.f32.mrb[0].mxu0
      %5934 = vmatprep.mubr.bf16.mxu0 0
      %5935 = vmatmul.mubr.bf16.gmra.mrb[0].mxu0 %v5795
      %v5936 = vpop.f32.mrb[0].mxu0
      %v5937 = vadd.f32 0.0, %v5936
      %v5938 = vpop.f32.mrb[0].mxu0
      %v5939 = vpop.f32.mrb[0].mxu0
      %v5940 = vadd.f32 0.0, %v5939
      %v5941 = vpop.f32.mrb[0].mxu0
      %5942 = vmatprep.mubr.bf16.mxu0 0
      %5943 = vmatmul.mubr.bf16.gmra.mrb[0].mxu0 %v5797
      %v5944 = vpop.f32.mrb[0].mxu0
      %v5945 = vadd.f32 0.0, %v5944
      %v5946 = vpop.f32.mrb[0].mxu0
      %v5947 = vpop.f32.mrb[0].mxu0
      %v5948 = vadd.f32 0.0, %v5947
      %v5949 = vpop.f32.mrb[0].mxu0
      %5950 = vmatprep.mubr.bf16.mxu0 0
      %5951 = vmatmul.mubr.bf16.gmra.mrb[0].mxu0 %v5799
      %v5952 = vpop.f32.mrb[0].mxu0
      %v5953 = vadd.f32 0.0, %v5952
      %v5954 = vpop.f32.mrb[0].mxu0
      %v5955 = vpop.f32.mrb[0].mxu0
      %v5956 = vadd.f32 0.0, %v5955
      %v5957 = vpop.f32.mrb[0].mxu0
      %5958 = vmatprep.mubr.bf16.mxu0 0
      %5959 = vmatmul.mubr.bf16.gmra.mrb[0].mxu0 %v5801
      %v5960 = vpop.f32.mrb[0].mxu0
      %v5961 = vadd.f32 0.0, %v5960
      %v5962 = vpop.f32.mrb[0].mxu0
      %v5963 = vpop.f32.mrb[0].mxu0
      %v5964 = vadd.f32 0.0, %v5963
      %v5965 = vpop.f32.mrb[0].mxu0
      %5966 = vdwg.mxu0
      %v5967 = vld [vmem:[#allocation5] sm:$0xff]
      %v5968 = vld [vmem:[#allocation5 + $0x8] sm:$0xff]
      %v5969 = vld [vmem:[#allocation5 + $0x10] sm:$0xff]
      %v5970 = vld [vmem:[#allocation5 + $0x18] sm:$0xff]
      %v5971 = vld [vmem:[#allocation5 + $0x20] sm:$0xff]
      %v5972 = vld [vmem:[#allocation5 + $0x28] sm:$0xff]
      %v5973 = vld [vmem:[#allocation5 + $0x30] sm:$0xff]
      %v5974 = vld [vmem:[#allocation5 + $0x38] sm:$0xff]
      %v5975 = vld [vmem:[#allocation5 + $0x40] sm:$0xff]
      %v5976 = vld [vmem:[#allocation5 + $0x48] sm:$0xff]
      %v5977 = vld [vmem:[#allocation5 + $0x50] sm:$0xff]
      %v5978 = vld [vmem:[#allocation5 + $0x58] sm:$0xff]
      %v5979 = vld [vmem:[#allocation5 + $0x60] sm:$0xff]
      %v5980 = vld [vmem:[#allocation5 + $0x68] sm:$0xff]
      %v5981 = vld [vmem:[#allocation5 + $0x70] sm:$0xff]
      %v5982 = vld [vmem:[#allocation5 + $0x78] sm:$0xff]
      %v5983 = vld [vmem:[#allocation5 + $0x80] sm:$0xff]
      %v5984 = vld [vmem:[#allocation5 + $0x88] sm:$0xff]
      %v5985 = vld [vmem:[#allocation5 + $0x90] sm:$0xff]
      %v5986 = vld [vmem:[#allocation5 + $0x98] sm:$0xff]
      %v5987 = vld [vmem:[#allocation5 + $0xa0] sm:$0xff]
      %v5988 = vld [vmem:[#allocation5 + $0xa8] sm:$0xff]
      %v5989 = vld [vmem:[#allocation5 + $0xb0] sm:$0xff]
      %v5990 = vld [vmem:[#allocation5 + $0xb8] sm:$0xff]
      %v5991 = vld [vmem:[#allocation5 + $0xc0] sm:$0xff]
      %v5992 = vld [vmem:[#allocation5 + $0xc8] sm:$0xff]
      %v5993 = vld [vmem:[#allocation5 + $0xd0] sm:$0xff]
      %v5994 = vld [vmem:[#allocation5 + $0xd8] sm:$0xff]
      %v5995 = vld [vmem:[#allocation5 + $0xe0] sm:$0xff]
      %v5996 = vld [vmem:[#allocation5 + $0xe8] sm:$0xff]
      %v5997 = vld [vmem:[#allocation5 + $0xf0] sm:$0xff]
      %v5998 = vld [vmem:[#allocation5 + $0xf8] sm:$0xff]
      %v5999 = vadd.f32 %v5967, %v5841
      %v6000 = vadd.f32 %v5968, %v5844
      %v6001 = vadd.f32 %v5969, %v5849
      %v6002 = vadd.f32 %v5970, %v5852
      %v6003 = vadd.f32 %v5971, %v5857
      %v6004 = vadd.f32 %v5972, %v5860
      %v6005 = vadd.f32 %v5973, %v5865
      %v6006 = vadd.f32 %v5974, %v5868
      %v6007 = vadd.f32 %v5975, %v5873
      %v6008 = vadd.f32 %v5976, %v5876
      %v6009 = vadd.f32 %v5977, %v5881
      %v6010 = vadd.f32 %v5978, %v5884
      %v6011 = vadd.f32 %v5979, %v5889
      %v6012 = vadd.f32 %v5980, %v5892
      %v6013 = vadd.f32 %v5981, %v5897
      %v6014 = vadd.f32 %v5982, %v5900
      %v6015 = vadd.f32 %v5983, %v5905
      %v6016 = vadd.f32 %v5984, %v5908
      %v6017 = vadd.f32 %v5985, %v5913
      %v6018 = vadd.f32 %v5986, %v5916
      %v6019 = vadd.f32 %v5987, %v5921
      %v6020 = vadd.f32 %v5988, %v5924
      %v6021 = vadd.f32 %v5989, %v5929
      %v6022 = vadd.f32 %v5990, %v5932
      %v6023 = vadd.f32 %v5991, %v5937
      %v6024 = vadd.f32 %v5992, %v5940
      %v6025 = vadd.f32 %v5993, %v5945
      %v6026 = vadd.f32 %v5994, %v5948
      %v6027 = vadd.f32 %v5995, %v5953
      %v6028 = vadd.f32 %v5996, %v5956
      %v6029 = vadd.f32 %v5997, %v5961
      %v6030 = vadd.f32 %v5998, %v5964
      %vm6031 = vcmask 64512
      %6032 = vst.msk [vmem:[%s224] sm:$0xff] %vm6031, %v5999
      %6033 = vst.msk [vmem:[%s224 + $0x8] sm:$0xff] %vm6031, %v6000
      %6034 = vst.msk [vmem:[%s224 + $0x10] sm:$0xff] %vm6031, %v6001
      %6035 = vst.msk [vmem:[%s224 + $0x18] sm:$0xff] %vm6031, %v6002
      %6036 = vst.msk [vmem:[%s224 + $0x20] sm:$0xff] %vm6031, %v6003
      %6037 = vst.msk [vmem:[%s224 + $0x28] sm:$0xff] %vm6031, %v6004
      %6038 = vst.msk [vmem:[%s224 + $0x30] sm:$0xff] %vm6031, %v6005
      %6039 = vst.msk [vmem:[%s224 + $0x38] sm:$0xff] %vm6031, %v6006
      %6040 = vst.msk [vmem:[%s224 + $0x40] sm:$0xff] %vm6031, %v6007
      %6041 = vst.msk [vmem:[%s224 + $0x48] sm:$0xff] %vm6031, %v6008
      %6042 = vst.msk [vmem:[%s224 + $0x50] sm:$0xff] %vm6031, %v6009
      %6043 = vst.msk [vmem:[%s224 + $0x58] sm:$0xff] %vm6031, %v6010
      %6044 = vst.msk [vmem:[%s224 + $0x60] sm:$0xff] %vm6031, %v6011
      %6045 = vst.msk [vmem:[%s224 + $0x68] sm:$0xff] %vm6031, %v6012
      %6046 = vst.msk [vmem:[%s224 + $0x70] sm:$0xff] %vm6031, %v6013
      %6047 = vst.msk [vmem:[%s224 + $0x78] sm:$0xff] %vm6031, %v6014
      %6048 = vst.msk [vmem:[%s224 + $0x80] sm:$0xff] %vm6031, %v6015
      %6049 = vst.msk [vmem:[%s224 + $0x88] sm:$0xff] %vm6031, %v6016
      %6050 = vst.msk [vmem:[%s224 + $0x90] sm:$0xff] %vm6031, %v6017
      %6051 = vst.msk [vmem:[%s224 + $0x98] sm:$0xff] %vm6031, %v6018
      %6052 = vst.msk [vmem:[%s224 + $0xa0] sm:$0xff] %vm6031, %v6019
      %6053 = vst.msk [vmem:[%s224 + $0xa8] sm:$0xff] %vm6031, %v6020
      %6054 = vst.msk [vmem:[%s224 + $0xb0] sm:$0xff] %vm6031, %v6021
      %6055 = vst.msk [vmem:[%s224 + $0xb8] sm:$0xff] %vm6031, %v6022
      %6056 = vst.msk [vmem:[%s224 + $0xc0] sm:$0xff] %vm6031, %v6023
      %6057 = vst.msk [vmem:[%s224 + $0xc8] sm:$0xff] %vm6031, %v6024
      %6058 = vst.msk [vmem:[%s224 + $0xd0] sm:$0xff] %vm6031, %v6025
      %6059 = vst.msk [vmem:[%s224 + $0xd8] sm:$0xff] %vm6031, %v6026
      %6060 = vst.msk [vmem:[%s224 + $0xe0] sm:$0xff] %vm6031, %v6027
      %6061 = vst.msk [vmem:[%s224 + $0xe8] sm:$0xff] %vm6031, %v6028
      %6062 = vst.msk [vmem:[%s224 + $0xf0] sm:$0xff] %vm6031, %v6029
      %6063 = vst.msk [vmem:[%s224 + $0xf8] sm:$0xff] %vm6031, %v6030
      %p6064 = scmp.lt.s32.totalorder %s16, 1
      %s6065 = scalar_select %p6064, %s16, 1
      %s6066 = smul.addr %s6065, 32
      %s6067 = smul.addr %s6066, 8
      %s6068 = scalar_lea.vmem %s5, %s6067
      // Predicated region
      $region41: #{conv_block.1} parent=39 // pred_check
        %p6069 = pneg %p144
      $region42: #{conv_block.1} parent=39 // pred_check_branch
        %6071 = sbr.rel (%p6069) target = $region44
      $region43: #{conv_block.1} parent=39 // pred_region
        _
      $region44: #{conv_block.1} parent=39 // pred_fallthru
        _
    $region40: #{conv_block.1} parent=5 // pred_fallthru
      _
    %p6072 = scmp.le.s32.totalorder 2, %s11
    // Predicated region
    $region45: #{conv_block.1} parent=5 // pred_check
      %p6073 = pneg %p6072
    $region46: #{conv_block.1} parent=5 // pred_check_branch
      %6075 = sbr.rel (%p6073) target = $region48
    $region47: #{conv_block.1} parent=5 // pred_region
      %s6076 = ssub.s32 %s11, 2
      // Predicated region
      $region49: #{conv_block.1} parent=47 // pred_check
        %p6077 = pneg %p150
      $region50: #{conv_block.1} parent=47 // pred_check_branch
        %6079 = sbr.rel (%p6077) target = $region52
      $region51: #{conv_block.1} parent=47 // pred_region
        %p6080 = scmp.lt.s32.totalorder %s17, 1
        %s6081 = scalar_select %p6080, %s17, 1
        %s6082 = smul.addr %s6081, 32
        %s6083 = smul.addr %s6082, 8
        %s6084 = scalar_lea.vmem %s5, %s6083
      $region52: #{conv_block.1} parent=47 // pred_fallthru
        _
    $region48: #{conv_block.1} parent=5 // pred_fallthru
      _
  $region6: #{conv_block.1} parent=0 // loop_footer
    %s15 = sadd.s32 1, %s11
  $region7: #{conv_block.1} parent=0 // loop_footer_branch
    %10 = sbr.rel target = $region3
  $region8: #{conv_block.1} parent=0 // loop_exit
    _

</llo_original>
